<compile_context>
chip_gen: v7x
topology: tpu7x:2x2x1
jax: 0.10.0
libtpu: 0.0.40
codegen_flags: <defaults>
</compile_context>

<pallas_src>
import functools

import jax
import jax.numpy as jnp
from jax.experimental import pallas as pl
from jax.experimental.pallas import tpu as pltpu


# ----------------------------------------------------------------------------
# Tiling config
# ----------------------------------------------------------------------------

def _choose_tile_n(n):
    # Points-axis tile: multiple of 8 (sublane); cap at 512 so the fused chains
    # (largest live intermediate is (TILE_N, 1024) f32) fit comfortably in the
    # scoped VMEM budget of every generation (v7x: 64 MiB physical).
    for t in (512, 256, 128, 64, 32, 16, 8):
        if t <= n:
            return t
    return 8


_COMPILER_PARAMS = pltpu.CompilerParams(
    dimension_semantics=("parallel", "arbitrary"),
    vmem_limit_bytes=64 * 1024 * 1024,
)


# ----------------------------------------------------------------------------
# Kernel 1: STN conv1->conv2->conv3 (+ReLU) fused with max-over-points
# ----------------------------------------------------------------------------

def _stn_conv_max_kernel(x_ref, w1, b1, w2, b2, w3, b3, gmax_ref, *,
                         n_valid, tile_n):
    n_idx = pl.program_id(1)

    h = jnp.dot(x_ref[...], w1[...], preferred_element_type=jnp.float32) + b1[...]
    h = jnp.maximum(h, 0.0)
    h = jnp.dot(h.astype(jnp.bfloat16), w2[...],
                preferred_element_type=jnp.float32) + b2[...]
    h = jnp.maximum(h, 0.0)
    h = jnp.dot(h.astype(jnp.bfloat16), w3[...],
                preferred_element_type=jnp.float32) + b3[...]
    h = jnp.maximum(h, 0.0)                                    # (TILE_N, 1024) f32

    rows = n_idx * tile_n + jax.lax.broadcasted_iota(jnp.int32, (tile_n, 1), 0)
    h = jnp.where(rows < n_valid, h, -jnp.inf)                 # mask padded points
    tile_max = jnp.max(h, axis=0, keepdims=True)               # (1, 1024)

    @pl.when(n_idx == 0)
    def _():
        gmax_ref[...] = jnp.full(gmax_ref.shape, -jnp.inf, gmax_ref.dtype)

    gmax_ref[...] = jnp.maximum(gmax_ref[...], tile_max)


def stn_conv_max(x_pad, p, *, n_valid, tile_n):
    B, n_pad, cin = x_pad.shape
    (w1, b1), (w2, b2), (w3, b3) = p["stn_conv1"], p["stn_conv2"], p["stn_conv3"]
    const = lambda b, n: (0, 0)
    out = pl.pallas_call(
        functools.partial(_stn_conv_max_kernel, n_valid=n_valid, tile_n=tile_n),
        out_shape=jax.ShapeDtypeStruct((B, 1, 1024), jnp.float32),
        grid=(B, n_pad // tile_n),
        in_specs=[
            pl.BlockSpec((None, tile_n, cin), lambda b, n: (b, n, 0)),
            pl.BlockSpec((cin, 64), const), pl.BlockSpec((1, 64), const),
            pl.BlockSpec((64, 128), const), pl.BlockSpec((1, 128), const),
            pl.BlockSpec((128, 1024), const), pl.BlockSpec((1, 1024), const),
        ],
        out_specs=pl.BlockSpec((None, 1, 1024), lambda b, n: (b, 0, 0)),
        compiler_params=_COMPILER_PARAMS,
    )(x_pad, w1, b1, w2, b2, w3, b3)
    return out.reshape(B, 1024)


# ----------------------------------------------------------------------------
# Kernel 2: tiny per-batch STN FC head (fc1->fc2->fc3), one call for all of it
# ----------------------------------------------------------------------------

def _stn_fc_kernel(g_ref, w1, b1, w2, b2, w3, b3, o_ref):
    h = jnp.dot(g_ref[...], w1[...], preferred_element_type=jnp.float32) + b1[...]
    h = jnp.maximum(h, 0.0)
    h = jnp.dot(h, w2[...], preferred_element_type=jnp.float32) + b2[...]
    h = jnp.maximum(h, 0.0)
    h = jnp.dot(h, w3[...], preferred_element_type=jnp.float32) + b3[...]
    o_ref[...] = h


def stn_fc_head(gmax, p):
    B = gmax.shape[0]
    (w1, b1), (w2, b2), (w3, b3) = p["stn_fc1"], p["stn_fc2"], p["stn_fc3"]
    const = lambda i: (0, 0)
    return pl.pallas_call(
        _stn_fc_kernel,
        out_shape=jax.ShapeDtypeStruct((B, 25), jnp.float32),
        grid=(1,),
        in_specs=[
            pl.BlockSpec((B, 1024), const),
            pl.BlockSpec((1024, 512), const), pl.BlockSpec((1, 512), const),
            pl.BlockSpec((512, 256), const), pl.BlockSpec((1, 256), const),
            pl.BlockSpec((256, 25), const), pl.BlockSpec((1, 25), const),
        ],
        out_specs=pl.BlockSpec((B, 25), const),
    )(gmax, w1, b1, w2, b2, w3, b3)


# ----------------------------------------------------------------------------
# Kernel 3: input transform (bmm) + feat conv1->conv2->conv3 fused with
#           max-over-points; also emits pointfeat (conv1 output)
# ----------------------------------------------------------------------------

def _feat_conv_kernel(x_ref, t_ref, w1, b1, w2, b2, w3, b3,
                      pf_ref, gmax_ref, *, n_valid, tile_n):
    n_idx = pl.program_id(1)

    # STN input transform: (TILE_N, 8) @ (8, 8)  (padded 5x5)
    xt = jnp.dot(x_ref[...].astype(jnp.float32), t_ref[...],
                 preferred_element_type=jnp.float32)

    h1 = jnp.dot(xt.astype(jnp.bfloat16), w1[...],
                 preferred_element_type=jnp.float32) + b1[...]
    h1 = jnp.maximum(h1, 0.0)                                  # pointfeat
    pf_ref[...] = h1.astype(pf_ref.dtype)

    h2 = jnp.dot(h1.astype(jnp.bfloat16), w2[...],
                 preferred_element_type=jnp.float32) + b2[...]
    h2 = jnp.maximum(h2, 0.0)
    h3 = jnp.dot(h2.astype(jnp.bfloat16), w3[...],
                 preferred_element_type=jnp.float32) + b3[...]   # bn3, no ReLU

    rows = n_idx * tile_n + jax.lax.broadcasted_iota(jnp.int32, (tile_n, 1), 0)
    h3 = jnp.where(rows < n_valid, h3, -jnp.inf)
    tile_max = jnp.max(h3, axis=0, keepdims=True)

    @pl.when(n_idx == 0)
    def _():
        gmax_ref[...] = jnp.full(gmax_ref.shape, -jnp.inf, gmax_ref.dtype)

    gmax_ref[...] = jnp.maximum(gmax_ref[...], tile_max)


def feat_conv_max(x_pad, trans_pad, p, *, n_valid, tile_n):
    B, n_pad, cin = x_pad.shape
    (w1, b1), (w2, b2), (w3, b3) = p["feat_conv1"], p["feat_conv2"], p["feat_conv3"]
    const = lambda b, n: (0, 0)
    pointfeat, gmax = pl.pallas_call(
        functools.partial(_feat_conv_kernel, n_valid=n_valid, tile_n=tile_n),
        out_shape=(
            jax.ShapeDtypeStruct((B, n_pad, 64), jnp.bfloat16),
            jax.ShapeDtypeStruct((B, 1, 1024), jnp.float32),
        ),
        grid=(B, n_pad // tile_n),
        in_specs=[
            pl.BlockSpec((None, tile_n, cin), lambda b, n: (b, n, 0)),
            pl.BlockSpec((None, 8, 8), lambda b, n: (b, 0, 0)),
            pl.BlockSpec((cin, 64), const), pl.BlockSpec((1, 64), const),
            pl.BlockSpec((64, 128), const), pl.BlockSpec((1, 128), const),
            pl.BlockSpec((128, 1024), const), pl.BlockSpec((1, 1024), const),
        ],
        out_specs=(
            pl.BlockSpec((None, tile_n, 64), lambda b, n: (b, n, 0)),
            pl.BlockSpec((None, 1, 1024), lambda b, n: (b, 0, 0)),
        ),
        compiler_params=_COMPILER_PARAMS,
    )(x_pad, trans_pad, w1, b1, w2, b2, w3, b3)
    return pointfeat, gmax


# ----------------------------------------------------------------------------
# Kernel 4: encoder head (split conv1 + conv2 + conv3 + conv4 + log_softmax)
# ----------------------------------------------------------------------------

def _head_kernel(pf_ref, gmax_ref, wg, wp, b1, w2, b2, w3, b3, w4, b4,
                 out_ref, gproj_ref):
    n_idx = pl.program_id(1)

    # Per-batch half of conv1: g_proj = gfeat @ W_g, computed once per batch.
    @pl.when(n_idx == 0)
    def _():
        gproj_ref[...] = jnp.dot(gmax_ref[...].astype(jnp.bfloat16), wg[...],
                                 preferred_element_type=jnp.float32)

    h = jnp.dot(pf_ref[...], wp[...], preferred_element_type=jnp.float32)
    h = jnp.maximum(h + gproj_ref[...] + b1[...], 0.0)         # conv1+bn1+relu
    h = jnp.dot(h.astype(jnp.bfloat16), w2[...],
                preferred_element_type=jnp.float32) + b2[...]
    h = jnp.maximum(h, 0.0)
    h = jnp.dot(h.astype(jnp.bfloat16), w3[...],
                preferred_element_type=jnp.float32) + b3[...]
    h = jnp.maximum(h, 0.0)
    h = jnp.dot(h.astype(jnp.bfloat16), w4[...],
                preferred_element_type=jnp.float32) + b4[...]   # (TILE_N, k)

    # log_softmax in f32
    m = jnp.max(h, axis=-1, keepdims=True)
    s = h - m
    lse = jnp.log(jnp.sum(jnp.exp(s), axis=-1, keepdims=True))
    out_ref[...] = (s - lse).astype(out_ref.dtype)


def encoder_head(pointfeat, gmax, p, *, k, tile_n):
    B, n_pad, _ = pointfeat.shape
    wg, wp, b1 = p["enc_conv1_g"], p["enc_conv1_p"], p["enc_conv1_b"]
    (w2, b2), (w3, b3), (w4, b4) = p["enc_conv2"], p["enc_conv3"], p["enc_conv4"]
    const = lambda b, n: (0, 0)
    return pl.pallas_call(
        _head_kernel,
        out_shape=jax.ShapeDtypeStruct((B, n_pad, k), jnp.float32),
        grid=(B, n_pad // tile_n),
        in_specs=[
            pl.BlockSpec((None, tile_n, 64), lambda b, n: (b, n, 0)),
            pl.BlockSpec((None, 1, 1024), lambda b, n: (b, 0, 0)),
            pl.BlockSpec((1024, 512), const), pl.BlockSpec((64, 512), const),
            pl.BlockSpec((1, 512), const),
            pl.BlockSpec((512, 256), const), pl.BlockSpec((1, 256), const),
            pl.BlockSpec((256, 128), const), pl.BlockSpec((1, 128), const),
            pl.BlockSpec((128, k), const), pl.BlockSpec((1, k), const),
        ],
        out_specs=pl.BlockSpec((None, tile_n, k), lambda b, n: (b, n, 0)),
        scratch_shapes=[pltpu.VMEM((1, 512), jnp.float32)],
        compiler_params=_COMPILER_PARAMS,
    )(pointfeat, gmax, wg, wp, b1, w2, b2, w3, b3, w4, b4)


# ----------------------------------------------------------------------------
# Parameter construction (deterministic, synthetic) + BN folding + packing
# ----------------------------------------------------------------------------

def _fold_bn(w, b, gamma, beta, mean, var, eps=1e-5):
    scale = gamma / jnp.sqrt(var + eps)
    return w * scale[None, :], (b - mean) * scale + beta


def _make_layer(key, cin, cout, with_bn):
    kw, kb, kg, kbe, km, kv = jax.random.split(key, 6)
    w = 0.02 * jax.random.normal(kw, (cin, cout), jnp.float32)
    b = 0.02 * jax.random.normal(kb, (cout,), jnp.float32)
    if with_bn:
        gamma = 1.0 + 0.1 * jax.random.normal(kg, (cout,), jnp.float32)
        beta = 0.1 * jax.random.normal(kbe, (cout,), jnp.float32)
        mean = 0.1 * jax.random.normal(km, (cout,), jnp.float32)
        var = 1.0 + 0.1 * jnp.abs(jax.random.normal(kv, (cout,), jnp.float32))
        w, b = _fold_bn(w, b, gamma, beta, mean, var)
    return w, b


def init_params(key, k=128):
    layer_defs = {
        # STN5d
        "stn_conv1": (5, 64, True),
        "stn_conv2": (64, 128, True),
        "stn_conv3": (128, 1024, True),
        "stn_fc1": (1024, 512, True),
        "stn_fc2": (512, 256, True),
        "stn_fc3": (256, 25, False),
        # PointNetfeat
        "feat_conv1": (5, 64, True),
        "feat_conv2": (64, 128, True),
        "feat_conv3": (128, 1024, True),
        # Encoder head ([1024 global | 64 pointfeat] concat order)
        "enc_conv1": (1088, 512, True),
        "enc_conv2": (512, 256, True),
        "enc_conv3": (256, 128, True),
        "enc_conv4": (128, k, False),
    }
    keys = jax.random.split(key, len(layer_defs))
    raw = {name: _make_layer(kk, cin, cout, bn)
           for kk, (name, (cin, cout, bn)) in zip(keys, layer_defs.items())}

    # Pack for the kernels: pad Cin 5->8 on the input layers, split enc_conv1,
    # weights -> bf16 for MXU throughput, biases -> (1, C) f32.
    for name in ("stn_conv1", "feat_conv1"):
        w, b = raw[name]
        raw[name] = (jnp.pad(w, ((0, 3), (0, 0))), b)

    def mm(name, dtype=jnp.bfloat16):
        w, b = raw[name]
        return w.astype(dtype), b.reshape(1, -1).astype(jnp.float32)

    p = {}
    for name in ("stn_conv1", "stn_conv2", "stn_conv3",
                 "feat_conv1", "feat_conv2", "feat_conv3",
                 "enc_conv2", "enc_conv3", "enc_conv4"):
        p[name] = mm(name)
    for name in ("stn_fc1", "stn_fc2", "stn_fc3"):
        p[name] = mm(name, jnp.float32)

    w1, b1 = raw["enc_conv1"]
    p["enc_conv1_g"] = w1[:1024].astype(jnp.bfloat16)   # global-feature half
    p["enc_conv1_p"] = w1[1024:].astype(jnp.bfloat16)   # pointfeat half
    p["enc_conv1_b"] = b1.reshape(1, -1).astype(jnp.float32)
    return p


# ----------------------------------------------------------------------------
# Forward pass
# ----------------------------------------------------------------------------

def pointnet_encoder_forward(x, params, k=128):
    """x: (B, 5, N) float32 (same NCW convention as the PyTorch module)."""
    B, C, N = x.shape
    tile_n = _choose_tile_n(N)
    n_tiles = pl.cdiv(N, tile_n)
    n_pad = tile_n * n_tiles

    xt = jnp.transpose(x, (0, 2, 1))                          # (B, N, 5)
    # zero-pad channels 5->8 and points N->n_pad; bf16 inter-kernel activation
    x_pad = jnp.pad(xt, ((0, 0), (0, n_pad - N), (0, 3))).astype(jnp.bfloat16)

    # ---- STN5d --------------------------------------------------------------
    stn_g = stn_conv_max(x_pad, params, n_valid=N, tile_n=tile_n)   # (B, 1024)
    stn_out = stn_fc_head(stn_g, params)                            # (B, 25)
    trans = stn_out.reshape(B, 5, 5) + jnp.eye(5, dtype=jnp.float32)[None]
    trans_pad = jnp.pad(trans, ((0, 0), (0, 3), (0, 3)))            # (B, 8, 8)

    # ---- PointNetfeat (bmm + conv chain + max fused) ------------------------
    pointfeat, gmax = feat_conv_max(x_pad, trans_pad, params,
                                    n_valid=N, tile_n=tile_n)
    # pointfeat: (B, n_pad, 64) bf16 ; gmax: (B, 1, 1024) f32

    # ---- Encoder head (split conv1 + conv2..4 + log_softmax fused) ----------
    out_full = encoder_head(pointfeat, gmax, params, k=k, tile_n=tile_n)
    out = out_full[:, :N, :]                                        # drop pad rows

    trans_feat = None   # feature_transform=False
    return out, trans, trans_feat


# ----------------------------------------------------------------------------
# Main
# ----------------------------------------------------------------------------

if __name__ == "__main__":
    key = jax.random.PRNGKey(0)
    kx, kp = jax.random.split(key)

    B, N, K = 2, 16, 128
    x = jax.random.normal(kx, (B, 5, N), jnp.float32)
    params = init_params(kp, k=K)

    fwd = jax.jit(lambda xx: pointnet_encoder_forward(xx, params, k=K))
    out, trans, trans_feat = fwd(x)
    jax.block_until_ready(out)
    jax.block_until_ready(trans)

    assert out.shape == (B, N, K)
    assert trans.shape == (B, 5, 5)
    # log_softmax rows must exponentiate to a probability distribution.
    row_sums = jnp.sum(jnp.exp(out), axis=-1)
    assert bool(jnp.all(jnp.abs(row_sums - 1.0) < 1e-3))
    assert bool(jnp.all(jnp.isfinite(out)))

    print("KERNEL_OK")
</pallas_src>

<mosaic_0001>
module attributes {stable_mosaic.version = 11 : i64} {
  func.func @_stn_fc_kernel(%arg0: i32, %arg1: memref<2x1024xf32, #tpu.memory_space<vmem>>, %arg2: memref<1024x512xf32, #tpu.memory_space<vmem>>, %arg3: memref<1x512xf32, #tpu.memory_space<vmem>>, %arg4: memref<512x256xf32, #tpu.memory_space<vmem>>, %arg5: memref<1x256xf32, #tpu.memory_space<vmem>>, %arg6: memref<256x25xf32, #tpu.memory_space<vmem>>, %arg7: memref<1x25xf32, #tpu.memory_space<vmem>>, %arg8: memref<2x25xf32, #tpu.memory_space<vmem>>) attributes {dimension_semantics = [#tpu.dimension_semantics<arbitrary>], iteration_bounds = array<i64: 1>, scalar_prefetch = 0 : i64, scratch_operands = 0 : i64, tpu.core_type = #tpu.core_type<tc>, window_params = [{pipeline_mode = #tpu.pipeline_mode<synchronous>, transform_indices = @transform_0, window_bounds = array<i64: 2, 1024>}, {pipeline_mode = #tpu.pipeline_mode<synchronous>, transform_indices = @transform_1, window_bounds = array<i64: 1024, 512>}, {pipeline_mode = #tpu.pipeline_mode<synchronous>, transform_indices = @transform_2, window_bounds = array<i64: 1, 512>}, {pipeline_mode = #tpu.pipeline_mode<synchronous>, transform_indices = @transform_3, window_bounds = array<i64: 512, 256>}, {pipeline_mode = #tpu.pipeline_mode<synchronous>, transform_indices = @transform_4, window_bounds = array<i64: 1, 256>}, {pipeline_mode = #tpu.pipeline_mode<synchronous>, transform_indices = @transform_5, window_bounds = array<i64: 256, 25>}, {pipeline_mode = #tpu.pipeline_mode<synchronous>, transform_indices = @transform_6, window_bounds = array<i64: 1, 25>}, {pipeline_mode = #tpu.pipeline_mode<synchronous>, transform_indices = @transform_7, window_bounds = array<i64: 2, 25>}]} {
    %c0 = arith.constant 0 : index
    %c0_0 = arith.constant 0 : index
    %0 = vector.load %arg1[%c0, %c0_0] : memref<2x1024xf32, #tpu.memory_space<vmem>>, vector<2x1024xf32>
    %c0_1 = arith.constant 0 : index
    %c0_2 = arith.constant 0 : index
    %1 = vector.load %arg2[%c0_1, %c0_2] : memref<1024x512xf32, #tpu.memory_space<vmem>>, vector<1024x512xf32>
    %cst = arith.constant dense<0.000000e+00> : vector<2x512xf32>
    %2 = tpu.matmul %0, %1, %cst {dimension_numbers = #tpu.dot_dimension_numbers<[1], [0], [0], [1], [0, 0, 1, 1], [], []>} : vector<2x1024xf32>, vector<1024x512xf32>, vector<2x512xf32> -> vector<2x512xf32>
    %c0_3 = arith.constant 0 : index
    %c0_4 = arith.constant 0 : index
    %3 = vector.load %arg3[%c0_3, %c0_4] : memref<1x512xf32, #tpu.memory_space<vmem>>, vector<1x512xf32>
    %4 = vector.broadcast %3 : vector<1x512xf32> to vector<2x512xf32>
    %5 = arith.addf %2, %4 : vector<2x512xf32>
    %cst_5 = arith.constant 0.000000e+00 : f32
    %6 = vector.broadcast %cst_5 : f32 to vector<2x512xf32>
    %7 = arith.maximumf %5, %6 : vector<2x512xf32>
    %c0_6 = arith.constant 0 : index
    %c0_7 = arith.constant 0 : index
    %8 = vector.load %arg4[%c0_6, %c0_7] : memref<512x256xf32, #tpu.memory_space<vmem>>, vector<512x256xf32>
    %cst_8 = arith.constant dense<0.000000e+00> : vector<2x256xf32>
    %9 = tpu.matmul %7, %8, %cst_8 {dimension_numbers = #tpu.dot_dimension_numbers<[1], [0], [0], [1], [0, 0, 1, 1], [], []>} : vector<2x512xf32>, vector<512x256xf32>, vector<2x256xf32> -> vector<2x256xf32>
    %c0_9 = arith.constant 0 : index
    %c0_10 = arith.constant 0 : index
    %10 = vector.load %arg5[%c0_9, %c0_10] : memref<1x256xf32, #tpu.memory_space<vmem>>, vector<1x256xf32>
    %11 = vector.broadcast %10 : vector<1x256xf32> to vector<2x256xf32>
    %12 = arith.addf %9, %11 : vector<2x256xf32>
    %cst_11 = arith.constant 0.000000e+00 : f32
    %13 = vector.broadcast %cst_11 : f32 to vector<2x256xf32>
    %14 = arith.maximumf %12, %13 : vector<2x256xf32>
    %c0_12 = arith.constant 0 : index
    %c0_13 = arith.constant 0 : index
    %15 = vector.load %arg6[%c0_12, %c0_13] : memref<256x25xf32, #tpu.memory_space<vmem>>, vector<256x25xf32>
    %cst_14 = arith.constant dense<0.000000e+00> : vector<2x25xf32>
    %16 = tpu.matmul %14, %15, %cst_14 {dimension_numbers = #tpu.dot_dimension_numbers<[1], [0], [0], [1], [0, 0, 1, 1], [], []>} : vector<2x256xf32>, vector<256x25xf32>, vector<2x25xf32> -> vector<2x25xf32>
    %c0_15 = arith.constant 0 : index
    %c0_16 = arith.constant 0 : index
    %17 = vector.load %arg7[%c0_15, %c0_16] : memref<1x25xf32, #tpu.memory_space<vmem>>, vector<1x25xf32>
    %18 = vector.broadcast %17 : vector<1x25xf32> to vector<2x25xf32>
    %19 = arith.addf %16, %18 : vector<2x25xf32>
    %c0_17 = arith.constant 0 : index
    %c0_18 = arith.constant 0 : index
    %20 = vector.load %arg8[%c0_17, %c0_18] : memref<2x25xf32, #tpu.memory_space<vmem>>, vector<2x25xf32>
    tpu.vector_store %arg8[%c0_17, %c0_18], %19 {strides = array<i32>} : memref<2x25xf32, #tpu.memory_space<vmem>>, vector<2x25xf32>,
    return
  }
  func.func @transform_0(%arg0: i32) -> (i32, i32) {
    %c0_i32 = arith.constant 0 : i32
    %c0_i32_0 = arith.constant 0 : i32
    %c0_i32_1 = arith.constant 0 : i32
    return %c0_i32, %c0_i32_0 : i32, i32
  }
  func.func @transform_1(%arg0: i32) -> (i32, i32) {
    %c0_i32 = arith.constant 0 : i32
    %c0_i32_0 = arith.constant 0 : i32
    %c0_i32_1 = arith.constant 0 : i32
    return %c0_i32, %c0_i32_0 : i32, i32
  }
  func.func @transform_2(%arg0: i32) -> (i32, i32) {
    %c0_i32 = arith.constant 0 : i32
    %c0_i32_0 = arith.constant 0 : i32
    %c0_i32_1 = arith.constant 0 : i32
    return %c0_i32, %c0_i32_0 : i32, i32
  }
  func.func @transform_3(%arg0: i32) -> (i32, i32) {
    %c0_i32 = arith.constant 0 : i32
    %c0_i32_0 = arith.constant 0 : i32
    %c0_i32_1 = arith.constant 0 : i32
    return %c0_i32, %c0_i32_0 : i32, i32
  }
  func.func @transform_4(%arg0: i32) -> (i32, i32) {
    %c0_i32 = arith.constant 0 : i32
    %c0_i32_0 = arith.constant 0 : i32
    %c0_i32_1 = arith.constant 0 : i32
    return %c0_i32, %c0_i32_0 : i32, i32
  }
  func.func @transform_5(%arg0: i32) -> (i32, i32) {
    %c0_i32 = arith.constant 0 : i32
    %c0_i32_0 = arith.constant 0 : i32
    %c0_i32_1 = arith.constant 0 : i32
    return %c0_i32, %c0_i32_0 : i32, i32
  }
  func.func @transform_6(%arg0: i32) -> (i32, i32) {
    %c0_i32 = arith.constant 0 : i32
    %c0_i32_0 = arith.constant 0 : i32
    %c0_i32_1 = arith.constant 0 : i32
    return %c0_i32, %c0_i32_0 : i32, i32
  }
  func.func @transform_7(%arg0: i32) -> (i32, i32) {
    %c0_i32 = arith.constant 0 : i32
    %c0_i32_0 = arith.constant 0 : i32
    %c0_i32_1 = arith.constant 0 : i32
    return %c0_i32, %c0_i32_0 : i32, i32
  }
}

module attributes {stable_mosaic.version = 11 : i64} {
  func.func @_stn_conv_max_kernel(%arg0: i32, %arg1: i32, %arg2: memref<1x16x8xbf16, #tpu.memory_space<vmem>>, %arg3: memref<8x64xbf16, #tpu.memory_space<vmem>>, %arg4: memref<1x64xf32, #tpu.memory_space<vmem>>, %arg5: memref<64x128xbf16, #tpu.memory_space<vmem>>, %arg6: memref<1x128xf32, #tpu.memory_space<vmem>>, %arg7: memref<128x1024xbf16, #tpu.memory_space<vmem>>, %arg8: memref<1x1024xf32, #tpu.memory_space<vmem>>, %arg9: memref<1x1x1024xf32, #tpu.memory_space<vmem>>) attributes {dimension_semantics = [#tpu.dimension_semantics<parallel>, #tpu.dimension_semantics<arbitrary>], iteration_bounds = array<i64: 2, 1>, scalar_prefetch = 0 : i64, scratch_operands = 0 : i64, tpu.core_type = #tpu.core_type<tc>, window_params = [{transform_indices = @transform_0, window_bounds = array<i64: 1, 16, 8>}, {pipeline_mode = #tpu.pipeline_mode<synchronous>, transform_indices = @transform_1, window_bounds = array<i64: 8, 64>}, {pipeline_mode = #tpu.pipeline_mode<synchronous>, transform_indices = @transform_2, window_bounds = array<i64: 1, 64>}, {pipeline_mode = #tpu.pipeline_mode<synchronous>, transform_indices = @transform_3, window_bounds = array<i64: 64, 128>}, {pipeline_mode = #tpu.pipeline_mode<synchronous>, transform_indices = @transform_4, window_bounds = array<i64: 1, 128>}, {pipeline_mode = #tpu.pipeline_mode<synchronous>, transform_indices = @transform_5, window_bounds = array<i64: 128, 1024>}, {pipeline_mode = #tpu.pipeline_mode<synchronous>, transform_indices = @transform_6, window_bounds = array<i64: 1, 1024>}, {transform_indices = @transform_7, window_bounds = array<i64: 1, 1, 1024>}]} {
    %c0 = arith.constant 0 : index
    %c0_0 = arith.constant 0 : index
    %c0_1 = arith.constant 0 : index
    %0 = vector.load %arg2[%c0, %c0_0, %c0_1] : memref<1x16x8xbf16, #tpu.memory_space<vmem>>, vector<1x16x8xbf16>
    %1 = vector.shape_cast %0 : vector<1x16x8xbf16> to vector<16x8xbf16>
    %c0_2 = arith.constant 0 : index
    %c0_3 = arith.constant 0 : index
    %2 = vector.load %arg3[%c0_2, %c0_3] : memref<8x64xbf16, #tpu.memory_space<vmem>>, vector<8x64xbf16>
    %cst = arith.constant dense<0.000000e+00> : vector<16x64xf32>
    %3 = tpu.matmul %1, %2, %cst {dimension_numbers = #tpu.dot_dimension_numbers<[1], [0], [0], [1], [0, 0, 1, 1], [], []>} : vector<16x8xbf16>, vector<8x64xbf16>, vector<16x64xf32> -> vector<16x64xf32>
    %c0_4 = arith.constant 0 : index
    %c0_5 = arith.constant 0 : index
    %4 = vector.load %arg4[%c0_4, %c0_5] : memref<1x64xf32, #tpu.memory_space<vmem>>, vector<1x64xf32>
    %5 = vector.broadcast %4 : vector<1x64xf32> to vector<16x64xf32>
    %6 = arith.addf %3, %5 : vector<16x64xf32>
    %cst_6 = arith.constant 0.000000e+00 : f32
    %7 = vector.broadcast %cst_6 : f32 to vector<16x64xf32>
    %8 = arith.maximumf %6, %7 : vector<16x64xf32>
    %9 = arith.truncf %8 : vector<16x64xf32> to vector<16x64xbf16>
    %c0_7 = arith.constant 0 : index
    %c0_8 = arith.constant 0 : index
    %10 = vector.load %arg5[%c0_7, %c0_8] : memref<64x128xbf16, #tpu.memory_space<vmem>>, vector<64x128xbf16>
    %cst_9 = arith.constant dense<0.000000e+00> : vector<16x128xf32>
    %11 = tpu.matmul %9, %10, %cst_9 {dimension_numbers = #tpu.dot_dimension_numbers<[1], [0], [0], [1], [0, 0, 1, 1], [], []>} : vector<16x64xbf16>, vector<64x128xbf16>, vector<16x128xf32> -> vector<16x128xf32>
    %c0_10 = arith.constant 0 : index
    %c0_11 = arith.constant 0 : index
    %12 = vector.load %arg6[%c0_10, %c0_11] : memref<1x128xf32, #tpu.memory_space<vmem>>, vector<1x128xf32>
    %13 = vector.broadcast %12 : vector<1x128xf32> to vector<16x128xf32>
    %14 = arith.addf %11, %13 : vector<16x128xf32>
    %cst_12 = arith.constant 0.000000e+00 : f32
    %15 = vector.broadcast %cst_12 : f32 to vector<16x128xf32>
    %16 = arith.maximumf %14, %15 : vector<16x128xf32>
    %17 = arith.truncf %16 : vector<16x128xf32> to vector<16x128xbf16>
    %c0_13 = arith.constant 0 : index
    %c0_14 = arith.constant 0 : index
    %18 = vector.load %arg7[%c0_13, %c0_14] : memref<128x1024xbf16, #tpu.memory_space<vmem>>, vector<128x1024xbf16>
    %cst_15 = arith.constant dense<0.000000e+00> : vector<16x1024xf32>
    %19 = tpu.matmul %17, %18, %cst_15 {dimension_numbers = #tpu.dot_dimension_numbers<[1], [0], [0], [1], [0, 0, 1, 1], [], []>} : vector<16x128xbf16>, vector<128x1024xbf16>, vector<16x1024xf32> -> vector<16x1024xf32>
    %c0_16 = arith.constant 0 : index
    %c0_17 = arith.constant 0 : index
    %20 = vector.load %arg8[%c0_16, %c0_17] : memref<1x1024xf32, #tpu.memory_space<vmem>>, vector<1x1024xf32>
    %21 = vector.broadcast %20 : vector<1x1024xf32> to vector<16x1024xf32>
    %22 = arith.addf %19, %21 : vector<16x1024xf32>
    %cst_18 = arith.constant 0.000000e+00 : f32
    %23 = vector.broadcast %cst_18 : f32 to vector<16x1024xf32>
    %24 = arith.maximumf %22, %23 : vector<16x1024xf32>
    %c16_i32 = arith.constant 16 : i32
    %25 = arith.muli %arg1, %c16_i32 : i32
    %26 = tpu.iota {dimensions = array<i32: 0>} : vector<16x1xi32>
    %27 = vector.broadcast %25 : i32 to vector<16x1xi32>
    %28 = arith.addi %27, %26 : vector<16x1xi32>
    %c16_i32_19 = arith.constant 16 : i32
    %29 = vector.broadcast %c16_i32_19 : i32 to vector<16x1xi32>
    %30 = arith.cmpi slt, %28, %29 : vector<16x1xi32>
    %cst_20 = arith.constant 0xFF800000 : f32
    %31 = vector.shape_cast %30 : vector<16x1xi1> to vector<16x1xi1>
    %32 = vector.broadcast %31 : vector<16x1xi1> to vector<16x1024xi1>
    %33 = vector.broadcast %cst_20 : f32 to vector<16x1024xf32>
    %34 = arith.select %32, %24, %33 : vector<16x1024xi1>, vector<16x1024xf32>
    %cst_21 = arith.constant dense<0xFF800000> : vector<1024xf32>
    %35 = vector.multi_reduction <maximumf>, %34, %cst_21 [0] : vector<16x1024xf32> to vector<1024xf32>
    %36 = vector.shape_cast %35 : vector<1024xf32> to vector<1x1024xf32>
    %c0_i32 = arith.constant 0 : i32
    %37 = arith.cmpi eq, %arg1, %c0_i32 : i32
    %38 = arith.extui %37 : i1 to i32
    %c0_i32_22 = arith.constant 0 : i32
    %39 = arith.cmpi ne, %38, %c0_i32_22 : i32
    scf.if %39 {
      %cst_29 = arith.constant 0xFF800000 : f32
      %46 = vector.broadcast %cst_29 : f32 to vector<1x1024xf32>
      %c0_30 = arith.constant 0 : index
      %c0_31 = arith.constant 0 : index
      %c0_32 = arith.constant 0 : index
      %47 = vector.load %arg9[%c0_30, %c0_31, %c0_32] : memref<1x1x1024xf32, #tpu.memory_space<vmem>>, vector<1x1x1024xf32>
      %48 = vector.shape_cast %47 : vector<1x1x1024xf32> to vector<1x1024xf32>
      %49 = vector.shape_cast %46 : vector<1x1024xf32> to vector<1x1x1024xf32>
      tpu.vector_store %arg9[%c0_30, %c0_31, %c0_32], %49 {strides = array<i32>} : memref<1x1x1024xf32, #tpu.memory_space<vmem>>, vector<1x1x1024xf32>,
    } else {
    }
    %c0_23 = arith.constant 0 : index
    %c0_24 = arith.constant 0 : index
    %c0_25 = arith.constant 0 : index
    %40 = vector.load %arg9[%c0_23, %c0_24, %c0_25] : memref<1x1x1024xf32, #tpu.memory_space<vmem>>, vector<1x1x1024xf32>
    %41 = vector.shape_cast %40 : vector<1x1x1024xf32> to vector<1x1024xf32>
    %42 = arith.maximumf %41, %36 : vector<1x1024xf32>
    %c0_26 = arith.constant 0 : index
    %c0_27 = arith.constant 0 : index
    %c0_28 = arith.constant 0 : index
    %43 = vector.load %arg9[%c0_26, %c0_27, %c0_28] : memref<1x1x1024xf32, #tpu.memory_space<vmem>>, vector<1x1x1024xf32>
    %44 = vector.shape_cast %43 : vector<1x1x1024xf32> to vector<1x1024xf32>
    %45 = vector.shape_cast %42 : vector<1x1024xf32> to vector<1x1x1024xf32>
    tpu.vector_store %arg9[%c0_26, %c0_27, %c0_28], %45 {strides = array<i32>} : memref<1x1x1024xf32, #tpu.memory_space<vmem>>, vector<1x1x1024xf32>,
    return
  }
  func.func @transform_0(%arg0: i32, %arg1: i32) -> (i32, i32, i32) {
    %c0_i32 = arith.constant 0 : i32
    %c0_i32_0 = arith.constant 0 : i32
    return %arg0, %arg1, %c0_i32 : i32, i32, i32
  }
  func.func @transform_1(%arg0: i32, %arg1: i32) -> (i32, i32) {
    %c0_i32 = arith.constant 0 : i32
    %c0_i32_0 = arith.constant 0 : i32
    %c0_i32_1 = arith.constant 0 : i32
    return %c0_i32, %c0_i32_0 : i32, i32
  }
  func.func @transform_2(%arg0: i32, %arg1: i32) -> (i32, i32) {
    %c0_i32 = arith.constant 0 : i32
    %c0_i32_0 = arith.constant 0 : i32
    %c0_i32_1 = arith.constant 0 : i32
    return %c0_i32, %c0_i32_0 : i32, i32
  }
  func.func @transform_3(%arg0: i32, %arg1: i32) -> (i32, i32) {
    %c0_i32 = arith.constant 0 : i32
    %c0_i32_0 = arith.constant 0 : i32
    %c0_i32_1 = arith.constant 0 : i32
    return %c0_i32, %c0_i32_0 : i32, i32
  }
  func.func @transform_4(%arg0: i32, %arg1: i32) -> (i32, i32) {
    %c0_i32 = arith.constant 0 : i32
    %c0_i32_0 = arith.constant 0 : i32
    %c0_i32_1 = arith.constant 0 : i32
    return %c0_i32, %c0_i32_0 : i32, i32
  }
  func.func @transform_5(%arg0: i32, %arg1: i32) -> (i32, i32) {
    %c0_i32 = arith.constant 0 : i32
    %c0_i32_0 = arith.constant 0 : i32
    %c0_i32_1 = arith.constant 0 : i32
    return %c0_i32, %c0_i32_0 : i32, i32
  }
  func.func @transform_6(%arg0: i32, %arg1: i32) -> (i32, i32) {
    %c0_i32 = arith.constant 0 : i32
    %c0_i32_0 = arith.constant 0 : i32
    %c0_i32_1 = arith.constant 0 : i32
    return %c0_i32, %c0_i32_0 : i32, i32
  }
  func.func @transform_7(%arg0: i32, %arg1: i32) -> (i32, i32, i32) {
    %c0_i32 = arith.constant 0 : i32
    %c0_i32_0 = arith.constant 0 : i32
    %c0_i32_1 = arith.constant 0 : i32
    return %arg0, %c0_i32, %c0_i32_0 : i32, i32, i32
  }
}

module attributes {stable_mosaic.version = 11 : i64} {
  func.func @_feat_conv_kernel(%arg0: i32, %arg1: i32, %arg2: memref<1x16x8xbf16, #tpu.memory_space<vmem>>, %arg3: memref<1x8x8xf32, #tpu.memory_space<vmem>>, %arg4: memref<8x64xbf16, #tpu.memory_space<vmem>>, %arg5: memref<1x64xf32, #tpu.memory_space<vmem>>, %arg6: memref<64x128xbf16, #tpu.memory_space<vmem>>, %arg7: memref<1x128xf32, #tpu.memory_space<vmem>>, %arg8: memref<128x1024xbf16, #tpu.memory_space<vmem>>, %arg9: memref<1x1024xf32, #tpu.memory_space<vmem>>, %arg10: memref<1x16x64xbf16, #tpu.memory_space<vmem>>, %arg11: memref<1x1x1024xf32, #tpu.memory_space<vmem>>) attributes {dimension_semantics = [#tpu.dimension_semantics<parallel>, #tpu.dimension_semantics<arbitrary>], iteration_bounds = array<i64: 2, 1>, scalar_prefetch = 0 : i64, scratch_operands = 0 : i64, tpu.core_type = #tpu.core_type<tc>, window_params = [{transform_indices = @transform_0, window_bounds = array<i64: 1, 16, 8>}, {transform_indices = @transform_1, window_bounds = array<i64: 1, 8, 8>}, {pipeline_mode = #tpu.pipeline_mode<synchronous>, transform_indices = @transform_2, window_bounds = array<i64: 8, 64>}, {pipeline_mode = #tpu.pipeline_mode<synchronous>, transform_indices = @transform_3, window_bounds = array<i64: 1, 64>}, {pipeline_mode = #tpu.pipeline_mode<synchronous>, transform_indices = @transform_4, window_bounds = array<i64: 64, 128>}, {pipeline_mode = #tpu.pipeline_mode<synchronous>, transform_indices = @transform_5, window_bounds = array<i64: 1, 128>}, {pipeline_mode = #tpu.pipeline_mode<synchronous>, transform_indices = @transform_6, window_bounds = array<i64: 128, 1024>}, {pipeline_mode = #tpu.pipeline_mode<synchronous>, transform_indices = @transform_7, window_bounds = array<i64: 1, 1024>}, {transform_indices = @transform_8, window_bounds = array<i64: 1, 16, 64>}, {transform_indices = @transform_9, window_bounds = array<i64: 1, 1, 1024>}]} {
    %c0 = arith.constant 0 : index
    %c0_0 = arith.constant 0 : index
    %c0_1 = arith.constant 0 : index
    %0 = vector.load %arg2[%c0, %c0_0, %c0_1] : memref<1x16x8xbf16, #tpu.memory_space<vmem>>, vector<1x16x8xbf16>
    %1 = vector.shape_cast %0 : vector<1x16x8xbf16> to vector<16x8xbf16>
    %2 = arith.extf %1 : vector<16x8xbf16> to vector<16x8xf32>
    %c0_2 = arith.constant 0 : index
    %c0_3 = arith.constant 0 : index
    %c0_4 = arith.constant 0 : index
    %3 = vector.load %arg3[%c0_2, %c0_3, %c0_4] : memref<1x8x8xf32, #tpu.memory_space<vmem>>, vector<1x8x8xf32>
    %4 = vector.shape_cast %3 : vector<1x8x8xf32> to vector<8x8xf32>
    %cst = arith.constant dense<0.000000e+00> : vector<16x8xf32>
    %5 = tpu.matmul %2, %4, %cst {dimension_numbers = #tpu.dot_dimension_numbers<[1], [0], [0], [1], [0, 0, 1, 1], [], []>} : vector<16x8xf32>, vector<8x8xf32>, vector<16x8xf32> -> vector<16x8xf32>
    %6 = arith.truncf %5 : vector<16x8xf32> to vector<16x8xbf16>
    %c0_5 = arith.constant 0 : index
    %c0_6 = arith.constant 0 : index
    %7 = vector.load %arg4[%c0_5, %c0_6] : memref<8x64xbf16, #tpu.memory_space<vmem>>, vector<8x64xbf16>
    %cst_7 = arith.constant dense<0.000000e+00> : vector<16x64xf32>
    %8 = tpu.matmul %6, %7, %cst_7 {dimension_numbers = #tpu.dot_dimension_numbers<[1], [0], [0], [1], [0, 0, 1, 1], [], []>} : vector<16x8xbf16>, vector<8x64xbf16>, vector<16x64xf32> -> vector<16x64xf32>
    %c0_8 = arith.constant 0 : index
    %c0_9 = arith.constant 0 : index
    %9 = vector.load %arg5[%c0_8, %c0_9] : memref<1x64xf32, #tpu.memory_space<vmem>>, vector<1x64xf32>
    %10 = vector.broadcast %9 : vector<1x64xf32> to vector<16x64xf32>
    %11 = arith.addf %8, %10 : vector<16x64xf32>
    %cst_10 = arith.constant 0.000000e+00 : f32
    %12 = vector.broadcast %cst_10 : f32 to vector<16x64xf32>
    %13 = arith.maximumf %11, %12 : vector<16x64xf32>
    %14 = arith.truncf %13 : vector<16x64xf32> to vector<16x64xbf16>
    %c0_11 = arith.constant 0 : index
    %c0_12 = arith.constant 0 : index
    %c0_13 = arith.constant 0 : index
    %15 = vector.load %arg10[%c0_11, %c0_12, %c0_13] : memref<1x16x64xbf16, #tpu.memory_space<vmem>>, vector<1x16x64xbf16>
    %16 = vector.shape_cast %15 : vector<1x16x64xbf16> to vector<16x64xbf16>
    %17 = vector.shape_cast %14 : vector<16x64xbf16> to vector<1x16x64xbf16>
    tpu.vector_store %arg10[%c0_11, %c0_12, %c0_13], %17 {strides = array<i32>} : memref<1x16x64xbf16, #tpu.memory_space<vmem>>, vector<1x16x64xbf16>,
    %18 = arith.truncf %13 : vector<16x64xf32> to vector<16x64xbf16>
    %c0_14 = arith.constant 0 : index
    %c0_15 = arith.constant 0 : index
    %19 = vector.load %arg6[%c0_14, %c0_15] : memref<64x128xbf16, #tpu.memory_space<vmem>>, vector<64x128xbf16>
    %cst_16 = arith.constant dense<0.000000e+00> : vector<16x128xf32>
    %20 = tpu.matmul %18, %19, %cst_16 {dimension_numbers = #tpu.dot_dimension_numbers<[1], [0], [0], [1], [0, 0, 1, 1], [], []>} : vector<16x64xbf16>, vector<64x128xbf16>, vector<16x128xf32> -> vector<16x128xf32>
    %c0_17 = arith.constant 0 : index
    %c0_18 = arith.constant 0 : index
    %21 = vector.load %arg7[%c0_17, %c0_18] : memref<1x128xf32, #tpu.memory_space<vmem>>, vector<1x128xf32>
    %22 = vector.broadcast %21 : vector<1x128xf32> to vector<16x128xf32>
    %23 = arith.addf %20, %22 : vector<16x128xf32>
    %cst_19 = arith.constant 0.000000e+00 : f32
    %24 = vector.broadcast %cst_19 : f32 to vector<16x128xf32>
    %25 = arith.maximumf %23, %24 : vector<16x128xf32>
    %26 = arith.truncf %25 : vector<16x128xf32> to vector<16x128xbf16>
    %c0_20 = arith.constant 0 : index
    %c0_21 = arith.constant 0 : index
    %27 = vector.load %arg8[%c0_20, %c0_21] : memref<128x1024xbf16, #tpu.memory_space<vmem>>, vector<128x1024xbf16>
    %cst_22 = arith.constant dense<0.000000e+00> : vector<16x1024xf32>
    %28 = tpu.matmul %26, %27, %cst_22 {dimension_numbers = #tpu.dot_dimension_numbers<[1], [0], [0], [1], [0, 0, 1, 1], [], []>} : vector<16x128xbf16>, vector<128x1024xbf16>, vector<16x1024xf32> -> vector<16x1024xf32>
    %c0_23 = arith.constant 0 : index
    %c0_24 = arith.constant 0 : index
    %29 = vector.load %arg9[%c0_23, %c0_24] : memref<1x1024xf32, #tpu.memory_space<vmem>>, vector<1x1024xf32>
    %30 = vector.broadcast %29 : vector<1x1024xf32> to vector<16x1024xf32>
    %31 = arith.addf %28, %30 : vector<16x1024xf32>
    %c16_i32 = arith.constant 16 : i32
    %32 = arith.muli %arg1, %c16_i32 : i32
    %33 = tpu.iota {dimensions = array<i32: 0>} : vector<16x1xi32>
    %34 = vector.broadcast %32 : i32 to vector<16x1xi32>
    %35 = arith.addi %34, %33 : vector<16x1xi32>
    %c16_i32_25 = arith.constant 16 : i32
    %36 = vector.broadcast %c16_i32_25 : i32 to vector<16x1xi32>
    %37 = arith.cmpi slt, %35, %36 : vector<16x1xi32>
    %cst_26 = arith.constant 0xFF800000 : f32
    %38 = vector.shape_cast %37 : vector<16x1xi1> to vector<16x1xi1>
    %39 = vector.broadcast %38 : vector<16x1xi1> to vector<16x1024xi1>
    %40 = vector.broadcast %cst_26 : f32 to vector<16x1024xf32>
    %41 = arith.select %39, %31, %40 : vector<16x1024xi1>, vector<16x1024xf32>
    %cst_27 = arith.constant dense<0xFF800000> : vector<1024xf32>
    %42 = vector.multi_reduction <maximumf>, %41, %cst_27 [0] : vector<16x1024xf32> to vector<1024xf32>
    %43 = vector.shape_cast %42 : vector<1024xf32> to vector<1x1024xf32>
    %c0_i32 = arith.constant 0 : i32
    %44 = arith.cmpi eq, %arg1, %c0_i32 : i32
    %45 = arith.extui %44 : i1 to i32
    %c0_i32_28 = arith.constant 0 : i32
    %46 = arith.cmpi ne, %45, %c0_i32_28 : i32
    scf.if %46 {
      %cst_35 = arith.constant 0xFF800000 : f32
      %53 = vector.broadcast %cst_35 : f32 to vector<1x1024xf32>
      %c0_36 = arith.constant 0 : index
      %c0_37 = arith.constant 0 : index
      %c0_38 = arith.constant 0 : index
      %54 = vector.load %arg11[%c0_36, %c0_37, %c0_38] : memref<1x1x1024xf32, #tpu.memory_space<vmem>>, vector<1x1x1024xf32>
      %55 = vector.shape_cast %54 : vector<1x1x1024xf32> to vector<1x1024xf32>
      %56 = vector.shape_cast %53 : vector<1x1024xf32> to vector<1x1x1024xf32>
      tpu.vector_store %arg11[%c0_36, %c0_37, %c0_38], %56 {strides = array<i32>} : memref<1x1x1024xf32, #tpu.memory_space<vmem>>, vector<1x1x1024xf32>,
    } else {
    }
    %c0_29 = arith.constant 0 : index
    %c0_30 = arith.constant 0 : index
    %c0_31 = arith.constant 0 : index
    %47 = vector.load %arg11[%c0_29, %c0_30, %c0_31] : memref<1x1x1024xf32, #tpu.memory_space<vmem>>, vector<1x1x1024xf32>
    %48 = vector.shape_cast %47 : vector<1x1x1024xf32> to vector<1x1024xf32>
    %49 = arith.maximumf %48, %43 : vector<1x1024xf32>
    %c0_32 = arith.constant 0 : index
    %c0_33 = arith.constant 0 : index
    %c0_34 = arith.constant 0 : index
    %50 = vector.load %arg11[%c0_32, %c0_33, %c0_34] : memref<1x1x1024xf32, #tpu.memory_space<vmem>>, vector<1x1x1024xf32>
    %51 = vector.shape_cast %50 : vector<1x1x1024xf32> to vector<1x1024xf32>
    %52 = vector.shape_cast %49 : vector<1x1024xf32> to vector<1x1x1024xf32>
    tpu.vector_store %arg11[%c0_32, %c0_33, %c0_34], %52 {strides = array<i32>} : memref<1x1x1024xf32, #tpu.memory_space<vmem>>, vector<1x1x1024xf32>,
    return
  }
  func.func @transform_0(%arg0: i32, %arg1: i32) -> (i32, i32, i32) {
    %c0_i32 = arith.constant 0 : i32
    %c0_i32_0 = arith.constant 0 : i32
    return %arg0, %arg1, %c0_i32 : i32, i32, i32
  }
  func.func @transform_1(%arg0: i32, %arg1: i32) -> (i32, i32, i32) {
    %c0_i32 = arith.constant 0 : i32
    %c0_i32_0 = arith.constant 0 : i32
    %c0_i32_1 = arith.constant 0 : i32
    return %arg0, %c0_i32, %c0_i32_0 : i32, i32, i32
  }
  func.func @transform_2(%arg0: i32, %arg1: i32) -> (i32, i32) {
    %c0_i32 = arith.constant 0 : i32
    %c0_i32_0 = arith.constant 0 : i32
    %c0_i32_1 = arith.constant 0 : i32
    return %c0_i32, %c0_i32_0 : i32, i32
  }
  func.func @transform_3(%arg0: i32, %arg1: i32) -> (i32, i32) {
    %c0_i32 = arith.constant 0 : i32
    %c0_i32_0 = arith.constant 0 : i32
    %c0_i32_1 = arith.constant 0 : i32
    return %c0_i32, %c0_i32_0 : i32, i32
  }
  func.func @transform_4(%arg0: i32, %arg1: i32) -> (i32, i32) {
    %c0_i32 = arith.constant 0 : i32
    %c0_i32_0 = arith.constant 0 : i32
    %c0_i32_1 = arith.constant 0 : i32
    return %c0_i32, %c0_i32_0 : i32, i32
  }
  func.func @transform_5(%arg0: i32, %arg1: i32) -> (i32, i32) {
    %c0_i32 = arith.constant 0 : i32
    %c0_i32_0 = arith.constant 0 : i32
    %c0_i32_1 = arith.constant 0 : i32
    return %c0_i32, %c0_i32_0 : i32, i32
  }
  func.func @transform_6(%arg0: i32, %arg1: i32) -> (i32, i32) {
    %c0_i32 = arith.constant 0 : i32
    %c0_i32_0 = arith.constant 0 : i32
    %c0_i32_1 = arith.constant 0 : i32
    return %c0_i32, %c0_i32_0 : i32, i32
  }
  func.func @transform_7(%arg0: i32, %arg1: i32) -> (i32, i32) {
    %c0_i32 = arith.constant 0 : i32
    %c0_i32_0 = arith.constant 0 : i32
    %c0_i32_1 = arith.constant 0 : i32
    return %c0_i32, %c0_i32_0 : i32, i32
  }
  func.func @transform_8(%arg0: i32, %arg1: i32) -> (i32, i32, i32) {
    %c0_i32 = arith.constant 0 : i32
    %c0_i32_0 = arith.constant 0 : i32
    return %arg0, %arg1, %c0_i32 : i32, i32, i32
  }
  func.func @transform_9(%arg0: i32, %arg1: i32) -> (i32, i32, i32) {
    %c0_i32 = arith.constant 0 : i32
    %c0_i32_0 = arith.constant 0 : i32
    %c0_i32_1 = arith.constant 0 : i32
    return %arg0, %c0_i32, %c0_i32_0 : i32, i32, i32
  }
}

module attributes {stable_mosaic.version = 11 : i64} {
  func.func @_head_kernel(%arg0: i32, %arg1: i32, %arg2: memref<1x16x64xbf16, #tpu.memory_space<vmem>>, %arg3: memref<1x1x1024xf32, #tpu.memory_space<vmem>>, %arg4: memref<1024x512xbf16, #tpu.memory_space<vmem>>, %arg5: memref<64x512xbf16, #tpu.memory_space<vmem>>, %arg6: memref<1x512xf32, #tpu.memory_space<vmem>>, %arg7: memref<512x256xbf16, #tpu.memory_space<vmem>>, %arg8: memref<1x256xf32, #tpu.memory_space<vmem>>, %arg9: memref<256x128xbf16, #tpu.memory_space<vmem>>, %arg10: memref<1x128xf32, #tpu.memory_space<vmem>>, %arg11: memref<128x128xbf16, #tpu.memory_space<vmem>>, %arg12: memref<1x128xf32, #tpu.memory_space<vmem>>, %arg13: memref<1x16x128xf32, #tpu.memory_space<vmem>>, %arg14: memref<1x512xf32, #tpu.memory_space<vmem>>) attributes {dimension_semantics = [#tpu.dimension_semantics<parallel>, #tpu.dimension_semantics<arbitrary>], iteration_bounds = array<i64: 2, 1>, scalar_prefetch = 0 : i64, scratch_operands = 1 : i64, tpu.core_type = #tpu.core_type<tc>, window_params = [{transform_indices = @transform_0, window_bounds = array<i64: 1, 16, 64>}, {transform_indices = @transform_1, window_bounds = array<i64: 1, 1, 1024>}, {pipeline_mode = #tpu.pipeline_mode<synchronous>, transform_indices = @transform_2, window_bounds = array<i64: 1024, 512>}, {pipeline_mode = #tpu.pipeline_mode<synchronous>, transform_indices = @transform_3, window_bounds = array<i64: 64, 512>}, {pipeline_mode = #tpu.pipeline_mode<synchronous>, transform_indices = @transform_4, window_bounds = array<i64: 1, 512>}, {pipeline_mode = #tpu.pipeline_mode<synchronous>, transform_indices = @transform_5, window_bounds = array<i64: 512, 256>}, {pipeline_mode = #tpu.pipeline_mode<synchronous>, transform_indices = @transform_6, window_bounds = array<i64: 1, 256>}, {pipeline_mode = #tpu.pipeline_mode<synchronous>, transform_indices = @transform_7, window_bounds = array<i64: 256, 128>}, {pipeline_mode = #tpu.pipeline_mode<synchronous>, transform_indices = @transform_8, window_bounds = array<i64: 1, 128>}, {pipeline_mode = #tpu.pipeline_mode<synchronous>, transform_indices = @transform_9, window_bounds = array<i64: 128, 128>}, {pipeline_mode = #tpu.pipeline_mode<synchronous>, transform_indices = @transform_10, window_bounds = array<i64: 1, 128>}, {transform_indices = @transform_11, window_bounds = array<i64: 1, 16, 128>}]} {
    %c0_i32 = arith.constant 0 : i32
    %0 = arith.cmpi eq, %arg1, %c0_i32 : i32
    %1 = arith.extui %0 : i1 to i32
    %c0_i32_0 = arith.constant 0 : i32
    %2 = arith.cmpi ne, %1, %c0_i32_0 : i32
    scf.if %2 {
      %c0_32 = arith.constant 0 : index
      %c0_33 = arith.constant 0 : index
      %c0_34 = arith.constant 0 : index
      %50 = vector.load %arg3[%c0_32, %c0_33, %c0_34] : memref<1x1x1024xf32, #tpu.memory_space<vmem>>, vector<1x1x1024xf32>
      %51 = vector.shape_cast %50 : vector<1x1x1024xf32> to vector<1x1024xf32>
      %52 = arith.truncf %51 : vector<1x1024xf32> to vector<1x1024xbf16>
      %c0_35 = arith.constant 0 : index
      %c0_36 = arith.constant 0 : index
      %53 = vector.load %arg4[%c0_35, %c0_36] : memref<1024x512xbf16, #tpu.memory_space<vmem>>, vector<1024x512xbf16>
      %cst_37 = arith.constant dense<0.000000e+00> : vector<1x512xf32>
      %54 = tpu.matmul %52, %53, %cst_37 {dimension_numbers = #tpu.dot_dimension_numbers<[1], [0], [0], [1], [0, 0, 1, 1], [], []>} : vector<1x1024xbf16>, vector<1024x512xbf16>, vector<1x512xf32> -> vector<1x512xf32>
      %c0_38 = arith.constant 0 : index
      %c0_39 = arith.constant 0 : index
      %55 = vector.load %arg14[%c0_38, %c0_39] : memref<1x512xf32, #tpu.memory_space<vmem>>, vector<1x512xf32>
      tpu.vector_store %arg14[%c0_38, %c0_39], %54 {strides = array<i32>} : memref<1x512xf32, #tpu.memory_space<vmem>>, vector<1x512xf32>,
    } else {
    }
    %c0 = arith.constant 0 : index
    %c0_1 = arith.constant 0 : index
    %c0_2 = arith.constant 0 : index
    %3 = vector.load %arg2[%c0, %c0_1, %c0_2] : memref<1x16x64xbf16, #tpu.memory_space<vmem>>, vector<1x16x64xbf16>
    %4 = vector.shape_cast %3 : vector<1x16x64xbf16> to vector<16x64xbf16>
    %c0_3 = arith.constant 0 : index
    %c0_4 = arith.constant 0 : index
    %5 = vector.load %arg5[%c0_3, %c0_4] : memref<64x512xbf16, #tpu.memory_space<vmem>>, vector<64x512xbf16>
    %cst = arith.constant dense<0.000000e+00> : vector<16x512xf32>
    %6 = tpu.matmul %4, %5, %cst {dimension_numbers = #tpu.dot_dimension_numbers<[1], [0], [0], [1], [0, 0, 1, 1], [], []>} : vector<16x64xbf16>, vector<64x512xbf16>, vector<16x512xf32> -> vector<16x512xf32>
    %c0_5 = arith.constant 0 : index
    %c0_6 = arith.constant 0 : index
    %7 = vector.load %arg14[%c0_5, %c0_6] : memref<1x512xf32, #tpu.memory_space<vmem>>, vector<1x512xf32>
    %8 = vector.broadcast %7 : vector<1x512xf32> to vector<16x512xf32>
    %9 = arith.addf %6, %8 : vector<16x512xf32>
    %c0_7 = arith.constant 0 : index
    %c0_8 = arith.constant 0 : index
    %10 = vector.load %arg6[%c0_7, %c0_8] : memref<1x512xf32, #tpu.memory_space<vmem>>, vector<1x512xf32>
    %11 = vector.broadcast %10 : vector<1x512xf32> to vector<16x512xf32>
    %12 = arith.addf %9, %11 : vector<16x512xf32>
    %cst_9 = arith.constant 0.000000e+00 : f32
    %13 = vector.broadcast %cst_9 : f32 to vector<16x512xf32>
    %14 = arith.maximumf %12, %13 : vector<16x512xf32>
    %15 = arith.truncf %14 : vector<16x512xf32> to vector<16x512xbf16>
    %c0_10 = arith.constant 0 : index
    %c0_11 = arith.constant 0 : index
    %16 = vector.load %arg7[%c0_10, %c0_11] : memref<512x256xbf16, #tpu.memory_space<vmem>>, vector<512x256xbf16>
    %cst_12 = arith.constant dense<0.000000e+00> : vector<16x256xf32>
    %17 = tpu.matmul %15, %16, %cst_12 {dimension_numbers = #tpu.dot_dimension_numbers<[1], [0], [0], [1], [0, 0, 1, 1], [], []>} : vector<16x512xbf16>, vector<512x256xbf16>, vector<16x256xf32> -> vector<16x256xf32>
    %c0_13 = arith.constant 0 : index
    %c0_14 = arith.constant 0 : index
    %18 = vector.load %arg8[%c0_13, %c0_14] : memref<1x256xf32, #tpu.memory_space<vmem>>, vector<1x256xf32>
    %19 = vector.broadcast %18 : vector<1x256xf32> to vector<16x256xf32>
    %20 = arith.addf %17, %19 : vector<16x256xf32>
    %cst_15 = arith.constant 0.000000e+00 : f32
    %21 = vector.broadcast %cst_15 : f32 to vector<16x256xf32>
    %22 = arith.maximumf %20, %21 : vector<16x256xf32>
    %23 = arith.truncf %22 : vector<16x256xf32> to vector<16x256xbf16>
    %c0_16 = arith.constant 0 : index
    %c0_17 = arith.constant 0 : index
    %24 = vector.load %arg9[%c0_16, %c0_17] : memref<256x128xbf16, #tpu.memory_space<vmem>>, vector<256x128xbf16>
    %cst_18 = arith.constant dense<0.000000e+00> : vector<16x128xf32>
    %25 = tpu.matmul %23, %24, %cst_18 {dimension_numbers = #tpu.dot_dimension_numbers<[1], [0], [0], [1], [0, 0, 1, 1], [], []>} : vector<16x256xbf16>, vector<256x128xbf16>, vector<16x128xf32> -> vector<16x128xf32>
    %c0_19 = arith.constant 0 : index
    %c0_20 = arith.constant 0 : index
    %26 = vector.load %arg10[%c0_19, %c0_20] : memref<1x128xf32, #tpu.memory_space<vmem>>, vector<1x128xf32>
    %27 = vector.broadcast %26 : vector<1x128xf32> to vector<16x128xf32>
    %28 = arith.addf %25, %27 : vector<16x128xf32>
    %cst_21 = arith.constant 0.000000e+00 : f32
    %29 = vector.broadcast %cst_21 : f32 to vector<16x128xf32>
    %30 = arith.maximumf %28, %29 : vector<16x128xf32>
    %31 = arith.truncf %30 : vector<16x128xf32> to vector<16x128xbf16>
    %c0_22 = arith.constant 0 : index
    %c0_23 = arith.constant 0 : index
    %32 = vector.load %arg11[%c0_22, %c0_23] : memref<128x128xbf16, #tpu.memory_space<vmem>>, vector<128x128xbf16>
    %cst_24 = arith.constant dense<0.000000e+00> : vector<16x128xf32>
    %33 = tpu.matmul %31, %32, %cst_24 {dimension_numbers = #tpu.dot_dimension_numbers<[1], [0], [0], [1], [0, 0, 1, 1], [], []>} : vector<16x128xbf16>, vector<128x128xbf16>, vector<16x128xf32> -> vector<16x128xf32>
    %c0_25 = arith.constant 0 : index
    %c0_26 = arith.constant 0 : index
    %34 = vector.load %arg12[%c0_25, %c0_26] : memref<1x128xf32, #tpu.memory_space<vmem>>, vector<1x128xf32>
    %35 = vector.broadcast %34 : vector<1x128xf32> to vector<16x128xf32>
    %36 = arith.addf %33, %35 : vector<16x128xf32>
    %cst_27 = arith.constant dense<0xFF800000> : vector<16xf32>
    %37 = vector.multi_reduction <maximumf>, %36, %cst_27 [1] : vector<16x128xf32> to vector<16xf32>
    %38 = vector.shape_cast %37 : vector<16xf32> to vector<16x1xf32>
    %39 = vector.broadcast %38 : vector<16x1xf32> to vector<16x128xf32>
    %40 = arith.subf %36, %39 : vector<16x128xf32>
    %41 = math.exp %40 : vector<16x128xf32>
    %cst_28 = arith.constant dense<0.000000e+00> : vector<16xf32>
    %42 = vector.multi_reduction <add>, %41, %cst_28 [1] : vector<16x128xf32> to vector<16xf32>
    %43 = vector.shape_cast %42 : vector<16xf32> to vector<16x1xf32>
    %44 = math.log %43 : vector<16x1xf32>
    %45 = vector.broadcast %44 : vector<16x1xf32> to vector<16x128xf32>
    %46 = arith.subf %40, %45 : vector<16x128xf32>
    %c0_29 = arith.constant 0 : index
    %c0_30 = arith.constant 0 : index
    %c0_31 = arith.constant 0 : index
    %47 = vector.load %arg13[%c0_29, %c0_30, %c0_31] : memref<1x16x128xf32, #tpu.memory_space<vmem>>, vector<1x16x128xf32>
    %48 = vector.shape_cast %47 : vector<1x16x128xf32> to vector<16x128xf32>
    %49 = vector.shape_cast %46 : vector<16x128xf32> to vector<1x16x128xf32>
    tpu.vector_store %arg13[%c0_29, %c0_30, %c0_31], %49 {strides = array<i32>} : memref<1x16x128xf32, #tpu.memory_space<vmem>>, vector<1x16x128xf32>,
    return
  }
  func.func @transform_0(%arg0: i32, %arg1: i32) -> (i32, i32, i32) {
    %c0_i32 = arith.constant 0 : i32
    %c0_i32_0 = arith.constant 0 : i32
    return %arg0, %arg1, %c0_i32 : i32, i32, i32
  }
  func.func @transform_1(%arg0: i32, %arg1: i32) -> (i32, i32, i32) {
    %c0_i32 = arith.constant 0 : i32
    %c0_i32_0 = arith.constant 0 : i32
    %c0_i32_1 = arith.constant 0 : i32
    return %arg0, %c0_i32, %c0_i32_0 : i32, i32, i32
  }
  func.func @transform_2(%arg0: i32, %arg1: i32) -> (i32, i32) {
    %c0_i32 = arith.constant 0 : i32
    %c0_i32_0 = arith.constant 0 : i32
    %c0_i32_1 = arith.constant 0 : i32
    return %c0_i32, %c0_i32_0 : i32, i32
  }
  func.func @transform_3(%arg0: i32, %arg1: i32) -> (i32, i32) {
    %c0_i32 = arith.constant 0 : i32
    %c0_i32_0 = arith.constant 0 : i32
    %c0_i32_1 = arith.constant 0 : i32
    return %c0_i32, %c0_i32_0 : i32, i32
  }
  func.func @transform_4(%arg0: i32, %arg1: i32) -> (i32, i32) {
    %c0_i32 = arith.constant 0 : i32
    %c0_i32_0 = arith.constant 0 : i32
    %c0_i32_1 = arith.constant 0 : i32
    return %c0_i32, %c0_i32_0 : i32, i32
  }
  func.func @transform_5(%arg0: i32, %arg1: i32) -> (i32, i32) {
    %c0_i32 = arith.constant 0 : i32
    %c0_i32_0 = arith.constant 0 : i32
    %c0_i32_1 = arith.constant 0 : i32
    return %c0_i32, %c0_i32_0 : i32, i32
  }
  func.func @transform_6(%arg0: i32, %arg1: i32) -> (i32, i32) {
    %c0_i32 = arith.constant 0 : i32
    %c0_i32_0 = arith.constant 0 : i32
    %c0_i32_1 = arith.constant 0 : i32
    return %c0_i32, %c0_i32_0 : i32, i32
  }
  func.func @transform_7(%arg0: i32, %arg1: i32) -> (i32, i32) {
    %c0_i32 = arith.constant 0 : i32
    %c0_i32_0 = arith.constant 0 : i32
    %c0_i32_1 = arith.constant 0 : i32
    return %c0_i32, %c0_i32_0 : i32, i32
  }
  func.func @transform_8(%arg0: i32, %arg1: i32) -> (i32, i32) {
    %c0_i32 = arith.constant 0 : i32
    %c0_i32_0 = arith.constant 0 : i32
    %c0_i32_1 = arith.constant 0 : i32
    return %c0_i32, %c0_i32_0 : i32, i32
  }
  func.func @transform_9(%arg0: i32, %arg1: i32) -> (i32, i32) {
    %c0_i32 = arith.constant 0 : i32
    %c0_i32_0 = arith.constant 0 : i32
    %c0_i32_1 = arith.constant 0 : i32
    return %c0_i32, %c0_i32_0 : i32, i32
  }
  func.func @transform_10(%arg0: i32, %arg1: i32) -> (i32, i32) {
    %c0_i32 = arith.constant 0 : i32
    %c0_i32_0 = arith.constant 0 : i32
    %c0_i32_1 = arith.constant 0 : i32
    return %c0_i32, %c0_i32_0 : i32, i32
  }
  func.func @transform_11(%arg0: i32, %arg1: i32) -> (i32, i32, i32) {
    %c0_i32 = arith.constant 0 : i32
    %c0_i32_0 = arith.constant 0 : i32
    return %arg0, %arg1, %c0_i32 : i32, i32, i32
  }
}

</mosaic_0001>

<llo_original>
// kernel: _lambda_.4
$region0: #{_lambda_.4}
  #allocation0 [shape = 'u32[]', space=smem, size = 0x4, offset = 0x4, fixed_abs, tag = 'smem constant byte address 0x4 - core index']
  #allocation1 [shape = 'u32[144,128]{1,0:T(1,128)}', space=vmem, size = 0x12000, scoped, tag = 'internal scratch']
  %s0 = inlined_call_operand.hbm [shape: bf16[2,16,8], index: 0, kind: input, shape index: {}]
  %s1 = inlined_call_operand.hbm [shape: bf16[8,64], index: 1, kind: input, shape index: {}]
  %s2 = inlined_call_operand.hbm [shape: f32[1,64], index: 2, kind: input, shape index: {}]
  %s3 = inlined_call_operand.hbm [shape: bf16[64,128], index: 3, kind: input, shape index: {}]
  %s4 = inlined_call_operand.hbm [shape: f32[1,128], index: 4, kind: input, shape index: {}]
  %s5 = inlined_call_operand.hbm [shape: bf16[128,1024], index: 5, kind: input, shape index: {}]
  %s6 = inlined_call_operand.hbm [shape: f32[1,1024], index: 6, kind: input, shape index: {}]
  %s7 = inlined_call_operand.hbm [shape: f32[2,1,1024], index: 7, kind: output, shape index: {}]
  %s8 = sld [smem:[#allocation0]]
  $region93: #{_lambda_.4} parent=0
    _
  %s10 = ssub.s32 1, %s8
  %s11 = scalar_select 0, %s10, %s8
  $region1: #{_lambda_.4} parent=0
    #allocation2 [shape = 'u8[8192]{0}', space=vmem, size = 0x2000, scoped, tag = 'input window, operand 0']
    #allocation3 [shape = 's32[2]{0}', space=sflag, size = 0x8, scoped, tag = 'scoped memory for _lambda_.4']
    #allocation4 [shape = 's32[2]{0}', space=sflag, size = 0x8, scoped, tag = 'scoped memory for _lambda_.4']
    #allocation5 [shape = 'u8[2048]{0}', space=vmem, size = 0x800, scoped, tag = 'input window, operand 1, single buffered']
    #allocation6 [shape = 's32[1]{0}', space=sflag, size = 0x4, scoped, tag = 'scoped memory for _lambda_.4']
    #allocation7 [shape = 'u8[512]{0}', space=vmem, size = 0x400, scoped, tag = 'input window, operand 2, single buffered']
    #allocation8 [shape = 'u8[16384]{0}', space=vmem, size = 0x4000, scoped, tag = 'input window, operand 3, single buffered']
    #allocation9 [shape = 's32[1]{0}', space=sflag, size = 0x4, scoped, tag = 'scoped memory for _lambda_.4']
    #allocation10 [shape = 'u8[512]{0}', space=vmem, size = 0x400, scoped, tag = 'input window, operand 4, single buffered']
    #allocation11 [shape = 'u8[262144]{0}', space=vmem, size = 0x40000, scoped, tag = 'input window, operand 5, single buffered']
    #allocation12 [shape = 's32[1]{0}', space=sflag, size = 0x4, scoped, tag = 'scoped memory for _lambda_.4']
    #allocation13 [shape = 'u8[4096]{0}', space=vmem, size = 0x1000, scoped, tag = 'input window, operand 6, single buffered']
    #allocation14 [shape = 'u8[8192]{0}', space=vmem, size = 0x2000, scoped, tag = 'output window, operand 0']
    %12 = vsyncpa [#allocation3], 0
    %s13 = scalar_lea.sflag [#allocation3], 1
    %14 = vsyncpa %s13, 0
    %15 = vsyncpa [#allocation6], 0
    %16 = vsyncpa [#allocation9], 0
    %17 = vsyncpa [#allocation12], 0
    %18 = vsyncpa [#allocation4], 0
    %s19 = scalar_lea.sflag [#allocation4], 1
    %20 = vsyncpa %s19, 0
    loop: start=0, step=1, limit=4
    $region2: #{_lambda_.4} parent=1 // loop_pre_header
      _
    $region3: #{_lambda_.4} parent=1 // loop_header
      %s22 = sphi 0, %s26
      %p23 = scmp.ge.s32.totalorder %s22, 4
      %s29 = sphi 0, %s41
      %s30 = sphi 0, %s37
      %s31 = sphi 0, %s29
      %s32 = sphi 0, %s30
      %s33 = sphi 0, %s31
      %s34 = sphi 0, %s32
      %s46 = sphi 0, %s48
      %s49 = sphi 0, %s46
      %s50 = sphi 0, %s49
      %s66 = sphi 0, %s50
      %s70 = sphi 0, %s70
      %s72 = sphi 0, %s70
      %s73 = sphi 0, %s72
      %s87 = sphi 0, %s73
      %s91 = sphi 0, %s91
      %s93 = sphi 0, %s91
      %s94 = sphi 0, %s93
      %s108 = sphi 0, %s94
      %s112 = sphi 0, %s112
      %s114 = sphi 0, %s112
      %s115 = sphi 0, %s114
      %s129 = sphi 0, %s115
      %s133 = sphi 0, %s133
      %s135 = sphi 0, %s133
      %s136 = sphi 0, %s135
      %s150 = sphi 0, %s136
      %s154 = sphi 0, %s154
      %s156 = sphi 0, %s154
      %s157 = sphi 0, %s156
      %s171 = sphi 0, %s157
      %s175 = sphi 0, %s175
      %s177 = sphi 0, %s175
      %s178 = sphi 0, %s177
      %s192 = sphi 0, %s178
      %s198 = sphi 0, %s200
      %s201 = sphi 0, %s198
      %s202 = sphi 0, %s201
      %s218 = sphi 0, %s202
    $region4: #{_lambda_.4} parent=1 // loop_header_branch
      %25 = sbr.rel (%p23) target = $region8
    $region5: #{_lambda_.4} parent=1 // loop_body
      %s27 = ssub.s32 %s22, 1
      %s28 = ssub.s32 %s22, 2
      %s35 = sadd.s32 1, %s30
      %p36 = scmp.ge.s32.totalorder %s35, 1
      %s37 = scalar_select %p36, 0, %s35
      %s38 = sadd.s32 1, %s29
      %s39 = scalar_select %p36, %s38, %s29
      %p40 = scmp.ge.s32.totalorder %s39, 2
      %s41 = scalar_select %p40, 0, %s39
      %s42 = ssub.s32 %s29, %s41
      %s43 = ssub.s32 %s30, %s37
      %s44 = sor.u32 %s42, %s43
      %p45 = scmp.eq.s32.totalorder %s44, 0
      %s47 = sadd.s32 %s46, 1
      %s48 = scalar_select %p45, %s46, %s47
      %p51 = pneg %p45
      %p52 = scmp.eq.s32.totalorder %s22, 1
      %p53 = por %p51, %p52
      %p54 = scmp.ne.s32.totalorder %s46, %s49
      %p55 = scmp.eq.s32.totalorder %s22, 0
      %p56 = por %p54, %p55
      %p57 = scmp.ne.s32.totalorder %s46, %s49
      %p58 = scmp.eq.s32.totalorder %s27, 1
      %p59 = por %p57, %p58
      %p60 = scmp.ne.s32.totalorder %s49, %s50
      %p61 = scmp.eq.s32.totalorder %s27, 0
      %p62 = por %p60, %p61
      %p63 = scmp.ne.s32.totalorder %s49, %s50
      %p64 = scmp.eq.s32.totalorder %s28, 1
      %p65 = por %p63, %p64
      %p67 = scmp.ne.s32.totalorder %s50, %s66
      %p68 = scmp.eq.s32.totalorder %s28, 0
      %p69 = por %p67, %p68
      %s71 = sadd.s32 %s70, 1
      %p74 = scmp.eq.s32.totalorder %s22, 1
      %p75 = scmp.ne.s32.totalorder %s70, %s72
      %p76 = scmp.eq.s32.totalorder %s22, 0
      %p77 = por %p75, %p76
      %p78 = scmp.ne.s32.totalorder %s70, %s72
      %p79 = scmp.eq.s32.totalorder %s27, 1
      %p80 = por %p78, %p79
      %p81 = scmp.ne.s32.totalorder %s72, %s73
      %p82 = scmp.eq.s32.totalorder %s27, 0
      %p83 = por %p81, %p82
      %p84 = scmp.ne.s32.totalorder %s72, %s73
      %p85 = scmp.eq.s32.totalorder %s28, 1
      %p86 = por %p84, %p85
      %p88 = scmp.ne.s32.totalorder %s73, %s87
      %p89 = scmp.eq.s32.totalorder %s28, 0
      %p90 = por %p88, %p89
      %s92 = sadd.s32 %s91, 1
      %p95 = scmp.eq.s32.totalorder %s22, 1
      %p96 = scmp.ne.s32.totalorder %s91, %s93
      %p97 = scmp.eq.s32.totalorder %s22, 0
      %p98 = por %p96, %p97
      %p99 = scmp.ne.s32.totalorder %s91, %s93
      %p100 = scmp.eq.s32.totalorder %s27, 1
      %p101 = por %p99, %p100
      %p102 = scmp.ne.s32.totalorder %s93, %s94
      %p103 = scmp.eq.s32.totalorder %s27, 0
      %p104 = por %p102, %p103
      %p105 = scmp.ne.s32.totalorder %s93, %s94
      %p106 = scmp.eq.s32.totalorder %s28, 1
      %p107 = por %p105, %p106
      %p109 = scmp.ne.s32.totalorder %s94, %s108
      %p110 = scmp.eq.s32.totalorder %s28, 0
      %p111 = por %p109, %p110
      %s113 = sadd.s32 %s112, 1
      %p116 = scmp.eq.s32.totalorder %s22, 1
      %p117 = scmp.ne.s32.totalorder %s112, %s114
      %p118 = scmp.eq.s32.totalorder %s22, 0
      %p119 = por %p117, %p118
      %p120 = scmp.ne.s32.totalorder %s112, %s114
      %p121 = scmp.eq.s32.totalorder %s27, 1
      %p122 = por %p120, %p121
      %p123 = scmp.ne.s32.totalorder %s114, %s115
      %p124 = scmp.eq.s32.totalorder %s27, 0
      %p125 = por %p123, %p124
      %p126 = scmp.ne.s32.totalorder %s114, %s115
      %p127 = scmp.eq.s32.totalorder %s28, 1
      %p128 = por %p126, %p127
      %p130 = scmp.ne.s32.totalorder %s115, %s129
      %p131 = scmp.eq.s32.totalorder %s28, 0
      %p132 = por %p130, %p131
      %s134 = sadd.s32 %s133, 1
      %p137 = scmp.eq.s32.totalorder %s22, 1
      %p138 = scmp.ne.s32.totalorder %s133, %s135
      %p139 = scmp.eq.s32.totalorder %s22, 0
      %p140 = por %p138, %p139
      %p141 = scmp.ne.s32.totalorder %s133, %s135
      %p142 = scmp.eq.s32.totalorder %s27, 1
      %p143 = por %p141, %p142
      %p144 = scmp.ne.s32.totalorder %s135, %s136
      %p145 = scmp.eq.s32.totalorder %s27, 0
      %p146 = por %p144, %p145
      %p147 = scmp.ne.s32.totalorder %s135, %s136
      %p148 = scmp.eq.s32.totalorder %s28, 1
      %p149 = por %p147, %p148
      %p151 = scmp.ne.s32.totalorder %s136, %s150
      %p152 = scmp.eq.s32.totalorder %s28, 0
      %p153 = por %p151, %p152
      %s155 = sadd.s32 %s154, 1
      %p158 = scmp.eq.s32.totalorder %s22, 1
      %p159 = scmp.ne.s32.totalorder %s154, %s156
      %p160 = scmp.eq.s32.totalorder %s22, 0
      %p161 = por %p159, %p160
      %p162 = scmp.ne.s32.totalorder %s154, %s156
      %p163 = scmp.eq.s32.totalorder %s27, 1
      %p164 = por %p162, %p163
      %p165 = scmp.ne.s32.totalorder %s156, %s157
      %p166 = scmp.eq.s32.totalorder %s27, 0
      %p167 = por %p165, %p166
      %p168 = scmp.ne.s32.totalorder %s156, %s157
      %p169 = scmp.eq.s32.totalorder %s28, 1
      %p170 = por %p168, %p169
      %p172 = scmp.ne.s32.totalorder %s157, %s171
      %p173 = scmp.eq.s32.totalorder %s28, 0
      %p174 = por %p172, %p173
      %s176 = sadd.s32 %s175, 1
      %p179 = scmp.eq.s32.totalorder %s22, 1
      %p180 = scmp.ne.s32.totalorder %s175, %s177
      %p181 = scmp.eq.s32.totalorder %s22, 0
      %p182 = por %p180, %p181
      %p183 = scmp.ne.s32.totalorder %s175, %s177
      %p184 = scmp.eq.s32.totalorder %s27, 1
      %p185 = por %p183, %p184
      %p186 = scmp.ne.s32.totalorder %s177, %s178
      %p187 = scmp.eq.s32.totalorder %s27, 0
      %p188 = por %p186, %p187
      %p189 = scmp.ne.s32.totalorder %s177, %s178
      %p190 = scmp.eq.s32.totalorder %s28, 1
      %p191 = por %p189, %p190
      %p193 = scmp.ne.s32.totalorder %s178, %s192
      %p194 = scmp.eq.s32.totalorder %s28, 0
      %p195 = por %p193, %p194
      %s196 = ssub.s32 %s29, %s41
      %p197 = scmp.eq.s32.totalorder %s196, 0
      %s199 = sadd.s32 %s198, 1
      %s200 = scalar_select %p197, %s198, %s199
      %p203 = pneg %p197
      %p204 = scmp.eq.s32.totalorder %s22, 1
      %p205 = por %p203, %p204
      %p206 = scmp.ne.s32.totalorder %s198, %s201
      %p207 = scmp.eq.s32.totalorder %s22, 0
      %p208 = por %p206, %p207
      %p209 = scmp.ne.s32.totalorder %s198, %s201
      %p210 = scmp.eq.s32.totalorder %s27, 1
      %p211 = por %p209, %p210
      %p212 = scmp.ne.s32.totalorder %s201, %s202
      %p213 = scmp.eq.s32.totalorder %s27, 0
      %p214 = por %p212, %p213
      %p215 = scmp.ne.s32.totalorder %s201, %s202
      %p216 = scmp.eq.s32.totalorder %s28, 1
      %p217 = por %p215, %p216
      %p219 = scmp.ne.s32.totalorder %s202, %s218
      %p220 = scmp.eq.s32.totalorder %s28, 0
      %p221 = por %p219, %p220
      %p222 = scmp.le.s32.totalorder 1, %s22
      %p223 = scmp.lt.s32.totalorder %s22, 3
      %p224 = pnand %p222, %p223
      %p225 = pneg %p224
      // Predicated region
      $region9: #{_lambda_.4} parent=5 // pred_check
        _
      $region10: #{_lambda_.4} parent=5 // pred_check_branch
        %227 = sbr.rel (%p224) target = $region12
      $region11: #{_lambda_.4} parent=5 // pred_region
        %s228 = ssub.s32 %s22, 1
        // Predicated region
        $region13: #{_lambda_.4} parent=11 // pred_check
          %p229 = pneg %p83
        $region14: #{_lambda_.4} parent=11 // pred_check_branch
          %231 = sbr.rel (%p229) target = $region16
        $region15: #{_lambda_.4} parent=11 // pred_region
          %s233 = ssub.s32 64, 64
          %234 = vsyncadd [#allocation6], %s233
          %s236 = sshll.u32 [#allocation5], 4
          %s237 = int_to_ptr.vmem [resolvable:$true] %s236
          %239 = dma.hbm_to_vmem [thread:$0]  %s1, 64, %s237, [#allocation6]
        $region16: #{_lambda_.4} parent=11 // pred_fallthru
          _
        // Predicated region
        $region17: #{_lambda_.4} parent=11 // pred_check
          %p240 = pneg %p104
        $region18: #{_lambda_.4} parent=11 // pred_check_branch
          %242 = sbr.rel (%p240) target = $region20
        $region19: #{_lambda_.4} parent=11 // pred_region
          %s244 = ssub.s32 16, 16
          %245 = vsyncadd [#allocation6], %s244
          %s247 = sshll.u32 [#allocation7], 4
          %s248 = int_to_ptr.vmem [resolvable:$true] %s247
          %250 = dma.hbm_to_vmem [thread:$0]  %s2, 16, %s248, [#allocation6]
        $region20: #{_lambda_.4} parent=11 // pred_fallthru
          _
        // Predicated region
        $region21: #{_lambda_.4} parent=11 // pred_check
          %p251 = pneg %p125
        $region22: #{_lambda_.4} parent=11 // pred_check_branch
          %253 = sbr.rel (%p251) target = $region24
        $region23: #{_lambda_.4} parent=11 // pred_region
          %s255 = ssub.s32 512, 512
          %256 = vsyncadd [#allocation9], %s255
          %s257 = sshll.u32 [#allocation8], 4
          %s258 = int_to_ptr.vmem [resolvable:$true] %s257
          %263 = dma.hbm_to_vmem [thread:$0]  %s3, 512, %s258, [#allocation9], 64, 64, 4
        $region24: #{_lambda_.4} parent=11 // pred_fallthru
          _
        // Predicated region
        $region25: #{_lambda_.4} parent=11 // pred_check
          %p264 = pneg %p146
        $region26: #{_lambda_.4} parent=11 // pred_check_branch
          %266 = sbr.rel (%p264) target = $region28
        $region27: #{_lambda_.4} parent=11 // pred_region
          %s268 = ssub.s32 16, 16
          %269 = vsyncadd [#allocation9], %s268
          %s271 = sshll.u32 [#allocation10], 4
          %s272 = int_to_ptr.vmem [resolvable:$true] %s271
          %274 = dma.hbm_to_vmem [thread:$0]  %s4, 16, %s272, [#allocation9]
        $region28: #{_lambda_.4} parent=11 // pred_fallthru
          _
        // Predicated region
        $region29: #{_lambda_.4} parent=11 // pred_check
          %p275 = pneg %p167
        $region30: #{_lambda_.4} parent=11 // pred_check_branch
          %277 = sbr.rel (%p275) target = $region32
        $region31: #{_lambda_.4} parent=11 // pred_region
          %s279 = ssub.s32 8192, 8192
          %280 = vsyncadd [#allocation12], %s279
          %s281 = sshll.u32 [#allocation11], 4
          %s282 = int_to_ptr.vmem [resolvable:$true] %s281
          %287 = dma.hbm_to_vmem [thread:$0]  %s5, 8192, %s282, [#allocation12], 512, 512, 32
        $region32: #{_lambda_.4} parent=11 // pred_fallthru
          _
        // Predicated region
        $region33: #{_lambda_.4} parent=11 // pred_check
          %p288 = pneg %p188
        $region34: #{_lambda_.4} parent=11 // pred_check_branch
          %290 = sbr.rel (%p288) target = $region36
        $region35: #{_lambda_.4} parent=11 // pred_region
          %s292 = ssub.s32 128, 128
          %293 = vsyncadd [#allocation12], %s292
          %s295 = sshll.u32 [#allocation13], 4
          %s296 = int_to_ptr.vmem [resolvable:$true] %s295
          %298 = dma.hbm_to_vmem [thread:$0]  %s6, 128, %s296, [#allocation12]
        $region36: #{_lambda_.4} parent=11 // pred_fallthru
          _
      $region12: #{_lambda_.4} parent=5 // pred_fallthru
        _
      %p299 = scmp.lt.s32.totalorder %s22, 2
      // Predicated region
      $region37: #{_lambda_.4} parent=5 // pred_check
        %p300 = pneg %p299
      $region38: #{_lambda_.4} parent=5 // pred_check_branch
        %302 = sbr.rel (%p300) target = $region40
      $region39: #{_lambda_.4} parent=5 // pred_region
        // Predicated region
        $region41: #{_lambda_.4} parent=39 // pred_check
          %p303 = pneg %p56
        $region42: #{_lambda_.4} parent=39 // pred_check_branch
          %305 = sbr.rel (%p303) target = $region44
        $region43: #{_lambda_.4} parent=39 // pred_region
          %s306 = sand.u32 %s46, 1
          %s307 = scalar_lea.sflag [#allocation3], %s306
          %s308 = sand.u32 %s46, 1
          %s309 = smul.addr %s308, 8
          %s310 = scalar_lea.vmem [#allocation2], %s309
          %s311 = smul.u32 2, %s30
          %s313 = ssub.s32 128, 128
          %314 = vsyncadd %s307, %s313
          %s315 = smul.addr %s29, 2
          %s316 = sadd.s32 %s311, %s315
          %s317 = smul.addr %s316, 64
          %s318 = scalar_lea.hbm %s0, %s317
          %s319 = sshll.u32 %s310, 4
          %s320 = int_to_ptr.vmem [resolvable:$true] %s319
          %325 = dma.hbm_to_vmem [thread:$0]  %s318, 128, %s320, %s307, 64, 64, 4
        $region44: #{_lambda_.4} parent=39 // pred_fallthru
          _
      $region40: #{_lambda_.4} parent=5 // pred_fallthru
        _
      %p326 = scmp.le.s32.totalorder 1, %s22
      %p327 = scmp.lt.s32.totalorder %s22, 3
      %p328 = pnand %p326, %p327
      %p329 = pneg %p328
      // Predicated region
      $region45: #{_lambda_.4} parent=5 // pred_check
        _
      $region46: #{_lambda_.4} parent=5 // pred_check_branch
        %331 = sbr.rel (%p328) target = $region48
      $region47: #{_lambda_.4} parent=5 // pred_region
        %s332 = ssub.s32 %s22, 1
        %s333 = sand.u32 %s49, 1
        %s334 = scalar_lea.sflag [#allocation3], %s333
        %s335 = sand.u32 %s49, 1
        %s336 = smul.addr %s335, 8
        %s337 = scalar_lea.vmem [#allocation2], %s336
        // Predicated region
        $region49: #{_lambda_.4} parent=47 // pred_check
          %p338 = pneg %p62
        $region50: #{_lambda_.4} parent=47 // pred_check_branch
          %340 = sbr.rel (%p338) target = $region52
        $region51: #{_lambda_.4} parent=47 // pred_region
          %341 = dma.done %s334, 128
        $region52: #{_lambda_.4} parent=47 // pred_fallthru
          _
        // Predicated region
        $region53: #{_lambda_.4} parent=47 // pred_check
          %p342 = pneg %p83
        $region54: #{_lambda_.4} parent=47 // pred_check_branch
          %344 = sbr.rel (%p342) target = $region56
        $region55: #{_lambda_.4} parent=47 // pred_region
          %345 = dma.done [#allocation6], 64
        $region56: #{_lambda_.4} parent=47 // pred_fallthru
          _
        // Predicated region
        $region57: #{_lambda_.4} parent=47 // pred_check
          %p346 = pneg %p104
        $region58: #{_lambda_.4} parent=47 // pred_check_branch
          %348 = sbr.rel (%p346) target = $region60
        $region59: #{_lambda_.4} parent=47 // pred_region
          %349 = dma.done [#allocation6], 16
        $region60: #{_lambda_.4} parent=47 // pred_fallthru
          _
        // Predicated region
        $region61: #{_lambda_.4} parent=47 // pred_check
          %p350 = pneg %p125
        $region62: #{_lambda_.4} parent=47 // pred_check_branch
          %352 = sbr.rel (%p350) target = $region64
        $region63: #{_lambda_.4} parent=47 // pred_region
          %353 = dma.done [#allocation9], 512
        $region64: #{_lambda_.4} parent=47 // pred_fallthru
          _
        // Predicated region
        $region65: #{_lambda_.4} parent=47 // pred_check
          %p354 = pneg %p146
        $region66: #{_lambda_.4} parent=47 // pred_check_branch
          %356 = sbr.rel (%p354) target = $region68
        $region67: #{_lambda_.4} parent=47 // pred_region
          %357 = dma.done [#allocation9], 16
        $region68: #{_lambda_.4} parent=47 // pred_fallthru
          _
        // Predicated region
        $region69: #{_lambda_.4} parent=47 // pred_check
          %p358 = pneg %p167
        $region70: #{_lambda_.4} parent=47 // pred_check_branch
          %360 = sbr.rel (%p358) target = $region72
        $region71: #{_lambda_.4} parent=47 // pred_region
          %361 = dma.done [#allocation12], 8192
        $region72: #{_lambda_.4} parent=47 // pred_fallthru
          _
        // Predicated region
        $region73: #{_lambda_.4} parent=47 // pred_check
          %p362 = pneg %p188
        $region74: #{_lambda_.4} parent=47 // pred_check_branch
          %364 = sbr.rel (%p362) target = $region76
        $region75: #{_lambda_.4} parent=47 // pred_region
          %365 = dma.done [#allocation12], 128
        $region76: #{_lambda_.4} parent=47 // pred_fallthru
          _
        %s366 = sand.u32 %s49, 1
        %s367 = scalar_lea.sflag [#allocation3], %s366
        %s368 = sand.u32 %s49, 1
        %s369 = smul.addr %s368, 8
        %s370 = scalar_lea.vmem [#allocation2], %s369
        %p371 = pneg %p62
        %p372 = pneg %p59
        %p373 = pneg %p83
        %p374 = pneg %p80
        %p375 = pneg %p104
        %p376 = pneg %p101
        %p377 = pneg %p125
        %p378 = pneg %p122
        %p379 = pneg %p146
        %p380 = pneg %p143
        %p381 = pneg %p167
        %p382 = pneg %p164
        %p383 = pneg %p188
        %p384 = pneg %p185
        %p385 = pneg %p214
        %p386 = pneg %p211
        %s387 = sand.u32 %s201, 1
        %s388 = scalar_lea.sflag [#allocation4], %s387
        %s389 = sand.u32 %s201, 1
        %s390 = smul.addr %s389, 8
        %s391 = scalar_lea.vmem [#allocation14], %s390
        %s392 = smul.u32 2, %s32
        %v394 = vld [vmem:[%s337] sm:$0xf]
        %v395 = vld [vmem:[%s337 + $0x4] sm:$0xf]
        %v396 = vld [vmem:[#allocation5] sm:$0xf]
        %v397 = vld [vmem:[#allocation7] sm:$0x1]
        %v399 = vlaneseq
        %v400 = vshrl.u32 %v399, 7
        %v401 = vsub.s32 0, %v400
        %v402 = vrot.slane %v397, %v401
        %v406 = vunpack.c.l.b16 %v394
        %v407 = vunpack.c.l.b16 %v395
        %v408 = vpack.c.b16 %v407, %v406
        %vm409 = vcmask 64512
        %v411 = vsel %vm409, %v408, 0
        %vm413 = vcmask 1043456
        %v415 = vsel %vm413, %v396, 0
        %417 = vmatprep.subr.bf16.mxu0 0
        %418 = vmatpush1.bf16.msra.mxu0 %v415
        %419 = vmatprep.subr.bf16.mxu0 0
        %420 = vmatpush1.bf16.msra.mxu0 0
        %421 = vmatprep.subr.bf16.mxu0 0
        %422 = vmatpush1.bf16.msra.mxu0 0
        %423 = vmatprep.subr.bf16.mxu0 0
        %424 = vmatpush1.bf16.msra.mxu0 0
        %425 = vmatprep.subr.bf16.mxu0 0
        %426 = vmatpush1.bf16.msra.mxu0 0
        %427 = vmatprep.subr.bf16.mxu0 0
        %428 = vmatpush1.bf16.msra.mxu0 0
        %429 = vmatprep.subr.bf16.mxu0 0
        %430 = vmatpush1.bf16.msra.mxu0 0
        %431 = vmatprep.subr.bf16.mxu0 0
        %432 = vmatpush1.bf16.msra.mxu0 0
        %433 = vmatprep.subr.bf16.mxu0 0
        %434 = vmatpush1.bf16.msra.mxu0 0
        %435 = vmatprep.subr.bf16.mxu0 0
        %436 = vmatpush1.bf16.msra.mxu0 0
        %437 = vmatprep.subr.bf16.mxu0 0
        %438 = vmatpush1.bf16.msra.mxu0 0
        %439 = vmatprep.subr.bf16.mxu0 0
        %440 = vmatpush1.bf16.msra.mxu0 0
        %441 = vmatprep.subr.bf16.mxu0 0
        %442 = vmatpush1.bf16.msra.mxu0 0
        %443 = vmatprep.subr.bf16.mxu0 0
        %444 = vmatpush1.bf16.msra.mxu0 0
        %445 = vmatprep.subr.bf16.mxu0 0
        %446 = vmatpush1.bf16.msra.mxu0 0
        %447 = vmatprep.subr.bf16.mxu0 0
        %448 = vmatpush1.bf16.msra.mxu0 0
        %449 = vmatprep.mubr.bf16.mxu0 0
        %450 = vmatmul.mubr.bf16.gmra.mrb[0].mxu0 %v411
        %v451 = vpop.f32.mrb[0].mxu0
        %v452 = vadd.f32 %v402, %v451
        %v453 = vpop.f32.mrb[0].mxu0
        %v454 = vpop.f32.mrb[0].mxu0
        %v455 = vadd.f32 %v402, %v454
        %v456 = vpop.f32.mrb[0].mxu0
        %457 = vdwg.mxu0
        %v458 = vmax.f32 %v452, 0.0
        %v459 = vmax.f32 %v455, 0.0
        %v460 = vpack.c.bf16 %v459, %v458
        %v461 = vld [vmem:[#allocation8] sm:$0xf]
        %v462 = vld [vmem:[#allocation8 + $0x4] sm:$0xf]
        %v463 = vld [vmem:[#allocation8 + $0x8] sm:$0xf]
        %v464 = vld [vmem:[#allocation8 + $0xc] sm:$0xf]
        %v465 = vld [vmem:[#allocation8 + $0x10] sm:$0xf]
        %v466 = vld [vmem:[#allocation8 + $0x14] sm:$0xf]
        %v467 = vld [vmem:[#allocation8 + $0x18] sm:$0xf]
        %v468 = vld [vmem:[#allocation8 + $0x1c] sm:$0xf]
        %v469 = vld [vmem:[#allocation10] sm:$0x1]
        %v471 = vlaneseq
        %v472 = vshrl.u32 %v471, 7
        %v473 = vsub.s32 0, %v472
        %v474 = vrot.slane %v469, %v473
        %v484 = vunpack.c.l.b16 %v461
        %v485 = vunpack.c.l.b16 %v462
        %v486 = vunpack.c.l.b16 %v463
        %v487 = vunpack.c.l.b16 %v464
        %v488 = vunpack.c.l.b16 %v465
        %v489 = vunpack.c.l.b16 %v466
        %v490 = vunpack.c.l.b16 %v467
        %v491 = vunpack.c.l.b16 %v468
        %v492 = vpack.c.b16 %v485, %v484
        %v493 = vpack.c.b16 %v487, %v486
        %v494 = vpack.c.b16 %v489, %v488
        %v495 = vpack.c.b16 %v491, %v490
        %vm500 = vcmask 523264
        %v502 = vsel %vm500, %v460, 0
        %504 = vmatprep.subr.bf16.mxu0 0
        %505 = vmatpush1.bf16.msra.mxu0 %v492
        %506 = vmatprep.subr.bf16.mxu0 0
        %507 = vmatpush1.bf16.msra.mxu0 %v493
        %508 = vmatprep.subr.bf16.mxu0 0
        %509 = vmatpush1.bf16.msra.mxu0 %v494
        %510 = vmatprep.subr.bf16.mxu0 0
        %511 = vmatpush1.bf16.msra.mxu0 %v495
        %512 = vmatprep.subr.bf16.mxu0 0
        %513 = vmatpush1.bf16.msra.mxu0 0
        %514 = vmatprep.subr.bf16.mxu0 0
        %515 = vmatpush1.bf16.msra.mxu0 0
        %516 = vmatprep.subr.bf16.mxu0 0
        %517 = vmatpush1.bf16.msra.mxu0 0
        %518 = vmatprep.subr.bf16.mxu0 0
        %519 = vmatpush1.bf16.msra.mxu0 0
        %520 = vmatprep.subr.bf16.mxu0 0
        %521 = vmatpush1.bf16.msra.mxu0 0
        %522 = vmatprep.subr.bf16.mxu0 0
        %523 = vmatpush1.bf16.msra.mxu0 0
        %524 = vmatprep.subr.bf16.mxu0 0
        %525 = vmatpush1.bf16.msra.mxu0 0
        %526 = vmatprep.subr.bf16.mxu0 0
        %527 = vmatpush1.bf16.msra.mxu0 0
        %528 = vmatprep.subr.bf16.mxu0 0
        %529 = vmatpush1.bf16.msra.mxu0 0
        %530 = vmatprep.subr.bf16.mxu0 0
        %531 = vmatpush1.bf16.msra.mxu0 0
        %532 = vmatprep.subr.bf16.mxu0 0
        %533 = vmatpush1.bf16.msra.mxu0 0
        %534 = vmatprep.subr.bf16.mxu0 0
        %535 = vmatpush1.bf16.msra.mxu0 0
        %536 = vmatprep.mubr.bf16.mxu0 0
        %537 = vmatmul.mubr.bf16.gmra.mrb[0].mxu0 %v502
        %v538 = vpop.f32.mrb[0].mxu0
        %v539 = vadd.f32 %v474, %v538
        %v540 = vpop.f32.mrb[0].mxu0
        %v541 = vpop.f32.mrb[0].mxu0
        %v542 = vadd.f32 %v474, %v541
        %v543 = vpop.f32.mrb[0].mxu0
        %544 = vdwg.mxu0
        %v545 = vmax.f32 %v539, 0.0
        %v546 = vmax.f32 %v542, 0.0
        %v547 = vpack.c.bf16 %v546, %v545
        %v548 = vld [vmem:[#allocation11] sm:$0xff]
        %v549 = vld [vmem:[#allocation11 + $0x8] sm:$0xff]
        %v550 = vld [vmem:[#allocation11 + $0x10] sm:$0xff]
        %v551 = vld [vmem:[#allocation11 + $0x18] sm:$0xff]
        %v552 = vld [vmem:[#allocation11 + $0x20] sm:$0xff]
        %v553 = vld [vmem:[#allocation11 + $0x28] sm:$0xff]
        %v554 = vld [vmem:[#allocation11 + $0x30] sm:$0xff]
        %v555 = vld [vmem:[#allocation11 + $0x38] sm:$0xff]
        %v556 = vld [vmem:[#allocation11 + $0x40] sm:$0xff]
        %v557 = vld [vmem:[#allocation11 + $0x48] sm:$0xff]
        %v558 = vld [vmem:[#allocation11 + $0x50] sm:$0xff]
        %v559 = vld [vmem:[#allocation11 + $0x58] sm:$0xff]
        %v560 = vld [vmem:[#allocation11 + $0x60] sm:$0xff]
        %v561 = vld [vmem:[#allocation11 + $0x68] sm:$0xff]
        %v562 = vld [vmem:[#allocation11 + $0x70] sm:$0xff]
        %v563 = vld [vmem:[#allocation11 + $0x78] sm:$0xff]
        %v564 = vld [vmem:[#allocation11 + $0x80] sm:$0xff]
        %v565 = vld [vmem:[#allocation11 + $0x88] sm:$0xff]
        %v566 = vld [vmem:[#allocation11 + $0x90] sm:$0xff]
        %v567 = vld [vmem:[#allocation11 + $0x98] sm:$0xff]
        %v568 = vld [vmem:[#allocation11 + $0xa0] sm:$0xff]
        %v569 = vld [vmem:[#allocation11 + $0xa8] sm:$0xff]
        %v570 = vld [vmem:[#allocation11 + $0xb0] sm:$0xff]
        %v571 = vld [vmem:[#allocation11 + $0xb8] sm:$0xff]
        %v572 = vld [vmem:[#allocation11 + $0xc0] sm:$0xff]
        %v573 = vld [vmem:[#allocation11 + $0xc8] sm:$0xff]
        %v574 = vld [vmem:[#allocation11 + $0xd0] sm:$0xff]
        %v575 = vld [vmem:[#allocation11 + $0xd8] sm:$0xff]
        %v576 = vld [vmem:[#allocation11 + $0xe0] sm:$0xff]
        %v577 = vld [vmem:[#allocation11 + $0xe8] sm:$0xff]
        %v578 = vld [vmem:[#allocation11 + $0xf0] sm:$0xff]
        %v579 = vld [vmem:[#allocation11 + $0xf8] sm:$0xff]
        %v580 = vld [vmem:[#allocation11 + $0x100] sm:$0xff]
        %v581 = vld [vmem:[#allocation11 + $0x108] sm:$0xff]
        %v582 = vld [vmem:[#allocation11 + $0x110] sm:$0xff]
        %v583 = vld [vmem:[#allocation11 + $0x118] sm:$0xff]
        %v584 = vld [vmem:[#allocation11 + $0x120] sm:$0xff]
        %v585 = vld [vmem:[#allocation11 + $0x128] sm:$0xff]
        %v586 = vld [vmem:[#allocation11 + $0x130] sm:$0xff]
        %v587 = vld [vmem:[#allocation11 + $0x138] sm:$0xff]
        %v588 = vld [vmem:[#allocation11 + $0x140] sm:$0xff]
        %v589 = vld [vmem:[#allocation11 + $0x148] sm:$0xff]
        %v590 = vld [vmem:[#allocation11 + $0x150] sm:$0xff]
        %v591 = vld [vmem:[#allocation11 + $0x158] sm:$0xff]
        %v592 = vld [vmem:[#allocation11 + $0x160] sm:$0xff]
        %v593 = vld [vmem:[#allocation11 + $0x168] sm:$0xff]
        %v594 = vld [vmem:[#allocation11 + $0x170] sm:$0xff]
        %v595 = vld [vmem:[#allocation11 + $0x178] sm:$0xff]
        %v596 = vld [vmem:[#allocation11 + $0x180] sm:$0xff]
        %v597 = vld [vmem:[#allocation11 + $0x188] sm:$0xff]
        %v598 = vld [vmem:[#allocation11 + $0x190] sm:$0xff]
        %v599 = vld [vmem:[#allocation11 + $0x198] sm:$0xff]
        %v600 = vld [vmem:[#allocation11 + $0x1a0] sm:$0xff]
        %v601 = vld [vmem:[#allocation11 + $0x1a8] sm:$0xff]
        %v602 = vld [vmem:[#allocation11 + $0x1b0] sm:$0xff]
        %v603 = vld [vmem:[#allocation11 + $0x1b8] sm:$0xff]
        %v604 = vld [vmem:[#allocation11 + $0x1c0] sm:$0xff]
        %v605 = vld [vmem:[#allocation11 + $0x1c8] sm:$0xff]
        %v606 = vld [vmem:[#allocation11 + $0x1d0] sm:$0xff]
        %v607 = vld [vmem:[#allocation11 + $0x1d8] sm:$0xff]
        %v608 = vld [vmem:[#allocation11 + $0x1e0] sm:$0xff]
        %v609 = vld [vmem:[#allocation11 + $0x1e8] sm:$0xff]
        %v610 = vld [vmem:[#allocation11 + $0x1f0] sm:$0xff]
        %v611 = vld [vmem:[#allocation11 + $0x1f8] sm:$0xff]
        %v612 = vld [vmem:[#allocation13] sm:$0xff]
        %v614 = vlaneseq
        %v615 = vshrl.u32 %v614, 7
        %v616 = vsub.s32 0, %v615
        %v617 = vrot.slane %v612, %v616
        %v618 = vlaneseq
        %v619 = vshrl.u32 %v618, 7
        %v620 = vsub.s32 1, %v619
        %v621 = vrot.slane %v612, %v620
        %v622 = vlaneseq
        %v623 = vshrl.u32 %v622, 7
        %v624 = vsub.s32 2, %v623
        %v625 = vrot.slane %v612, %v624
        %v626 = vlaneseq
        %v627 = vshrl.u32 %v626, 7
        %v628 = vsub.s32 3, %v627
        %v629 = vrot.slane %v612, %v628
        %v630 = vlaneseq
        %v631 = vshrl.u32 %v630, 7
        %v632 = vsub.s32 4, %v631
        %v633 = vrot.slane %v612, %v632
        %v634 = vlaneseq
        %v635 = vshrl.u32 %v634, 7
        %v636 = vsub.s32 5, %v635
        %v637 = vrot.slane %v612, %v636
        %v638 = vlaneseq
        %v639 = vshrl.u32 %v638, 7
        %v640 = vsub.s32 6, %v639
        %v641 = vrot.slane %v612, %v640
        %v642 = vlaneseq
        %v643 = vshrl.u32 %v642, 7
        %v644 = vsub.s32 7, %v643
        %v645 = vrot.slane %v612, %v644
        %v718 = vunpack.c.l.b16 %v548
        %v719 = vunpack.c.h.b16 %v548
        %v720 = vunpack.c.l.b16 %v549
        %v721 = vunpack.c.h.b16 %v549
        %v722 = vunpack.c.l.b16 %v550
        %v723 = vunpack.c.h.b16 %v550
        %v724 = vunpack.c.l.b16 %v551
        %v725 = vunpack.c.h.b16 %v551
        %v726 = vunpack.c.l.b16 %v552
        %v727 = vunpack.c.h.b16 %v552
        %v728 = vunpack.c.l.b16 %v553
        %v729 = vunpack.c.h.b16 %v553
        %v730 = vunpack.c.l.b16 %v554
        %v731 = vunpack.c.h.b16 %v554
        %v732 = vunpack.c.l.b16 %v555
        %v733 = vunpack.c.h.b16 %v555
        %v734 = vunpack.c.l.b16 %v556
        %v735 = vunpack.c.h.b16 %v556
        %v736 = vunpack.c.l.b16 %v557
        %v737 = vunpack.c.h.b16 %v557
        %v738 = vunpack.c.l.b16 %v558
        %v739 = vunpack.c.h.b16 %v558
        %v740 = vunpack.c.l.b16 %v559
        %v741 = vunpack.c.h.b16 %v559
        %v742 = vunpack.c.l.b16 %v560
        %v743 = vunpack.c.h.b16 %v560
        %v744 = vunpack.c.l.b16 %v561
        %v745 = vunpack.c.h.b16 %v561
        %v746 = vunpack.c.l.b16 %v562
        %v747 = vunpack.c.h.b16 %v562
        %v748 = vunpack.c.l.b16 %v563
        %v749 = vunpack.c.h.b16 %v563
        %v750 = vunpack.c.l.b16 %v564
        %v751 = vunpack.c.h.b16 %v564
        %v752 = vunpack.c.l.b16 %v565
        %v753 = vunpack.c.h.b16 %v565
        %v754 = vunpack.c.l.b16 %v566
        %v755 = vunpack.c.h.b16 %v566
        %v756 = vunpack.c.l.b16 %v567
        %v757 = vunpack.c.h.b16 %v567
        %v758 = vunpack.c.l.b16 %v568
        %v759 = vunpack.c.h.b16 %v568
        %v760 = vunpack.c.l.b16 %v569
        %v761 = vunpack.c.h.b16 %v569
        %v762 = vunpack.c.l.b16 %v570
        %v763 = vunpack.c.h.b16 %v570
        %v764 = vunpack.c.l.b16 %v571
        %v765 = vunpack.c.h.b16 %v571
        %v766 = vunpack.c.l.b16 %v572
        %v767 = vunpack.c.h.b16 %v572
        %v768 = vunpack.c.l.b16 %v573
        %v769 = vunpack.c.h.b16 %v573
        %v770 = vunpack.c.l.b16 %v574
        %v771 = vunpack.c.h.b16 %v574
        %v772 = vunpack.c.l.b16 %v575
        %v773 = vunpack.c.h.b16 %v575
        %v774 = vunpack.c.l.b16 %v576
        %v775 = vunpack.c.h.b16 %v576
        %v776 = vunpack.c.l.b16 %v577
        %v777 = vunpack.c.h.b16 %v577
        %v778 = vunpack.c.l.b16 %v578
        %v779 = vunpack.c.h.b16 %v578
        %v780 = vunpack.c.l.b16 %v579
        %v781 = vunpack.c.h.b16 %v579
        %v782 = vunpack.c.l.b16 %v580
        %v783 = vunpack.c.h.b16 %v580
        %v784 = vunpack.c.l.b16 %v581
        %v785 = vunpack.c.h.b16 %v581
        %v786 = vunpack.c.l.b16 %v582
        %v787 = vunpack.c.h.b16 %v582
        %v788 = vunpack.c.l.b16 %v583
        %v789 = vunpack.c.h.b16 %v583
        %v790 = vunpack.c.l.b16 %v584
        %v791 = vunpack.c.h.b16 %v584
        %v792 = vunpack.c.l.b16 %v585
        %v793 = vunpack.c.h.b16 %v585
        %v794 = vunpack.c.l.b16 %v586
        %v795 = vunpack.c.h.b16 %v586
        %v796 = vunpack.c.l.b16 %v587
        %v797 = vunpack.c.h.b16 %v587
        %v798 = vunpack.c.l.b16 %v588
        %v799 = vunpack.c.h.b16 %v588
        %v800 = vunpack.c.l.b16 %v589
        %v801 = vunpack.c.h.b16 %v589
        %v802 = vunpack.c.l.b16 %v590
        %v803 = vunpack.c.h.b16 %v590
        %v804 = vunpack.c.l.b16 %v591
        %v805 = vunpack.c.h.b16 %v591
        %v806 = vunpack.c.l.b16 %v592
        %v807 = vunpack.c.h.b16 %v592
        %v808 = vunpack.c.l.b16 %v593
        %v809 = vunpack.c.h.b16 %v593
        %v810 = vunpack.c.l.b16 %v594
        %v811 = vunpack.c.h.b16 %v594
        %v812 = vunpack.c.l.b16 %v595
        %v813 = vunpack.c.h.b16 %v595
        %v814 = vunpack.c.l.b16 %v596
        %v815 = vunpack.c.h.b16 %v596
        %v816 = vunpack.c.l.b16 %v597
        %v817 = vunpack.c.h.b16 %v597
        %v818 = vunpack.c.l.b16 %v598
        %v819 = vunpack.c.h.b16 %v598
        %v820 = vunpack.c.l.b16 %v599
        %v821 = vunpack.c.h.b16 %v599
        %v822 = vunpack.c.l.b16 %v600
        %v823 = vunpack.c.h.b16 %v600
        %v824 = vunpack.c.l.b16 %v601
        %v825 = vunpack.c.h.b16 %v601
        %v826 = vunpack.c.l.b16 %v602
        %v827 = vunpack.c.h.b16 %v602
        %v828 = vunpack.c.l.b16 %v603
        %v829 = vunpack.c.h.b16 %v603
        %v830 = vunpack.c.l.b16 %v604
        %v831 = vunpack.c.h.b16 %v604
        %v832 = vunpack.c.l.b16 %v605
        %v833 = vunpack.c.h.b16 %v605
        %v834 = vunpack.c.l.b16 %v606
        %v835 = vunpack.c.h.b16 %v606
        %v836 = vunpack.c.l.b16 %v607
        %v837 = vunpack.c.h.b16 %v607
        %v838 = vunpack.c.l.b16 %v608
        %v839 = vunpack.c.h.b16 %v608
        %v840 = vunpack.c.l.b16 %v609
        %v841 = vunpack.c.h.b16 %v609
        %v842 = vunpack.c.l.b16 %v610
        %v843 = vunpack.c.h.b16 %v610
        %v844 = vunpack.c.l.b16 %v611
        %v845 = vunpack.c.h.b16 %v611
        %v846 = vpack.c.b16 %v726, %v718
        %v847 = vpack.c.b16 %v727, %v719
        %v848 = vpack.c.b16 %v728, %v720
        %v849 = vpack.c.b16 %v729, %v721
        %v850 = vpack.c.b16 %v730, %v722
        %v851 = vpack.c.b16 %v731, %v723
        %v852 = vpack.c.b16 %v732, %v724
        %v853 = vpack.c.b16 %v733, %v725
        %v854 = vpack.c.b16 %v742, %v734
        %v855 = vpack.c.b16 %v743, %v735
        %v856 = vpack.c.b16 %v744, %v736
        %v857 = vpack.c.b16 %v745, %v737
        %v858 = vpack.c.b16 %v746, %v738
        %v859 = vpack.c.b16 %v747, %v739
        %v860 = vpack.c.b16 %v748, %v740
        %v861 = vpack.c.b16 %v749, %v741
        %v862 = vpack.c.b16 %v758, %v750
        %v863 = vpack.c.b16 %v759, %v751
        %v864 = vpack.c.b16 %v760, %v752
        %v865 = vpack.c.b16 %v761, %v753
        %v866 = vpack.c.b16 %v762, %v754
        %v867 = vpack.c.b16 %v763, %v755
        %v868 = vpack.c.b16 %v764, %v756
        %v869 = vpack.c.b16 %v765, %v757
        %v870 = vpack.c.b16 %v774, %v766
        %v871 = vpack.c.b16 %v775, %v767
        %v872 = vpack.c.b16 %v776, %v768
        %v873 = vpack.c.b16 %v777, %v769
        %v874 = vpack.c.b16 %v778, %v770
        %v875 = vpack.c.b16 %v779, %v771
        %v876 = vpack.c.b16 %v780, %v772
        %v877 = vpack.c.b16 %v781, %v773
        %v878 = vpack.c.b16 %v790, %v782
        %v879 = vpack.c.b16 %v791, %v783
        %v880 = vpack.c.b16 %v792, %v784
        %v881 = vpack.c.b16 %v793, %v785
        %v882 = vpack.c.b16 %v794, %v786
        %v883 = vpack.c.b16 %v795, %v787
        %v884 = vpack.c.b16 %v796, %v788
        %v885 = vpack.c.b16 %v797, %v789
        %v886 = vpack.c.b16 %v806, %v798
        %v887 = vpack.c.b16 %v807, %v799
        %v888 = vpack.c.b16 %v808, %v800
        %v889 = vpack.c.b16 %v809, %v801
        %v890 = vpack.c.b16 %v810, %v802
        %v891 = vpack.c.b16 %v811, %v803
        %v892 = vpack.c.b16 %v812, %v804
        %v893 = vpack.c.b16 %v813, %v805
        %v894 = vpack.c.b16 %v822, %v814
        %v895 = vpack.c.b16 %v823, %v815
        %v896 = vpack.c.b16 %v824, %v816
        %v897 = vpack.c.b16 %v825, %v817
        %v898 = vpack.c.b16 %v826, %v818
        %v899 = vpack.c.b16 %v827, %v819
        %v900 = vpack.c.b16 %v828, %v820
        %v901 = vpack.c.b16 %v829, %v821
        %v902 = vpack.c.b16 %v838, %v830
        %v903 = vpack.c.b16 %v839, %v831
        %v904 = vpack.c.b16 %v840, %v832
        %v905 = vpack.c.b16 %v841, %v833
        %v906 = vpack.c.b16 %v842, %v834
        %v907 = vpack.c.b16 %v843, %v835
        %v908 = vpack.c.b16 %v844, %v836
        %v909 = vpack.c.b16 %v845, %v837
        %974 = vmatprep.subr.bf16.mxu0 %v847
        %975 = vmatpush1.bf16.msra.mxu0 %v846
        %976 = vmatprep.subr.bf16.mxu0 %v855
        %977 = vmatpush1.bf16.msra.mxu0 %v854
        %978 = vmatprep.subr.bf16.mxu0 %v863
        %979 = vmatpush1.bf16.msra.mxu0 %v862
        %980 = vmatprep.subr.bf16.mxu0 %v871
        %981 = vmatpush1.bf16.msra.mxu0 %v870
        %982 = vmatprep.subr.bf16.mxu0 %v879
        %983 = vmatpush1.bf16.msra.mxu0 %v878
        %984 = vmatprep.subr.bf16.mxu0 %v887
        %985 = vmatpush1.bf16.msra.mxu0 %v886
        %986 = vmatprep.subr.bf16.mxu0 %v895
        %987 = vmatpush1.bf16.msra.mxu0 %v894
        %988 = vmatprep.subr.bf16.mxu0 %v903
        %989 = vmatpush1.bf16.msra.mxu0 %v902
        %990 = vmatprep.subr.bf16.mxu0 0
        %991 = vmatpush1.bf16.msra.mxu0 0
        %992 = vmatprep.subr.bf16.mxu0 0
        %993 = vmatpush1.bf16.msra.mxu0 0
        %994 = vmatprep.subr.bf16.mxu0 0
        %995 = vmatpush1.bf16.msra.mxu0 0
        %996 = vmatprep.subr.bf16.mxu0 0
        %997 = vmatpush1.bf16.msra.mxu0 0
        %998 = vmatprep.subr.bf16.mxu0 0
        %999 = vmatpush1.bf16.msra.mxu0 0
        %1000 = vmatprep.subr.bf16.mxu0 0
        %1001 = vmatpush1.bf16.msra.mxu0 0
        %1002 = vmatprep.subr.bf16.mxu0 0
        %1003 = vmatpush1.bf16.msra.mxu0 0
        %1004 = vmatprep.subr.bf16.mxu0 0
        %1005 = vmatpush1.bf16.msra.mxu0 0
        %1006 = vmatprep.mubr.bf16.mxu0 0
        %1007 = vmatmul.mubr.bf16.gmra.mrb[0].mxu0 %v547
        %v1008 = vpop.f32.mrb[0].mxu0
        %v1009 = vadd.f32 %v617, %v1008
        %v1010 = vpop.f32.mrb[0].mxu0
        %v1011 = vadd.f32 %v621, %v1010
        %v1012 = vpop.f32.mrb[0].mxu0
        %v1013 = vadd.f32 %v617, %v1012
        %v1014 = vpop.f32.mrb[0].mxu0
        %v1015 = vadd.f32 %v621, %v1014
        %1016 = vdwg.mxu0
        %1017 = vmatprep.subr.bf16.mxu0 %v849
        %1018 = vmatpush1.bf16.msra.mxu0 %v848
        %1019 = vmatprep.subr.bf16.mxu0 %v857
        %1020 = vmatpush1.bf16.msra.mxu0 %v856
        %1021 = vmatprep.subr.bf16.mxu0 %v865
        %1022 = vmatpush1.bf16.msra.mxu0 %v864
        %1023 = vmatprep.subr.bf16.mxu0 %v873
        %1024 = vmatpush1.bf16.msra.mxu0 %v872
        %1025 = vmatprep.subr.bf16.mxu0 %v881
        %1026 = vmatpush1.bf16.msra.mxu0 %v880
        %1027 = vmatprep.subr.bf16.mxu0 %v889
        %1028 = vmatpush1.bf16.msra.mxu0 %v888
        %1029 = vmatprep.subr.bf16.mxu0 %v897
        %1030 = vmatpush1.bf16.msra.mxu0 %v896
        %1031 = vmatprep.subr.bf16.mxu0 %v905
        %1032 = vmatpush1.bf16.msra.mxu0 %v904
        %1033 = vmatprep.subr.bf16.mxu0 0
        %1034 = vmatpush1.bf16.msra.mxu0 0
        %1035 = vmatprep.subr.bf16.mxu0 0
        %1036 = vmatpush1.bf16.msra.mxu0 0
        %1037 = vmatprep.subr.bf16.mxu0 0
        %1038 = vmatpush1.bf16.msra.mxu0 0
        %1039 = vmatprep.subr.bf16.mxu0 0
        %1040 = vmatpush1.bf16.msra.mxu0 0
        %1041 = vmatprep.subr.bf16.mxu0 0
        %1042 = vmatpush1.bf16.msra.mxu0 0
        %1043 = vmatprep.subr.bf16.mxu0 0
        %1044 = vmatpush1.bf16.msra.mxu0 0
        %1045 = vmatprep.subr.bf16.mxu0 0
        %1046 = vmatpush1.bf16.msra.mxu0 0
        %1047 = vmatprep.subr.bf16.mxu0 0
        %1048 = vmatpush1.bf16.msra.mxu0 0
        %1049 = vmatprep.mubr.bf16.mxu0 0
        %1050 = vmatmul.mubr.bf16.gmra.mrb[0].mxu0 %v547
        %v1051 = vpop.f32.mrb[0].mxu0
        %v1052 = vadd.f32 %v625, %v1051
        %v1053 = vpop.f32.mrb[0].mxu0
        %v1054 = vadd.f32 %v629, %v1053
        %v1055 = vpop.f32.mrb[0].mxu0
        %v1056 = vadd.f32 %v625, %v1055
        %v1057 = vpop.f32.mrb[0].mxu0
        %v1058 = vadd.f32 %v629, %v1057
        %1059 = vdwg.mxu0
        %1060 = vmatprep.subr.bf16.mxu0 %v851
        %1061 = vmatpush1.bf16.msra.mxu0 %v850
        %1062 = vmatprep.subr.bf16.mxu0 %v859
        %1063 = vmatpush1.bf16.msra.mxu0 %v858
        %1064 = vmatprep.subr.bf16.mxu0 %v867
        %1065 = vmatpush1.bf16.msra.mxu0 %v866
        %1066 = vmatprep.subr.bf16.mxu0 %v875
        %1067 = vmatpush1.bf16.msra.mxu0 %v874
        %1068 = vmatprep.subr.bf16.mxu0 %v883
        %1069 = vmatpush1.bf16.msra.mxu0 %v882
        %1070 = vmatprep.subr.bf16.mxu0 %v891
        %1071 = vmatpush1.bf16.msra.mxu0 %v890
        %1072 = vmatprep.subr.bf16.mxu0 %v899
        %1073 = vmatpush1.bf16.msra.mxu0 %v898
        %1074 = vmatprep.subr.bf16.mxu0 %v907
        %1075 = vmatpush1.bf16.msra.mxu0 %v906
        %1076 = vmatprep.subr.bf16.mxu0 0
        %1077 = vmatpush1.bf16.msra.mxu0 0
        %1078 = vmatprep.subr.bf16.mxu0 0
        %1079 = vmatpush1.bf16.msra.mxu0 0
        %1080 = vmatprep.subr.bf16.mxu0 0
        %1081 = vmatpush1.bf16.msra.mxu0 0
        %1082 = vmatprep.subr.bf16.mxu0 0
        %1083 = vmatpush1.bf16.msra.mxu0 0
        %1084 = vmatprep.subr.bf16.mxu0 0
        %1085 = vmatpush1.bf16.msra.mxu0 0
        %1086 = vmatprep.subr.bf16.mxu0 0
        %1087 = vmatpush1.bf16.msra.mxu0 0
        %1088 = vmatprep.subr.bf16.mxu0 0
        %1089 = vmatpush1.bf16.msra.mxu0 0
        %1090 = vmatprep.subr.bf16.mxu0 0
        %1091 = vmatpush1.bf16.msra.mxu0 0
        %1092 = vmatprep.mubr.bf16.mxu0 0
        %1093 = vmatmul.mubr.bf16.gmra.mrb[0].mxu0 %v547
        %v1094 = vpop.f32.mrb[0].mxu0
        %v1095 = vadd.f32 %v633, %v1094
        %v1096 = vpop.f32.mrb[0].mxu0
        %v1097 = vadd.f32 %v637, %v1096
        %v1098 = vpop.f32.mrb[0].mxu0
        %v1099 = vadd.f32 %v633, %v1098
        %v1100 = vpop.f32.mrb[0].mxu0
        %v1101 = vadd.f32 %v637, %v1100
        %1102 = vdwg.mxu0
        %1103 = vmatprep.subr.bf16.mxu0 %v853
        %1104 = vmatpush1.bf16.msra.mxu0 %v852
        %1105 = vmatprep.subr.bf16.mxu0 %v861
        %1106 = vmatpush1.bf16.msra.mxu0 %v860
        %1107 = vmatprep.subr.bf16.mxu0 %v869
        %1108 = vmatpush1.bf16.msra.mxu0 %v868
        %1109 = vmatprep.subr.bf16.mxu0 %v877
        %1110 = vmatpush1.bf16.msra.mxu0 %v876
        %1111 = vmatprep.subr.bf16.mxu0 %v885
        %1112 = vmatpush1.bf16.msra.mxu0 %v884
        %1113 = vmatprep.subr.bf16.mxu0 %v893
        %1114 = vmatpush1.bf16.msra.mxu0 %v892
        %1115 = vmatprep.subr.bf16.mxu0 %v901
        %1116 = vmatpush1.bf16.msra.mxu0 %v900
        %1117 = vmatprep.subr.bf16.mxu0 %v909
        %1118 = vmatpush1.bf16.msra.mxu0 %v908
        %1119 = vmatprep.subr.bf16.mxu0 0
        %1120 = vmatpush1.bf16.msra.mxu0 0
        %1121 = vmatprep.subr.bf16.mxu0 0
        %1122 = vmatpush1.bf16.msra.mxu0 0
        %1123 = vmatprep.subr.bf16.mxu0 0
        %1124 = vmatpush1.bf16.msra.mxu0 0
        %1125 = vmatprep.subr.bf16.mxu0 0
        %1126 = vmatpush1.bf16.msra.mxu0 0
        %1127 = vmatprep.subr.bf16.mxu0 0
        %1128 = vmatpush1.bf16.msra.mxu0 0
        %1129 = vmatprep.subr.bf16.mxu0 0
        %1130 = vmatpush1.bf16.msra.mxu0 0
        %1131 = vmatprep.subr.bf16.mxu0 0
        %1132 = vmatpush1.bf16.msra.mxu0 0
        %1133 = vmatprep.subr.bf16.mxu0 0
        %1134 = vmatpush1.bf16.msra.mxu0 0
        %1135 = vmatprep.mubr.bf16.mxu0 0
        %1136 = vmatmul.mubr.bf16.gmra.mrb[0].mxu0 %v547
        %v1137 = vpop.f32.mrb[0].mxu0
        %v1138 = vadd.f32 %v641, %v1137
        %v1139 = vpop.f32.mrb[0].mxu0
        %v1140 = vadd.f32 %v645, %v1139
        %v1141 = vpop.f32.mrb[0].mxu0
        %v1142 = vadd.f32 %v641, %v1141
        %v1143 = vpop.f32.mrb[0].mxu0
        %v1144 = vadd.f32 %v645, %v1143
        %1145 = vdwg.mxu0
        %v1146 = vmax.f32 %v1009, 0.0
        %v1147 = vmax.f32 %v1011, 0.0
        %v1148 = vmax.f32 %v1052, 0.0
        %v1149 = vmax.f32 %v1054, 0.0
        %v1150 = vmax.f32 %v1095, 0.0
        %v1151 = vmax.f32 %v1097, 0.0
        %v1152 = vmax.f32 %v1138, 0.0
        %v1153 = vmax.f32 %v1140, 0.0
        %v1154 = vmax.f32 %v1013, 0.0
        %v1155 = vmax.f32 %v1015, 0.0
        %v1156 = vmax.f32 %v1056, 0.0
        %v1157 = vmax.f32 %v1058, 0.0
        %v1158 = vmax.f32 %v1099, 0.0
        %v1159 = vmax.f32 %v1101, 0.0
        %v1160 = vmax.f32 %v1142, 0.0
        %v1161 = vmax.f32 %v1144, 0.0
        %s1162 = smul.u32 %s32, 16
        %v1163 = vlaneseq
        %v1164 = vshrl.u32 %v1163, 7
        %v1165 = vadd.s32 %v1164, 8
        %v1166 = vstv %s1162
        %v1167 = vadd.s32 %v1166, %v1164
        %v1168 = vadd.s32 %v1166, %v1165
        %vm1169 = vcmp.lt.s32.totalorder %v1167, 16
        %vm1170 = vcmp.lt.s32.totalorder %v1168, 16
        %v1171 = vsel %vm1169, 1, 0
        %v1172 = vsel %vm1170, 1, 0
        %vm1173 = vcmp.eq.s32.totalorder %v1171, 1
        %vm1174 = vcmp.eq.s32.totalorder %v1172, 1
        %v1175 = vsel %vm1173, %v1146, -inf
        %v1176 = vsel %vm1173, %v1147, -inf
        %v1177 = vsel %vm1173, %v1148, -inf
        %v1178 = vsel %vm1173, %v1149, -inf
        %v1179 = vsel %vm1173, %v1150, -inf
        %v1180 = vsel %vm1173, %v1151, -inf
        %v1181 = vsel %vm1173, %v1152, -inf
        %v1182 = vsel %vm1173, %v1153, -inf
        %v1183 = vsel %vm1174, %v1154, -inf
        %v1184 = vsel %vm1174, %v1155, -inf
        %v1185 = vsel %vm1174, %v1156, -inf
        %v1186 = vsel %vm1174, %v1157, -inf
        %v1187 = vsel %vm1174, %v1158, -inf
        %v1188 = vsel %vm1174, %v1159, -inf
        %v1189 = vsel %vm1174, %v1160, -inf
        %v1190 = vsel %vm1174, %v1161, -inf
        %v1191 = vmax.f32 %v1175, %v1183
        %v1192 = vrot.slane %v1191, 4
        %v1193 = vmax.f32 %v1191, %v1192
        %v1194 = vrot.slane %v1193, 2
        %v1195 = vmax.f32 %v1193, %v1194
        %v1196 = vrot.slane %v1195, 1
        %v1197 = vmax.f32 %v1195, %v1196
        %v1198 = vmax.f32 %v1176, %v1184
        %v1199 = vrot.slane %v1198, 4
        %v1200 = vmax.f32 %v1198, %v1199
        %v1201 = vrot.slane %v1200, 2
        %v1202 = vmax.f32 %v1200, %v1201
        %v1203 = vrot.slane %v1202, 1
        %v1204 = vmax.f32 %v1202, %v1203
        %v1205 = vmax.f32 %v1177, %v1185
        %v1206 = vrot.slane %v1205, 4
        %v1207 = vmax.f32 %v1205, %v1206
        %v1208 = vrot.slane %v1207, 2
        %v1209 = vmax.f32 %v1207, %v1208
        %v1210 = vrot.slane %v1209, 1
        %v1211 = vmax.f32 %v1209, %v1210
        %v1212 = vmax.f32 %v1178, %v1186
        %v1213 = vrot.slane %v1212, 4
        %v1214 = vmax.f32 %v1212, %v1213
        %v1215 = vrot.slane %v1214, 2
        %v1216 = vmax.f32 %v1214, %v1215
        %v1217 = vrot.slane %v1216, 1
        %v1218 = vmax.f32 %v1216, %v1217
        %v1219 = vmax.f32 %v1179, %v1187
        %v1220 = vrot.slane %v1219, 4
        %v1221 = vmax.f32 %v1219, %v1220
        %v1222 = vrot.slane %v1221, 2
        %v1223 = vmax.f32 %v1221, %v1222
        %v1224 = vrot.slane %v1223, 1
        %v1225 = vmax.f32 %v1223, %v1224
        %v1226 = vmax.f32 %v1180, %v1188
        %v1227 = vrot.slane %v1226, 4
        %v1228 = vmax.f32 %v1226, %v1227
        %v1229 = vrot.slane %v1228, 2
        %v1230 = vmax.f32 %v1228, %v1229
        %v1231 = vrot.slane %v1230, 1
        %v1232 = vmax.f32 %v1230, %v1231
        %v1233 = vmax.f32 %v1181, %v1189
        %v1234 = vrot.slane %v1233, 4
        %v1235 = vmax.f32 %v1233, %v1234
        %v1236 = vrot.slane %v1235, 2
        %v1237 = vmax.f32 %v1235, %v1236
        %v1238 = vrot.slane %v1237, 1
        %v1239 = vmax.f32 %v1237, %v1238
        %v1240 = vmax.f32 %v1182, %v1190
        %v1241 = vrot.slane %v1240, 4
        %v1242 = vmax.f32 %v1240, %v1241
        %v1243 = vrot.slane %v1242, 2
        %v1244 = vmax.f32 %v1242, %v1243
        %v1245 = vrot.slane %v1244, 1
        %v1246 = vmax.f32 %v1244, %v1245
        %p1247 = scmp.eq.s32.totalorder %s32, 0
        // Predicated region
        $region77: #{_lambda_.4} parent=47 // pred_check
          %p1248 = pneg %p1247
        $region78: #{_lambda_.4} parent=47 // pred_check_branch
          %1250 = sbr.rel (%p1248) target = $region80
        $region79: #{_lambda_.4} parent=47 // pred_region
          %1251 = vst [vmem:[%s391] sm:$0xff] -inf
        $region80: #{_lambda_.4} parent=47 // pred_fallthru
          _
        %v1252 = vld [vmem:[%s391] sm:$0xff]
        %v1261 = vcombine.low %v1197, %v1204
        %v1262 = vcombine.low %v1211, %v1218
        %v1263 = vcombine.low %v1225, %v1232
        %v1264 = vcombine.low %v1239, %v1246
        %v1266 = vunpack.c.l.s4 1966171168
        %v1267 = vunpack.c.0.s8 %v1266
        %v1268 = vlaneseq
        %v1269 = vshrl.u32 %v1268, 7
        %v1270 = vsub.s32 %v1267, %v1269
        %v1271 = vrot.slane %v1261, %v1270
        %v1273 = vunpack.c.l.s4 1966171168
        %v1274 = vunpack.c.0.s8 %v1273
        %v1275 = vlaneseq
        %v1276 = vshrl.u32 %v1275, 7
        %v1277 = vsub.s32 %v1274, %v1276
        %v1278 = vrot.slane %v1262, %v1277
        %v1280 = vunpack.c.l.s4 1966171168
        %v1281 = vunpack.c.0.s8 %v1280
        %v1282 = vlaneseq
        %v1283 = vshrl.u32 %v1282, 7
        %v1284 = vsub.s32 %v1281, %v1283
        %v1285 = vrot.slane %v1263, %v1284
        %v1287 = vunpack.c.l.s4 1966171168
        %v1288 = vunpack.c.0.s8 %v1287
        %v1289 = vlaneseq
        %v1290 = vshrl.u32 %v1289, 7
        %v1291 = vsub.s32 %v1288, %v1290
        %v1292 = vrot.slane %v1264, %v1291
        %v1293 = vcombine.low %v1271, %v1278
        %v1294 = vcombine.low %v1285, %v1292
        %v1296 = vunpack.c.l.s4 1966171168
        %v1297 = vunpack.c.0.s8 %v1296
        %v1298 = vlaneseq
        %v1299 = vshrl.u32 %v1298, 7
        %v1300 = vsub.s32 %v1297, %v1299
        %v1301 = vrot.slane %v1293, %v1300
        %v1303 = vunpack.c.l.s4 1966171168
        %v1304 = vunpack.c.0.s8 %v1303
        %v1305 = vlaneseq
        %v1306 = vshrl.u32 %v1305, 7
        %v1307 = vsub.s32 %v1304, %v1306
        %v1308 = vrot.slane %v1294, %v1307
        %v1309 = vcombine.low %v1301, %v1308
        %v1311 = vmax.f32 %v1252, %v1309
        %1312 = vst [vmem:[%s391] sm:$0xff] %v1311
        %s1313 = sand.u32 %s201, 1
        %s1314 = scalar_lea.sflag [#allocation4], %s1313
        %s1315 = sand.u32 %s201, 1
        %s1316 = smul.addr %s1315, 8
        %s1317 = scalar_lea.vmem [#allocation14], %s1316
        // Predicated region
        $region81: #{_lambda_.4} parent=47 // pred_check
          %p1318 = pneg %p211
        $region82: #{_lambda_.4} parent=47 // pred_check_branch
          %1320 = sbr.rel (%p1318) target = $region84
        $region83: #{_lambda_.4} parent=47 // pred_region
          %s1322 = ssub.s32 128, 128
          %1323 = vsyncadd %s1314, %s1322
          %s1324 = smul.addr %s31, 8
          %s1325 = smul.addr %s1324, 16
          %s1326 = scalar_lea.hbm %s7, %s1325
          %s1328 = sshll.u32 %s1317, 4
          %s1329 = int_to_ptr.vmem [resolvable:$true] %s1328
          %1331 = dma.vmem_to_hbm [thread:$0]  %s1329, 128, %s1326, %s1314
        $region84: #{_lambda_.4} parent=47 // pred_fallthru
          _
      $region48: #{_lambda_.4} parent=5 // pred_fallthru
        _
      %p1332 = scmp.le.s32.totalorder 2, %s22
      // Predicated region
      $region85: #{_lambda_.4} parent=5 // pred_check
        %p1333 = pneg %p1332
      $region86: #{_lambda_.4} parent=5 // pred_check_branch
        %1335 = sbr.rel (%p1333) target = $region88
      $region87: #{_lambda_.4} parent=5 // pred_region
        %s1336 = ssub.s32 %s22, 2
        // Predicated region
        $region89: #{_lambda_.4} parent=87 // pred_check
          %p1337 = pneg %p217
        $region90: #{_lambda_.4} parent=87 // pred_check_branch
          %1339 = sbr.rel (%p1337) target = $region92
        $region91: #{_lambda_.4} parent=87 // pred_region
          %s1340 = sand.u32 %s202, 1
          %s1341 = scalar_lea.sflag [#allocation4], %s1340
          %s1342 = sand.u32 %s202, 1
          %s1343 = smul.addr %s1342, 8
          %s1344 = scalar_lea.vmem [#allocation14], %s1343
          %1345 = dma.done %s1341, 128
        $region92: #{_lambda_.4} parent=87 // pred_fallthru
          _
      $region88: #{_lambda_.4} parent=5 // pred_fallthru
        _
    $region6: #{_lambda_.4} parent=1 // loop_footer
      %s26 = sadd.s32 1, %s22
    $region7: #{_lambda_.4} parent=1 // loop_footer_branch
      %21 = sbr.rel target = $region3
    $region8: #{_lambda_.4} parent=1 // loop_exit
      _
    %1346 = vsyncpa [#allocation3], 1
    %s1347 = scalar_lea.sflag [#allocation3], 1
    %1348 = vsyncpa %s1347, 1
    %1349 = vsyncpa [#allocation6], 1
    %1350 = vsyncpa [#allocation9], 1
    %1351 = vsyncpa [#allocation12], 1
    %1352 = vsyncpa [#allocation4], 1
    %s1353 = scalar_lea.sflag [#allocation4], 1
    %1354 = vsyncpa %s1353, 1

// kernel: _lambda_.6
$region0: #{_lambda_.6}
  #allocation0 [shape = 'u32[]', space=smem, size = 0x4, offset = 0x4, fixed_abs, tag = 'smem constant byte address 0x4 - core index']
  #allocation1 [shape = 'u32[144,128]{1,0:T(1,128)}', space=vmem, size = 0x12000, scoped, tag = 'internal scratch']
  %s0 = inlined_call_operand.hbm [shape: bf16[2,16,8], index: 0, kind: input, shape index: {}]
  %s1 = inlined_call_operand.hbm [shape: f32[2,8,8], index: 1, kind: input, shape index: {}]
  %s2 = inlined_call_operand.hbm [shape: bf16[8,64], index: 2, kind: input, shape index: {}]
  %s3 = inlined_call_operand.hbm [shape: f32[1,64], index: 3, kind: input, shape index: {}]
  %s4 = inlined_call_operand.hbm [shape: bf16[64,128], index: 4, kind: input, shape index: {}]
  %s5 = inlined_call_operand.hbm [shape: f32[1,128], index: 5, kind: input, shape index: {}]
  %s6 = inlined_call_operand.hbm [shape: bf16[128,1024], index: 6, kind: input, shape index: {}]
  %s7 = inlined_call_operand.hbm [shape: f32[1,1024], index: 7, kind: input, shape index: {}]
  %s8 = inlined_call_operand.hbm [shape: bf16[2,16,64], index: 8, kind: output, shape index: {0}]
  %s9 = inlined_call_operand.hbm [shape: f32[2,1,1024], index: 9, kind: output, shape index: {1}]
  %10 = xla_tuple %s8, %s9
  %s11 = sld [smem:[#allocation0]]
  $region109: #{_lambda_.6} parent=0
    _
  %s13 = ssub.s32 1, %s11
  %s14 = scalar_select 0, %s13, %s11
  $region1: #{_lambda_.6} parent=0
    #allocation2 [shape = 'u8[8192]{0}', space=vmem, size = 0x2000, scoped, tag = 'input window, operand 0']
    #allocation3 [shape = 's32[2]{0}', space=sflag, size = 0x8, scoped, tag = 'scoped memory for _lambda_.6']
    #allocation4 [shape = 's32[2]{0}', space=sflag, size = 0x8, scoped, tag = 'scoped memory for _lambda_.6']
    #allocation5 [shape = 'u8[8192]{0}', space=vmem, size = 0x2000, scoped, tag = 'input window, operand 1']
    #allocation6 [shape = 's32[2]{0}', space=sflag, size = 0x8, scoped, tag = 'scoped memory for _lambda_.6']
    #allocation7 [shape = 'u8[2048]{0}', space=vmem, size = 0x800, scoped, tag = 'input window, operand 2, single buffered']
    #allocation8 [shape = 'u8[512]{0}', space=vmem, size = 0x400, scoped, tag = 'input window, operand 3, single buffered']
    #allocation9 [shape = 's32[1]{0}', space=sflag, size = 0x4, scoped, tag = 'scoped memory for _lambda_.6']
    #allocation10 [shape = 'u8[16384]{0}', space=vmem, size = 0x4000, scoped, tag = 'input window, operand 4, single buffered']
    #allocation11 [shape = 'u8[512]{0}', space=vmem, size = 0x400, scoped, tag = 'input window, operand 5, single buffered']
    #allocation12 [shape = 's32[1]{0}', space=sflag, size = 0x4, scoped, tag = 'scoped memory for _lambda_.6']
    #allocation13 [shape = 'u8[262144]{0}', space=vmem, size = 0x40000, scoped, tag = 'input window, operand 6, single buffered']
    #allocation14 [shape = 'u8[4096]{0}', space=vmem, size = 0x1000, scoped, tag = 'input window, operand 7, single buffered']
    #allocation15 [shape = 's32[1]{0}', space=sflag, size = 0x4, scoped, tag = 'scoped memory for _lambda_.6']
    #allocation16 [shape = 'u8[8192]{0}', space=vmem, size = 0x2000, scoped, tag = 'output window, operand 0']
    #allocation17 [shape = 'u8[8192]{0}', space=vmem, size = 0x2000, scoped, tag = 'output window, operand 1']
    #allocation18 [shape = 's32[2]{0}', space=sflag, size = 0x8, scoped, tag = 'scoped memory for _lambda_.6']
    %15 = vsyncpa [#allocation3], 0
    %s16 = scalar_lea.sflag [#allocation3], 1
    %17 = vsyncpa %s16, 0
    %18 = vsyncpa [#allocation6], 0
    %s19 = scalar_lea.sflag [#allocation6], 1
    %20 = vsyncpa %s19, 0
    %21 = vsyncpa [#allocation9], 0
    %22 = vsyncpa [#allocation12], 0
    %23 = vsyncpa [#allocation15], 0
    %24 = vsyncpa [#allocation4], 0
    %s25 = scalar_lea.sflag [#allocation4], 1
    %26 = vsyncpa %s25, 0
    %27 = vsyncpa [#allocation18], 0
    %s28 = scalar_lea.sflag [#allocation18], 1
    %29 = vsyncpa %s28, 0
    loop: start=0, step=1, limit=4
    $region2: #{_lambda_.6} parent=1 // loop_pre_header
      _
    $region3: #{_lambda_.6} parent=1 // loop_header
      %s31 = sphi 0, %s35
      %p32 = scmp.ge.s32.totalorder %s31, 4
      %s38 = sphi 0, %s50
      %s39 = sphi 0, %s46
      %s40 = sphi 0, %s38
      %s41 = sphi 0, %s39
      %s42 = sphi 0, %s40
      %s43 = sphi 0, %s41
      %s55 = sphi 0, %s57
      %s58 = sphi 0, %s55
      %s59 = sphi 0, %s58
      %s75 = sphi 0, %s59
      %s81 = sphi 0, %s83
      %s84 = sphi 0, %s81
      %s85 = sphi 0, %s84
      %s101 = sphi 0, %s85
      %s105 = sphi 0, %s105
      %s107 = sphi 0, %s105
      %s108 = sphi 0, %s107
      %s122 = sphi 0, %s108
      %s126 = sphi 0, %s126
      %s128 = sphi 0, %s126
      %s129 = sphi 0, %s128
      %s143 = sphi 0, %s129
      %s147 = sphi 0, %s147
      %s149 = sphi 0, %s147
      %s150 = sphi 0, %s149
      %s164 = sphi 0, %s150
      %s168 = sphi 0, %s168
      %s170 = sphi 0, %s168
      %s171 = sphi 0, %s170
      %s185 = sphi 0, %s171
      %s189 = sphi 0, %s189
      %s191 = sphi 0, %s189
      %s192 = sphi 0, %s191
      %s206 = sphi 0, %s192
      %s210 = sphi 0, %s210
      %s212 = sphi 0, %s210
      %s213 = sphi 0, %s212
      %s227 = sphi 0, %s213
      %s235 = sphi 0, %s237
      %s238 = sphi 0, %s235
      %s239 = sphi 0, %s238
      %s255 = sphi 0, %s239
      %s261 = sphi 0, %s263
      %s264 = sphi 0, %s261
      %s265 = sphi 0, %s264
      %s281 = sphi 0, %s265
    $region4: #{_lambda_.6} parent=1 // loop_header_branch
      %34 = sbr.rel (%p32) target = $region8
    $region5: #{_lambda_.6} parent=1 // loop_body
      %s36 = ssub.s32 %s31, 1
      %s37 = ssub.s32 %s31, 2
      %s44 = sadd.s32 1, %s39
      %p45 = scmp.ge.s32.totalorder %s44, 1
      %s46 = scalar_select %p45, 0, %s44
      %s47 = sadd.s32 1, %s38
      %s48 = scalar_select %p45, %s47, %s38
      %p49 = scmp.ge.s32.totalorder %s48, 2
      %s50 = scalar_select %p49, 0, %s48
      %s51 = ssub.s32 %s38, %s50
      %s52 = ssub.s32 %s39, %s46
      %s53 = sor.u32 %s51, %s52
      %p54 = scmp.eq.s32.totalorder %s53, 0
      %s56 = sadd.s32 %s55, 1
      %s57 = scalar_select %p54, %s55, %s56
      %p60 = pneg %p54
      %p61 = scmp.eq.s32.totalorder %s31, 1
      %p62 = por %p60, %p61
      %p63 = scmp.ne.s32.totalorder %s55, %s58
      %p64 = scmp.eq.s32.totalorder %s31, 0
      %p65 = por %p63, %p64
      %p66 = scmp.ne.s32.totalorder %s55, %s58
      %p67 = scmp.eq.s32.totalorder %s36, 1
      %p68 = por %p66, %p67
      %p69 = scmp.ne.s32.totalorder %s58, %s59
      %p70 = scmp.eq.s32.totalorder %s36, 0
      %p71 = por %p69, %p70
      %p72 = scmp.ne.s32.totalorder %s58, %s59
      %p73 = scmp.eq.s32.totalorder %s37, 1
      %p74 = por %p72, %p73
      %p76 = scmp.ne.s32.totalorder %s59, %s75
      %p77 = scmp.eq.s32.totalorder %s37, 0
      %p78 = por %p76, %p77
      %s79 = ssub.s32 %s38, %s50
      %p80 = scmp.eq.s32.totalorder %s79, 0
      %s82 = sadd.s32 %s81, 1
      %s83 = scalar_select %p80, %s81, %s82
      %p86 = pneg %p80
      %p87 = scmp.eq.s32.totalorder %s31, 1
      %p88 = por %p86, %p87
      %p89 = scmp.ne.s32.totalorder %s81, %s84
      %p90 = scmp.eq.s32.totalorder %s31, 0
      %p91 = por %p89, %p90
      %p92 = scmp.ne.s32.totalorder %s81, %s84
      %p93 = scmp.eq.s32.totalorder %s36, 1
      %p94 = por %p92, %p93
      %p95 = scmp.ne.s32.totalorder %s84, %s85
      %p96 = scmp.eq.s32.totalorder %s36, 0
      %p97 = por %p95, %p96
      %p98 = scmp.ne.s32.totalorder %s84, %s85
      %p99 = scmp.eq.s32.totalorder %s37, 1
      %p100 = por %p98, %p99
      %p102 = scmp.ne.s32.totalorder %s85, %s101
      %p103 = scmp.eq.s32.totalorder %s37, 0
      %p104 = por %p102, %p103
      %s106 = sadd.s32 %s105, 1
      %p109 = scmp.eq.s32.totalorder %s31, 1
      %p110 = scmp.ne.s32.totalorder %s105, %s107
      %p111 = scmp.eq.s32.totalorder %s31, 0
      %p112 = por %p110, %p111
      %p113 = scmp.ne.s32.totalorder %s105, %s107
      %p114 = scmp.eq.s32.totalorder %s36, 1
      %p115 = por %p113, %p114
      %p116 = scmp.ne.s32.totalorder %s107, %s108
      %p117 = scmp.eq.s32.totalorder %s36, 0
      %p118 = por %p116, %p117
      %p119 = scmp.ne.s32.totalorder %s107, %s108
      %p120 = scmp.eq.s32.totalorder %s37, 1
      %p121 = por %p119, %p120
      %p123 = scmp.ne.s32.totalorder %s108, %s122
      %p124 = scmp.eq.s32.totalorder %s37, 0
      %p125 = por %p123, %p124
      %s127 = sadd.s32 %s126, 1
      %p130 = scmp.eq.s32.totalorder %s31, 1
      %p131 = scmp.ne.s32.totalorder %s126, %s128
      %p132 = scmp.eq.s32.totalorder %s31, 0
      %p133 = por %p131, %p132
      %p134 = scmp.ne.s32.totalorder %s126, %s128
      %p135 = scmp.eq.s32.totalorder %s36, 1
      %p136 = por %p134, %p135
      %p137 = scmp.ne.s32.totalorder %s128, %s129
      %p138 = scmp.eq.s32.totalorder %s36, 0
      %p139 = por %p137, %p138
      %p140 = scmp.ne.s32.totalorder %s128, %s129
      %p141 = scmp.eq.s32.totalorder %s37, 1
      %p142 = por %p140, %p141
      %p144 = scmp.ne.s32.totalorder %s129, %s143
      %p145 = scmp.eq.s32.totalorder %s37, 0
      %p146 = por %p144, %p145
      %s148 = sadd.s32 %s147, 1
      %p151 = scmp.eq.s32.totalorder %s31, 1
      %p152 = scmp.ne.s32.totalorder %s147, %s149
      %p153 = scmp.eq.s32.totalorder %s31, 0
      %p154 = por %p152, %p153
      %p155 = scmp.ne.s32.totalorder %s147, %s149
      %p156 = scmp.eq.s32.totalorder %s36, 1
      %p157 = por %p155, %p156
      %p158 = scmp.ne.s32.totalorder %s149, %s150
      %p159 = scmp.eq.s32.totalorder %s36, 0
      %p160 = por %p158, %p159
      %p161 = scmp.ne.s32.totalorder %s149, %s150
      %p162 = scmp.eq.s32.totalorder %s37, 1
      %p163 = por %p161, %p162
      %p165 = scmp.ne.s32.totalorder %s150, %s164
      %p166 = scmp.eq.s32.totalorder %s37, 0
      %p167 = por %p165, %p166
      %s169 = sadd.s32 %s168, 1
      %p172 = scmp.eq.s32.totalorder %s31, 1
      %p173 = scmp.ne.s32.totalorder %s168, %s170
      %p174 = scmp.eq.s32.totalorder %s31, 0
      %p175 = por %p173, %p174
      %p176 = scmp.ne.s32.totalorder %s168, %s170
      %p177 = scmp.eq.s32.totalorder %s36, 1
      %p178 = por %p176, %p177
      %p179 = scmp.ne.s32.totalorder %s170, %s171
      %p180 = scmp.eq.s32.totalorder %s36, 0
      %p181 = por %p179, %p180
      %p182 = scmp.ne.s32.totalorder %s170, %s171
      %p183 = scmp.eq.s32.totalorder %s37, 1
      %p184 = por %p182, %p183
      %p186 = scmp.ne.s32.totalorder %s171, %s185
      %p187 = scmp.eq.s32.totalorder %s37, 0
      %p188 = por %p186, %p187
      %s190 = sadd.s32 %s189, 1
      %p193 = scmp.eq.s32.totalorder %s31, 1
      %p194 = scmp.ne.s32.totalorder %s189, %s191
      %p195 = scmp.eq.s32.totalorder %s31, 0
      %p196 = por %p194, %p195
      %p197 = scmp.ne.s32.totalorder %s189, %s191
      %p198 = scmp.eq.s32.totalorder %s36, 1
      %p199 = por %p197, %p198
      %p200 = scmp.ne.s32.totalorder %s191, %s192
      %p201 = scmp.eq.s32.totalorder %s36, 0
      %p202 = por %p200, %p201
      %p203 = scmp.ne.s32.totalorder %s191, %s192
      %p204 = scmp.eq.s32.totalorder %s37, 1
      %p205 = por %p203, %p204
      %p207 = scmp.ne.s32.totalorder %s192, %s206
      %p208 = scmp.eq.s32.totalorder %s37, 0
      %p209 = por %p207, %p208
      %s211 = sadd.s32 %s210, 1
      %p214 = scmp.eq.s32.totalorder %s31, 1
      %p215 = scmp.ne.s32.totalorder %s210, %s212
      %p216 = scmp.eq.s32.totalorder %s31, 0
      %p217 = por %p215, %p216
      %p218 = scmp.ne.s32.totalorder %s210, %s212
      %p219 = scmp.eq.s32.totalorder %s36, 1
      %p220 = por %p218, %p219
      %p221 = scmp.ne.s32.totalorder %s212, %s213
      %p222 = scmp.eq.s32.totalorder %s36, 0
      %p223 = por %p221, %p222
      %p224 = scmp.ne.s32.totalorder %s212, %s213
      %p225 = scmp.eq.s32.totalorder %s37, 1
      %p226 = por %p224, %p225
      %p228 = scmp.ne.s32.totalorder %s213, %s227
      %p229 = scmp.eq.s32.totalorder %s37, 0
      %p230 = por %p228, %p229
      %s231 = ssub.s32 %s38, %s50
      %s232 = ssub.s32 %s39, %s46
      %s233 = sor.u32 %s231, %s232
      %p234 = scmp.eq.s32.totalorder %s233, 0
      %s236 = sadd.s32 %s235, 1
      %s237 = scalar_select %p234, %s235, %s236
      %p240 = pneg %p234
      %p241 = scmp.eq.s32.totalorder %s31, 1
      %p242 = por %p240, %p241
      %p243 = scmp.ne.s32.totalorder %s235, %s238
      %p244 = scmp.eq.s32.totalorder %s31, 0
      %p245 = por %p243, %p244
      %p246 = scmp.ne.s32.totalorder %s235, %s238
      %p247 = scmp.eq.s32.totalorder %s36, 1
      %p248 = por %p246, %p247
      %p249 = scmp.ne.s32.totalorder %s238, %s239
      %p250 = scmp.eq.s32.totalorder %s36, 0
      %p251 = por %p249, %p250
      %p252 = scmp.ne.s32.totalorder %s238, %s239
      %p253 = scmp.eq.s32.totalorder %s37, 1
      %p254 = por %p252, %p253
      %p256 = scmp.ne.s32.totalorder %s239, %s255
      %p257 = scmp.eq.s32.totalorder %s37, 0
      %p258 = por %p256, %p257
      %s259 = ssub.s32 %s38, %s50
      %p260 = scmp.eq.s32.totalorder %s259, 0
      %s262 = sadd.s32 %s261, 1
      %s263 = scalar_select %p260, %s261, %s262
      %p266 = pneg %p260
      %p267 = scmp.eq.s32.totalorder %s31, 1
      %p268 = por %p266, %p267
      %p269 = scmp.ne.s32.totalorder %s261, %s264
      %p270 = scmp.eq.s32.totalorder %s31, 0
      %p271 = por %p269, %p270
      %p272 = scmp.ne.s32.totalorder %s261, %s264
      %p273 = scmp.eq.s32.totalorder %s36, 1
      %p274 = por %p272, %p273
      %p275 = scmp.ne.s32.totalorder %s264, %s265
      %p276 = scmp.eq.s32.totalorder %s36, 0
      %p277 = por %p275, %p276
      %p278 = scmp.ne.s32.totalorder %s264, %s265
      %p279 = scmp.eq.s32.totalorder %s37, 1
      %p280 = por %p278, %p279
      %p282 = scmp.ne.s32.totalorder %s265, %s281
      %p283 = scmp.eq.s32.totalorder %s37, 0
      %p284 = por %p282, %p283
      %p285 = scmp.le.s32.totalorder 1, %s31
      %p286 = scmp.lt.s32.totalorder %s31, 3
      %p287 = pnand %p285, %p286
      %p288 = pneg %p287
      // Predicated region
      $region9: #{_lambda_.6} parent=5 // pred_check
        _
      $region10: #{_lambda_.6} parent=5 // pred_check_branch
        %290 = sbr.rel (%p287) target = $region12
      $region11: #{_lambda_.6} parent=5 // pred_region
        %s291 = ssub.s32 %s31, 1
        // Predicated region
        $region13: #{_lambda_.6} parent=11 // pred_check
          %p292 = pneg %p118
        $region14: #{_lambda_.6} parent=11 // pred_check_branch
          %294 = sbr.rel (%p292) target = $region16
        $region15: #{_lambda_.6} parent=11 // pred_region
          %s296 = ssub.s32 64, 64
          %297 = vsyncadd [#allocation6], %s296
          %s299 = sshll.u32 [#allocation7], 4
          %s300 = int_to_ptr.vmem [resolvable:$true] %s299
          %302 = dma.hbm_to_vmem [thread:$0]  %s2, 64, %s300, [#allocation6]
        $region16: #{_lambda_.6} parent=11 // pred_fallthru
          _
        // Predicated region
        $region17: #{_lambda_.6} parent=11 // pred_check
          %p303 = pneg %p139
        $region18: #{_lambda_.6} parent=11 // pred_check_branch
          %305 = sbr.rel (%p303) target = $region20
        $region19: #{_lambda_.6} parent=11 // pred_region
          %s307 = ssub.s32 16, 16
          %308 = vsyncadd [#allocation9], %s307
          %s310 = sshll.u32 [#allocation8], 4
          %s311 = int_to_ptr.vmem [resolvable:$true] %s310
          %313 = dma.hbm_to_vmem [thread:$0]  %s3, 16, %s311, [#allocation9]
        $region20: #{_lambda_.6} parent=11 // pred_fallthru
          _
        // Predicated region
        $region21: #{_lambda_.6} parent=11 // pred_check
          %p314 = pneg %p160
        $region22: #{_lambda_.6} parent=11 // pred_check_branch
          %316 = sbr.rel (%p314) target = $region24
        $region23: #{_lambda_.6} parent=11 // pred_region
          %s318 = ssub.s32 512, 512
          %319 = vsyncadd [#allocation9], %s318
          %s320 = sshll.u32 [#allocation10], 4
          %s321 = int_to_ptr.vmem [resolvable:$true] %s320
          %326 = dma.hbm_to_vmem [thread:$0]  %s4, 512, %s321, [#allocation9], 64, 64, 4
        $region24: #{_lambda_.6} parent=11 // pred_fallthru
          _
        // Predicated region
        $region25: #{_lambda_.6} parent=11 // pred_check
          %p327 = pneg %p181
        $region26: #{_lambda_.6} parent=11 // pred_check_branch
          %329 = sbr.rel (%p327) target = $region28
        $region27: #{_lambda_.6} parent=11 // pred_region
          %s331 = ssub.s32 16, 16
          %332 = vsyncadd [#allocation12], %s331
          %s334 = sshll.u32 [#allocation11], 4
          %s335 = int_to_ptr.vmem [resolvable:$true] %s334
          %337 = dma.hbm_to_vmem [thread:$0]  %s5, 16, %s335, [#allocation12]
        $region28: #{_lambda_.6} parent=11 // pred_fallthru
          _
        // Predicated region
        $region29: #{_lambda_.6} parent=11 // pred_check
          %p338 = pneg %p202
        $region30: #{_lambda_.6} parent=11 // pred_check_branch
          %340 = sbr.rel (%p338) target = $region32
        $region31: #{_lambda_.6} parent=11 // pred_region
          %s342 = ssub.s32 8192, 8192
          %343 = vsyncadd [#allocation12], %s342
          %s344 = sshll.u32 [#allocation13], 4
          %s345 = int_to_ptr.vmem [resolvable:$true] %s344
          %350 = dma.hbm_to_vmem [thread:$0]  %s6, 8192, %s345, [#allocation12], 512, 512, 32
        $region32: #{_lambda_.6} parent=11 // pred_fallthru
          _
        // Predicated region
        $region33: #{_lambda_.6} parent=11 // pred_check
          %p351 = pneg %p223
        $region34: #{_lambda_.6} parent=11 // pred_check_branch
          %353 = sbr.rel (%p351) target = $region36
        $region35: #{_lambda_.6} parent=11 // pred_region
          %s355 = ssub.s32 128, 128
          %356 = vsyncadd [#allocation15], %s355
          %s358 = sshll.u32 [#allocation14], 4
          %s359 = int_to_ptr.vmem [resolvable:$true] %s358
          %361 = dma.hbm_to_vmem [thread:$0]  %s7, 128, %s359, [#allocation15]
        $region36: #{_lambda_.6} parent=11 // pred_fallthru
          _
      $region12: #{_lambda_.6} parent=5 // pred_fallthru
        _
      %p362 = scmp.lt.s32.totalorder %s31, 2
      // Predicated region
      $region37: #{_lambda_.6} parent=5 // pred_check
        %p363 = pneg %p362
      $region38: #{_lambda_.6} parent=5 // pred_check_branch
        %365 = sbr.rel (%p363) target = $region40
      $region39: #{_lambda_.6} parent=5 // pred_region
        // Predicated region
        $region41: #{_lambda_.6} parent=39 // pred_check
          %p366 = pneg %p65
        $region42: #{_lambda_.6} parent=39 // pred_check_branch
          %368 = sbr.rel (%p366) target = $region44
        $region43: #{_lambda_.6} parent=39 // pred_region
          %s369 = sand.u32 %s55, 1
          %s370 = scalar_lea.sflag [#allocation3], %s369
          %s371 = sand.u32 %s55, 1
          %s372 = smul.addr %s371, 8
          %s373 = scalar_lea.vmem [#allocation2], %s372
          %s374 = smul.u32 2, %s39
          %s376 = ssub.s32 128, 128
          %377 = vsyncadd %s370, %s376
          %s378 = smul.addr %s38, 2
          %s379 = sadd.s32 %s374, %s378
          %s380 = smul.addr %s379, 64
          %s381 = scalar_lea.hbm %s0, %s380
          %s382 = sshll.u32 %s373, 4
          %s383 = int_to_ptr.vmem [resolvable:$true] %s382
          %388 = dma.hbm_to_vmem [thread:$0]  %s381, 128, %s383, %s370, 64, 64, 4
        $region44: #{_lambda_.6} parent=39 // pred_fallthru
          _
        // Predicated region
        $region45: #{_lambda_.6} parent=39 // pred_check
          %p389 = pneg %p91
        $region46: #{_lambda_.6} parent=39 // pred_check_branch
          %391 = sbr.rel (%p389) target = $region48
        $region47: #{_lambda_.6} parent=39 // pred_region
          %s392 = sand.u32 %s31, 1
          %s393 = scalar_lea.sflag [#allocation6], %s392
          %s394 = sand.u32 %s81, 1
          %s395 = smul.addr %s394, 8
          %s396 = scalar_lea.vmem [#allocation5], %s395
          %s398 = ssub.s32 128, 128
          %399 = vsyncadd %s393, %s398
          %s400 = smul.addr %s38, 128
          %s401 = scalar_lea.hbm %s1, %s400
          %s403 = sshll.u32 %s396, 4
          %s404 = int_to_ptr.vmem [resolvable:$true] %s403
          %406 = dma.hbm_to_vmem [thread:$0]  %s401, 128, %s404, %s393
        $region48: #{_lambda_.6} parent=39 // pred_fallthru
          _
      $region40: #{_lambda_.6} parent=5 // pred_fallthru
        _
      %p407 = scmp.le.s32.totalorder 1, %s31
      %p408 = scmp.lt.s32.totalorder %s31, 3
      %p409 = pnand %p407, %p408
      %p410 = pneg %p409
      // Predicated region
      $region49: #{_lambda_.6} parent=5 // pred_check
        _
      $region50: #{_lambda_.6} parent=5 // pred_check_branch
        %412 = sbr.rel (%p409) target = $region52
      $region51: #{_lambda_.6} parent=5 // pred_region
        %s413 = ssub.s32 %s31, 1
        %s414 = sand.u32 %s58, 1
        %s415 = scalar_lea.sflag [#allocation3], %s414
        %s416 = sand.u32 %s58, 1
        %s417 = smul.addr %s416, 8
        %s418 = scalar_lea.vmem [#allocation2], %s417
        // Predicated region
        $region53: #{_lambda_.6} parent=51 // pred_check
          %p419 = pneg %p71
        $region54: #{_lambda_.6} parent=51 // pred_check_branch
          %421 = sbr.rel (%p419) target = $region56
        $region55: #{_lambda_.6} parent=51 // pred_region
          %422 = dma.done %s415, 128
        $region56: #{_lambda_.6} parent=51 // pred_fallthru
          _
        %s423 = sand.u32 %s36, 1
        %s424 = scalar_lea.sflag [#allocation6], %s423
        %s425 = sand.u32 %s84, 1
        %s426 = smul.addr %s425, 8
        %s427 = scalar_lea.vmem [#allocation5], %s426
        // Predicated region
        $region57: #{_lambda_.6} parent=51 // pred_check
          %p428 = pneg %p97
        $region58: #{_lambda_.6} parent=51 // pred_check_branch
          %430 = sbr.rel (%p428) target = $region60
        $region59: #{_lambda_.6} parent=51 // pred_region
          %431 = dma.done %s424, 128
        $region60: #{_lambda_.6} parent=51 // pred_fallthru
          _
        // Predicated region
        $region61: #{_lambda_.6} parent=51 // pred_check
          %p432 = pneg %p118
        $region62: #{_lambda_.6} parent=51 // pred_check_branch
          %434 = sbr.rel (%p432) target = $region64
        $region63: #{_lambda_.6} parent=51 // pred_region
          %435 = dma.done [#allocation6], 64
        $region64: #{_lambda_.6} parent=51 // pred_fallthru
          _
        // Predicated region
        $region65: #{_lambda_.6} parent=51 // pred_check
          %p436 = pneg %p139
        $region66: #{_lambda_.6} parent=51 // pred_check_branch
          %438 = sbr.rel (%p436) target = $region68
        $region67: #{_lambda_.6} parent=51 // pred_region
          %439 = dma.done [#allocation9], 16
        $region68: #{_lambda_.6} parent=51 // pred_fallthru
          _
        // Predicated region
        $region69: #{_lambda_.6} parent=51 // pred_check
          %p440 = pneg %p160
        $region70: #{_lambda_.6} parent=51 // pred_check_branch
          %442 = sbr.rel (%p440) target = $region72
        $region71: #{_lambda_.6} parent=51 // pred_region
          %443 = dma.done [#allocation9], 512
        $region72: #{_lambda_.6} parent=51 // pred_fallthru
          _
        // Predicated region
        $region73: #{_lambda_.6} parent=51 // pred_check
          %p444 = pneg %p181
        $region74: #{_lambda_.6} parent=51 // pred_check_branch
          %446 = sbr.rel (%p444) target = $region76
        $region75: #{_lambda_.6} parent=51 // pred_region
          %447 = dma.done [#allocation12], 16
        $region76: #{_lambda_.6} parent=51 // pred_fallthru
          _
        // Predicated region
        $region77: #{_lambda_.6} parent=51 // pred_check
          %p448 = pneg %p202
        $region78: #{_lambda_.6} parent=51 // pred_check_branch
          %450 = sbr.rel (%p448) target = $region80
        $region79: #{_lambda_.6} parent=51 // pred_region
          %451 = dma.done [#allocation12], 8192
        $region80: #{_lambda_.6} parent=51 // pred_fallthru
          _
        // Predicated region
        $region81: #{_lambda_.6} parent=51 // pred_check
          %p452 = pneg %p223
        $region82: #{_lambda_.6} parent=51 // pred_check_branch
          %454 = sbr.rel (%p452) target = $region84
        $region83: #{_lambda_.6} parent=51 // pred_region
          %455 = dma.done [#allocation15], 128
        $region84: #{_lambda_.6} parent=51 // pred_fallthru
          _
        %s456 = sand.u32 %s58, 1
        %s457 = scalar_lea.sflag [#allocation3], %s456
        %s458 = sand.u32 %s58, 1
        %s459 = smul.addr %s458, 8
        %s460 = scalar_lea.vmem [#allocation2], %s459
        %p461 = pneg %p71
        %p462 = pneg %p68
        %s463 = sand.u32 %s36, 1
        %s464 = scalar_lea.sflag [#allocation6], %s463
        %s465 = sand.u32 %s84, 1
        %s466 = smul.addr %s465, 8
        %s467 = scalar_lea.vmem [#allocation5], %s466
        %p468 = pneg %p97
        %p469 = pneg %p94
        %p470 = pneg %p118
        %p471 = pneg %p115
        %p472 = pneg %p139
        %p473 = pneg %p136
        %p474 = pneg %p160
        %p475 = pneg %p157
        %p476 = pneg %p181
        %p477 = pneg %p178
        %p478 = pneg %p202
        %p479 = pneg %p199
        %p480 = pneg %p223
        %p481 = pneg %p220
        %p482 = pneg %p251
        %p483 = pneg %p248
        %s484 = sand.u32 %s238, 1
        %s485 = scalar_lea.sflag [#allocation4], %s484
        %s486 = sand.u32 %s238, 1
        %s487 = smul.addr %s486, 8
        %s488 = scalar_lea.vmem [#allocation16], %s487
        %p489 = pneg %p277
        %p490 = pneg %p274
        %s491 = sand.u32 %s264, 1
        %s492 = scalar_lea.sflag [#allocation18], %s491
        %s493 = sand.u32 %s264, 1
        %s494 = smul.addr %s493, 8
        %s495 = scalar_lea.vmem [#allocation17], %s494
        %s496 = smul.u32 2, %s41
        %s497 = smul.u32 2, %s41
        %v499 = vld [vmem:[%s418] sm:$0xf]
        %v500 = vld [vmem:[%s418 + $0x4] sm:$0xf]
        %v501 = vunpack.c.l.bf16 %v499
        %v502 = vunpack.c.l.bf16 %v500
        %v503 = vld [vmem:[%s427] sm:$0xff]
        %vm504 = vcmask 64512
        %v506 = vsel %vm504, %v501, 0
        %v509 = vsel %vm504, %v502, 0
        %511 = vmatprep.subr.mxu0 0.0
        %512 = vmatpush1.msra.mxu0 %v503
        %513 = vmatprep.subr.mxu0 0.0
        %514 = vmatpush1.msra.mxu0 0.0
        %515 = vmatprep.subr.mxu0 0.0
        %516 = vmatpush1.msra.mxu0 0.0
        %517 = vmatprep.subr.mxu0 0.0
        %518 = vmatpush1.msra.mxu0 0.0
        %519 = vmatprep.subr.mxu0 0.0
        %520 = vmatpush1.msra.mxu0 0.0
        %521 = vmatprep.subr.mxu0 0.0
        %522 = vmatpush1.msra.mxu0 0.0
        %523 = vmatprep.subr.mxu0 0.0
        %524 = vmatpush1.msra.mxu0 0.0
        %525 = vmatprep.subr.mxu0 0.0
        %526 = vmatpush1.msra.mxu0 0.0
        %527 = vmatprep.subr.mxu0 0.0
        %528 = vmatpush1.msra.mxu0 0.0
        %529 = vmatprep.subr.mxu0 0.0
        %530 = vmatpush1.msra.mxu0 0.0
        %531 = vmatprep.subr.mxu0 0.0
        %532 = vmatpush1.msra.mxu0 0.0
        %533 = vmatprep.subr.mxu0 0.0
        %534 = vmatpush1.msra.mxu0 0.0
        %535 = vmatprep.subr.mxu0 0.0
        %536 = vmatpush1.msra.mxu0 0.0
        %537 = vmatprep.subr.mxu0 0.0
        %538 = vmatpush1.msra.mxu0 0.0
        %539 = vmatprep.subr.mxu0 0.0
        %540 = vmatpush1.msra.mxu0 0.0
        %541 = vmatprep.subr.mxu0 0.0
        %542 = vmatpush1.msra.mxu0 0.0
        %543 = vmatprep.subr.mxu0 0.0
        %544 = vmatpush1.msra.mxu0 0.0
        %545 = vmatprep.subr.mxu0 0.0
        %546 = vmatpush1.msra.mxu0 0.0
        %547 = vmatprep.subr.mxu0 0.0
        %548 = vmatpush1.msra.mxu0 0.0
        %549 = vmatprep.subr.mxu0 0.0
        %550 = vmatpush1.msra.mxu0 0.0
        %551 = vmatprep.subr.mxu0 0.0
        %552 = vmatpush1.msra.mxu0 0.0
        %553 = vmatprep.subr.mxu0 0.0
        %554 = vmatpush1.msra.mxu0 0.0
        %555 = vmatprep.subr.mxu0 0.0
        %556 = vmatpush1.msra.mxu0 0.0
        %557 = vmatprep.subr.mxu0 0.0
        %558 = vmatpush1.msra.mxu0 0.0
        %559 = vmatprep.subr.mxu0 0.0
        %560 = vmatpush1.msra.mxu0 0.0
        %561 = vmatprep.subr.mxu0 0.0
        %562 = vmatpush1.msra.mxu0 0.0
        %563 = vmatprep.subr.mxu0 0.0
        %564 = vmatpush1.msra.mxu0 0.0
        %565 = vmatprep.subr.mxu0 0.0
        %566 = vmatpush1.msra.mxu0 0.0
        %567 = vmatprep.subr.mxu0 0.0
        %568 = vmatpush1.msra.mxu0 0.0
        %569 = vmatprep.subr.mxu0 0.0
        %570 = vmatpush1.msra.mxu0 0.0
        %571 = vmatprep.subr.mxu0 0.0
        %572 = vmatpush1.msra.mxu0 0.0
        %573 = vmatprep.subr.mxu0 0.0
        %574 = vmatpush1.msra.mxu0 0.0
        %575 = vmatprep.mubr.f32.mxu0 0.0
        %576 = vmatmul.mubr.f32.gmra.mrb[0].mxu0 %v506
        %v577 = vpop.f32.mrb[0].mxu0
        %v578 = vadd.f32 0.0, %v577
        %v579 = vpop.f32.mrb[0].mxu0
        %580 = vmatprep.mubr.f32.mxu0 0.0
        %581 = vmatmul.mubr.f32.gmra.mrb[0].mxu0 %v509
        %v582 = vpop.f32.mrb[0].mxu0
        %v583 = vadd.f32 0.0, %v582
        %v584 = vpop.f32.mrb[0].mxu0
        %585 = vdwg.mxu0
        %v586 = vpack.c.bf16 %v583, %v578
        %v587 = vld [vmem:[#allocation7] sm:$0xf]
        %v588 = vld [vmem:[#allocation8] sm:$0x1]
        %v590 = vlaneseq
        %v591 = vshrl.u32 %v590, 7
        %v592 = vsub.s32 0, %v591
        %v593 = vrot.slane %v588, %v592
        %v596 = vsel %vm504, %v586, 0
        %vm598 = vcmask 1043456
        %v600 = vsel %vm598, %v587, 0
        %602 = vmatprep.subr.bf16.mxu0 0
        %603 = vmatpush1.bf16.msra.mxu0 %v600
        %604 = vmatprep.subr.bf16.mxu0 0
        %605 = vmatpush1.bf16.msra.mxu0 0
        %606 = vmatprep.subr.bf16.mxu0 0
        %607 = vmatpush1.bf16.msra.mxu0 0
        %608 = vmatprep.subr.bf16.mxu0 0
        %609 = vmatpush1.bf16.msra.mxu0 0
        %610 = vmatprep.subr.bf16.mxu0 0
        %611 = vmatpush1.bf16.msra.mxu0 0
        %612 = vmatprep.subr.bf16.mxu0 0
        %613 = vmatpush1.bf16.msra.mxu0 0
        %614 = vmatprep.subr.bf16.mxu0 0
        %615 = vmatpush1.bf16.msra.mxu0 0
        %616 = vmatprep.subr.bf16.mxu0 0
        %617 = vmatpush1.bf16.msra.mxu0 0
        %618 = vmatprep.subr.bf16.mxu0 0
        %619 = vmatpush1.bf16.msra.mxu0 0
        %620 = vmatprep.subr.bf16.mxu0 0
        %621 = vmatpush1.bf16.msra.mxu0 0
        %622 = vmatprep.subr.bf16.mxu0 0
        %623 = vmatpush1.bf16.msra.mxu0 0
        %624 = vmatprep.subr.bf16.mxu0 0
        %625 = vmatpush1.bf16.msra.mxu0 0
        %626 = vmatprep.subr.bf16.mxu0 0
        %627 = vmatpush1.bf16.msra.mxu0 0
        %628 = vmatprep.subr.bf16.mxu0 0
        %629 = vmatpush1.bf16.msra.mxu0 0
        %630 = vmatprep.subr.bf16.mxu0 0
        %631 = vmatpush1.bf16.msra.mxu0 0
        %632 = vmatprep.subr.bf16.mxu0 0
        %633 = vmatpush1.bf16.msra.mxu0 0
        %634 = vmatprep.mubr.bf16.mxu0 0
        %635 = vmatmul.mubr.bf16.gmra.mrb[0].mxu0 %v596
        %v636 = vpop.f32.mrb[0].mxu0
        %v637 = vadd.f32 %v593, %v636
        %v638 = vpop.f32.mrb[0].mxu0
        %v639 = vpop.f32.mrb[0].mxu0
        %v640 = vadd.f32 %v593, %v639
        %v641 = vpop.f32.mrb[0].mxu0
        %642 = vdwg.mxu0
        %v643 = vmax.f32 %v637, 0.0
        %v644 = vmax.f32 %v640, 0.0
        %v645 = vpack.c.bf16 %v644, %v643
        %v647 = vunpack.c.l.b16 %v645
        %v648 = vunpack.c.h.b16 %v645
        %v649 = vpack.c.b16 %v647, %v647
        %v650 = vpack.c.b16 %v648, %v648
        %vm653 = vcmask 519168
        %654 = vst.msk [vmem:[%s488] sm:$0xf] %vm653, %v649
        %655 = vst.msk [vmem:[%s488 + $0x4] sm:$0xf] %vm653, %v650
        %v656 = vld [vmem:[#allocation10] sm:$0xf]
        %v657 = vld [vmem:[#allocation10 + $0x4] sm:$0xf]
        %v658 = vld [vmem:[#allocation10 + $0x8] sm:$0xf]
        %v659 = vld [vmem:[#allocation10 + $0xc] sm:$0xf]
        %v660 = vld [vmem:[#allocation10 + $0x10] sm:$0xf]
        %v661 = vld [vmem:[#allocation10 + $0x14] sm:$0xf]
        %v662 = vld [vmem:[#allocation10 + $0x18] sm:$0xf]
        %v663 = vld [vmem:[#allocation10 + $0x1c] sm:$0xf]
        %v664 = vld [vmem:[#allocation11] sm:$0x1]
        %v666 = vlaneseq
        %v667 = vshrl.u32 %v666, 7
        %v668 = vsub.s32 0, %v667
        %v669 = vrot.slane %v664, %v668
        %v679 = vunpack.c.l.b16 %v656
        %v680 = vunpack.c.l.b16 %v657
        %v681 = vunpack.c.l.b16 %v658
        %v682 = vunpack.c.l.b16 %v659
        %v683 = vunpack.c.l.b16 %v660
        %v684 = vunpack.c.l.b16 %v661
        %v685 = vunpack.c.l.b16 %v662
        %v686 = vunpack.c.l.b16 %v663
        %v687 = vpack.c.b16 %v680, %v679
        %v688 = vpack.c.b16 %v682, %v681
        %v689 = vpack.c.b16 %v684, %v683
        %v690 = vpack.c.b16 %v686, %v685
        %vm695 = vcmask 523264
        %v697 = vsel %vm695, %v645, 0
        %699 = vmatprep.subr.bf16.mxu0 0
        %700 = vmatpush1.bf16.msra.mxu0 %v687
        %701 = vmatprep.subr.bf16.mxu0 0
        %702 = vmatpush1.bf16.msra.mxu0 %v688
        %703 = vmatprep.subr.bf16.mxu0 0
        %704 = vmatpush1.bf16.msra.mxu0 %v689
        %705 = vmatprep.subr.bf16.mxu0 0
        %706 = vmatpush1.bf16.msra.mxu0 %v690
        %707 = vmatprep.subr.bf16.mxu0 0
        %708 = vmatpush1.bf16.msra.mxu0 0
        %709 = vmatprep.subr.bf16.mxu0 0
        %710 = vmatpush1.bf16.msra.mxu0 0
        %711 = vmatprep.subr.bf16.mxu0 0
        %712 = vmatpush1.bf16.msra.mxu0 0
        %713 = vmatprep.subr.bf16.mxu0 0
        %714 = vmatpush1.bf16.msra.mxu0 0
        %715 = vmatprep.subr.bf16.mxu0 0
        %716 = vmatpush1.bf16.msra.mxu0 0
        %717 = vmatprep.subr.bf16.mxu0 0
        %718 = vmatpush1.bf16.msra.mxu0 0
        %719 = vmatprep.subr.bf16.mxu0 0
        %720 = vmatpush1.bf16.msra.mxu0 0
        %721 = vmatprep.subr.bf16.mxu0 0
        %722 = vmatpush1.bf16.msra.mxu0 0
        %723 = vmatprep.subr.bf16.mxu0 0
        %724 = vmatpush1.bf16.msra.mxu0 0
        %725 = vmatprep.subr.bf16.mxu0 0
        %726 = vmatpush1.bf16.msra.mxu0 0
        %727 = vmatprep.subr.bf16.mxu0 0
        %728 = vmatpush1.bf16.msra.mxu0 0
        %729 = vmatprep.subr.bf16.mxu0 0
        %730 = vmatpush1.bf16.msra.mxu0 0
        %731 = vmatprep.mubr.bf16.mxu0 0
        %732 = vmatmul.mubr.bf16.gmra.mrb[0].mxu0 %v697
        %v733 = vpop.f32.mrb[0].mxu0
        %v734 = vadd.f32 %v669, %v733
        %v735 = vpop.f32.mrb[0].mxu0
        %v736 = vpop.f32.mrb[0].mxu0
        %v737 = vadd.f32 %v669, %v736
        %v738 = vpop.f32.mrb[0].mxu0
        %739 = vdwg.mxu0
        %v740 = vmax.f32 %v734, 0.0
        %v741 = vmax.f32 %v737, 0.0
        %v742 = vpack.c.bf16 %v741, %v740
        %v743 = vld [vmem:[#allocation13] sm:$0xff]
        %v744 = vld [vmem:[#allocation13 + $0x8] sm:$0xff]
        %v745 = vld [vmem:[#allocation13 + $0x10] sm:$0xff]
        %v746 = vld [vmem:[#allocation13 + $0x18] sm:$0xff]
        %v747 = vld [vmem:[#allocation13 + $0x20] sm:$0xff]
        %v748 = vld [vmem:[#allocation13 + $0x28] sm:$0xff]
        %v749 = vld [vmem:[#allocation13 + $0x30] sm:$0xff]
        %v750 = vld [vmem:[#allocation13 + $0x38] sm:$0xff]
        %v751 = vld [vmem:[#allocation13 + $0x40] sm:$0xff]
        %v752 = vld [vmem:[#allocation13 + $0x48] sm:$0xff]
        %v753 = vld [vmem:[#allocation13 + $0x50] sm:$0xff]
        %v754 = vld [vmem:[#allocation13 + $0x58] sm:$0xff]
        %v755 = vld [vmem:[#allocation13 + $0x60] sm:$0xff]
        %v756 = vld [vmem:[#allocation13 + $0x68] sm:$0xff]
        %v757 = vld [vmem:[#allocation13 + $0x70] sm:$0xff]
        %v758 = vld [vmem:[#allocation13 + $0x78] sm:$0xff]
        %v759 = vld [vmem:[#allocation13 + $0x80] sm:$0xff]
        %v760 = vld [vmem:[#allocation13 + $0x88] sm:$0xff]
        %v761 = vld [vmem:[#allocation13 + $0x90] sm:$0xff]
        %v762 = vld [vmem:[#allocation13 + $0x98] sm:$0xff]
        %v763 = vld [vmem:[#allocation13 + $0xa0] sm:$0xff]
        %v764 = vld [vmem:[#allocation13 + $0xa8] sm:$0xff]
        %v765 = vld [vmem:[#allocation13 + $0xb0] sm:$0xff]
        %v766 = vld [vmem:[#allocation13 + $0xb8] sm:$0xff]
        %v767 = vld [vmem:[#allocation13 + $0xc0] sm:$0xff]
        %v768 = vld [vmem:[#allocation13 + $0xc8] sm:$0xff]
        %v769 = vld [vmem:[#allocation13 + $0xd0] sm:$0xff]
        %v770 = vld [vmem:[#allocation13 + $0xd8] sm:$0xff]
        %v771 = vld [vmem:[#allocation13 + $0xe0] sm:$0xff]
        %v772 = vld [vmem:[#allocation13 + $0xe8] sm:$0xff]
        %v773 = vld [vmem:[#allocation13 + $0xf0] sm:$0xff]
        %v774 = vld [vmem:[#allocation13 + $0xf8] sm:$0xff]
        %v775 = vld [vmem:[#allocation13 + $0x100] sm:$0xff]
        %v776 = vld [vmem:[#allocation13 + $0x108] sm:$0xff]
        %v777 = vld [vmem:[#allocation13 + $0x110] sm:$0xff]
        %v778 = vld [vmem:[#allocation13 + $0x118] sm:$0xff]
        %v779 = vld [vmem:[#allocation13 + $0x120] sm:$0xff]
        %v780 = vld [vmem:[#allocation13 + $0x128] sm:$0xff]
        %v781 = vld [vmem:[#allocation13 + $0x130] sm:$0xff]
        %v782 = vld [vmem:[#allocation13 + $0x138] sm:$0xff]
        %v783 = vld [vmem:[#allocation13 + $0x140] sm:$0xff]
        %v784 = vld [vmem:[#allocation13 + $0x148] sm:$0xff]
        %v785 = vld [vmem:[#allocation13 + $0x150] sm:$0xff]
        %v786 = vld [vmem:[#allocation13 + $0x158] sm:$0xff]
        %v787 = vld [vmem:[#allocation13 + $0x160] sm:$0xff]
        %v788 = vld [vmem:[#allocation13 + $0x168] sm:$0xff]
        %v789 = vld [vmem:[#allocation13 + $0x170] sm:$0xff]
        %v790 = vld [vmem:[#allocation13 + $0x178] sm:$0xff]
        %v791 = vld [vmem:[#allocation13 + $0x180] sm:$0xff]
        %v792 = vld [vmem:[#allocation13 + $0x188] sm:$0xff]
        %v793 = vld [vmem:[#allocation13 + $0x190] sm:$0xff]
        %v794 = vld [vmem:[#allocation13 + $0x198] sm:$0xff]
        %v795 = vld [vmem:[#allocation13 + $0x1a0] sm:$0xff]
        %v796 = vld [vmem:[#allocation13 + $0x1a8] sm:$0xff]
        %v797 = vld [vmem:[#allocation13 + $0x1b0] sm:$0xff]
        %v798 = vld [vmem:[#allocation13 + $0x1b8] sm:$0xff]
        %v799 = vld [vmem:[#allocation13 + $0x1c0] sm:$0xff]
        %v800 = vld [vmem:[#allocation13 + $0x1c8] sm:$0xff]
        %v801 = vld [vmem:[#allocation13 + $0x1d0] sm:$0xff]
        %v802 = vld [vmem:[#allocation13 + $0x1d8] sm:$0xff]
        %v803 = vld [vmem:[#allocation13 + $0x1e0] sm:$0xff]
        %v804 = vld [vmem:[#allocation13 + $0x1e8] sm:$0xff]
        %v805 = vld [vmem:[#allocation13 + $0x1f0] sm:$0xff]
        %v806 = vld [vmem:[#allocation13 + $0x1f8] sm:$0xff]
        %v807 = vld [vmem:[#allocation14] sm:$0xff]
        %v809 = vlaneseq
        %v810 = vshrl.u32 %v809, 7
        %v811 = vsub.s32 0, %v810
        %v812 = vrot.slane %v807, %v811
        %v813 = vlaneseq
        %v814 = vshrl.u32 %v813, 7
        %v815 = vsub.s32 1, %v814
        %v816 = vrot.slane %v807, %v815
        %v817 = vlaneseq
        %v818 = vshrl.u32 %v817, 7
        %v819 = vsub.s32 2, %v818
        %v820 = vrot.slane %v807, %v819
        %v821 = vlaneseq
        %v822 = vshrl.u32 %v821, 7
        %v823 = vsub.s32 3, %v822
        %v824 = vrot.slane %v807, %v823
        %v825 = vlaneseq
        %v826 = vshrl.u32 %v825, 7
        %v827 = vsub.s32 4, %v826
        %v828 = vrot.slane %v807, %v827
        %v829 = vlaneseq
        %v830 = vshrl.u32 %v829, 7
        %v831 = vsub.s32 5, %v830
        %v832 = vrot.slane %v807, %v831
        %v833 = vlaneseq
        %v834 = vshrl.u32 %v833, 7
        %v835 = vsub.s32 6, %v834
        %v836 = vrot.slane %v807, %v835
        %v837 = vlaneseq
        %v838 = vshrl.u32 %v837, 7
        %v839 = vsub.s32 7, %v838
        %v840 = vrot.slane %v807, %v839
        %v913 = vunpack.c.l.b16 %v743
        %v914 = vunpack.c.h.b16 %v743
        %v915 = vunpack.c.l.b16 %v744
        %v916 = vunpack.c.h.b16 %v744
        %v917 = vunpack.c.l.b16 %v745
        %v918 = vunpack.c.h.b16 %v745
        %v919 = vunpack.c.l.b16 %v746
        %v920 = vunpack.c.h.b16 %v746
        %v921 = vunpack.c.l.b16 %v747
        %v922 = vunpack.c.h.b16 %v747
        %v923 = vunpack.c.l.b16 %v748
        %v924 = vunpack.c.h.b16 %v748
        %v925 = vunpack.c.l.b16 %v749
        %v926 = vunpack.c.h.b16 %v749
        %v927 = vunpack.c.l.b16 %v750
        %v928 = vunpack.c.h.b16 %v750
        %v929 = vunpack.c.l.b16 %v751
        %v930 = vunpack.c.h.b16 %v751
        %v931 = vunpack.c.l.b16 %v752
        %v932 = vunpack.c.h.b16 %v752
        %v933 = vunpack.c.l.b16 %v753
        %v934 = vunpack.c.h.b16 %v753
        %v935 = vunpack.c.l.b16 %v754
        %v936 = vunpack.c.h.b16 %v754
        %v937 = vunpack.c.l.b16 %v755
        %v938 = vunpack.c.h.b16 %v755
        %v939 = vunpack.c.l.b16 %v756
        %v940 = vunpack.c.h.b16 %v756
        %v941 = vunpack.c.l.b16 %v757
        %v942 = vunpack.c.h.b16 %v757
        %v943 = vunpack.c.l.b16 %v758
        %v944 = vunpack.c.h.b16 %v758
        %v945 = vunpack.c.l.b16 %v759
        %v946 = vunpack.c.h.b16 %v759
        %v947 = vunpack.c.l.b16 %v760
        %v948 = vunpack.c.h.b16 %v760
        %v949 = vunpack.c.l.b16 %v761
        %v950 = vunpack.c.h.b16 %v761
        %v951 = vunpack.c.l.b16 %v762
        %v952 = vunpack.c.h.b16 %v762
        %v953 = vunpack.c.l.b16 %v763
        %v954 = vunpack.c.h.b16 %v763
        %v955 = vunpack.c.l.b16 %v764
        %v956 = vunpack.c.h.b16 %v764
        %v957 = vunpack.c.l.b16 %v765
        %v958 = vunpack.c.h.b16 %v765
        %v959 = vunpack.c.l.b16 %v766
        %v960 = vunpack.c.h.b16 %v766
        %v961 = vunpack.c.l.b16 %v767
        %v962 = vunpack.c.h.b16 %v767
        %v963 = vunpack.c.l.b16 %v768
        %v964 = vunpack.c.h.b16 %v768
        %v965 = vunpack.c.l.b16 %v769
        %v966 = vunpack.c.h.b16 %v769
        %v967 = vunpack.c.l.b16 %v770
        %v968 = vunpack.c.h.b16 %v770
        %v969 = vunpack.c.l.b16 %v771
        %v970 = vunpack.c.h.b16 %v771
        %v971 = vunpack.c.l.b16 %v772
        %v972 = vunpack.c.h.b16 %v772
        %v973 = vunpack.c.l.b16 %v773
        %v974 = vunpack.c.h.b16 %v773
        %v975 = vunpack.c.l.b16 %v774
        %v976 = vunpack.c.h.b16 %v774
        %v977 = vunpack.c.l.b16 %v775
        %v978 = vunpack.c.h.b16 %v775
        %v979 = vunpack.c.l.b16 %v776
        %v980 = vunpack.c.h.b16 %v776
        %v981 = vunpack.c.l.b16 %v777
        %v982 = vunpack.c.h.b16 %v777
        %v983 = vunpack.c.l.b16 %v778
        %v984 = vunpack.c.h.b16 %v778
        %v985 = vunpack.c.l.b16 %v779
        %v986 = vunpack.c.h.b16 %v779
        %v987 = vunpack.c.l.b16 %v780
        %v988 = vunpack.c.h.b16 %v780
        %v989 = vunpack.c.l.b16 %v781
        %v990 = vunpack.c.h.b16 %v781
        %v991 = vunpack.c.l.b16 %v782
        %v992 = vunpack.c.h.b16 %v782
        %v993 = vunpack.c.l.b16 %v783
        %v994 = vunpack.c.h.b16 %v783
        %v995 = vunpack.c.l.b16 %v784
        %v996 = vunpack.c.h.b16 %v784
        %v997 = vunpack.c.l.b16 %v785
        %v998 = vunpack.c.h.b16 %v785
        %v999 = vunpack.c.l.b16 %v786
        %v1000 = vunpack.c.h.b16 %v786
        %v1001 = vunpack.c.l.b16 %v787
        %v1002 = vunpack.c.h.b16 %v787
        %v1003 = vunpack.c.l.b16 %v788
        %v1004 = vunpack.c.h.b16 %v788
        %v1005 = vunpack.c.l.b16 %v789
        %v1006 = vunpack.c.h.b16 %v789
        %v1007 = vunpack.c.l.b16 %v790
        %v1008 = vunpack.c.h.b16 %v790
        %v1009 = vunpack.c.l.b16 %v791
        %v1010 = vunpack.c.h.b16 %v791
        %v1011 = vunpack.c.l.b16 %v792
        %v1012 = vunpack.c.h.b16 %v792
        %v1013 = vunpack.c.l.b16 %v793
        %v1014 = vunpack.c.h.b16 %v793
        %v1015 = vunpack.c.l.b16 %v794
        %v1016 = vunpack.c.h.b16 %v794
        %v1017 = vunpack.c.l.b16 %v795
        %v1018 = vunpack.c.h.b16 %v795
        %v1019 = vunpack.c.l.b16 %v796
        %v1020 = vunpack.c.h.b16 %v796
        %v1021 = vunpack.c.l.b16 %v797
        %v1022 = vunpack.c.h.b16 %v797
        %v1023 = vunpack.c.l.b16 %v798
        %v1024 = vunpack.c.h.b16 %v798
        %v1025 = vunpack.c.l.b16 %v799
        %v1026 = vunpack.c.h.b16 %v799
        %v1027 = vunpack.c.l.b16 %v800
        %v1028 = vunpack.c.h.b16 %v800
        %v1029 = vunpack.c.l.b16 %v801
        %v1030 = vunpack.c.h.b16 %v801
        %v1031 = vunpack.c.l.b16 %v802
        %v1032 = vunpack.c.h.b16 %v802
        %v1033 = vunpack.c.l.b16 %v803
        %v1034 = vunpack.c.h.b16 %v803
        %v1035 = vunpack.c.l.b16 %v804
        %v1036 = vunpack.c.h.b16 %v804
        %v1037 = vunpack.c.l.b16 %v805
        %v1038 = vunpack.c.h.b16 %v805
        %v1039 = vunpack.c.l.b16 %v806
        %v1040 = vunpack.c.h.b16 %v806
        %v1041 = vpack.c.b16 %v921, %v913
        %v1042 = vpack.c.b16 %v922, %v914
        %v1043 = vpack.c.b16 %v923, %v915
        %v1044 = vpack.c.b16 %v924, %v916
        %v1045 = vpack.c.b16 %v925, %v917
        %v1046 = vpack.c.b16 %v926, %v918
        %v1047 = vpack.c.b16 %v927, %v919
        %v1048 = vpack.c.b16 %v928, %v920
        %v1049 = vpack.c.b16 %v937, %v929
        %v1050 = vpack.c.b16 %v938, %v930
        %v1051 = vpack.c.b16 %v939, %v931
        %v1052 = vpack.c.b16 %v940, %v932
        %v1053 = vpack.c.b16 %v941, %v933
        %v1054 = vpack.c.b16 %v942, %v934
        %v1055 = vpack.c.b16 %v943, %v935
        %v1056 = vpack.c.b16 %v944, %v936
        %v1057 = vpack.c.b16 %v953, %v945
        %v1058 = vpack.c.b16 %v954, %v946
        %v1059 = vpack.c.b16 %v955, %v947
        %v1060 = vpack.c.b16 %v956, %v948
        %v1061 = vpack.c.b16 %v957, %v949
        %v1062 = vpack.c.b16 %v958, %v950
        %v1063 = vpack.c.b16 %v959, %v951
        %v1064 = vpack.c.b16 %v960, %v952
        %v1065 = vpack.c.b16 %v969, %v961
        %v1066 = vpack.c.b16 %v970, %v962
        %v1067 = vpack.c.b16 %v971, %v963
        %v1068 = vpack.c.b16 %v972, %v964
        %v1069 = vpack.c.b16 %v973, %v965
        %v1070 = vpack.c.b16 %v974, %v966
        %v1071 = vpack.c.b16 %v975, %v967
        %v1072 = vpack.c.b16 %v976, %v968
        %v1073 = vpack.c.b16 %v985, %v977
        %v1074 = vpack.c.b16 %v986, %v978
        %v1075 = vpack.c.b16 %v987, %v979
        %v1076 = vpack.c.b16 %v988, %v980
        %v1077 = vpack.c.b16 %v989, %v981
        %v1078 = vpack.c.b16 %v990, %v982
        %v1079 = vpack.c.b16 %v991, %v983
        %v1080 = vpack.c.b16 %v992, %v984
        %v1081 = vpack.c.b16 %v1001, %v993
        %v1082 = vpack.c.b16 %v1002, %v994
        %v1083 = vpack.c.b16 %v1003, %v995
        %v1084 = vpack.c.b16 %v1004, %v996
        %v1085 = vpack.c.b16 %v1005, %v997
        %v1086 = vpack.c.b16 %v1006, %v998
        %v1087 = vpack.c.b16 %v1007, %v999
        %v1088 = vpack.c.b16 %v1008, %v1000
        %v1089 = vpack.c.b16 %v1017, %v1009
        %v1090 = vpack.c.b16 %v1018, %v1010
        %v1091 = vpack.c.b16 %v1019, %v1011
        %v1092 = vpack.c.b16 %v1020, %v1012
        %v1093 = vpack.c.b16 %v1021, %v1013
        %v1094 = vpack.c.b16 %v1022, %v1014
        %v1095 = vpack.c.b16 %v1023, %v1015
        %v1096 = vpack.c.b16 %v1024, %v1016
        %v1097 = vpack.c.b16 %v1033, %v1025
        %v1098 = vpack.c.b16 %v1034, %v1026
        %v1099 = vpack.c.b16 %v1035, %v1027
        %v1100 = vpack.c.b16 %v1036, %v1028
        %v1101 = vpack.c.b16 %v1037, %v1029
        %v1102 = vpack.c.b16 %v1038, %v1030
        %v1103 = vpack.c.b16 %v1039, %v1031
        %v1104 = vpack.c.b16 %v1040, %v1032
        %1169 = vmatprep.subr.bf16.mxu0 %v1042
        %1170 = vmatpush1.bf16.msra.mxu0 %v1041
        %1171 = vmatprep.subr.bf16.mxu0 %v1050
        %1172 = vmatpush1.bf16.msra.mxu0 %v1049
        %1173 = vmatprep.subr.bf16.mxu0 %v1058
        %1174 = vmatpush1.bf16.msra.mxu0 %v1057
        %1175 = vmatprep.subr.bf16.mxu0 %v1066
        %1176 = vmatpush1.bf16.msra.mxu0 %v1065
        %1177 = vmatprep.subr.bf16.mxu0 %v1074
        %1178 = vmatpush1.bf16.msra.mxu0 %v1073
        %1179 = vmatprep.subr.bf16.mxu0 %v1082
        %1180 = vmatpush1.bf16.msra.mxu0 %v1081
        %1181 = vmatprep.subr.bf16.mxu0 %v1090
        %1182 = vmatpush1.bf16.msra.mxu0 %v1089
        %1183 = vmatprep.subr.bf16.mxu0 %v1098
        %1184 = vmatpush1.bf16.msra.mxu0 %v1097
        %1185 = vmatprep.subr.bf16.mxu0 0
        %1186 = vmatpush1.bf16.msra.mxu0 0
        %1187 = vmatprep.subr.bf16.mxu0 0
        %1188 = vmatpush1.bf16.msra.mxu0 0
        %1189 = vmatprep.subr.bf16.mxu0 0
        %1190 = vmatpush1.bf16.msra.mxu0 0
        %1191 = vmatprep.subr.bf16.mxu0 0
        %1192 = vmatpush1.bf16.msra.mxu0 0
        %1193 = vmatprep.subr.bf16.mxu0 0
        %1194 = vmatpush1.bf16.msra.mxu0 0
        %1195 = vmatprep.subr.bf16.mxu0 0
        %1196 = vmatpush1.bf16.msra.mxu0 0
        %1197 = vmatprep.subr.bf16.mxu0 0
        %1198 = vmatpush1.bf16.msra.mxu0 0
        %1199 = vmatprep.subr.bf16.mxu0 0
        %1200 = vmatpush1.bf16.msra.mxu0 0
        %1201 = vmatprep.mubr.bf16.mxu0 0
        %1202 = vmatmul.mubr.bf16.gmra.mrb[0].mxu0 %v742
        %v1203 = vpop.f32.mrb[0].mxu0
        %v1204 = vadd.f32 %v812, %v1203
        %v1205 = vpop.f32.mrb[0].mxu0
        %v1206 = vadd.f32 %v816, %v1205
        %v1207 = vpop.f32.mrb[0].mxu0
        %v1208 = vadd.f32 %v812, %v1207
        %v1209 = vpop.f32.mrb[0].mxu0
        %v1210 = vadd.f32 %v816, %v1209
        %1211 = vdwg.mxu0
        %1212 = vmatprep.subr.bf16.mxu0 %v1044
        %1213 = vmatpush1.bf16.msra.mxu0 %v1043
        %1214 = vmatprep.subr.bf16.mxu0 %v1052
        %1215 = vmatpush1.bf16.msra.mxu0 %v1051
        %1216 = vmatprep.subr.bf16.mxu0 %v1060
        %1217 = vmatpush1.bf16.msra.mxu0 %v1059
        %1218 = vmatprep.subr.bf16.mxu0 %v1068
        %1219 = vmatpush1.bf16.msra.mxu0 %v1067
        %1220 = vmatprep.subr.bf16.mxu0 %v1076
        %1221 = vmatpush1.bf16.msra.mxu0 %v1075
        %1222 = vmatprep.subr.bf16.mxu0 %v1084
        %1223 = vmatpush1.bf16.msra.mxu0 %v1083
        %1224 = vmatprep.subr.bf16.mxu0 %v1092
        %1225 = vmatpush1.bf16.msra.mxu0 %v1091
        %1226 = vmatprep.subr.bf16.mxu0 %v1100
        %1227 = vmatpush1.bf16.msra.mxu0 %v1099
        %1228 = vmatprep.subr.bf16.mxu0 0
        %1229 = vmatpush1.bf16.msra.mxu0 0
        %1230 = vmatprep.subr.bf16.mxu0 0
        %1231 = vmatpush1.bf16.msra.mxu0 0
        %1232 = vmatprep.subr.bf16.mxu0 0
        %1233 = vmatpush1.bf16.msra.mxu0 0
        %1234 = vmatprep.subr.bf16.mxu0 0
        %1235 = vmatpush1.bf16.msra.mxu0 0
        %1236 = vmatprep.subr.bf16.mxu0 0
        %1237 = vmatpush1.bf16.msra.mxu0 0
        %1238 = vmatprep.subr.bf16.mxu0 0
        %1239 = vmatpush1.bf16.msra.mxu0 0
        %1240 = vmatprep.subr.bf16.mxu0 0
        %1241 = vmatpush1.bf16.msra.mxu0 0
        %1242 = vmatprep.subr.bf16.mxu0 0
        %1243 = vmatpush1.bf16.msra.mxu0 0
        %1244 = vmatprep.mubr.bf16.mxu0 0
        %1245 = vmatmul.mubr.bf16.gmra.mrb[0].mxu0 %v742
        %v1246 = vpop.f32.mrb[0].mxu0
        %v1247 = vadd.f32 %v820, %v1246
        %v1248 = vpop.f32.mrb[0].mxu0
        %v1249 = vadd.f32 %v824, %v1248
        %v1250 = vpop.f32.mrb[0].mxu0
        %v1251 = vadd.f32 %v820, %v1250
        %v1252 = vpop.f32.mrb[0].mxu0
        %v1253 = vadd.f32 %v824, %v1252
        %1254 = vdwg.mxu0
        %1255 = vmatprep.subr.bf16.mxu0 %v1046
        %1256 = vmatpush1.bf16.msra.mxu0 %v1045
        %1257 = vmatprep.subr.bf16.mxu0 %v1054
        %1258 = vmatpush1.bf16.msra.mxu0 %v1053
        %1259 = vmatprep.subr.bf16.mxu0 %v1062
        %1260 = vmatpush1.bf16.msra.mxu0 %v1061
        %1261 = vmatprep.subr.bf16.mxu0 %v1070
        %1262 = vmatpush1.bf16.msra.mxu0 %v1069
        %1263 = vmatprep.subr.bf16.mxu0 %v1078
        %1264 = vmatpush1.bf16.msra.mxu0 %v1077
        %1265 = vmatprep.subr.bf16.mxu0 %v1086
        %1266 = vmatpush1.bf16.msra.mxu0 %v1085
        %1267 = vmatprep.subr.bf16.mxu0 %v1094
        %1268 = vmatpush1.bf16.msra.mxu0 %v1093
        %1269 = vmatprep.subr.bf16.mxu0 %v1102
        %1270 = vmatpush1.bf16.msra.mxu0 %v1101
        %1271 = vmatprep.subr.bf16.mxu0 0
        %1272 = vmatpush1.bf16.msra.mxu0 0
        %1273 = vmatprep.subr.bf16.mxu0 0
        %1274 = vmatpush1.bf16.msra.mxu0 0
        %1275 = vmatprep.subr.bf16.mxu0 0
        %1276 = vmatpush1.bf16.msra.mxu0 0
        %1277 = vmatprep.subr.bf16.mxu0 0
        %1278 = vmatpush1.bf16.msra.mxu0 0
        %1279 = vmatprep.subr.bf16.mxu0 0
        %1280 = vmatpush1.bf16.msra.mxu0 0
        %1281 = vmatprep.subr.bf16.mxu0 0
        %1282 = vmatpush1.bf16.msra.mxu0 0
        %1283 = vmatprep.subr.bf16.mxu0 0
        %1284 = vmatpush1.bf16.msra.mxu0 0
        %1285 = vmatprep.subr.bf16.mxu0 0
        %1286 = vmatpush1.bf16.msra.mxu0 0
        %1287 = vmatprep.mubr.bf16.mxu0 0
        %1288 = vmatmul.mubr.bf16.gmra.mrb[0].mxu0 %v742
        %v1289 = vpop.f32.mrb[0].mxu0
        %v1290 = vadd.f32 %v828, %v1289
        %v1291 = vpop.f32.mrb[0].mxu0
        %v1292 = vadd.f32 %v832, %v1291
        %v1293 = vpop.f32.mrb[0].mxu0
        %v1294 = vadd.f32 %v828, %v1293
        %v1295 = vpop.f32.mrb[0].mxu0
        %v1296 = vadd.f32 %v832, %v1295
        %1297 = vdwg.mxu0
        %1298 = vmatprep.subr.bf16.mxu0 %v1048
        %1299 = vmatpush1.bf16.msra.mxu0 %v1047
        %1300 = vmatprep.subr.bf16.mxu0 %v1056
        %1301 = vmatpush1.bf16.msra.mxu0 %v1055
        %1302 = vmatprep.subr.bf16.mxu0 %v1064
        %1303 = vmatpush1.bf16.msra.mxu0 %v1063
        %1304 = vmatprep.subr.bf16.mxu0 %v1072
        %1305 = vmatpush1.bf16.msra.mxu0 %v1071
        %1306 = vmatprep.subr.bf16.mxu0 %v1080
        %1307 = vmatpush1.bf16.msra.mxu0 %v1079
        %1308 = vmatprep.subr.bf16.mxu0 %v1088
        %1309 = vmatpush1.bf16.msra.mxu0 %v1087
        %1310 = vmatprep.subr.bf16.mxu0 %v1096
        %1311 = vmatpush1.bf16.msra.mxu0 %v1095
        %1312 = vmatprep.subr.bf16.mxu0 %v1104
        %1313 = vmatpush1.bf16.msra.mxu0 %v1103
        %1314 = vmatprep.subr.bf16.mxu0 0
        %1315 = vmatpush1.bf16.msra.mxu0 0
        %1316 = vmatprep.subr.bf16.mxu0 0
        %1317 = vmatpush1.bf16.msra.mxu0 0
        %1318 = vmatprep.subr.bf16.mxu0 0
        %1319 = vmatpush1.bf16.msra.mxu0 0
        %1320 = vmatprep.subr.bf16.mxu0 0
        %1321 = vmatpush1.bf16.msra.mxu0 0
        %1322 = vmatprep.subr.bf16.mxu0 0
        %1323 = vmatpush1.bf16.msra.mxu0 0
        %1324 = vmatprep.subr.bf16.mxu0 0
        %1325 = vmatpush1.bf16.msra.mxu0 0
        %1326 = vmatprep.subr.bf16.mxu0 0
        %1327 = vmatpush1.bf16.msra.mxu0 0
        %1328 = vmatprep.subr.bf16.mxu0 0
        %1329 = vmatpush1.bf16.msra.mxu0 0
        %1330 = vmatprep.mubr.bf16.mxu0 0
        %1331 = vmatmul.mubr.bf16.gmra.mrb[0].mxu0 %v742
        %v1332 = vpop.f32.mrb[0].mxu0
        %v1333 = vadd.f32 %v836, %v1332
        %v1334 = vpop.f32.mrb[0].mxu0
        %v1335 = vadd.f32 %v840, %v1334
        %v1336 = vpop.f32.mrb[0].mxu0
        %v1337 = vadd.f32 %v836, %v1336
        %v1338 = vpop.f32.mrb[0].mxu0
        %v1339 = vadd.f32 %v840, %v1338
        %1340 = vdwg.mxu0
        %s1341 = smul.u32 %s41, 16
        %v1342 = vlaneseq
        %v1343 = vshrl.u32 %v1342, 7
        %v1344 = vadd.s32 %v1343, 8
        %v1345 = vstv %s1341
        %v1346 = vadd.s32 %v1345, %v1343
        %v1347 = vadd.s32 %v1345, %v1344
        %vm1348 = vcmp.lt.s32.totalorder %v1346, 16
        %vm1349 = vcmp.lt.s32.totalorder %v1347, 16
        %v1350 = vsel %vm1348, 1, 0
        %v1351 = vsel %vm1349, 1, 0
        %vm1352 = vcmp.eq.s32.totalorder %v1350, 1
        %vm1353 = vcmp.eq.s32.totalorder %v1351, 1
        %v1354 = vsel %vm1352, %v1204, -inf
        %v1355 = vsel %vm1352, %v1206, -inf
        %v1356 = vsel %vm1352, %v1247, -inf
        %v1357 = vsel %vm1352, %v1249, -inf
        %v1358 = vsel %vm1352, %v1290, -inf
        %v1359 = vsel %vm1352, %v1292, -inf
        %v1360 = vsel %vm1352, %v1333, -inf
        %v1361 = vsel %vm1352, %v1335, -inf
        %v1362 = vsel %vm1353, %v1208, -inf
        %v1363 = vsel %vm1353, %v1210, -inf
        %v1364 = vsel %vm1353, %v1251, -inf
        %v1365 = vsel %vm1353, %v1253, -inf
        %v1366 = vsel %vm1353, %v1294, -inf
        %v1367 = vsel %vm1353, %v1296, -inf
        %v1368 = vsel %vm1353, %v1337, -inf
        %v1369 = vsel %vm1353, %v1339, -inf
        %v1370 = vmax.f32 %v1354, %v1362
        %v1371 = vrot.slane %v1370, 4
        %v1372 = vmax.f32 %v1370, %v1371
        %v1373 = vrot.slane %v1372, 2
        %v1374 = vmax.f32 %v1372, %v1373
        %v1375 = vrot.slane %v1374, 1
        %v1376 = vmax.f32 %v1374, %v1375
        %v1377 = vmax.f32 %v1355, %v1363
        %v1378 = vrot.slane %v1377, 4
        %v1379 = vmax.f32 %v1377, %v1378
        %v1380 = vrot.slane %v1379, 2
        %v1381 = vmax.f32 %v1379, %v1380
        %v1382 = vrot.slane %v1381, 1
        %v1383 = vmax.f32 %v1381, %v1382
        %v1384 = vmax.f32 %v1356, %v1364
        %v1385 = vrot.slane %v1384, 4
        %v1386 = vmax.f32 %v1384, %v1385
        %v1387 = vrot.slane %v1386, 2
        %v1388 = vmax.f32 %v1386, %v1387
        %v1389 = vrot.slane %v1388, 1
        %v1390 = vmax.f32 %v1388, %v1389
        %v1391 = vmax.f32 %v1357, %v1365
        %v1392 = vrot.slane %v1391, 4
        %v1393 = vmax.f32 %v1391, %v1392
        %v1394 = vrot.slane %v1393, 2
        %v1395 = vmax.f32 %v1393, %v1394
        %v1396 = vrot.slane %v1395, 1
        %v1397 = vmax.f32 %v1395, %v1396
        %v1398 = vmax.f32 %v1358, %v1366
        %v1399 = vrot.slane %v1398, 4
        %v1400 = vmax.f32 %v1398, %v1399
        %v1401 = vrot.slane %v1400, 2
        %v1402 = vmax.f32 %v1400, %v1401
        %v1403 = vrot.slane %v1402, 1
        %v1404 = vmax.f32 %v1402, %v1403
        %v1405 = vmax.f32 %v1359, %v1367
        %v1406 = vrot.slane %v1405, 4
        %v1407 = vmax.f32 %v1405, %v1406
        %v1408 = vrot.slane %v1407, 2
        %v1409 = vmax.f32 %v1407, %v1408
        %v1410 = vrot.slane %v1409, 1
        %v1411 = vmax.f32 %v1409, %v1410
        %v1412 = vmax.f32 %v1360, %v1368
        %v1413 = vrot.slane %v1412, 4
        %v1414 = vmax.f32 %v1412, %v1413
        %v1415 = vrot.slane %v1414, 2
        %v1416 = vmax.f32 %v1414, %v1415
        %v1417 = vrot.slane %v1416, 1
        %v1418 = vmax.f32 %v1416, %v1417
        %v1419 = vmax.f32 %v1361, %v1369
        %v1420 = vrot.slane %v1419, 4
        %v1421 = vmax.f32 %v1419, %v1420
        %v1422 = vrot.slane %v1421, 2
        %v1423 = vmax.f32 %v1421, %v1422
        %v1424 = vrot.slane %v1423, 1
        %v1425 = vmax.f32 %v1423, %v1424
        %p1426 = scmp.eq.s32.totalorder %s41, 0
        // Predicated region
        $region85: #{_lambda_.6} parent=51 // pred_check
          %p1427 = pneg %p1426
        $region86: #{_lambda_.6} parent=51 // pred_check_branch
          %1429 = sbr.rel (%p1427) target = $region88
        $region87: #{_lambda_.6} parent=51 // pred_region
          %1430 = vst [vmem:[%s495] sm:$0xff] -inf
        $region88: #{_lambda_.6} parent=51 // pred_fallthru
          _
        %v1431 = vld [vmem:[%s495] sm:$0xff]
        %v1440 = vcombine.low %v1376, %v1383
        %v1441 = vcombine.low %v1390, %v1397
        %v1442 = vcombine.low %v1404, %v1411
        %v1443 = vcombine.low %v1418, %v1425
        %v1445 = vunpack.c.l.s4 1966171168
        %v1446 = vunpack.c.0.s8 %v1445
        %v1447 = vlaneseq
        %v1448 = vshrl.u32 %v1447, 7
        %v1449 = vsub.s32 %v1446, %v1448
        %v1450 = vrot.slane %v1440, %v1449
        %v1452 = vunpack.c.l.s4 1966171168
        %v1453 = vunpack.c.0.s8 %v1452
        %v1454 = vlaneseq
        %v1455 = vshrl.u32 %v1454, 7
        %v1456 = vsub.s32 %v1453, %v1455
        %v1457 = vrot.slane %v1441, %v1456
        %v1459 = vunpack.c.l.s4 1966171168
        %v1460 = vunpack.c.0.s8 %v1459
        %v1461 = vlaneseq
        %v1462 = vshrl.u32 %v1461, 7
        %v1463 = vsub.s32 %v1460, %v1462
        %v1464 = vrot.slane %v1442, %v1463
        %v1466 = vunpack.c.l.s4 1966171168
        %v1467 = vunpack.c.0.s8 %v1466
        %v1468 = vlaneseq
        %v1469 = vshrl.u32 %v1468, 7
        %v1470 = vsub.s32 %v1467, %v1469
        %v1471 = vrot.slane %v1443, %v1470
        %v1472 = vcombine.low %v1450, %v1457
        %v1473 = vcombine.low %v1464, %v1471
        %v1475 = vunpack.c.l.s4 1966171168
        %v1476 = vunpack.c.0.s8 %v1475
        %v1477 = vlaneseq
        %v1478 = vshrl.u32 %v1477, 7
        %v1479 = vsub.s32 %v1476, %v1478
        %v1480 = vrot.slane %v1472, %v1479
        %v1482 = vunpack.c.l.s4 1966171168
        %v1483 = vunpack.c.0.s8 %v1482
        %v1484 = vlaneseq
        %v1485 = vshrl.u32 %v1484, 7
        %v1486 = vsub.s32 %v1483, %v1485
        %v1487 = vrot.slane %v1473, %v1486
        %v1488 = vcombine.low %v1480, %v1487
        %v1490 = vmax.f32 %v1431, %v1488
        %1491 = vst [vmem:[%s495] sm:$0xff] %v1490
        %s1492 = sand.u32 %s238, 1
        %s1493 = scalar_lea.sflag [#allocation4], %s1492
        %s1494 = sand.u32 %s238, 1
        %s1495 = smul.addr %s1494, 8
        %s1496 = scalar_lea.vmem [#allocation16], %s1495
        %s1497 = sand.u32 %s264, 1
        %s1498 = scalar_lea.sflag [#allocation18], %s1497
        %s1499 = sand.u32 %s264, 1
        %s1500 = smul.addr %s1499, 8
        %s1501 = scalar_lea.vmem [#allocation17], %s1500
        // Predicated region
        $region89: #{_lambda_.6} parent=51 // pred_check
          %p1502 = pneg %p248
        $region90: #{_lambda_.6} parent=51 // pred_check_branch
          %1504 = sbr.rel (%p1502) target = $region92
        $region91: #{_lambda_.6} parent=51 // pred_region
          %s1505 = smul.u32 2, %s41
          %s1507 = ssub.s32 128, 128
          %1508 = vsyncadd %s1493, %s1507
          %s1509 = smul.addr %s40, 2
          %s1510 = sadd.s32 %s1505, %s1509
          %s1511 = smul.addr %s1510, 64
          %s1512 = scalar_lea.hbm %s8, %s1511
          %s1513 = sshll.u32 %s1496, 4
          %s1514 = int_to_ptr.vmem [resolvable:$true] %s1513
          %1519 = dma.vmem_to_hbm [thread:$0]  %s1514, 128, %s1512, %s1493, 64, 64, 4
        $region92: #{_lambda_.6} parent=51 // pred_fallthru
          _
        // Predicated region
        $region93: #{_lambda_.6} parent=51 // pred_check
          %p1520 = pneg %p274
        $region94: #{_lambda_.6} parent=51 // pred_check_branch
          %1522 = sbr.rel (%p1520) target = $region96
        $region95: #{_lambda_.6} parent=51 // pred_region
          %s1524 = ssub.s32 128, 128
          %1525 = vsyncadd %s1498, %s1524
          %s1526 = smul.addr %s40, 8
          %s1527 = smul.addr %s1526, 16
          %s1528 = scalar_lea.hbm %s9, %s1527
          %s1530 = sshll.u32 %s1501, 4
          %s1531 = int_to_ptr.vmem [resolvable:$true] %s1530
          %1533 = dma.vmem_to_hbm [thread:$0]  %s1531, 128, %s1528, %s1498
        $region96: #{_lambda_.6} parent=51 // pred_fallthru
          _
      $region52: #{_lambda_.6} parent=5 // pred_fallthru
        _
      %p1534 = scmp.le.s32.totalorder 2, %s31
      // Predicated region
      $region97: #{_lambda_.6} parent=5 // pred_check
        %p1535 = pneg %p1534
      $region98: #{_lambda_.6} parent=5 // pred_check_branch
        %1537 = sbr.rel (%p1535) target = $region100
      $region99: #{_lambda_.6} parent=5 // pred_region
        %s1538 = ssub.s32 %s31, 2
        // Predicated region
        $region101: #{_lambda_.6} parent=99 // pred_check
          %p1539 = pneg %p254
        $region102: #{_lambda_.6} parent=99 // pred_check_branch
          %1541 = sbr.rel (%p1539) target = $region104
        $region103: #{_lambda_.6} parent=99 // pred_region
          %s1542 = sand.u32 %s239, 1
          %s1543 = scalar_lea.sflag [#allocation4], %s1542
          %s1544 = sand.u32 %s239, 1
          %s1545 = smul.addr %s1544, 8
          %s1546 = scalar_lea.vmem [#allocation16], %s1545
          %1547 = dma.done %s1543, 128
        $region104: #{_lambda_.6} parent=99 // pred_fallthru
          _
        // Predicated region
        $region105: #{_lambda_.6} parent=99 // pred_check
          %p1548 = pneg %p280
        $region106: #{_lambda_.6} parent=99 // pred_check_branch
          %1550 = sbr.rel (%p1548) target = $region108
        $region107: #{_lambda_.6} parent=99 // pred_region
          %s1551 = sand.u32 %s265, 1
          %s1552 = scalar_lea.sflag [#allocation18], %s1551
          %s1553 = sand.u32 %s265, 1
          %s1554 = smul.addr %s1553, 8
          %s1555 = scalar_lea.vmem [#allocation17], %s1554
          %1556 = dma.done %s1552, 128
        $region108: #{_lambda_.6} parent=99 // pred_fallthru
          _
      $region100: #{_lambda_.6} parent=5 // pred_fallthru
        _
    $region6: #{_lambda_.6} parent=1 // loop_footer
      %s35 = sadd.s32 1, %s31
    $region7: #{_lambda_.6} parent=1 // loop_footer_branch
      %30 = sbr.rel target = $region3
    $region8: #{_lambda_.6} parent=1 // loop_exit
      _
    %1557 = vsyncpa [#allocation3], 1
    %s1558 = scalar_lea.sflag [#allocation3], 1
    %1559 = vsyncpa %s1558, 1
    %1560 = vsyncpa [#allocation6], 1
    %s1561 = scalar_lea.sflag [#allocation6], 1
    %1562 = vsyncpa %s1561, 1
    %1563 = vsyncpa [#allocation9], 1
    %1564 = vsyncpa [#allocation12], 1
    %1565 = vsyncpa [#allocation15], 1
    %1566 = vsyncpa [#allocation4], 1
    %s1567 = scalar_lea.sflag [#allocation4], 1
    %1568 = vsyncpa %s1567, 1
    %1569 = vsyncpa [#allocation18], 1
    %s1570 = scalar_lea.sflag [#allocation18], 1
    %1571 = vsyncpa %s1570, 1

// kernel: _lambda_.5
$region0: #{_lambda_.5}
  #allocation0 [shape = 'u32[]', space=smem, size = 0x4, offset = 0x4, fixed_abs, tag = 'smem constant byte address 0x4 - core index']
  #allocation1 [shape = 'u32[144,128]{1,0:T(1,128)}', space=vmem, size = 0x12000, scoped, tag = 'internal scratch']
  %s0 = inlined_call_operand.vmem [shape: f32[2,1024], index: 0, kind: input, shape index: {}]
  %s1 = inlined_call_operand.hbm [shape: f32[1024,512], index: 1, kind: input, shape index: {}]
  %s2 = inlined_call_operand.hbm [shape: f32[1,512], index: 2, kind: input, shape index: {}]
  %s3 = inlined_call_operand.hbm [shape: f32[512,256], index: 3, kind: input, shape index: {}]
  %s4 = inlined_call_operand.hbm [shape: f32[1,256], index: 4, kind: input, shape index: {}]
  %s5 = inlined_call_operand.hbm [shape: f32[256,25], index: 5, kind: input, shape index: {}]
  %s6 = inlined_call_operand.hbm [shape: f32[1,25], index: 6, kind: input, shape index: {}]
  %s7 = inlined_call_operand.vmem [shape: f32[2,25], index: 7, kind: output, shape index: {}]
  %s8 = sld [smem:[#allocation0]]
  $region62: #{_lambda_.5} parent=0
    _
  %s10 = ssub.s32 1, %s8
  %s11 = scalar_select 0, %s10, %s8
  $region1: #{_lambda_.5} parent=0
    #allocation2 [shape = 'u8[2097152]{0}', space=vmem, size = 0x200000, scoped, tag = 'input window, operand 1, single buffered']
    #allocation3 [shape = 's32[1]{0}', space=sflag, size = 0x4, scoped, tag = 'scoped memory for _lambda_.5']
    #allocation4 [shape = 'u8[2048]{0}', space=vmem, size = 0x800, scoped, tag = 'input window, operand 2, single buffered']
    #allocation5 [shape = 's32[1]{0}', space=sflag, size = 0x4, scoped, tag = 'scoped memory for _lambda_.5']
    #allocation6 [shape = 'u8[524288]{0}', space=vmem, size = 0x80000, scoped, tag = 'input window, operand 3, single buffered']
    #allocation7 [shape = 'u8[1024]{0}', space=vmem, size = 0x400, scoped, tag = 'input window, operand 4, single buffered']
    #allocation8 [shape = 's32[1]{0}', space=sflag, size = 0x4, scoped, tag = 'scoped memory for _lambda_.5']
    #allocation9 [shape = 'u8[131072]{0}', space=vmem, size = 0x20000, scoped, tag = 'input window, operand 5, single buffered']
    #allocation10 [shape = 'u8[512]{0}', space=vmem, size = 0x400, scoped, tag = 'input window, operand 6, single buffered']
    #allocation11 [shape = 's32[1]{0}', space=sflag, size = 0x4, scoped, tag = 'scoped memory for _lambda_.5']
    %12 = vsyncpa [#allocation3], 0
    %13 = vsyncpa [#allocation5], 0
    %14 = vsyncpa [#allocation8], 0
    %15 = vsyncpa [#allocation11], 0
    // Predicated region
    $region2: #{_lambda_.5} parent=1 // pred_check
      _
    $region3: #{_lambda_.5} parent=1 // pred_check_branch
      %17 = sbr.rel (0) target = $region5
    $region4: #{_lambda_.5} parent=1 // pred_region
      _
    $region5: #{_lambda_.5} parent=1 // pred_fallthru
      _
    // Predicated region
    $region6: #{_lambda_.5} parent=1 // pred_check
      _
    $region7: #{_lambda_.5} parent=1 // pred_check_branch
      %19 = sbr.rel (0) target = $region9
    $region8: #{_lambda_.5} parent=1 // pred_region
      %s21 = ssub.s32 65536, 65536
      %22 = vsyncadd [#allocation3], %s21
      %s23 = sshll.u32 [#allocation2], 4
      %s24 = int_to_ptr.vmem [resolvable:$true] %s23
      %29 = dma.hbm_to_vmem [thread:$0]  %s1, 65536, %s24, [#allocation3], 512, 512, 32
    $region9: #{_lambda_.5} parent=1 // pred_fallthru
      _
    // Predicated region
    $region10: #{_lambda_.5} parent=1 // pred_check
      _
    $region11: #{_lambda_.5} parent=1 // pred_check_branch
      %31 = sbr.rel (0) target = $region13
    $region12: #{_lambda_.5} parent=1 // pred_region
      %s33 = ssub.s32 64, 64
      %34 = vsyncadd [#allocation5], %s33
      %s36 = sshll.u32 [#allocation4], 4
      %s37 = int_to_ptr.vmem [resolvable:$true] %s36
      %39 = dma.hbm_to_vmem [thread:$0]  %s2, 64, %s37, [#allocation5]
    $region13: #{_lambda_.5} parent=1 // pred_fallthru
      _
    // Predicated region
    $region14: #{_lambda_.5} parent=1 // pred_check
      _
    $region15: #{_lambda_.5} parent=1 // pred_check_branch
      %41 = sbr.rel (0) target = $region17
    $region16: #{_lambda_.5} parent=1 // pred_region
      %s43 = ssub.s32 16384, 16384
      %44 = vsyncadd [#allocation5], %s43
      %s45 = sshll.u32 [#allocation6], 4
      %s46 = int_to_ptr.vmem [resolvable:$true] %s45
      %51 = dma.hbm_to_vmem [thread:$0]  %s3, 16384, %s46, [#allocation5], 256, 256, 16
    $region17: #{_lambda_.5} parent=1 // pred_fallthru
      _
    // Predicated region
    $region18: #{_lambda_.5} parent=1 // pred_check
      _
    $region19: #{_lambda_.5} parent=1 // pred_check_branch
      %53 = sbr.rel (0) target = $region21
    $region20: #{_lambda_.5} parent=1 // pred_region
      %s55 = ssub.s32 32, 32
      %56 = vsyncadd [#allocation8], %s55
      %s58 = sshll.u32 [#allocation7], 4
      %s59 = int_to_ptr.vmem [resolvable:$true] %s58
      %61 = dma.hbm_to_vmem [thread:$0]  %s4, 32, %s59, [#allocation8]
    $region21: #{_lambda_.5} parent=1 // pred_fallthru
      _
    // Predicated region
    $region22: #{_lambda_.5} parent=1 // pred_check
      _
    $region23: #{_lambda_.5} parent=1 // pred_check_branch
      %63 = sbr.rel (0) target = $region25
    $region24: #{_lambda_.5} parent=1 // pred_region
      %s65 = ssub.s32 4096, 4096
      %66 = vsyncadd [#allocation8], %s65
      %s67 = sshll.u32 [#allocation9], 4
      %s68 = int_to_ptr.vmem [resolvable:$true] %s67
      %73 = dma.hbm_to_vmem [thread:$0]  %s5, 4096, %s68, [#allocation8], 128, 128, 8
    $region25: #{_lambda_.5} parent=1 // pred_fallthru
      _
    // Predicated region
    $region26: #{_lambda_.5} parent=1 // pred_check
      _
    $region27: #{_lambda_.5} parent=1 // pred_check_branch
      %75 = sbr.rel (0) target = $region29
    $region28: #{_lambda_.5} parent=1 // pred_region
      %s77 = ssub.s32 16, 16
      %78 = vsyncadd [#allocation11], %s77
      %s80 = sshll.u32 [#allocation10], 4
      %s81 = int_to_ptr.vmem [resolvable:$true] %s80
      %83 = dma.hbm_to_vmem [thread:$0]  %s6, 16, %s81, [#allocation11]
    $region29: #{_lambda_.5} parent=1 // pred_fallthru
      _
    // Predicated region
    $region30: #{_lambda_.5} parent=1 // pred_check
      _
    $region31: #{_lambda_.5} parent=1 // pred_check_branch
      %85 = sbr.rel (0) target = $region33
    $region32: #{_lambda_.5} parent=1 // pred_region
      %86 = dma.done [#allocation3], 65536
    $region33: #{_lambda_.5} parent=1 // pred_fallthru
      _
    // Predicated region
    $region34: #{_lambda_.5} parent=1 // pred_check
      _
    $region35: #{_lambda_.5} parent=1 // pred_check_branch
      %88 = sbr.rel (0) target = $region37
    $region36: #{_lambda_.5} parent=1 // pred_region
      %89 = dma.done [#allocation5], 64
    $region37: #{_lambda_.5} parent=1 // pred_fallthru
      _
    // Predicated region
    $region38: #{_lambda_.5} parent=1 // pred_check
      _
    $region39: #{_lambda_.5} parent=1 // pred_check_branch
      %91 = sbr.rel (0) target = $region41
    $region40: #{_lambda_.5} parent=1 // pred_region
      %92 = dma.done [#allocation5], 16384
    $region41: #{_lambda_.5} parent=1 // pred_fallthru
      _
    // Predicated region
    $region42: #{_lambda_.5} parent=1 // pred_check
      _
    $region43: #{_lambda_.5} parent=1 // pred_check_branch
      %94 = sbr.rel (0) target = $region45
    $region44: #{_lambda_.5} parent=1 // pred_region
      %95 = dma.done [#allocation8], 32
    $region45: #{_lambda_.5} parent=1 // pred_fallthru
      _
    // Predicated region
    $region46: #{_lambda_.5} parent=1 // pred_check
      _
    $region47: #{_lambda_.5} parent=1 // pred_check_branch
      %97 = sbr.rel (0) target = $region49
    $region48: #{_lambda_.5} parent=1 // pred_region
      %98 = dma.done [#allocation8], 4096
    $region49: #{_lambda_.5} parent=1 // pred_fallthru
      _
    // Predicated region
    $region50: #{_lambda_.5} parent=1 // pred_check
      _
    $region51: #{_lambda_.5} parent=1 // pred_check_branch
      %100 = sbr.rel (0) target = $region53
    $region52: #{_lambda_.5} parent=1 // pred_region
      %101 = dma.done [#allocation11], 16
    $region53: #{_lambda_.5} parent=1 // pred_fallthru
      _
    %v102 = vld [vmem:[%s0] sm:$0xff]
    %v103 = vld [vmem:[%s0 + $0x8] sm:$0xff]
    %v104 = vld [vmem:[#allocation2] sm:$0xff]
    %v105 = vld [vmem:[#allocation2 + $0x8] sm:$0xff]
    %v106 = vld [vmem:[#allocation2 + $0x10] sm:$0xff]
    %v107 = vld [vmem:[#allocation2 + $0x18] sm:$0xff]
    %v108 = vld [vmem:[#allocation2 + $0x20] sm:$0xff]
    %v109 = vld [vmem:[#allocation2 + $0x28] sm:$0xff]
    %v110 = vld [vmem:[#allocation2 + $0x30] sm:$0xff]
    %v111 = vld [vmem:[#allocation2 + $0x38] sm:$0xff]
    %v112 = vld [vmem:[#allocation2 + $0x40] sm:$0xff]
    %v113 = vld [vmem:[#allocation2 + $0x48] sm:$0xff]
    %v114 = vld [vmem:[#allocation2 + $0x50] sm:$0xff]
    %v115 = vld [vmem:[#allocation2 + $0x58] sm:$0xff]
    %v116 = vld [vmem:[#allocation2 + $0x60] sm:$0xff]
    %v117 = vld [vmem:[#allocation2 + $0x68] sm:$0xff]
    %v118 = vld [vmem:[#allocation2 + $0x70] sm:$0xff]
    %v119 = vld [vmem:[#allocation2 + $0x78] sm:$0xff]
    %v120 = vld [vmem:[#allocation2 + $0x80] sm:$0xff]
    %v121 = vld [vmem:[#allocation2 + $0x88] sm:$0xff]
    %v122 = vld [vmem:[#allocation2 + $0x90] sm:$0xff]
    %v123 = vld [vmem:[#allocation2 + $0x98] sm:$0xff]
    %v124 = vld [vmem:[#allocation2 + $0xa0] sm:$0xff]
    %v125 = vld [vmem:[#allocation2 + $0xa8] sm:$0xff]
    %v126 = vld [vmem:[#allocation2 + $0xb0] sm:$0xff]
    %v127 = vld [vmem:[#allocation2 + $0xb8] sm:$0xff]
    %v128 = vld [vmem:[#allocation2 + $0xc0] sm:$0xff]
    %v129 = vld [vmem:[#allocation2 + $0xc8] sm:$0xff]
    %v130 = vld [vmem:[#allocation2 + $0xd0] sm:$0xff]
    %v131 = vld [vmem:[#allocation2 + $0xd8] sm:$0xff]
    %v132 = vld [vmem:[#allocation2 + $0xe0] sm:$0xff]
    %v133 = vld [vmem:[#allocation2 + $0xe8] sm:$0xff]
    %v134 = vld [vmem:[#allocation2 + $0xf0] sm:$0xff]
    %v135 = vld [vmem:[#allocation2 + $0xf8] sm:$0xff]
    %v136 = vld [vmem:[#allocation2 + $0x100] sm:$0xff]
    %v137 = vld [vmem:[#allocation2 + $0x108] sm:$0xff]
    %v138 = vld [vmem:[#allocation2 + $0x110] sm:$0xff]
    %v139 = vld [vmem:[#allocation2 + $0x118] sm:$0xff]
    %v140 = vld [vmem:[#allocation2 + $0x120] sm:$0xff]
    %v141 = vld [vmem:[#allocation2 + $0x128] sm:$0xff]
    %v142 = vld [vmem:[#allocation2 + $0x130] sm:$0xff]
    %v143 = vld [vmem:[#allocation2 + $0x138] sm:$0xff]
    %v144 = vld [vmem:[#allocation2 + $0x140] sm:$0xff]
    %v145 = vld [vmem:[#allocation2 + $0x148] sm:$0xff]
    %v146 = vld [vmem:[#allocation2 + $0x150] sm:$0xff]
    %v147 = vld [vmem:[#allocation2 + $0x158] sm:$0xff]
    %v148 = vld [vmem:[#allocation2 + $0x160] sm:$0xff]
    %v149 = vld [vmem:[#allocation2 + $0x168] sm:$0xff]
    %v150 = vld [vmem:[#allocation2 + $0x170] sm:$0xff]
    %v151 = vld [vmem:[#allocation2 + $0x178] sm:$0xff]
    %v152 = vld [vmem:[#allocation2 + $0x180] sm:$0xff]
    %v153 = vld [vmem:[#allocation2 + $0x188] sm:$0xff]
    %v154 = vld [vmem:[#allocation2 + $0x190] sm:$0xff]
    %v155 = vld [vmem:[#allocation2 + $0x198] sm:$0xff]
    %v156 = vld [vmem:[#allocation2 + $0x1a0] sm:$0xff]
    %v157 = vld [vmem:[#allocation2 + $0x1a8] sm:$0xff]
    %v158 = vld [vmem:[#allocation2 + $0x1b0] sm:$0xff]
    %v159 = vld [vmem:[#allocation2 + $0x1b8] sm:$0xff]
    %v160 = vld [vmem:[#allocation2 + $0x1c0] sm:$0xff]
    %v161 = vld [vmem:[#allocation2 + $0x1c8] sm:$0xff]
    %v162 = vld [vmem:[#allocation2 + $0x1d0] sm:$0xff]
    %v163 = vld [vmem:[#allocation2 + $0x1d8] sm:$0xff]
    %v164 = vld [vmem:[#allocation2 + $0x1e0] sm:$0xff]
    %v165 = vld [vmem:[#allocation2 + $0x1e8] sm:$0xff]
    %v166 = vld [vmem:[#allocation2 + $0x1f0] sm:$0xff]
    %v167 = vld [vmem:[#allocation2 + $0x1f8] sm:$0xff]
    %v168 = vld [vmem:[#allocation2 + $0x200] sm:$0xff]
    %v169 = vld [vmem:[#allocation2 + $0x208] sm:$0xff]
    %v170 = vld [vmem:[#allocation2 + $0x210] sm:$0xff]
    %v171 = vld [vmem:[#allocation2 + $0x218] sm:$0xff]
    %v172 = vld [vmem:[#allocation2 + $0x220] sm:$0xff]
    %v173 = vld [vmem:[#allocation2 + $0x228] sm:$0xff]
    %v174 = vld [vmem:[#allocation2 + $0x230] sm:$0xff]
    %v175 = vld [vmem:[#allocation2 + $0x238] sm:$0xff]
    %v176 = vld [vmem:[#allocation2 + $0x240] sm:$0xff]
    %v177 = vld [vmem:[#allocation2 + $0x248] sm:$0xff]
    %v178 = vld [vmem:[#allocation2 + $0x250] sm:$0xff]
    %v179 = vld [vmem:[#allocation2 + $0x258] sm:$0xff]
    %v180 = vld [vmem:[#allocation2 + $0x260] sm:$0xff]
    %v181 = vld [vmem:[#allocation2 + $0x268] sm:$0xff]
    %v182 = vld [vmem:[#allocation2 + $0x270] sm:$0xff]
    %v183 = vld [vmem:[#allocation2 + $0x278] sm:$0xff]
    %v184 = vld [vmem:[#allocation2 + $0x280] sm:$0xff]
    %v185 = vld [vmem:[#allocation2 + $0x288] sm:$0xff]
    %v186 = vld [vmem:[#allocation2 + $0x290] sm:$0xff]
    %v187 = vld [vmem:[#allocation2 + $0x298] sm:$0xff]
    %v188 = vld [vmem:[#allocation2 + $0x2a0] sm:$0xff]
    %v189 = vld [vmem:[#allocation2 + $0x2a8] sm:$0xff]
    %v190 = vld [vmem:[#allocation2 + $0x2b0] sm:$0xff]
    %v191 = vld [vmem:[#allocation2 + $0x2b8] sm:$0xff]
    %v192 = vld [vmem:[#allocation2 + $0x2c0] sm:$0xff]
    %v193 = vld [vmem:[#allocation2 + $0x2c8] sm:$0xff]
    %v194 = vld [vmem:[#allocation2 + $0x2d0] sm:$0xff]
    %v195 = vld [vmem:[#allocation2 + $0x2d8] sm:$0xff]
    %v196 = vld [vmem:[#allocation2 + $0x2e0] sm:$0xff]
    %v197 = vld [vmem:[#allocation2 + $0x2e8] sm:$0xff]
    %v198 = vld [vmem:[#allocation2 + $0x2f0] sm:$0xff]
    %v199 = vld [vmem:[#allocation2 + $0x2f8] sm:$0xff]
    %v200 = vld [vmem:[#allocation2 + $0x300] sm:$0xff]
    %v201 = vld [vmem:[#allocation2 + $0x308] sm:$0xff]
    %v202 = vld [vmem:[#allocation2 + $0x310] sm:$0xff]
    %v203 = vld [vmem:[#allocation2 + $0x318] sm:$0xff]
    %v204 = vld [vmem:[#allocation2 + $0x320] sm:$0xff]
    %v205 = vld [vmem:[#allocation2 + $0x328] sm:$0xff]
    %v206 = vld [vmem:[#allocation2 + $0x330] sm:$0xff]
    %v207 = vld [vmem:[#allocation2 + $0x338] sm:$0xff]
    %v208 = vld [vmem:[#allocation2 + $0x340] sm:$0xff]
    %v209 = vld [vmem:[#allocation2 + $0x348] sm:$0xff]
    %v210 = vld [vmem:[#allocation2 + $0x350] sm:$0xff]
    %v211 = vld [vmem:[#allocation2 + $0x358] sm:$0xff]
    %v212 = vld [vmem:[#allocation2 + $0x360] sm:$0xff]
    %v213 = vld [vmem:[#allocation2 + $0x368] sm:$0xff]
    %v214 = vld [vmem:[#allocation2 + $0x370] sm:$0xff]
    %v215 = vld [vmem:[#allocation2 + $0x378] sm:$0xff]
    %v216 = vld [vmem:[#allocation2 + $0x380] sm:$0xff]
    %v217 = vld [vmem:[#allocation2 + $0x388] sm:$0xff]
    %v218 = vld [vmem:[#allocation2 + $0x390] sm:$0xff]
    %v219 = vld [vmem:[#allocation2 + $0x398] sm:$0xff]
    %v220 = vld [vmem:[#allocation2 + $0x3a0] sm:$0xff]
    %v221 = vld [vmem:[#allocation2 + $0x3a8] sm:$0xff]
    %v222 = vld [vmem:[#allocation2 + $0x3b0] sm:$0xff]
    %v223 = vld [vmem:[#allocation2 + $0x3b8] sm:$0xff]
    %v224 = vld [vmem:[#allocation2 + $0x3c0] sm:$0xff]
    %v225 = vld [vmem:[#allocation2 + $0x3c8] sm:$0xff]
    %v226 = vld [vmem:[#allocation2 + $0x3d0] sm:$0xff]
    %v227 = vld [vmem:[#allocation2 + $0x3d8] sm:$0xff]
    %v228 = vld [vmem:[#allocation2 + $0x3e0] sm:$0xff]
    %v229 = vld [vmem:[#allocation2 + $0x3e8] sm:$0xff]
    %v230 = vld [vmem:[#allocation2 + $0x3f0] sm:$0xff]
    %v231 = vld [vmem:[#allocation2 + $0x3f8] sm:$0xff]
    %v232 = vld [vmem:[#allocation2 + $0x400] sm:$0xff]
    %v233 = vld [vmem:[#allocation2 + $0x408] sm:$0xff]
    %v234 = vld [vmem:[#allocation2 + $0x410] sm:$0xff]
    %v235 = vld [vmem:[#allocation2 + $0x418] sm:$0xff]
    %v236 = vld [vmem:[#allocation2 + $0x420] sm:$0xff]
    %v237 = vld [vmem:[#allocation2 + $0x428] sm:$0xff]
    %v238 = vld [vmem:[#allocation2 + $0x430] sm:$0xff]
    %v239 = vld [vmem:[#allocation2 + $0x438] sm:$0xff]
    %v240 = vld [vmem:[#allocation2 + $0x440] sm:$0xff]
    %v241 = vld [vmem:[#allocation2 + $0x448] sm:$0xff]
    %v242 = vld [vmem:[#allocation2 + $0x450] sm:$0xff]
    %v243 = vld [vmem:[#allocation2 + $0x458] sm:$0xff]
    %v244 = vld [vmem:[#allocation2 + $0x460] sm:$0xff]
    %v245 = vld [vmem:[#allocation2 + $0x468] sm:$0xff]
    %v246 = vld [vmem:[#allocation2 + $0x470] sm:$0xff]
    %v247 = vld [vmem:[#allocation2 + $0x478] sm:$0xff]
    %v248 = vld [vmem:[#allocation2 + $0x480] sm:$0xff]
    %v249 = vld [vmem:[#allocation2 + $0x488] sm:$0xff]
    %v250 = vld [vmem:[#allocation2 + $0x490] sm:$0xff]
    %v251 = vld [vmem:[#allocation2 + $0x498] sm:$0xff]
    %v252 = vld [vmem:[#allocation2 + $0x4a0] sm:$0xff]
    %v253 = vld [vmem:[#allocation2 + $0x4a8] sm:$0xff]
    %v254 = vld [vmem:[#allocation2 + $0x4b0] sm:$0xff]
    %v255 = vld [vmem:[#allocation2 + $0x4b8] sm:$0xff]
    %v256 = vld [vmem:[#allocation2 + $0x4c0] sm:$0xff]
    %v257 = vld [vmem:[#allocation2 + $0x4c8] sm:$0xff]
    %v258 = vld [vmem:[#allocation2 + $0x4d0] sm:$0xff]
    %v259 = vld [vmem:[#allocation2 + $0x4d8] sm:$0xff]
    %v260 = vld [vmem:[#allocation2 + $0x4e0] sm:$0xff]
    %v261 = vld [vmem:[#allocation2 + $0x4e8] sm:$0xff]
    %v262 = vld [vmem:[#allocation2 + $0x4f0] sm:$0xff]
    %v263 = vld [vmem:[#allocation2 + $0x4f8] sm:$0xff]
    %v264 = vld [vmem:[#allocation2 + $0x500] sm:$0xff]
    %v265 = vld [vmem:[#allocation2 + $0x508] sm:$0xff]
    %v266 = vld [vmem:[#allocation2 + $0x510] sm:$0xff]
    %v267 = vld [vmem:[#allocation2 + $0x518] sm:$0xff]
    %v268 = vld [vmem:[#allocation2 + $0x520] sm:$0xff]
    %v269 = vld [vmem:[#allocation2 + $0x528] sm:$0xff]
    %v270 = vld [vmem:[#allocation2 + $0x530] sm:$0xff]
    %v271 = vld [vmem:[#allocation2 + $0x538] sm:$0xff]
    %v272 = vld [vmem:[#allocation2 + $0x540] sm:$0xff]
    %v273 = vld [vmem:[#allocation2 + $0x548] sm:$0xff]
    %v274 = vld [vmem:[#allocation2 + $0x550] sm:$0xff]
    %v275 = vld [vmem:[#allocation2 + $0x558] sm:$0xff]
    %v276 = vld [vmem:[#allocation2 + $0x560] sm:$0xff]
    %v277 = vld [vmem:[#allocation2 + $0x568] sm:$0xff]
    %v278 = vld [vmem:[#allocation2 + $0x570] sm:$0xff]
    %v279 = vld [vmem:[#allocation2 + $0x578] sm:$0xff]
    %v280 = vld [vmem:[#allocation2 + $0x580] sm:$0xff]
    %v281 = vld [vmem:[#allocation2 + $0x588] sm:$0xff]
    %v282 = vld [vmem:[#allocation2 + $0x590] sm:$0xff]
    %v283 = vld [vmem:[#allocation2 + $0x598] sm:$0xff]
    %v284 = vld [vmem:[#allocation2 + $0x5a0] sm:$0xff]
    %v285 = vld [vmem:[#allocation2 + $0x5a8] sm:$0xff]
    %v286 = vld [vmem:[#allocation2 + $0x5b0] sm:$0xff]
    %v287 = vld [vmem:[#allocation2 + $0x5b8] sm:$0xff]
    %v288 = vld [vmem:[#allocation2 + $0x5c0] sm:$0xff]
    %v289 = vld [vmem:[#allocation2 + $0x5c8] sm:$0xff]
    %v290 = vld [vmem:[#allocation2 + $0x5d0] sm:$0xff]
    %v291 = vld [vmem:[#allocation2 + $0x5d8] sm:$0xff]
    %v292 = vld [vmem:[#allocation2 + $0x5e0] sm:$0xff]
    %v293 = vld [vmem:[#allocation2 + $0x5e8] sm:$0xff]
    %v294 = vld [vmem:[#allocation2 + $0x5f0] sm:$0xff]
    %v295 = vld [vmem:[#allocation2 + $0x5f8] sm:$0xff]
    %v296 = vld [vmem:[#allocation2 + $0x600] sm:$0xff]
    %v297 = vld [vmem:[#allocation2 + $0x608] sm:$0xff]
    %v298 = vld [vmem:[#allocation2 + $0x610] sm:$0xff]
    %v299 = vld [vmem:[#allocation2 + $0x618] sm:$0xff]
    %v300 = vld [vmem:[#allocation2 + $0x620] sm:$0xff]
    %v301 = vld [vmem:[#allocation2 + $0x628] sm:$0xff]
    %v302 = vld [vmem:[#allocation2 + $0x630] sm:$0xff]
    %v303 = vld [vmem:[#allocation2 + $0x638] sm:$0xff]
    %v304 = vld [vmem:[#allocation2 + $0x640] sm:$0xff]
    %v305 = vld [vmem:[#allocation2 + $0x648] sm:$0xff]
    %v306 = vld [vmem:[#allocation2 + $0x650] sm:$0xff]
    %v307 = vld [vmem:[#allocation2 + $0x658] sm:$0xff]
    %v308 = vld [vmem:[#allocation2 + $0x660] sm:$0xff]
    %v309 = vld [vmem:[#allocation2 + $0x668] sm:$0xff]
    %v310 = vld [vmem:[#allocation2 + $0x670] sm:$0xff]
    %v311 = vld [vmem:[#allocation2 + $0x678] sm:$0xff]
    %v312 = vld [vmem:[#allocation2 + $0x680] sm:$0xff]
    %v313 = vld [vmem:[#allocation2 + $0x688] sm:$0xff]
    %v314 = vld [vmem:[#allocation2 + $0x690] sm:$0xff]
    %v315 = vld [vmem:[#allocation2 + $0x698] sm:$0xff]
    %v316 = vld [vmem:[#allocation2 + $0x6a0] sm:$0xff]
    %v317 = vld [vmem:[#allocation2 + $0x6a8] sm:$0xff]
    %v318 = vld [vmem:[#allocation2 + $0x6b0] sm:$0xff]
    %v319 = vld [vmem:[#allocation2 + $0x6b8] sm:$0xff]
    %v320 = vld [vmem:[#allocation2 + $0x6c0] sm:$0xff]
    %v321 = vld [vmem:[#allocation2 + $0x6c8] sm:$0xff]
    %v322 = vld [vmem:[#allocation2 + $0x6d0] sm:$0xff]
    %v323 = vld [vmem:[#allocation2 + $0x6d8] sm:$0xff]
    %v324 = vld [vmem:[#allocation2 + $0x6e0] sm:$0xff]
    %v325 = vld [vmem:[#allocation2 + $0x6e8] sm:$0xff]
    %v326 = vld [vmem:[#allocation2 + $0x6f0] sm:$0xff]
    %v327 = vld [vmem:[#allocation2 + $0x6f8] sm:$0xff]
    %v328 = vld [vmem:[#allocation2 + $0x700] sm:$0xff]
    %v329 = vld [vmem:[#allocation2 + $0x708] sm:$0xff]
    %v330 = vld [vmem:[#allocation2 + $0x710] sm:$0xff]
    %v331 = vld [vmem:[#allocation2 + $0x718] sm:$0xff]
    %v332 = vld [vmem:[#allocation2 + $0x720] sm:$0xff]
    %v333 = vld [vmem:[#allocation2 + $0x728] sm:$0xff]
    %v334 = vld [vmem:[#allocation2 + $0x730] sm:$0xff]
    %v335 = vld [vmem:[#allocation2 + $0x738] sm:$0xff]
    %v336 = vld [vmem:[#allocation2 + $0x740] sm:$0xff]
    %v337 = vld [vmem:[#allocation2 + $0x748] sm:$0xff]
    %v338 = vld [vmem:[#allocation2 + $0x750] sm:$0xff]
    %v339 = vld [vmem:[#allocation2 + $0x758] sm:$0xff]
    %v340 = vld [vmem:[#allocation2 + $0x760] sm:$0xff]
    %v341 = vld [vmem:[#allocation2 + $0x768] sm:$0xff]
    %v342 = vld [vmem:[#allocation2 + $0x770] sm:$0xff]
    %v343 = vld [vmem:[#allocation2 + $0x778] sm:$0xff]
    %v344 = vld [vmem:[#allocation2 + $0x780] sm:$0xff]
    %v345 = vld [vmem:[#allocation2 + $0x788] sm:$0xff]
    %v346 = vld [vmem:[#allocation2 + $0x790] sm:$0xff]
    %v347 = vld [vmem:[#allocation2 + $0x798] sm:$0xff]
    %v348 = vld [vmem:[#allocation2 + $0x7a0] sm:$0xff]
    %v349 = vld [vmem:[#allocation2 + $0x7a8] sm:$0xff]
    %v350 = vld [vmem:[#allocation2 + $0x7b0] sm:$0xff]
    %v351 = vld [vmem:[#allocation2 + $0x7b8] sm:$0xff]
    %v352 = vld [vmem:[#allocation2 + $0x7c0] sm:$0xff]
    %v353 = vld [vmem:[#allocation2 + $0x7c8] sm:$0xff]
    %v354 = vld [vmem:[#allocation2 + $0x7d0] sm:$0xff]
    %v355 = vld [vmem:[#allocation2 + $0x7d8] sm:$0xff]
    %v356 = vld [vmem:[#allocation2 + $0x7e0] sm:$0xff]
    %v357 = vld [vmem:[#allocation2 + $0x7e8] sm:$0xff]
    %v358 = vld [vmem:[#allocation2 + $0x7f0] sm:$0xff]
    %v359 = vld [vmem:[#allocation2 + $0x7f8] sm:$0xff]
    %v360 = vld [vmem:[#allocation2 + $0x800] sm:$0xff]
    %v361 = vld [vmem:[#allocation2 + $0x808] sm:$0xff]
    %v362 = vld [vmem:[#allocation2 + $0x810] sm:$0xff]
    %v363 = vld [vmem:[#allocation2 + $0x818] sm:$0xff]
    %v364 = vld [vmem:[#allocation2 + $0x820] sm:$0xff]
    %v365 = vld [vmem:[#allocation2 + $0x828] sm:$0xff]
    %v366 = vld [vmem:[#allocation2 + $0x830] sm:$0xff]
    %v367 = vld [vmem:[#allocation2 + $0x838] sm:$0xff]
    %v368 = vld [vmem:[#allocation2 + $0x840] sm:$0xff]
    %v369 = vld [vmem:[#allocation2 + $0x848] sm:$0xff]
    %v370 = vld [vmem:[#allocation2 + $0x850] sm:$0xff]
    %v371 = vld [vmem:[#allocation2 + $0x858] sm:$0xff]
    %v372 = vld [vmem:[#allocation2 + $0x860] sm:$0xff]
    %v373 = vld [vmem:[#allocation2 + $0x868] sm:$0xff]
    %v374 = vld [vmem:[#allocation2 + $0x870] sm:$0xff]
    %v375 = vld [vmem:[#allocation2 + $0x878] sm:$0xff]
    %v376 = vld [vmem:[#allocation2 + $0x880] sm:$0xff]
    %v377 = vld [vmem:[#allocation2 + $0x888] sm:$0xff]
    %v378 = vld [vmem:[#allocation2 + $0x890] sm:$0xff]
    %v379 = vld [vmem:[#allocation2 + $0x898] sm:$0xff]
    %v380 = vld [vmem:[#allocation2 + $0x8a0] sm:$0xff]
    %v381 = vld [vmem:[#allocation2 + $0x8a8] sm:$0xff]
    %v382 = vld [vmem:[#allocation2 + $0x8b0] sm:$0xff]
    %v383 = vld [vmem:[#allocation2 + $0x8b8] sm:$0xff]
    %v384 = vld [vmem:[#allocation2 + $0x8c0] sm:$0xff]
    %v385 = vld [vmem:[#allocation2 + $0x8c8] sm:$0xff]
    %v386 = vld [vmem:[#allocation2 + $0x8d0] sm:$0xff]
    %v387 = vld [vmem:[#allocation2 + $0x8d8] sm:$0xff]
    %v388 = vld [vmem:[#allocation2 + $0x8e0] sm:$0xff]
    %v389 = vld [vmem:[#allocation2 + $0x8e8] sm:$0xff]
    %v390 = vld [vmem:[#allocation2 + $0x8f0] sm:$0xff]
    %v391 = vld [vmem:[#allocation2 + $0x8f8] sm:$0xff]
    %v392 = vld [vmem:[#allocation2 + $0x900] sm:$0xff]
    %v393 = vld [vmem:[#allocation2 + $0x908] sm:$0xff]
    %v394 = vld [vmem:[#allocation2 + $0x910] sm:$0xff]
    %v395 = vld [vmem:[#allocation2 + $0x918] sm:$0xff]
    %v396 = vld [vmem:[#allocation2 + $0x920] sm:$0xff]
    %v397 = vld [vmem:[#allocation2 + $0x928] sm:$0xff]
    %v398 = vld [vmem:[#allocation2 + $0x930] sm:$0xff]
    %v399 = vld [vmem:[#allocation2 + $0x938] sm:$0xff]
    %v400 = vld [vmem:[#allocation2 + $0x940] sm:$0xff]
    %v401 = vld [vmem:[#allocation2 + $0x948] sm:$0xff]
    %v402 = vld [vmem:[#allocation2 + $0x950] sm:$0xff]
    %v403 = vld [vmem:[#allocation2 + $0x958] sm:$0xff]
    %v404 = vld [vmem:[#allocation2 + $0x960] sm:$0xff]
    %v405 = vld [vmem:[#allocation2 + $0x968] sm:$0xff]
    %v406 = vld [vmem:[#allocation2 + $0x970] sm:$0xff]
    %v407 = vld [vmem:[#allocation2 + $0x978] sm:$0xff]
    %v408 = vld [vmem:[#allocation2 + $0x980] sm:$0xff]
    %v409 = vld [vmem:[#allocation2 + $0x988] sm:$0xff]
    %v410 = vld [vmem:[#allocation2 + $0x990] sm:$0xff]
    %v411 = vld [vmem:[#allocation2 + $0x998] sm:$0xff]
    %v412 = vld [vmem:[#allocation2 + $0x9a0] sm:$0xff]
    %v413 = vld [vmem:[#allocation2 + $0x9a8] sm:$0xff]
    %v414 = vld [vmem:[#allocation2 + $0x9b0] sm:$0xff]
    %v415 = vld [vmem:[#allocation2 + $0x9b8] sm:$0xff]
    %v416 = vld [vmem:[#allocation2 + $0x9c0] sm:$0xff]
    %v417 = vld [vmem:[#allocation2 + $0x9c8] sm:$0xff]
    %v418 = vld [vmem:[#allocation2 + $0x9d0] sm:$0xff]
    %v419 = vld [vmem:[#allocation2 + $0x9d8] sm:$0xff]
    %v420 = vld [vmem:[#allocation2 + $0x9e0] sm:$0xff]
    %v421 = vld [vmem:[#allocation2 + $0x9e8] sm:$0xff]
    %v422 = vld [vmem:[#allocation2 + $0x9f0] sm:$0xff]
    %v423 = vld [vmem:[#allocation2 + $0x9f8] sm:$0xff]
    %v424 = vld [vmem:[#allocation2 + $0xa00] sm:$0xff]
    %v425 = vld [vmem:[#allocation2 + $0xa08] sm:$0xff]
    %v426 = vld [vmem:[#allocation2 + $0xa10] sm:$0xff]
    %v427 = vld [vmem:[#allocation2 + $0xa18] sm:$0xff]
    %v428 = vld [vmem:[#allocation2 + $0xa20] sm:$0xff]
    %v429 = vld [vmem:[#allocation2 + $0xa28] sm:$0xff]
    %v430 = vld [vmem:[#allocation2 + $0xa30] sm:$0xff]
    %v431 = vld [vmem:[#allocation2 + $0xa38] sm:$0xff]
    %v432 = vld [vmem:[#allocation2 + $0xa40] sm:$0xff]
    %v433 = vld [vmem:[#allocation2 + $0xa48] sm:$0xff]
    %v434 = vld [vmem:[#allocation2 + $0xa50] sm:$0xff]
    %v435 = vld [vmem:[#allocation2 + $0xa58] sm:$0xff]
    %v436 = vld [vmem:[#allocation2 + $0xa60] sm:$0xff]
    %v437 = vld [vmem:[#allocation2 + $0xa68] sm:$0xff]
    %v438 = vld [vmem:[#allocation2 + $0xa70] sm:$0xff]
    %v439 = vld [vmem:[#allocation2 + $0xa78] sm:$0xff]
    %v440 = vld [vmem:[#allocation2 + $0xa80] sm:$0xff]
    %v441 = vld [vmem:[#allocation2 + $0xa88] sm:$0xff]
    %v442 = vld [vmem:[#allocation2 + $0xa90] sm:$0xff]
    %v443 = vld [vmem:[#allocation2 + $0xa98] sm:$0xff]
    %v444 = vld [vmem:[#allocation2 + $0xaa0] sm:$0xff]
    %v445 = vld [vmem:[#allocation2 + $0xaa8] sm:$0xff]
    %v446 = vld [vmem:[#allocation2 + $0xab0] sm:$0xff]
    %v447 = vld [vmem:[#allocation2 + $0xab8] sm:$0xff]
    %v448 = vld [vmem:[#allocation2 + $0xac0] sm:$0xff]
    %v449 = vld [vmem:[#allocation2 + $0xac8] sm:$0xff]
    %v450 = vld [vmem:[#allocation2 + $0xad0] sm:$0xff]
    %v451 = vld [vmem:[#allocation2 + $0xad8] sm:$0xff]
    %v452 = vld [vmem:[#allocation2 + $0xae0] sm:$0xff]
    %v453 = vld [vmem:[#allocation2 + $0xae8] sm:$0xff]
    %v454 = vld [vmem:[#allocation2 + $0xaf0] sm:$0xff]
    %v455 = vld [vmem:[#allocation2 + $0xaf8] sm:$0xff]
    %v456 = vld [vmem:[#allocation2 + $0xb00] sm:$0xff]
    %v457 = vld [vmem:[#allocation2 + $0xb08] sm:$0xff]
    %v458 = vld [vmem:[#allocation2 + $0xb10] sm:$0xff]
    %v459 = vld [vmem:[#allocation2 + $0xb18] sm:$0xff]
    %v460 = vld [vmem:[#allocation2 + $0xb20] sm:$0xff]
    %v461 = vld [vmem:[#allocation2 + $0xb28] sm:$0xff]
    %v462 = vld [vmem:[#allocation2 + $0xb30] sm:$0xff]
    %v463 = vld [vmem:[#allocation2 + $0xb38] sm:$0xff]
    %v464 = vld [vmem:[#allocation2 + $0xb40] sm:$0xff]
    %v465 = vld [vmem:[#allocation2 + $0xb48] sm:$0xff]
    %v466 = vld [vmem:[#allocation2 + $0xb50] sm:$0xff]
    %v467 = vld [vmem:[#allocation2 + $0xb58] sm:$0xff]
    %v468 = vld [vmem:[#allocation2 + $0xb60] sm:$0xff]
    %v469 = vld [vmem:[#allocation2 + $0xb68] sm:$0xff]
    %v470 = vld [vmem:[#allocation2 + $0xb70] sm:$0xff]
    %v471 = vld [vmem:[#allocation2 + $0xb78] sm:$0xff]
    %v472 = vld [vmem:[#allocation2 + $0xb80] sm:$0xff]
    %v473 = vld [vmem:[#allocation2 + $0xb88] sm:$0xff]
    %v474 = vld [vmem:[#allocation2 + $0xb90] sm:$0xff]
    %v475 = vld [vmem:[#allocation2 + $0xb98] sm:$0xff]
    %v476 = vld [vmem:[#allocation2 + $0xba0] sm:$0xff]
    %v477 = vld [vmem:[#allocation2 + $0xba8] sm:$0xff]
    %v478 = vld [vmem:[#allocation2 + $0xbb0] sm:$0xff]
    %v479 = vld [vmem:[#allocation2 + $0xbb8] sm:$0xff]
    %v480 = vld [vmem:[#allocation2 + $0xbc0] sm:$0xff]
    %v481 = vld [vmem:[#allocation2 + $0xbc8] sm:$0xff]
    %v482 = vld [vmem:[#allocation2 + $0xbd0] sm:$0xff]
    %v483 = vld [vmem:[#allocation2 + $0xbd8] sm:$0xff]
    %v484 = vld [vmem:[#allocation2 + $0xbe0] sm:$0xff]
    %v485 = vld [vmem:[#allocation2 + $0xbe8] sm:$0xff]
    %v486 = vld [vmem:[#allocation2 + $0xbf0] sm:$0xff]
    %v487 = vld [vmem:[#allocation2 + $0xbf8] sm:$0xff]
    %v488 = vld [vmem:[#allocation2 + $0xc00] sm:$0xff]
    %v489 = vld [vmem:[#allocation2 + $0xc08] sm:$0xff]
    %v490 = vld [vmem:[#allocation2 + $0xc10] sm:$0xff]
    %v491 = vld [vmem:[#allocation2 + $0xc18] sm:$0xff]
    %v492 = vld [vmem:[#allocation2 + $0xc20] sm:$0xff]
    %v493 = vld [vmem:[#allocation2 + $0xc28] sm:$0xff]
    %v494 = vld [vmem:[#allocation2 + $0xc30] sm:$0xff]
    %v495 = vld [vmem:[#allocation2 + $0xc38] sm:$0xff]
    %v496 = vld [vmem:[#allocation2 + $0xc40] sm:$0xff]
    %v497 = vld [vmem:[#allocation2 + $0xc48] sm:$0xff]
    %v498 = vld [vmem:[#allocation2 + $0xc50] sm:$0xff]
    %v499 = vld [vmem:[#allocation2 + $0xc58] sm:$0xff]
    %v500 = vld [vmem:[#allocation2 + $0xc60] sm:$0xff]
    %v501 = vld [vmem:[#allocation2 + $0xc68] sm:$0xff]
    %v502 = vld [vmem:[#allocation2 + $0xc70] sm:$0xff]
    %v503 = vld [vmem:[#allocation2 + $0xc78] sm:$0xff]
    %v504 = vld [vmem:[#allocation2 + $0xc80] sm:$0xff]
    %v505 = vld [vmem:[#allocation2 + $0xc88] sm:$0xff]
    %v506 = vld [vmem:[#allocation2 + $0xc90] sm:$0xff]
    %v507 = vld [vmem:[#allocation2 + $0xc98] sm:$0xff]
    %v508 = vld [vmem:[#allocation2 + $0xca0] sm:$0xff]
    %v509 = vld [vmem:[#allocation2 + $0xca8] sm:$0xff]
    %v510 = vld [vmem:[#allocation2 + $0xcb0] sm:$0xff]
    %v511 = vld [vmem:[#allocation2 + $0xcb8] sm:$0xff]
    %v512 = vld [vmem:[#allocation2 + $0xcc0] sm:$0xff]
    %v513 = vld [vmem:[#allocation2 + $0xcc8] sm:$0xff]
    %v514 = vld [vmem:[#allocation2 + $0xcd0] sm:$0xff]
    %v515 = vld [vmem:[#allocation2 + $0xcd8] sm:$0xff]
    %v516 = vld [vmem:[#allocation2 + $0xce0] sm:$0xff]
    %v517 = vld [vmem:[#allocation2 + $0xce8] sm:$0xff]
    %v518 = vld [vmem:[#allocation2 + $0xcf0] sm:$0xff]
    %v519 = vld [vmem:[#allocation2 + $0xcf8] sm:$0xff]
    %v520 = vld [vmem:[#allocation2 + $0xd00] sm:$0xff]
    %v521 = vld [vmem:[#allocation2 + $0xd08] sm:$0xff]
    %v522 = vld [vmem:[#allocation2 + $0xd10] sm:$0xff]
    %v523 = vld [vmem:[#allocation2 + $0xd18] sm:$0xff]
    %v524 = vld [vmem:[#allocation2 + $0xd20] sm:$0xff]
    %v525 = vld [vmem:[#allocation2 + $0xd28] sm:$0xff]
    %v526 = vld [vmem:[#allocation2 + $0xd30] sm:$0xff]
    %v527 = vld [vmem:[#allocation2 + $0xd38] sm:$0xff]
    %v528 = vld [vmem:[#allocation2 + $0xd40] sm:$0xff]
    %v529 = vld [vmem:[#allocation2 + $0xd48] sm:$0xff]
    %v530 = vld [vmem:[#allocation2 + $0xd50] sm:$0xff]
    %v531 = vld [vmem:[#allocation2 + $0xd58] sm:$0xff]
    %v532 = vld [vmem:[#allocation2 + $0xd60] sm:$0xff]
    %v533 = vld [vmem:[#allocation2 + $0xd68] sm:$0xff]
    %v534 = vld [vmem:[#allocation2 + $0xd70] sm:$0xff]
    %v535 = vld [vmem:[#allocation2 + $0xd78] sm:$0xff]
    %v536 = vld [vmem:[#allocation2 + $0xd80] sm:$0xff]
    %v537 = vld [vmem:[#allocation2 + $0xd88] sm:$0xff]
    %v538 = vld [vmem:[#allocation2 + $0xd90] sm:$0xff]
    %v539 = vld [vmem:[#allocation2 + $0xd98] sm:$0xff]
    %v540 = vld [vmem:[#allocation2 + $0xda0] sm:$0xff]
    %v541 = vld [vmem:[#allocation2 + $0xda8] sm:$0xff]
    %v542 = vld [vmem:[#allocation2 + $0xdb0] sm:$0xff]
    %v543 = vld [vmem:[#allocation2 + $0xdb8] sm:$0xff]
    %v544 = vld [vmem:[#allocation2 + $0xdc0] sm:$0xff]
    %v545 = vld [vmem:[#allocation2 + $0xdc8] sm:$0xff]
    %v546 = vld [vmem:[#allocation2 + $0xdd0] sm:$0xff]
    %v547 = vld [vmem:[#allocation2 + $0xdd8] sm:$0xff]
    %v548 = vld [vmem:[#allocation2 + $0xde0] sm:$0xff]
    %v549 = vld [vmem:[#allocation2 + $0xde8] sm:$0xff]
    %v550 = vld [vmem:[#allocation2 + $0xdf0] sm:$0xff]
    %v551 = vld [vmem:[#allocation2 + $0xdf8] sm:$0xff]
    %v552 = vld [vmem:[#allocation2 + $0xe00] sm:$0xff]
    %v553 = vld [vmem:[#allocation2 + $0xe08] sm:$0xff]
    %v554 = vld [vmem:[#allocation2 + $0xe10] sm:$0xff]
    %v555 = vld [vmem:[#allocation2 + $0xe18] sm:$0xff]
    %v556 = vld [vmem:[#allocation2 + $0xe20] sm:$0xff]
    %v557 = vld [vmem:[#allocation2 + $0xe28] sm:$0xff]
    %v558 = vld [vmem:[#allocation2 + $0xe30] sm:$0xff]
    %v559 = vld [vmem:[#allocation2 + $0xe38] sm:$0xff]
    %v560 = vld [vmem:[#allocation2 + $0xe40] sm:$0xff]
    %v561 = vld [vmem:[#allocation2 + $0xe48] sm:$0xff]
    %v562 = vld [vmem:[#allocation2 + $0xe50] sm:$0xff]
    %v563 = vld [vmem:[#allocation2 + $0xe58] sm:$0xff]
    %v564 = vld [vmem:[#allocation2 + $0xe60] sm:$0xff]
    %v565 = vld [vmem:[#allocation2 + $0xe68] sm:$0xff]
    %v566 = vld [vmem:[#allocation2 + $0xe70] sm:$0xff]
    %v567 = vld [vmem:[#allocation2 + $0xe78] sm:$0xff]
    %v568 = vld [vmem:[#allocation2 + $0xe80] sm:$0xff]
    %v569 = vld [vmem:[#allocation2 + $0xe88] sm:$0xff]
    %v570 = vld [vmem:[#allocation2 + $0xe90] sm:$0xff]
    %v571 = vld [vmem:[#allocation2 + $0xe98] sm:$0xff]
    %v572 = vld [vmem:[#allocation2 + $0xea0] sm:$0xff]
    %v573 = vld [vmem:[#allocation2 + $0xea8] sm:$0xff]
    %v574 = vld [vmem:[#allocation2 + $0xeb0] sm:$0xff]
    %v575 = vld [vmem:[#allocation2 + $0xeb8] sm:$0xff]
    %v576 = vld [vmem:[#allocation2 + $0xec0] sm:$0xff]
    %v577 = vld [vmem:[#allocation2 + $0xec8] sm:$0xff]
    %v578 = vld [vmem:[#allocation2 + $0xed0] sm:$0xff]
    %v579 = vld [vmem:[#allocation2 + $0xed8] sm:$0xff]
    %v580 = vld [vmem:[#allocation2 + $0xee0] sm:$0xff]
    %v581 = vld [vmem:[#allocation2 + $0xee8] sm:$0xff]
    %v582 = vld [vmem:[#allocation2 + $0xef0] sm:$0xff]
    %v583 = vld [vmem:[#allocation2 + $0xef8] sm:$0xff]
    %v584 = vld [vmem:[#allocation2 + $0xf00] sm:$0xff]
    %v585 = vld [vmem:[#allocation2 + $0xf08] sm:$0xff]
    %v586 = vld [vmem:[#allocation2 + $0xf10] sm:$0xff]
    %v587 = vld [vmem:[#allocation2 + $0xf18] sm:$0xff]
    %v588 = vld [vmem:[#allocation2 + $0xf20] sm:$0xff]
    %v589 = vld [vmem:[#allocation2 + $0xf28] sm:$0xff]
    %v590 = vld [vmem:[#allocation2 + $0xf30] sm:$0xff]
    %v591 = vld [vmem:[#allocation2 + $0xf38] sm:$0xff]
    %v592 = vld [vmem:[#allocation2 + $0xf40] sm:$0xff]
    %v593 = vld [vmem:[#allocation2 + $0xf48] sm:$0xff]
    %v594 = vld [vmem:[#allocation2 + $0xf50] sm:$0xff]
    %v595 = vld [vmem:[#allocation2 + $0xf58] sm:$0xff]
    %v596 = vld [vmem:[#allocation2 + $0xf60] sm:$0xff]
    %v597 = vld [vmem:[#allocation2 + $0xf68] sm:$0xff]
    %v598 = vld [vmem:[#allocation2 + $0xf70] sm:$0xff]
    %v599 = vld [vmem:[#allocation2 + $0xf78] sm:$0xff]
    %v600 = vld [vmem:[#allocation2 + $0xf80] sm:$0xff]
    %v601 = vld [vmem:[#allocation2 + $0xf88] sm:$0xff]
    %v602 = vld [vmem:[#allocation2 + $0xf90] sm:$0xff]
    %v603 = vld [vmem:[#allocation2 + $0xf98] sm:$0xff]
    %v604 = vld [vmem:[#allocation2 + $0xfa0] sm:$0xff]
    %v605 = vld [vmem:[#allocation2 + $0xfa8] sm:$0xff]
    %v606 = vld [vmem:[#allocation2 + $0xfb0] sm:$0xff]
    %v607 = vld [vmem:[#allocation2 + $0xfb8] sm:$0xff]
    %v608 = vld [vmem:[#allocation2 + $0xfc0] sm:$0xff]
    %v609 = vld [vmem:[#allocation2 + $0xfc8] sm:$0xff]
    %v610 = vld [vmem:[#allocation2 + $0xfd0] sm:$0xff]
    %v611 = vld [vmem:[#allocation2 + $0xfd8] sm:$0xff]
    %v612 = vld [vmem:[#allocation2 + $0xfe0] sm:$0xff]
    %v613 = vld [vmem:[#allocation2 + $0xfe8] sm:$0xff]
    %v614 = vld [vmem:[#allocation2 + $0xff0] sm:$0xff]
    %v615 = vld [vmem:[#allocation2 + $0xff8] sm:$0xff]
    %v616 = vld [vmem:[#allocation4] sm:$0xf]
    %v618 = vlaneseq
    %v619 = vshrl.u32 %v618, 7
    %v620 = vsub.s32 0, %v619
    %v621 = vrot.slane %v616, %v620
    %v622 = vlaneseq
    %v623 = vshrl.u32 %v622, 7
    %v624 = vsub.s32 1, %v623
    %v625 = vrot.slane %v616, %v624
    %v626 = vlaneseq
    %v627 = vshrl.u32 %v626, 7
    %v628 = vsub.s32 2, %v627
    %v629 = vrot.slane %v616, %v628
    %v630 = vlaneseq
    %v631 = vshrl.u32 %v630, 7
    %v632 = vsub.s32 3, %v631
    %v633 = vrot.slane %v616, %v632
    %v640 = vcombine.high %v102, %v102
    %v642 = vunpack.c.l.s4 1983009808
    %v643 = vunpack.c.0.s8 %v642
    %v644 = vlaneseq
    %v645 = vshrl.u32 %v644, 7
    %v646 = vsub.s32 %v643, %v645
    %v647 = vrot.slane %v102, %v646
    %v649 = vunpack.c.l.s4 1983009808
    %v650 = vunpack.c.0.s8 %v649
    %v651 = vlaneseq
    %v652 = vshrl.u32 %v651, 7
    %v653 = vsub.s32 %v650, %v652
    %v654 = vrot.slane %v640, %v653
    %v655 = vcombine.high %v647, %v647
    %v656 = vcombine.high %v654, %v654
    %v657 = vcombine.high %v103, %v103
    %v659 = vunpack.c.l.s4 1983009808
    %v660 = vunpack.c.0.s8 %v659
    %v661 = vlaneseq
    %v662 = vshrl.u32 %v661, 7
    %v663 = vsub.s32 %v660, %v662
    %v664 = vrot.slane %v103, %v663
    %v666 = vunpack.c.l.s4 1983009808
    %v667 = vunpack.c.0.s8 %v666
    %v668 = vlaneseq
    %v669 = vshrl.u32 %v668, 7
    %v670 = vsub.s32 %v667, %v669
    %v671 = vrot.slane %v657, %v670
    %v672 = vcombine.high %v664, %v664
    %v673 = vcombine.high %v671, %v671
    %682 = vmatprep.subr.mxu0 %v105
    %683 = vmatpush1.msra.mxu0 %v104
    %684 = vmatprep.subr.mxu0 %v109
    %685 = vmatpush1.msra.mxu0 %v108
    %686 = vmatprep.subr.mxu0 %v113
    %687 = vmatpush1.msra.mxu0 %v112
    %688 = vmatprep.subr.mxu0 %v117
    %689 = vmatpush1.msra.mxu0 %v116
    %690 = vmatprep.subr.mxu0 %v121
    %691 = vmatpush1.msra.mxu0 %v120
    %692 = vmatprep.subr.mxu0 %v125
    %693 = vmatpush1.msra.mxu0 %v124
    %694 = vmatprep.subr.mxu0 %v129
    %695 = vmatpush1.msra.mxu0 %v128
    %696 = vmatprep.subr.mxu0 %v133
    %697 = vmatpush1.msra.mxu0 %v132
    %698 = vmatprep.subr.mxu0 %v137
    %699 = vmatpush1.msra.mxu0 %v136
    %700 = vmatprep.subr.mxu0 %v141
    %701 = vmatpush1.msra.mxu0 %v140
    %702 = vmatprep.subr.mxu0 %v145
    %703 = vmatpush1.msra.mxu0 %v144
    %704 = vmatprep.subr.mxu0 %v149
    %705 = vmatpush1.msra.mxu0 %v148
    %706 = vmatprep.subr.mxu0 %v153
    %707 = vmatpush1.msra.mxu0 %v152
    %708 = vmatprep.subr.mxu0 %v157
    %709 = vmatpush1.msra.mxu0 %v156
    %710 = vmatprep.subr.mxu0 %v161
    %711 = vmatpush1.msra.mxu0 %v160
    %712 = vmatprep.subr.mxu0 %v165
    %713 = vmatpush1.msra.mxu0 %v164
    %714 = vmatprep.subr.mxu0 %v169
    %715 = vmatpush1.msra.mxu0 %v168
    %716 = vmatprep.subr.mxu0 %v173
    %717 = vmatpush1.msra.mxu0 %v172
    %718 = vmatprep.subr.mxu0 %v177
    %719 = vmatpush1.msra.mxu0 %v176
    %720 = vmatprep.subr.mxu0 %v181
    %721 = vmatpush1.msra.mxu0 %v180
    %722 = vmatprep.subr.mxu0 %v185
    %723 = vmatpush1.msra.mxu0 %v184
    %724 = vmatprep.subr.mxu0 %v189
    %725 = vmatpush1.msra.mxu0 %v188
    %726 = vmatprep.subr.mxu0 %v193
    %727 = vmatpush1.msra.mxu0 %v192
    %728 = vmatprep.subr.mxu0 %v197
    %729 = vmatpush1.msra.mxu0 %v196
    %730 = vmatprep.subr.mxu0 %v201
    %731 = vmatpush1.msra.mxu0 %v200
    %732 = vmatprep.subr.mxu0 %v205
    %733 = vmatpush1.msra.mxu0 %v204
    %734 = vmatprep.subr.mxu0 %v209
    %735 = vmatpush1.msra.mxu0 %v208
    %736 = vmatprep.subr.mxu0 %v213
    %737 = vmatpush1.msra.mxu0 %v212
    %738 = vmatprep.subr.mxu0 %v217
    %739 = vmatpush1.msra.mxu0 %v216
    %740 = vmatprep.subr.mxu0 %v221
    %741 = vmatpush1.msra.mxu0 %v220
    %742 = vmatprep.subr.mxu0 %v225
    %743 = vmatpush1.msra.mxu0 %v224
    %744 = vmatprep.subr.mxu0 %v229
    %745 = vmatpush1.msra.mxu0 %v228
    %746 = vmatprep.mubr.f32.mxu0 %v655
    %747 = vmatmul.mubr.f32.gmra.mrb[0].mxu0 %v647
    %v748 = vpop.f32.mrb[0].mxu0
    %v749 = vadd.f32 %v621, %v748
    %v750 = vpop.f32.mrb[0].mxu0
    %v751 = vadd.f32 %v625, %v750
    %752 = vdwg.mxu0
    %753 = vmatprep.subr.mxu0 %v233
    %754 = vmatpush1.msra.mxu0 %v232
    %755 = vmatprep.subr.mxu0 %v237
    %756 = vmatpush1.msra.mxu0 %v236
    %757 = vmatprep.subr.mxu0 %v241
    %758 = vmatpush1.msra.mxu0 %v240
    %759 = vmatprep.subr.mxu0 %v245
    %760 = vmatpush1.msra.mxu0 %v244
    %761 = vmatprep.subr.mxu0 %v249
    %762 = vmatpush1.msra.mxu0 %v248
    %763 = vmatprep.subr.mxu0 %v253
    %764 = vmatpush1.msra.mxu0 %v252
    %765 = vmatprep.subr.mxu0 %v257
    %766 = vmatpush1.msra.mxu0 %v256
    %767 = vmatprep.subr.mxu0 %v261
    %768 = vmatpush1.msra.mxu0 %v260
    %769 = vmatprep.subr.mxu0 %v265
    %770 = vmatpush1.msra.mxu0 %v264
    %771 = vmatprep.subr.mxu0 %v269
    %772 = vmatpush1.msra.mxu0 %v268
    %773 = vmatprep.subr.mxu0 %v273
    %774 = vmatpush1.msra.mxu0 %v272
    %775 = vmatprep.subr.mxu0 %v277
    %776 = vmatpush1.msra.mxu0 %v276
    %777 = vmatprep.subr.mxu0 %v281
    %778 = vmatpush1.msra.mxu0 %v280
    %779 = vmatprep.subr.mxu0 %v285
    %780 = vmatpush1.msra.mxu0 %v284
    %781 = vmatprep.subr.mxu0 %v289
    %782 = vmatpush1.msra.mxu0 %v288
    %783 = vmatprep.subr.mxu0 %v293
    %784 = vmatpush1.msra.mxu0 %v292
    %785 = vmatprep.subr.mxu0 %v297
    %786 = vmatpush1.msra.mxu0 %v296
    %787 = vmatprep.subr.mxu0 %v301
    %788 = vmatpush1.msra.mxu0 %v300
    %789 = vmatprep.subr.mxu0 %v305
    %790 = vmatpush1.msra.mxu0 %v304
    %791 = vmatprep.subr.mxu0 %v309
    %792 = vmatpush1.msra.mxu0 %v308
    %793 = vmatprep.subr.mxu0 %v313
    %794 = vmatpush1.msra.mxu0 %v312
    %795 = vmatprep.subr.mxu0 %v317
    %796 = vmatpush1.msra.mxu0 %v316
    %797 = vmatprep.subr.mxu0 %v321
    %798 = vmatpush1.msra.mxu0 %v320
    %799 = vmatprep.subr.mxu0 %v325
    %800 = vmatpush1.msra.mxu0 %v324
    %801 = vmatprep.subr.mxu0 %v329
    %802 = vmatpush1.msra.mxu0 %v328
    %803 = vmatprep.subr.mxu0 %v333
    %804 = vmatpush1.msra.mxu0 %v332
    %805 = vmatprep.subr.mxu0 %v337
    %806 = vmatpush1.msra.mxu0 %v336
    %807 = vmatprep.subr.mxu0 %v341
    %808 = vmatpush1.msra.mxu0 %v340
    %809 = vmatprep.subr.mxu0 %v345
    %810 = vmatpush1.msra.mxu0 %v344
    %811 = vmatprep.subr.mxu0 %v349
    %812 = vmatpush1.msra.mxu0 %v348
    %813 = vmatprep.subr.mxu0 %v353
    %814 = vmatpush1.msra.mxu0 %v352
    %815 = vmatprep.subr.mxu0 %v357
    %816 = vmatpush1.msra.mxu0 %v356
    %817 = vmatprep.mubr.f32.mxu0 %v656
    %818 = vmatmul.mubr.f32.gmra.mrb[0].mxu0 %v654
    %v819 = vpop.f32.mrb[0].mxu0
    %v820 = vadd.f32 %v749, %v819
    %v821 = vpop.f32.mrb[0].mxu0
    %v822 = vadd.f32 %v751, %v821
    %823 = vdwg.mxu0
    %824 = vmatprep.subr.mxu0 %v361
    %825 = vmatpush1.msra.mxu0 %v360
    %826 = vmatprep.subr.mxu0 %v365
    %827 = vmatpush1.msra.mxu0 %v364
    %828 = vmatprep.subr.mxu0 %v369
    %829 = vmatpush1.msra.mxu0 %v368
    %830 = vmatprep.subr.mxu0 %v373
    %831 = vmatpush1.msra.mxu0 %v372
    %832 = vmatprep.subr.mxu0 %v377
    %833 = vmatpush1.msra.mxu0 %v376
    %834 = vmatprep.subr.mxu0 %v381
    %835 = vmatpush1.msra.mxu0 %v380
    %836 = vmatprep.subr.mxu0 %v385
    %837 = vmatpush1.msra.mxu0 %v384
    %838 = vmatprep.subr.mxu0 %v389
    %839 = vmatpush1.msra.mxu0 %v388
    %840 = vmatprep.subr.mxu0 %v393
    %841 = vmatpush1.msra.mxu0 %v392
    %842 = vmatprep.subr.mxu0 %v397
    %843 = vmatpush1.msra.mxu0 %v396
    %844 = vmatprep.subr.mxu0 %v401
    %845 = vmatpush1.msra.mxu0 %v400
    %846 = vmatprep.subr.mxu0 %v405
    %847 = vmatpush1.msra.mxu0 %v404
    %848 = vmatprep.subr.mxu0 %v409
    %849 = vmatpush1.msra.mxu0 %v408
    %850 = vmatprep.subr.mxu0 %v413
    %851 = vmatpush1.msra.mxu0 %v412
    %852 = vmatprep.subr.mxu0 %v417
    %853 = vmatpush1.msra.mxu0 %v416
    %854 = vmatprep.subr.mxu0 %v421
    %855 = vmatpush1.msra.mxu0 %v420
    %856 = vmatprep.subr.mxu0 %v425
    %857 = vmatpush1.msra.mxu0 %v424
    %858 = vmatprep.subr.mxu0 %v429
    %859 = vmatpush1.msra.mxu0 %v428
    %860 = vmatprep.subr.mxu0 %v433
    %861 = vmatpush1.msra.mxu0 %v432
    %862 = vmatprep.subr.mxu0 %v437
    %863 = vmatpush1.msra.mxu0 %v436
    %864 = vmatprep.subr.mxu0 %v441
    %865 = vmatpush1.msra.mxu0 %v440
    %866 = vmatprep.subr.mxu0 %v445
    %867 = vmatpush1.msra.mxu0 %v444
    %868 = vmatprep.subr.mxu0 %v449
    %869 = vmatpush1.msra.mxu0 %v448
    %870 = vmatprep.subr.mxu0 %v453
    %871 = vmatpush1.msra.mxu0 %v452
    %872 = vmatprep.subr.mxu0 %v457
    %873 = vmatpush1.msra.mxu0 %v456
    %874 = vmatprep.subr.mxu0 %v461
    %875 = vmatpush1.msra.mxu0 %v460
    %876 = vmatprep.subr.mxu0 %v465
    %877 = vmatpush1.msra.mxu0 %v464
    %878 = vmatprep.subr.mxu0 %v469
    %879 = vmatpush1.msra.mxu0 %v468
    %880 = vmatprep.subr.mxu0 %v473
    %881 = vmatpush1.msra.mxu0 %v472
    %882 = vmatprep.subr.mxu0 %v477
    %883 = vmatpush1.msra.mxu0 %v476
    %884 = vmatprep.subr.mxu0 %v481
    %885 = vmatpush1.msra.mxu0 %v480
    %886 = vmatprep.subr.mxu0 %v485
    %887 = vmatpush1.msra.mxu0 %v484
    %888 = vmatprep.mubr.f32.mxu0 %v672
    %889 = vmatmul.mubr.f32.gmra.mrb[0].mxu0 %v664
    %v890 = vpop.f32.mrb[0].mxu0
    %v891 = vadd.f32 %v820, %v890
    %v892 = vpop.f32.mrb[0].mxu0
    %v893 = vadd.f32 %v822, %v892
    %894 = vdwg.mxu0
    %895 = vmatprep.subr.mxu0 %v489
    %896 = vmatpush1.msra.mxu0 %v488
    %897 = vmatprep.subr.mxu0 %v493
    %898 = vmatpush1.msra.mxu0 %v492
    %899 = vmatprep.subr.mxu0 %v497
    %900 = vmatpush1.msra.mxu0 %v496
    %901 = vmatprep.subr.mxu0 %v501
    %902 = vmatpush1.msra.mxu0 %v500
    %903 = vmatprep.subr.mxu0 %v505
    %904 = vmatpush1.msra.mxu0 %v504
    %905 = vmatprep.subr.mxu0 %v509
    %906 = vmatpush1.msra.mxu0 %v508
    %907 = vmatprep.subr.mxu0 %v513
    %908 = vmatpush1.msra.mxu0 %v512
    %909 = vmatprep.subr.mxu0 %v517
    %910 = vmatpush1.msra.mxu0 %v516
    %911 = vmatprep.subr.mxu0 %v521
    %912 = vmatpush1.msra.mxu0 %v520
    %913 = vmatprep.subr.mxu0 %v525
    %914 = vmatpush1.msra.mxu0 %v524
    %915 = vmatprep.subr.mxu0 %v529
    %916 = vmatpush1.msra.mxu0 %v528
    %917 = vmatprep.subr.mxu0 %v533
    %918 = vmatpush1.msra.mxu0 %v532
    %919 = vmatprep.subr.mxu0 %v537
    %920 = vmatpush1.msra.mxu0 %v536
    %921 = vmatprep.subr.mxu0 %v541
    %922 = vmatpush1.msra.mxu0 %v540
    %923 = vmatprep.subr.mxu0 %v545
    %924 = vmatpush1.msra.mxu0 %v544
    %925 = vmatprep.subr.mxu0 %v549
    %926 = vmatpush1.msra.mxu0 %v548
    %927 = vmatprep.subr.mxu0 %v553
    %928 = vmatpush1.msra.mxu0 %v552
    %929 = vmatprep.subr.mxu0 %v557
    %930 = vmatpush1.msra.mxu0 %v556
    %931 = vmatprep.subr.mxu0 %v561
    %932 = vmatpush1.msra.mxu0 %v560
    %933 = vmatprep.subr.mxu0 %v565
    %934 = vmatpush1.msra.mxu0 %v564
    %935 = vmatprep.subr.mxu0 %v569
    %936 = vmatpush1.msra.mxu0 %v568
    %937 = vmatprep.subr.mxu0 %v573
    %938 = vmatpush1.msra.mxu0 %v572
    %939 = vmatprep.subr.mxu0 %v577
    %940 = vmatpush1.msra.mxu0 %v576
    %941 = vmatprep.subr.mxu0 %v581
    %942 = vmatpush1.msra.mxu0 %v580
    %943 = vmatprep.subr.mxu0 %v585
    %944 = vmatpush1.msra.mxu0 %v584
    %945 = vmatprep.subr.mxu0 %v589
    %946 = vmatpush1.msra.mxu0 %v588
    %947 = vmatprep.subr.mxu0 %v593
    %948 = vmatpush1.msra.mxu0 %v592
    %949 = vmatprep.subr.mxu0 %v597
    %950 = vmatpush1.msra.mxu0 %v596
    %951 = vmatprep.subr.mxu0 %v601
    %952 = vmatpush1.msra.mxu0 %v600
    %953 = vmatprep.subr.mxu0 %v605
    %954 = vmatpush1.msra.mxu0 %v604
    %955 = vmatprep.subr.mxu0 %v609
    %956 = vmatpush1.msra.mxu0 %v608
    %957 = vmatprep.subr.mxu0 %v613
    %958 = vmatpush1.msra.mxu0 %v612
    %959 = vmatprep.mubr.f32.mxu0 %v673
    %960 = vmatmul.mubr.f32.gmra.mrb[0].mxu0 %v671
    %v961 = vpop.f32.mrb[0].mxu0
    %v962 = vadd.f32 %v891, %v961
    %v963 = vpop.f32.mrb[0].mxu0
    %v964 = vadd.f32 %v893, %v963
    %965 = vdwg.mxu0
    %966 = vmatprep.subr.mxu0 %v107
    %967 = vmatpush1.msra.mxu0 %v106
    %968 = vmatprep.subr.mxu0 %v111
    %969 = vmatpush1.msra.mxu0 %v110
    %970 = vmatprep.subr.mxu0 %v115
    %971 = vmatpush1.msra.mxu0 %v114
    %972 = vmatprep.subr.mxu0 %v119
    %973 = vmatpush1.msra.mxu0 %v118
    %974 = vmatprep.subr.mxu0 %v123
    %975 = vmatpush1.msra.mxu0 %v122
    %976 = vmatprep.subr.mxu0 %v127
    %977 = vmatpush1.msra.mxu0 %v126
    %978 = vmatprep.subr.mxu0 %v131
    %979 = vmatpush1.msra.mxu0 %v130
    %980 = vmatprep.subr.mxu0 %v135
    %981 = vmatpush1.msra.mxu0 %v134
    %982 = vmatprep.subr.mxu0 %v139
    %983 = vmatpush1.msra.mxu0 %v138
    %984 = vmatprep.subr.mxu0 %v143
    %985 = vmatpush1.msra.mxu0 %v142
    %986 = vmatprep.subr.mxu0 %v147
    %987 = vmatpush1.msra.mxu0 %v146
    %988 = vmatprep.subr.mxu0 %v151
    %989 = vmatpush1.msra.mxu0 %v150
    %990 = vmatprep.subr.mxu0 %v155
    %991 = vmatpush1.msra.mxu0 %v154
    %992 = vmatprep.subr.mxu0 %v159
    %993 = vmatpush1.msra.mxu0 %v158
    %994 = vmatprep.subr.mxu0 %v163
    %995 = vmatpush1.msra.mxu0 %v162
    %996 = vmatprep.subr.mxu0 %v167
    %997 = vmatpush1.msra.mxu0 %v166
    %998 = vmatprep.subr.mxu0 %v171
    %999 = vmatpush1.msra.mxu0 %v170
    %1000 = vmatprep.subr.mxu0 %v175
    %1001 = vmatpush1.msra.mxu0 %v174
    %1002 = vmatprep.subr.mxu0 %v179
    %1003 = vmatpush1.msra.mxu0 %v178
    %1004 = vmatprep.subr.mxu0 %v183
    %1005 = vmatpush1.msra.mxu0 %v182
    %1006 = vmatprep.subr.mxu0 %v187
    %1007 = vmatpush1.msra.mxu0 %v186
    %1008 = vmatprep.subr.mxu0 %v191
    %1009 = vmatpush1.msra.mxu0 %v190
    %1010 = vmatprep.subr.mxu0 %v195
    %1011 = vmatpush1.msra.mxu0 %v194
    %1012 = vmatprep.subr.mxu0 %v199
    %1013 = vmatpush1.msra.mxu0 %v198
    %1014 = vmatprep.subr.mxu0 %v203
    %1015 = vmatpush1.msra.mxu0 %v202
    %1016 = vmatprep.subr.mxu0 %v207
    %1017 = vmatpush1.msra.mxu0 %v206
    %1018 = vmatprep.subr.mxu0 %v211
    %1019 = vmatpush1.msra.mxu0 %v210
    %1020 = vmatprep.subr.mxu0 %v215
    %1021 = vmatpush1.msra.mxu0 %v214
    %1022 = vmatprep.subr.mxu0 %v219
    %1023 = vmatpush1.msra.mxu0 %v218
    %1024 = vmatprep.subr.mxu0 %v223
    %1025 = vmatpush1.msra.mxu0 %v222
    %1026 = vmatprep.subr.mxu0 %v227
    %1027 = vmatpush1.msra.mxu0 %v226
    %1028 = vmatprep.subr.mxu0 %v231
    %1029 = vmatpush1.msra.mxu0 %v230
    %1030 = vmatprep.mubr.f32.mxu0 %v655
    %1031 = vmatmul.mubr.f32.gmra.mrb[0].mxu0 %v647
    %v1032 = vpop.f32.mrb[0].mxu0
    %v1033 = vadd.f32 %v629, %v1032
    %v1034 = vpop.f32.mrb[0].mxu0
    %v1035 = vadd.f32 %v633, %v1034
    %1036 = vdwg.mxu0
    %1037 = vmatprep.subr.mxu0 %v235
    %1038 = vmatpush1.msra.mxu0 %v234
    %1039 = vmatprep.subr.mxu0 %v239
    %1040 = vmatpush1.msra.mxu0 %v238
    %1041 = vmatprep.subr.mxu0 %v243
    %1042 = vmatpush1.msra.mxu0 %v242
    %1043 = vmatprep.subr.mxu0 %v247
    %1044 = vmatpush1.msra.mxu0 %v246
    %1045 = vmatprep.subr.mxu0 %v251
    %1046 = vmatpush1.msra.mxu0 %v250
    %1047 = vmatprep.subr.mxu0 %v255
    %1048 = vmatpush1.msra.mxu0 %v254
    %1049 = vmatprep.subr.mxu0 %v259
    %1050 = vmatpush1.msra.mxu0 %v258
    %1051 = vmatprep.subr.mxu0 %v263
    %1052 = vmatpush1.msra.mxu0 %v262
    %1053 = vmatprep.subr.mxu0 %v267
    %1054 = vmatpush1.msra.mxu0 %v266
    %1055 = vmatprep.subr.mxu0 %v271
    %1056 = vmatpush1.msra.mxu0 %v270
    %1057 = vmatprep.subr.mxu0 %v275
    %1058 = vmatpush1.msra.mxu0 %v274
    %1059 = vmatprep.subr.mxu0 %v279
    %1060 = vmatpush1.msra.mxu0 %v278
    %1061 = vmatprep.subr.mxu0 %v283
    %1062 = vmatpush1.msra.mxu0 %v282
    %1063 = vmatprep.subr.mxu0 %v287
    %1064 = vmatpush1.msra.mxu0 %v286
    %1065 = vmatprep.subr.mxu0 %v291
    %1066 = vmatpush1.msra.mxu0 %v290
    %1067 = vmatprep.subr.mxu0 %v295
    %1068 = vmatpush1.msra.mxu0 %v294
    %1069 = vmatprep.subr.mxu0 %v299
    %1070 = vmatpush1.msra.mxu0 %v298
    %1071 = vmatprep.subr.mxu0 %v303
    %1072 = vmatpush1.msra.mxu0 %v302
    %1073 = vmatprep.subr.mxu0 %v307
    %1074 = vmatpush1.msra.mxu0 %v306
    %1075 = vmatprep.subr.mxu0 %v311
    %1076 = vmatpush1.msra.mxu0 %v310
    %1077 = vmatprep.subr.mxu0 %v315
    %1078 = vmatpush1.msra.mxu0 %v314
    %1079 = vmatprep.subr.mxu0 %v319
    %1080 = vmatpush1.msra.mxu0 %v318
    %1081 = vmatprep.subr.mxu0 %v323
    %1082 = vmatpush1.msra.mxu0 %v322
    %1083 = vmatprep.subr.mxu0 %v327
    %1084 = vmatpush1.msra.mxu0 %v326
    %1085 = vmatprep.subr.mxu0 %v331
    %1086 = vmatpush1.msra.mxu0 %v330
    %1087 = vmatprep.subr.mxu0 %v335
    %1088 = vmatpush1.msra.mxu0 %v334
    %1089 = vmatprep.subr.mxu0 %v339
    %1090 = vmatpush1.msra.mxu0 %v338
    %1091 = vmatprep.subr.mxu0 %v343
    %1092 = vmatpush1.msra.mxu0 %v342
    %1093 = vmatprep.subr.mxu0 %v347
    %1094 = vmatpush1.msra.mxu0 %v346
    %1095 = vmatprep.subr.mxu0 %v351
    %1096 = vmatpush1.msra.mxu0 %v350
    %1097 = vmatprep.subr.mxu0 %v355
    %1098 = vmatpush1.msra.mxu0 %v354
    %1099 = vmatprep.subr.mxu0 %v359
    %1100 = vmatpush1.msra.mxu0 %v358
    %1101 = vmatprep.mubr.f32.mxu0 %v656
    %1102 = vmatmul.mubr.f32.gmra.mrb[0].mxu0 %v654
    %v1103 = vpop.f32.mrb[0].mxu0
    %v1104 = vadd.f32 %v1033, %v1103
    %v1105 = vpop.f32.mrb[0].mxu0
    %v1106 = vadd.f32 %v1035, %v1105
    %1107 = vdwg.mxu0
    %1108 = vmatprep.subr.mxu0 %v363
    %1109 = vmatpush1.msra.mxu0 %v362
    %1110 = vmatprep.subr.mxu0 %v367
    %1111 = vmatpush1.msra.mxu0 %v366
    %1112 = vmatprep.subr.mxu0 %v371
    %1113 = vmatpush1.msra.mxu0 %v370
    %1114 = vmatprep.subr.mxu0 %v375
    %1115 = vmatpush1.msra.mxu0 %v374
    %1116 = vmatprep.subr.mxu0 %v379
    %1117 = vmatpush1.msra.mxu0 %v378
    %1118 = vmatprep.subr.mxu0 %v383
    %1119 = vmatpush1.msra.mxu0 %v382
    %1120 = vmatprep.subr.mxu0 %v387
    %1121 = vmatpush1.msra.mxu0 %v386
    %1122 = vmatprep.subr.mxu0 %v391
    %1123 = vmatpush1.msra.mxu0 %v390
    %1124 = vmatprep.subr.mxu0 %v395
    %1125 = vmatpush1.msra.mxu0 %v394
    %1126 = vmatprep.subr.mxu0 %v399
    %1127 = vmatpush1.msra.mxu0 %v398
    %1128 = vmatprep.subr.mxu0 %v403
    %1129 = vmatpush1.msra.mxu0 %v402
    %1130 = vmatprep.subr.mxu0 %v407
    %1131 = vmatpush1.msra.mxu0 %v406
    %1132 = vmatprep.subr.mxu0 %v411
    %1133 = vmatpush1.msra.mxu0 %v410
    %1134 = vmatprep.subr.mxu0 %v415
    %1135 = vmatpush1.msra.mxu0 %v414
    %1136 = vmatprep.subr.mxu0 %v419
    %1137 = vmatpush1.msra.mxu0 %v418
    %1138 = vmatprep.subr.mxu0 %v423
    %1139 = vmatpush1.msra.mxu0 %v422
    %1140 = vmatprep.subr.mxu0 %v427
    %1141 = vmatpush1.msra.mxu0 %v426
    %1142 = vmatprep.subr.mxu0 %v431
    %1143 = vmatpush1.msra.mxu0 %v430
    %1144 = vmatprep.subr.mxu0 %v435
    %1145 = vmatpush1.msra.mxu0 %v434
    %1146 = vmatprep.subr.mxu0 %v439
    %1147 = vmatpush1.msra.mxu0 %v438
    %1148 = vmatprep.subr.mxu0 %v443
    %1149 = vmatpush1.msra.mxu0 %v442
    %1150 = vmatprep.subr.mxu0 %v447
    %1151 = vmatpush1.msra.mxu0 %v446
    %1152 = vmatprep.subr.mxu0 %v451
    %1153 = vmatpush1.msra.mxu0 %v450
    %1154 = vmatprep.subr.mxu0 %v455
    %1155 = vmatpush1.msra.mxu0 %v454
    %1156 = vmatprep.subr.mxu0 %v459
    %1157 = vmatpush1.msra.mxu0 %v458
    %1158 = vmatprep.subr.mxu0 %v463
    %1159 = vmatpush1.msra.mxu0 %v462
    %1160 = vmatprep.subr.mxu0 %v467
    %1161 = vmatpush1.msra.mxu0 %v466
    %1162 = vmatprep.subr.mxu0 %v471
    %1163 = vmatpush1.msra.mxu0 %v470
    %1164 = vmatprep.subr.mxu0 %v475
    %1165 = vmatpush1.msra.mxu0 %v474
    %1166 = vmatprep.subr.mxu0 %v479
    %1167 = vmatpush1.msra.mxu0 %v478
    %1168 = vmatprep.subr.mxu0 %v483
    %1169 = vmatpush1.msra.mxu0 %v482
    %1170 = vmatprep.subr.mxu0 %v487
    %1171 = vmatpush1.msra.mxu0 %v486
    %1172 = vmatprep.mubr.f32.mxu0 %v672
    %1173 = vmatmul.mubr.f32.gmra.mrb[0].mxu0 %v664
    %v1174 = vpop.f32.mrb[0].mxu0
    %v1175 = vadd.f32 %v1104, %v1174
    %v1176 = vpop.f32.mrb[0].mxu0
    %v1177 = vadd.f32 %v1106, %v1176
    %1178 = vdwg.mxu0
    %1179 = vmatprep.subr.mxu0 %v491
    %1180 = vmatpush1.msra.mxu0 %v490
    %1181 = vmatprep.subr.mxu0 %v495
    %1182 = vmatpush1.msra.mxu0 %v494
    %1183 = vmatprep.subr.mxu0 %v499
    %1184 = vmatpush1.msra.mxu0 %v498
    %1185 = vmatprep.subr.mxu0 %v503
    %1186 = vmatpush1.msra.mxu0 %v502
    %1187 = vmatprep.subr.mxu0 %v507
    %1188 = vmatpush1.msra.mxu0 %v506
    %1189 = vmatprep.subr.mxu0 %v511
    %1190 = vmatpush1.msra.mxu0 %v510
    %1191 = vmatprep.subr.mxu0 %v515
    %1192 = vmatpush1.msra.mxu0 %v514
    %1193 = vmatprep.subr.mxu0 %v519
    %1194 = vmatpush1.msra.mxu0 %v518
    %1195 = vmatprep.subr.mxu0 %v523
    %1196 = vmatpush1.msra.mxu0 %v522
    %1197 = vmatprep.subr.mxu0 %v527
    %1198 = vmatpush1.msra.mxu0 %v526
    %1199 = vmatprep.subr.mxu0 %v531
    %1200 = vmatpush1.msra.mxu0 %v530
    %1201 = vmatprep.subr.mxu0 %v535
    %1202 = vmatpush1.msra.mxu0 %v534
    %1203 = vmatprep.subr.mxu0 %v539
    %1204 = vmatpush1.msra.mxu0 %v538
    %1205 = vmatprep.subr.mxu0 %v543
    %1206 = vmatpush1.msra.mxu0 %v542
    %1207 = vmatprep.subr.mxu0 %v547
    %1208 = vmatpush1.msra.mxu0 %v546
    %1209 = vmatprep.subr.mxu0 %v551
    %1210 = vmatpush1.msra.mxu0 %v550
    %1211 = vmatprep.subr.mxu0 %v555
    %1212 = vmatpush1.msra.mxu0 %v554
    %1213 = vmatprep.subr.mxu0 %v559
    %1214 = vmatpush1.msra.mxu0 %v558
    %1215 = vmatprep.subr.mxu0 %v563
    %1216 = vmatpush1.msra.mxu0 %v562
    %1217 = vmatprep.subr.mxu0 %v567
    %1218 = vmatpush1.msra.mxu0 %v566
    %1219 = vmatprep.subr.mxu0 %v571
    %1220 = vmatpush1.msra.mxu0 %v570
    %1221 = vmatprep.subr.mxu0 %v575
    %1222 = vmatpush1.msra.mxu0 %v574
    %1223 = vmatprep.subr.mxu0 %v579
    %1224 = vmatpush1.msra.mxu0 %v578
    %1225 = vmatprep.subr.mxu0 %v583
    %1226 = vmatpush1.msra.mxu0 %v582
    %1227 = vmatprep.subr.mxu0 %v587
    %1228 = vmatpush1.msra.mxu0 %v586
    %1229 = vmatprep.subr.mxu0 %v591
    %1230 = vmatpush1.msra.mxu0 %v590
    %1231 = vmatprep.subr.mxu0 %v595
    %1232 = vmatpush1.msra.mxu0 %v594
    %1233 = vmatprep.subr.mxu0 %v599
    %1234 = vmatpush1.msra.mxu0 %v598
    %1235 = vmatprep.subr.mxu0 %v603
    %1236 = vmatpush1.msra.mxu0 %v602
    %1237 = vmatprep.subr.mxu0 %v607
    %1238 = vmatpush1.msra.mxu0 %v606
    %1239 = vmatprep.subr.mxu0 %v611
    %1240 = vmatpush1.msra.mxu0 %v610
    %1241 = vmatprep.subr.mxu0 %v615
    %1242 = vmatpush1.msra.mxu0 %v614
    %1243 = vmatprep.mubr.f32.mxu0 %v673
    %1244 = vmatmul.mubr.f32.gmra.mrb[0].mxu0 %v671
    %v1245 = vpop.f32.mrb[0].mxu0
    %v1246 = vadd.f32 %v1175, %v1245
    %v1247 = vpop.f32.mrb[0].mxu0
    %v1248 = vadd.f32 %v1177, %v1247
    %1249 = vdwg.mxu0
    %v1250 = vmax.f32 %v962, 0.0
    %v1251 = vmax.f32 %v964, 0.0
    %v1252 = vmax.f32 %v1246, 0.0
    %v1253 = vmax.f32 %v1248, 0.0
    %v1254 = vld [vmem:[#allocation6] sm:$0xff]
    %v1255 = vld [vmem:[#allocation6 + $0x8] sm:$0xff]
    %v1256 = vld [vmem:[#allocation6 + $0x10] sm:$0xff]
    %v1257 = vld [vmem:[#allocation6 + $0x18] sm:$0xff]
    %v1258 = vld [vmem:[#allocation6 + $0x20] sm:$0xff]
    %v1259 = vld [vmem:[#allocation6 + $0x28] sm:$0xff]
    %v1260 = vld [vmem:[#allocation6 + $0x30] sm:$0xff]
    %v1261 = vld [vmem:[#allocation6 + $0x38] sm:$0xff]
    %v1262 = vld [vmem:[#allocation6 + $0x40] sm:$0xff]
    %v1263 = vld [vmem:[#allocation6 + $0x48] sm:$0xff]
    %v1264 = vld [vmem:[#allocation6 + $0x50] sm:$0xff]
    %v1265 = vld [vmem:[#allocation6 + $0x58] sm:$0xff]
    %v1266 = vld [vmem:[#allocation6 + $0x60] sm:$0xff]
    %v1267 = vld [vmem:[#allocation6 + $0x68] sm:$0xff]
    %v1268 = vld [vmem:[#allocation6 + $0x70] sm:$0xff]
    %v1269 = vld [vmem:[#allocation6 + $0x78] sm:$0xff]
    %v1270 = vld [vmem:[#allocation6 + $0x80] sm:$0xff]
    %v1271 = vld [vmem:[#allocation6 + $0x88] sm:$0xff]
    %v1272 = vld [vmem:[#allocation6 + $0x90] sm:$0xff]
    %v1273 = vld [vmem:[#allocation6 + $0x98] sm:$0xff]
    %v1274 = vld [vmem:[#allocation6 + $0xa0] sm:$0xff]
    %v1275 = vld [vmem:[#allocation6 + $0xa8] sm:$0xff]
    %v1276 = vld [vmem:[#allocation6 + $0xb0] sm:$0xff]
    %v1277 = vld [vmem:[#allocation6 + $0xb8] sm:$0xff]
    %v1278 = vld [vmem:[#allocation6 + $0xc0] sm:$0xff]
    %v1279 = vld [vmem:[#allocation6 + $0xc8] sm:$0xff]
    %v1280 = vld [vmem:[#allocation6 + $0xd0] sm:$0xff]
    %v1281 = vld [vmem:[#allocation6 + $0xd8] sm:$0xff]
    %v1282 = vld [vmem:[#allocation6 + $0xe0] sm:$0xff]
    %v1283 = vld [vmem:[#allocation6 + $0xe8] sm:$0xff]
    %v1284 = vld [vmem:[#allocation6 + $0xf0] sm:$0xff]
    %v1285 = vld [vmem:[#allocation6 + $0xf8] sm:$0xff]
    %v1286 = vld [vmem:[#allocation6 + $0x100] sm:$0xff]
    %v1287 = vld [vmem:[#allocation6 + $0x108] sm:$0xff]
    %v1288 = vld [vmem:[#allocation6 + $0x110] sm:$0xff]
    %v1289 = vld [vmem:[#allocation6 + $0x118] sm:$0xff]
    %v1290 = vld [vmem:[#allocation6 + $0x120] sm:$0xff]
    %v1291 = vld [vmem:[#allocation6 + $0x128] sm:$0xff]
    %v1292 = vld [vmem:[#allocation6 + $0x130] sm:$0xff]
    %v1293 = vld [vmem:[#allocation6 + $0x138] sm:$0xff]
    %v1294 = vld [vmem:[#allocation6 + $0x140] sm:$0xff]
    %v1295 = vld [vmem:[#allocation6 + $0x148] sm:$0xff]
    %v1296 = vld [vmem:[#allocation6 + $0x150] sm:$0xff]
    %v1297 = vld [vmem:[#allocation6 + $0x158] sm:$0xff]
    %v1298 = vld [vmem:[#allocation6 + $0x160] sm:$0xff]
    %v1299 = vld [vmem:[#allocation6 + $0x168] sm:$0xff]
    %v1300 = vld [vmem:[#allocation6 + $0x170] sm:$0xff]
    %v1301 = vld [vmem:[#allocation6 + $0x178] sm:$0xff]
    %v1302 = vld [vmem:[#allocation6 + $0x180] sm:$0xff]
    %v1303 = vld [vmem:[#allocation6 + $0x188] sm:$0xff]
    %v1304 = vld [vmem:[#allocation6 + $0x190] sm:$0xff]
    %v1305 = vld [vmem:[#allocation6 + $0x198] sm:$0xff]
    %v1306 = vld [vmem:[#allocation6 + $0x1a0] sm:$0xff]
    %v1307 = vld [vmem:[#allocation6 + $0x1a8] sm:$0xff]
    %v1308 = vld [vmem:[#allocation6 + $0x1b0] sm:$0xff]
    %v1309 = vld [vmem:[#allocation6 + $0x1b8] sm:$0xff]
    %v1310 = vld [vmem:[#allocation6 + $0x1c0] sm:$0xff]
    %v1311 = vld [vmem:[#allocation6 + $0x1c8] sm:$0xff]
    %v1312 = vld [vmem:[#allocation6 + $0x1d0] sm:$0xff]
    %v1313 = vld [vmem:[#allocation6 + $0x1d8] sm:$0xff]
    %v1314 = vld [vmem:[#allocation6 + $0x1e0] sm:$0xff]
    %v1315 = vld [vmem:[#allocation6 + $0x1e8] sm:$0xff]
    %v1316 = vld [vmem:[#allocation6 + $0x1f0] sm:$0xff]
    %v1317 = vld [vmem:[#allocation6 + $0x1f8] sm:$0xff]
    %v1318 = vld [vmem:[#allocation6 + $0x200] sm:$0xff]
    %v1319 = vld [vmem:[#allocation6 + $0x208] sm:$0xff]
    %v1320 = vld [vmem:[#allocation6 + $0x210] sm:$0xff]
    %v1321 = vld [vmem:[#allocation6 + $0x218] sm:$0xff]
    %v1322 = vld [vmem:[#allocation6 + $0x220] sm:$0xff]
    %v1323 = vld [vmem:[#allocation6 + $0x228] sm:$0xff]
    %v1324 = vld [vmem:[#allocation6 + $0x230] sm:$0xff]
    %v1325 = vld [vmem:[#allocation6 + $0x238] sm:$0xff]
    %v1326 = vld [vmem:[#allocation6 + $0x240] sm:$0xff]
    %v1327 = vld [vmem:[#allocation6 + $0x248] sm:$0xff]
    %v1328 = vld [vmem:[#allocation6 + $0x250] sm:$0xff]
    %v1329 = vld [vmem:[#allocation6 + $0x258] sm:$0xff]
    %v1330 = vld [vmem:[#allocation6 + $0x260] sm:$0xff]
    %v1331 = vld [vmem:[#allocation6 + $0x268] sm:$0xff]
    %v1332 = vld [vmem:[#allocation6 + $0x270] sm:$0xff]
    %v1333 = vld [vmem:[#allocation6 + $0x278] sm:$0xff]
    %v1334 = vld [vmem:[#allocation6 + $0x280] sm:$0xff]
    %v1335 = vld [vmem:[#allocation6 + $0x288] sm:$0xff]
    %v1336 = vld [vmem:[#allocation6 + $0x290] sm:$0xff]
    %v1337 = vld [vmem:[#allocation6 + $0x298] sm:$0xff]
    %v1338 = vld [vmem:[#allocation6 + $0x2a0] sm:$0xff]
    %v1339 = vld [vmem:[#allocation6 + $0x2a8] sm:$0xff]
    %v1340 = vld [vmem:[#allocation6 + $0x2b0] sm:$0xff]
    %v1341 = vld [vmem:[#allocation6 + $0x2b8] sm:$0xff]
    %v1342 = vld [vmem:[#allocation6 + $0x2c0] sm:$0xff]
    %v1343 = vld [vmem:[#allocation6 + $0x2c8] sm:$0xff]
    %v1344 = vld [vmem:[#allocation6 + $0x2d0] sm:$0xff]
    %v1345 = vld [vmem:[#allocation6 + $0x2d8] sm:$0xff]
    %v1346 = vld [vmem:[#allocation6 + $0x2e0] sm:$0xff]
    %v1347 = vld [vmem:[#allocation6 + $0x2e8] sm:$0xff]
    %v1348 = vld [vmem:[#allocation6 + $0x2f0] sm:$0xff]
    %v1349 = vld [vmem:[#allocation6 + $0x2f8] sm:$0xff]
    %v1350 = vld [vmem:[#allocation6 + $0x300] sm:$0xff]
    %v1351 = vld [vmem:[#allocation6 + $0x308] sm:$0xff]
    %v1352 = vld [vmem:[#allocation6 + $0x310] sm:$0xff]
    %v1353 = vld [vmem:[#allocation6 + $0x318] sm:$0xff]
    %v1354 = vld [vmem:[#allocation6 + $0x320] sm:$0xff]
    %v1355 = vld [vmem:[#allocation6 + $0x328] sm:$0xff]
    %v1356 = vld [vmem:[#allocation6 + $0x330] sm:$0xff]
    %v1357 = vld [vmem:[#allocation6 + $0x338] sm:$0xff]
    %v1358 = vld [vmem:[#allocation6 + $0x340] sm:$0xff]
    %v1359 = vld [vmem:[#allocation6 + $0x348] sm:$0xff]
    %v1360 = vld [vmem:[#allocation6 + $0x350] sm:$0xff]
    %v1361 = vld [vmem:[#allocation6 + $0x358] sm:$0xff]
    %v1362 = vld [vmem:[#allocation6 + $0x360] sm:$0xff]
    %v1363 = vld [vmem:[#allocation6 + $0x368] sm:$0xff]
    %v1364 = vld [vmem:[#allocation6 + $0x370] sm:$0xff]
    %v1365 = vld [vmem:[#allocation6 + $0x378] sm:$0xff]
    %v1366 = vld [vmem:[#allocation6 + $0x380] sm:$0xff]
    %v1367 = vld [vmem:[#allocation6 + $0x388] sm:$0xff]
    %v1368 = vld [vmem:[#allocation6 + $0x390] sm:$0xff]
    %v1369 = vld [vmem:[#allocation6 + $0x398] sm:$0xff]
    %v1370 = vld [vmem:[#allocation6 + $0x3a0] sm:$0xff]
    %v1371 = vld [vmem:[#allocation6 + $0x3a8] sm:$0xff]
    %v1372 = vld [vmem:[#allocation6 + $0x3b0] sm:$0xff]
    %v1373 = vld [vmem:[#allocation6 + $0x3b8] sm:$0xff]
    %v1374 = vld [vmem:[#allocation6 + $0x3c0] sm:$0xff]
    %v1375 = vld [vmem:[#allocation6 + $0x3c8] sm:$0xff]
    %v1376 = vld [vmem:[#allocation6 + $0x3d0] sm:$0xff]
    %v1377 = vld [vmem:[#allocation6 + $0x3d8] sm:$0xff]
    %v1378 = vld [vmem:[#allocation6 + $0x3e0] sm:$0xff]
    %v1379 = vld [vmem:[#allocation6 + $0x3e8] sm:$0xff]
    %v1380 = vld [vmem:[#allocation6 + $0x3f0] sm:$0xff]
    %v1381 = vld [vmem:[#allocation6 + $0x3f8] sm:$0xff]
    %v1382 = vld [vmem:[#allocation7] sm:$0x3]
    %v1384 = vlaneseq
    %v1385 = vshrl.u32 %v1384, 7
    %v1386 = vsub.s32 0, %v1385
    %v1387 = vrot.slane %v1382, %v1386
    %v1388 = vlaneseq
    %v1389 = vshrl.u32 %v1388, 7
    %v1390 = vsub.s32 1, %v1389
    %v1391 = vrot.slane %v1382, %v1390
    %1394 = vmatprep.subr.mxu0 %v1255
    %1395 = vmatpush1.msra.mxu0 %v1254
    %1396 = vmatprep.subr.mxu0 %v1257
    %1397 = vmatpush1.msra.mxu0 %v1256
    %1398 = vmatprep.subr.mxu0 %v1259
    %1399 = vmatpush1.msra.mxu0 %v1258
    %1400 = vmatprep.subr.mxu0 %v1261
    %1401 = vmatpush1.msra.mxu0 %v1260
    %1402 = vmatprep.subr.mxu0 %v1263
    %1403 = vmatpush1.msra.mxu0 %v1262
    %1404 = vmatprep.subr.mxu0 %v1265
    %1405 = vmatpush1.msra.mxu0 %v1264
    %1406 = vmatprep.subr.mxu0 %v1267
    %1407 = vmatpush1.msra.mxu0 %v1266
    %1408 = vmatprep.subr.mxu0 %v1269
    %1409 = vmatpush1.msra.mxu0 %v1268
    %1410 = vmatprep.subr.mxu0 %v1271
    %1411 = vmatpush1.msra.mxu0 %v1270
    %1412 = vmatprep.subr.mxu0 %v1273
    %1413 = vmatpush1.msra.mxu0 %v1272
    %1414 = vmatprep.subr.mxu0 %v1275
    %1415 = vmatpush1.msra.mxu0 %v1274
    %1416 = vmatprep.subr.mxu0 %v1277
    %1417 = vmatpush1.msra.mxu0 %v1276
    %1418 = vmatprep.subr.mxu0 %v1279
    %1419 = vmatpush1.msra.mxu0 %v1278
    %1420 = vmatprep.subr.mxu0 %v1281
    %1421 = vmatpush1.msra.mxu0 %v1280
    %1422 = vmatprep.subr.mxu0 %v1283
    %1423 = vmatpush1.msra.mxu0 %v1282
    %1424 = vmatprep.subr.mxu0 %v1285
    %1425 = vmatpush1.msra.mxu0 %v1284
    %1426 = vmatprep.subr.mxu0 %v1287
    %1427 = vmatpush1.msra.mxu0 %v1286
    %1428 = vmatprep.subr.mxu0 %v1289
    %1429 = vmatpush1.msra.mxu0 %v1288
    %1430 = vmatprep.subr.mxu0 %v1291
    %1431 = vmatpush1.msra.mxu0 %v1290
    %1432 = vmatprep.subr.mxu0 %v1293
    %1433 = vmatpush1.msra.mxu0 %v1292
    %1434 = vmatprep.subr.mxu0 %v1295
    %1435 = vmatpush1.msra.mxu0 %v1294
    %1436 = vmatprep.subr.mxu0 %v1297
    %1437 = vmatpush1.msra.mxu0 %v1296
    %1438 = vmatprep.subr.mxu0 %v1299
    %1439 = vmatpush1.msra.mxu0 %v1298
    %1440 = vmatprep.subr.mxu0 %v1301
    %1441 = vmatpush1.msra.mxu0 %v1300
    %1442 = vmatprep.subr.mxu0 %v1303
    %1443 = vmatpush1.msra.mxu0 %v1302
    %1444 = vmatprep.subr.mxu0 %v1305
    %1445 = vmatpush1.msra.mxu0 %v1304
    %1446 = vmatprep.subr.mxu0 %v1307
    %1447 = vmatpush1.msra.mxu0 %v1306
    %1448 = vmatprep.subr.mxu0 %v1309
    %1449 = vmatpush1.msra.mxu0 %v1308
    %1450 = vmatprep.subr.mxu0 %v1311
    %1451 = vmatpush1.msra.mxu0 %v1310
    %1452 = vmatprep.subr.mxu0 %v1313
    %1453 = vmatpush1.msra.mxu0 %v1312
    %1454 = vmatprep.subr.mxu0 %v1315
    %1455 = vmatpush1.msra.mxu0 %v1314
    %1456 = vmatprep.subr.mxu0 %v1317
    %1457 = vmatpush1.msra.mxu0 %v1316
    %1458 = vmatprep.mubr.f32.mxu0 %v1251
    %1459 = vmatmul.mubr.f32.gmra.mrb[0].mxu0 %v1250
    %v1460 = vpop.f32.mrb[0].mxu0
    %v1461 = vadd.f32 %v1387, %v1460
    %v1462 = vpop.f32.mrb[0].mxu0
    %v1463 = vadd.f32 %v1391, %v1462
    %1464 = vdwg.mxu0
    %1465 = vmatprep.subr.mxu0 %v1319
    %1466 = vmatpush1.msra.mxu0 %v1318
    %1467 = vmatprep.subr.mxu0 %v1321
    %1468 = vmatpush1.msra.mxu0 %v1320
    %1469 = vmatprep.subr.mxu0 %v1323
    %1470 = vmatpush1.msra.mxu0 %v1322
    %1471 = vmatprep.subr.mxu0 %v1325
    %1472 = vmatpush1.msra.mxu0 %v1324
    %1473 = vmatprep.subr.mxu0 %v1327
    %1474 = vmatpush1.msra.mxu0 %v1326
    %1475 = vmatprep.subr.mxu0 %v1329
    %1476 = vmatpush1.msra.mxu0 %v1328
    %1477 = vmatprep.subr.mxu0 %v1331
    %1478 = vmatpush1.msra.mxu0 %v1330
    %1479 = vmatprep.subr.mxu0 %v1333
    %1480 = vmatpush1.msra.mxu0 %v1332
    %1481 = vmatprep.subr.mxu0 %v1335
    %1482 = vmatpush1.msra.mxu0 %v1334
    %1483 = vmatprep.subr.mxu0 %v1337
    %1484 = vmatpush1.msra.mxu0 %v1336
    %1485 = vmatprep.subr.mxu0 %v1339
    %1486 = vmatpush1.msra.mxu0 %v1338
    %1487 = vmatprep.subr.mxu0 %v1341
    %1488 = vmatpush1.msra.mxu0 %v1340
    %1489 = vmatprep.subr.mxu0 %v1343
    %1490 = vmatpush1.msra.mxu0 %v1342
    %1491 = vmatprep.subr.mxu0 %v1345
    %1492 = vmatpush1.msra.mxu0 %v1344
    %1493 = vmatprep.subr.mxu0 %v1347
    %1494 = vmatpush1.msra.mxu0 %v1346
    %1495 = vmatprep.subr.mxu0 %v1349
    %1496 = vmatpush1.msra.mxu0 %v1348
    %1497 = vmatprep.subr.mxu0 %v1351
    %1498 = vmatpush1.msra.mxu0 %v1350
    %1499 = vmatprep.subr.mxu0 %v1353
    %1500 = vmatpush1.msra.mxu0 %v1352
    %1501 = vmatprep.subr.mxu0 %v1355
    %1502 = vmatpush1.msra.mxu0 %v1354
    %1503 = vmatprep.subr.mxu0 %v1357
    %1504 = vmatpush1.msra.mxu0 %v1356
    %1505 = vmatprep.subr.mxu0 %v1359
    %1506 = vmatpush1.msra.mxu0 %v1358
    %1507 = vmatprep.subr.mxu0 %v1361
    %1508 = vmatpush1.msra.mxu0 %v1360
    %1509 = vmatprep.subr.mxu0 %v1363
    %1510 = vmatpush1.msra.mxu0 %v1362
    %1511 = vmatprep.subr.mxu0 %v1365
    %1512 = vmatpush1.msra.mxu0 %v1364
    %1513 = vmatprep.subr.mxu0 %v1367
    %1514 = vmatpush1.msra.mxu0 %v1366
    %1515 = vmatprep.subr.mxu0 %v1369
    %1516 = vmatpush1.msra.mxu0 %v1368
    %1517 = vmatprep.subr.mxu0 %v1371
    %1518 = vmatpush1.msra.mxu0 %v1370
    %1519 = vmatprep.subr.mxu0 %v1373
    %1520 = vmatpush1.msra.mxu0 %v1372
    %1521 = vmatprep.subr.mxu0 %v1375
    %1522 = vmatpush1.msra.mxu0 %v1374
    %1523 = vmatprep.subr.mxu0 %v1377
    %1524 = vmatpush1.msra.mxu0 %v1376
    %1525 = vmatprep.subr.mxu0 %v1379
    %1526 = vmatpush1.msra.mxu0 %v1378
    %1527 = vmatprep.subr.mxu0 %v1381
    %1528 = vmatpush1.msra.mxu0 %v1380
    %1529 = vmatprep.mubr.f32.mxu0 %v1253
    %1530 = vmatmul.mubr.f32.gmra.mrb[0].mxu0 %v1252
    %v1531 = vpop.f32.mrb[0].mxu0
    %v1532 = vadd.f32 %v1461, %v1531
    %v1533 = vpop.f32.mrb[0].mxu0
    %v1534 = vadd.f32 %v1463, %v1533
    %1535 = vdwg.mxu0
    %v1536 = vmax.f32 %v1532, 0.0
    %v1537 = vmax.f32 %v1534, 0.0
    %v1538 = vld [vmem:[#allocation9] sm:$0xff]
    %v1539 = vld [vmem:[#allocation9 + $0x8] sm:$0xff]
    %v1540 = vld [vmem:[#allocation9 + $0x10] sm:$0xff]
    %v1541 = vld [vmem:[#allocation9 + $0x18] sm:$0xff]
    %v1542 = vld [vmem:[#allocation9 + $0x20] sm:$0xff]
    %v1543 = vld [vmem:[#allocation9 + $0x28] sm:$0xff]
    %v1544 = vld [vmem:[#allocation9 + $0x30] sm:$0xff]
    %v1545 = vld [vmem:[#allocation9 + $0x38] sm:$0xff]
    %v1546 = vld [vmem:[#allocation9 + $0x40] sm:$0xff]
    %v1547 = vld [vmem:[#allocation9 + $0x48] sm:$0xff]
    %v1548 = vld [vmem:[#allocation9 + $0x50] sm:$0xff]
    %v1549 = vld [vmem:[#allocation9 + $0x58] sm:$0xff]
    %v1550 = vld [vmem:[#allocation9 + $0x60] sm:$0xff]
    %v1551 = vld [vmem:[#allocation9 + $0x68] sm:$0xff]
    %v1552 = vld [vmem:[#allocation9 + $0x70] sm:$0xff]
    %v1553 = vld [vmem:[#allocation9 + $0x78] sm:$0xff]
    %v1554 = vld [vmem:[#allocation9 + $0x80] sm:$0xff]
    %v1555 = vld [vmem:[#allocation9 + $0x88] sm:$0xff]
    %v1556 = vld [vmem:[#allocation9 + $0x90] sm:$0xff]
    %v1557 = vld [vmem:[#allocation9 + $0x98] sm:$0xff]
    %v1558 = vld [vmem:[#allocation9 + $0xa0] sm:$0xff]
    %v1559 = vld [vmem:[#allocation9 + $0xa8] sm:$0xff]
    %v1560 = vld [vmem:[#allocation9 + $0xb0] sm:$0xff]
    %v1561 = vld [vmem:[#allocation9 + $0xb8] sm:$0xff]
    %v1562 = vld [vmem:[#allocation9 + $0xc0] sm:$0xff]
    %v1563 = vld [vmem:[#allocation9 + $0xc8] sm:$0xff]
    %v1564 = vld [vmem:[#allocation9 + $0xd0] sm:$0xff]
    %v1565 = vld [vmem:[#allocation9 + $0xd8] sm:$0xff]
    %v1566 = vld [vmem:[#allocation9 + $0xe0] sm:$0xff]
    %v1567 = vld [vmem:[#allocation9 + $0xe8] sm:$0xff]
    %v1568 = vld [vmem:[#allocation9 + $0xf0] sm:$0xff]
    %v1569 = vld [vmem:[#allocation9 + $0xf8] sm:$0xff]
    %v1570 = vld [vmem:[#allocation10] sm:$0x1]
    %v1572 = vlaneseq
    %v1573 = vshrl.u32 %v1572, 7
    %v1574 = vsub.s32 0, %v1573
    %v1575 = vrot.slane %v1570, %v1574
    %1577 = vmatprep.subr.mxu0 0.0
    %1578 = vmatpush1.msra.mxu0 %v1538
    %1579 = vmatprep.subr.mxu0 0.0
    %1580 = vmatpush1.msra.mxu0 %v1539
    %1581 = vmatprep.subr.mxu0 0.0
    %1582 = vmatpush1.msra.mxu0 %v1540
    %1583 = vmatprep.subr.mxu0 0.0
    %1584 = vmatpush1.msra.mxu0 %v1541
    %1585 = vmatprep.subr.mxu0 0.0
    %1586 = vmatpush1.msra.mxu0 %v1542
    %1587 = vmatprep.subr.mxu0 0.0
    %1588 = vmatpush1.msra.mxu0 %v1543
    %1589 = vmatprep.subr.mxu0 0.0
    %1590 = vmatpush1.msra.mxu0 %v1544
    %1591 = vmatprep.subr.mxu0 0.0
    %1592 = vmatpush1.msra.mxu0 %v1545
    %1593 = vmatprep.subr.mxu0 0.0
    %1594 = vmatpush1.msra.mxu0 %v1546
    %1595 = vmatprep.subr.mxu0 0.0
    %1596 = vmatpush1.msra.mxu0 %v1547
    %1597 = vmatprep.subr.mxu0 0.0
    %1598 = vmatpush1.msra.mxu0 %v1548
    %1599 = vmatprep.subr.mxu0 0.0
    %1600 = vmatpush1.msra.mxu0 %v1549
    %1601 = vmatprep.subr.mxu0 0.0
    %1602 = vmatpush1.msra.mxu0 %v1550
    %1603 = vmatprep.subr.mxu0 0.0
    %1604 = vmatpush1.msra.mxu0 %v1551
    %1605 = vmatprep.subr.mxu0 0.0
    %1606 = vmatpush1.msra.mxu0 %v1552
    %1607 = vmatprep.subr.mxu0 0.0
    %1608 = vmatpush1.msra.mxu0 %v1553
    %1609 = vmatprep.subr.mxu0 0.0
    %1610 = vmatpush1.msra.mxu0 %v1554
    %1611 = vmatprep.subr.mxu0 0.0
    %1612 = vmatpush1.msra.mxu0 %v1555
    %1613 = vmatprep.subr.mxu0 0.0
    %1614 = vmatpush1.msra.mxu0 %v1556
    %1615 = vmatprep.subr.mxu0 0.0
    %1616 = vmatpush1.msra.mxu0 %v1557
    %1617 = vmatprep.subr.mxu0 0.0
    %1618 = vmatpush1.msra.mxu0 %v1558
    %1619 = vmatprep.subr.mxu0 0.0
    %1620 = vmatpush1.msra.mxu0 %v1559
    %1621 = vmatprep.subr.mxu0 0.0
    %1622 = vmatpush1.msra.mxu0 %v1560
    %1623 = vmatprep.subr.mxu0 0.0
    %1624 = vmatpush1.msra.mxu0 %v1561
    %1625 = vmatprep.subr.mxu0 0.0
    %1626 = vmatpush1.msra.mxu0 %v1562
    %1627 = vmatprep.subr.mxu0 0.0
    %1628 = vmatpush1.msra.mxu0 %v1563
    %1629 = vmatprep.subr.mxu0 0.0
    %1630 = vmatpush1.msra.mxu0 %v1564
    %1631 = vmatprep.subr.mxu0 0.0
    %1632 = vmatpush1.msra.mxu0 %v1565
    %1633 = vmatprep.subr.mxu0 0.0
    %1634 = vmatpush1.msra.mxu0 %v1566
    %1635 = vmatprep.subr.mxu0 0.0
    %1636 = vmatpush1.msra.mxu0 %v1567
    %1637 = vmatprep.subr.mxu0 0.0
    %1638 = vmatpush1.msra.mxu0 %v1568
    %1639 = vmatprep.subr.mxu0 0.0
    %1640 = vmatpush1.msra.mxu0 %v1569
    %1641 = vmatprep.mubr.f32.mxu0 %v1537
    %1642 = vmatmul.mubr.f32.gmra.mrb[0].mxu0 %v1536
    %v1643 = vpop.f32.mrb[0].mxu0
    %v1644 = vadd.f32 %v1575, %v1643
    %v1645 = vpop.f32.mrb[0].mxu0
    %1646 = vdwg.mxu0
    %vm1647 = vcmask 197632
    %1648 = vst.msk [vmem:[%s7] sm:$0x3] %vm1647, %v1644
    // Predicated region
    $region54: #{_lambda_.5} parent=1 // pred_check
      _
    $region55: #{_lambda_.5} parent=1 // pred_check_branch
      %1650 = sbr.rel (0) target = $region57
    $region56: #{_lambda_.5} parent=1 // pred_region
      _
    $region57: #{_lambda_.5} parent=1 // pred_fallthru
      _
    // Predicated region
    $region58: #{_lambda_.5} parent=1 // pred_check
      _
    $region59: #{_lambda_.5} parent=1 // pred_check_branch
      %1652 = sbr.rel (0) target = $region61
    $region60: #{_lambda_.5} parent=1 // pred_region
      _
    $region61: #{_lambda_.5} parent=1 // pred_fallthru
      _
    %1653 = vsyncpa [#allocation3], 1
    %1654 = vsyncpa [#allocation5], 1
    %1655 = vsyncpa [#allocation8], 1
    %1656 = vsyncpa [#allocation11], 1

// kernel: _lambda_.7
$region0: #{_lambda_.7}
  #allocation0 [shape = 'u32[]', space=smem, size = 0x4, offset = 0x4, fixed_abs, tag = 'smem constant byte address 0x4 - core index']
  #allocation1 [shape = 'u32[144,128]{1,0:T(1,128)}', space=vmem, size = 0x12000, scoped, tag = 'internal scratch']
  #allocation2 [shape = 'f32[1,512]{1,0:T(1,128)}', space=vmem, size = 0x800, scoped, tag = 'scratch operand']
  %s0 = inlined_call_operand.hbm [shape: bf16[2,16,64], index: 0, kind: input, shape index: {}]
  %s1 = inlined_call_operand.hbm [shape: f32[2,1,1024], index: 1, kind: input, shape index: {}]
  %s2 = inlined_call_operand.hbm [shape: bf16[1024,512], index: 2, kind: input, shape index: {}]
  %s3 = inlined_call_operand.hbm [shape: bf16[64,512], index: 3, kind: input, shape index: {}]
  %s4 = inlined_call_operand.hbm [shape: f32[1,512], index: 4, kind: input, shape index: {}]
  %s5 = inlined_call_operand.hbm [shape: bf16[512,256], index: 5, kind: input, shape index: {}]
  %s6 = inlined_call_operand.hbm [shape: f32[1,256], index: 6, kind: input, shape index: {}]
  %s7 = inlined_call_operand.hbm [shape: bf16[256,128], index: 7, kind: input, shape index: {}]
  %s8 = inlined_call_operand.hbm [shape: f32[1,128], index: 8, kind: input, shape index: {}]
  %s9 = inlined_call_operand.hbm [shape: bf16[128,128], index: 9, kind: input, shape index: {}]
  %s10 = inlined_call_operand.hbm [shape: f32[1,128], index: 10, kind: input, shape index: {}]
  %s11 = inlined_call_operand.hbm [shape: f32[2,16,128], index: 11, kind: output, shape index: {}]
  %s12 = sld [smem:[#allocation0]]
  $region125: #{_lambda_.7} parent=0
    _
  %s14 = ssub.s32 1, %s12
  %s15 = scalar_select 0, %s14, %s12
  $region1: #{_lambda_.7} parent=0
    #allocation3 [shape = 'u8[8192]{0}', space=vmem, size = 0x2000, scoped, tag = 'input window, operand 0']
    #allocation4 [shape = 's32[2]{0}', space=sflag, size = 0x8, scoped, tag = 'scoped memory for _lambda_.7']
    #allocation5 [shape = 's32[2]{0}', space=sflag, size = 0x8, scoped, tag = 'scoped memory for _lambda_.7']
    #allocation6 [shape = 'u8[8192]{0}', space=vmem, size = 0x2000, scoped, tag = 'input window, operand 1']
    #allocation7 [shape = 's32[2]{0}', space=sflag, size = 0x8, scoped, tag = 'scoped memory for _lambda_.7']
    #allocation8 [shape = 'u8[1048576]{0}', space=vmem, size = 0x100000, scoped, tag = 'input window, operand 2, single buffered']
    #allocation9 [shape = 'u8[65536]{0}', space=vmem, size = 0x10000, scoped, tag = 'input window, operand 3, single buffered']
    #allocation10 [shape = 's32[1]{0}', space=sflag, size = 0x4, scoped, tag = 'scoped memory for _lambda_.7']
    #allocation11 [shape = 'u8[2048]{0}', space=vmem, size = 0x800, scoped, tag = 'input window, operand 4, single buffered']
    #allocation12 [shape = 'u8[262144]{0}', space=vmem, size = 0x40000, scoped, tag = 'input window, operand 5, single buffered']
    #allocation13 [shape = 's32[1]{0}', space=sflag, size = 0x4, scoped, tag = 'scoped memory for _lambda_.7']
    #allocation14 [shape = 'u8[1024]{0}', space=vmem, size = 0x400, scoped, tag = 'input window, operand 6, single buffered']
    #allocation15 [shape = 'u8[65536]{0}', space=vmem, size = 0x10000, scoped, tag = 'input window, operand 7, single buffered']
    #allocation16 [shape = 's32[1]{0}', space=sflag, size = 0x4, scoped, tag = 'scoped memory for _lambda_.7']
    #allocation17 [shape = 'u8[512]{0}', space=vmem, size = 0x400, scoped, tag = 'input window, operand 8, single buffered']
    #allocation18 [shape = 'u8[32768]{0}', space=vmem, size = 0x8000, scoped, tag = 'input window, operand 9, single buffered']
    #allocation19 [shape = 's32[1]{0}', space=sflag, size = 0x4, scoped, tag = 'scoped memory for _lambda_.7']
    #allocation20 [shape = 'u8[512]{0}', space=vmem, size = 0x400, scoped, tag = 'input window, operand 10, single buffered']
    #allocation21 [shape = 'u8[16384]{0}', space=vmem, size = 0x4000, scoped, tag = 'output window, operand 0']
    %16 = vsyncpa [#allocation4], 0
    %s17 = scalar_lea.sflag [#allocation4], 1
    %18 = vsyncpa %s17, 0
    %19 = vsyncpa [#allocation7], 0
    %s20 = scalar_lea.sflag [#allocation7], 1
    %21 = vsyncpa %s20, 0
    %22 = vsyncpa [#allocation10], 0
    %23 = vsyncpa [#allocation13], 0
    %24 = vsyncpa [#allocation16], 0
    %25 = vsyncpa [#allocation19], 0
    %26 = vsyncpa [#allocation5], 0
    %s27 = scalar_lea.sflag [#allocation5], 1
    %28 = vsyncpa %s27, 0
    loop: start=0, step=1, limit=4
    $region2: #{_lambda_.7} parent=1 // loop_pre_header
      _
    $region3: #{_lambda_.7} parent=1 // loop_header
      %s30 = sphi 0, %s34
      %p31 = scmp.ge.s32.totalorder %s30, 4
      %s37 = sphi 0, %s49
      %s38 = sphi 0, %s45
      %s39 = sphi 0, %s37
      %s40 = sphi 0, %s38
      %s41 = sphi 0, %s39
      %s42 = sphi 0, %s40
      %s54 = sphi 0, %s56
      %s57 = sphi 0, %s54
      %s58 = sphi 0, %s57
      %s74 = sphi 0, %s58
      %s80 = sphi 0, %s82
      %s83 = sphi 0, %s80
      %s84 = sphi 0, %s83
      %s100 = sphi 0, %s84
      %s104 = sphi 0, %s104
      %s106 = sphi 0, %s104
      %s107 = sphi 0, %s106
      %s121 = sphi 0, %s107
      %s125 = sphi 0, %s125
      %s127 = sphi 0, %s125
      %s128 = sphi 0, %s127
      %s142 = sphi 0, %s128
      %s146 = sphi 0, %s146
      %s148 = sphi 0, %s146
      %s149 = sphi 0, %s148
      %s163 = sphi 0, %s149
      %s167 = sphi 0, %s167
      %s169 = sphi 0, %s167
      %s170 = sphi 0, %s169
      %s184 = sphi 0, %s170
      %s188 = sphi 0, %s188
      %s190 = sphi 0, %s188
      %s191 = sphi 0, %s190
      %s205 = sphi 0, %s191
      %s209 = sphi 0, %s209
      %s211 = sphi 0, %s209
      %s212 = sphi 0, %s211
      %s226 = sphi 0, %s212
      %s230 = sphi 0, %s230
      %s232 = sphi 0, %s230
      %s233 = sphi 0, %s232
      %s247 = sphi 0, %s233
      %s251 = sphi 0, %s251
      %s253 = sphi 0, %s251
      %s254 = sphi 0, %s253
      %s268 = sphi 0, %s254
      %s272 = sphi 0, %s272
      %s274 = sphi 0, %s272
      %s275 = sphi 0, %s274
      %s289 = sphi 0, %s275
      %s297 = sphi 0, %s299
      %s300 = sphi 0, %s297
      %s301 = sphi 0, %s300
      %s317 = sphi 0, %s301
    $region4: #{_lambda_.7} parent=1 // loop_header_branch
      %33 = sbr.rel (%p31) target = $region8
    $region5: #{_lambda_.7} parent=1 // loop_body
      %s35 = ssub.s32 %s30, 1
      %s36 = ssub.s32 %s30, 2
      %s43 = sadd.s32 1, %s38
      %p44 = scmp.ge.s32.totalorder %s43, 1
      %s45 = scalar_select %p44, 0, %s43
      %s46 = sadd.s32 1, %s37
      %s47 = scalar_select %p44, %s46, %s37
      %p48 = scmp.ge.s32.totalorder %s47, 2
      %s49 = scalar_select %p48, 0, %s47
      %s50 = ssub.s32 %s37, %s49
      %s51 = ssub.s32 %s38, %s45
      %s52 = sor.u32 %s50, %s51
      %p53 = scmp.eq.s32.totalorder %s52, 0
      %s55 = sadd.s32 %s54, 1
      %s56 = scalar_select %p53, %s54, %s55
      %p59 = pneg %p53
      %p60 = scmp.eq.s32.totalorder %s30, 1
      %p61 = por %p59, %p60
      %p62 = scmp.ne.s32.totalorder %s54, %s57
      %p63 = scmp.eq.s32.totalorder %s30, 0
      %p64 = por %p62, %p63
      %p65 = scmp.ne.s32.totalorder %s54, %s57
      %p66 = scmp.eq.s32.totalorder %s35, 1
      %p67 = por %p65, %p66
      %p68 = scmp.ne.s32.totalorder %s57, %s58
      %p69 = scmp.eq.s32.totalorder %s35, 0
      %p70 = por %p68, %p69
      %p71 = scmp.ne.s32.totalorder %s57, %s58
      %p72 = scmp.eq.s32.totalorder %s36, 1
      %p73 = por %p71, %p72
      %p75 = scmp.ne.s32.totalorder %s58, %s74
      %p76 = scmp.eq.s32.totalorder %s36, 0
      %p77 = por %p75, %p76
      %s78 = ssub.s32 %s37, %s49
      %p79 = scmp.eq.s32.totalorder %s78, 0
      %s81 = sadd.s32 %s80, 1
      %s82 = scalar_select %p79, %s80, %s81
      %p85 = pneg %p79
      %p86 = scmp.eq.s32.totalorder %s30, 1
      %p87 = por %p85, %p86
      %p88 = scmp.ne.s32.totalorder %s80, %s83
      %p89 = scmp.eq.s32.totalorder %s30, 0
      %p90 = por %p88, %p89
      %p91 = scmp.ne.s32.totalorder %s80, %s83
      %p92 = scmp.eq.s32.totalorder %s35, 1
      %p93 = por %p91, %p92
      %p94 = scmp.ne.s32.totalorder %s83, %s84
      %p95 = scmp.eq.s32.totalorder %s35, 0
      %p96 = por %p94, %p95
      %p97 = scmp.ne.s32.totalorder %s83, %s84
      %p98 = scmp.eq.s32.totalorder %s36, 1
      %p99 = por %p97, %p98
      %p101 = scmp.ne.s32.totalorder %s84, %s100
      %p102 = scmp.eq.s32.totalorder %s36, 0
      %p103 = por %p101, %p102
      %s105 = sadd.s32 %s104, 1
      %p108 = scmp.eq.s32.totalorder %s30, 1
      %p109 = scmp.ne.s32.totalorder %s104, %s106
      %p110 = scmp.eq.s32.totalorder %s30, 0
      %p111 = por %p109, %p110
      %p112 = scmp.ne.s32.totalorder %s104, %s106
      %p113 = scmp.eq.s32.totalorder %s35, 1
      %p114 = por %p112, %p113
      %p115 = scmp.ne.s32.totalorder %s106, %s107
      %p116 = scmp.eq.s32.totalorder %s35, 0
      %p117 = por %p115, %p116
      %p118 = scmp.ne.s32.totalorder %s106, %s107
      %p119 = scmp.eq.s32.totalorder %s36, 1
      %p120 = por %p118, %p119
      %p122 = scmp.ne.s32.totalorder %s107, %s121
      %p123 = scmp.eq.s32.totalorder %s36, 0
      %p124 = por %p122, %p123
      %s126 = sadd.s32 %s125, 1
      %p129 = scmp.eq.s32.totalorder %s30, 1
      %p130 = scmp.ne.s32.totalorder %s125, %s127
      %p131 = scmp.eq.s32.totalorder %s30, 0
      %p132 = por %p130, %p131
      %p133 = scmp.ne.s32.totalorder %s125, %s127
      %p134 = scmp.eq.s32.totalorder %s35, 1
      %p135 = por %p133, %p134
      %p136 = scmp.ne.s32.totalorder %s127, %s128
      %p137 = scmp.eq.s32.totalorder %s35, 0
      %p138 = por %p136, %p137
      %p139 = scmp.ne.s32.totalorder %s127, %s128
      %p140 = scmp.eq.s32.totalorder %s36, 1
      %p141 = por %p139, %p140
      %p143 = scmp.ne.s32.totalorder %s128, %s142
      %p144 = scmp.eq.s32.totalorder %s36, 0
      %p145 = por %p143, %p144
      %s147 = sadd.s32 %s146, 1
      %p150 = scmp.eq.s32.totalorder %s30, 1
      %p151 = scmp.ne.s32.totalorder %s146, %s148
      %p152 = scmp.eq.s32.totalorder %s30, 0
      %p153 = por %p151, %p152
      %p154 = scmp.ne.s32.totalorder %s146, %s148
      %p155 = scmp.eq.s32.totalorder %s35, 1
      %p156 = por %p154, %p155
      %p157 = scmp.ne.s32.totalorder %s148, %s149
      %p158 = scmp.eq.s32.totalorder %s35, 0
      %p159 = por %p157, %p158
      %p160 = scmp.ne.s32.totalorder %s148, %s149
      %p161 = scmp.eq.s32.totalorder %s36, 1
      %p162 = por %p160, %p161
      %p164 = scmp.ne.s32.totalorder %s149, %s163
      %p165 = scmp.eq.s32.totalorder %s36, 0
      %p166 = por %p164, %p165
      %s168 = sadd.s32 %s167, 1
      %p171 = scmp.eq.s32.totalorder %s30, 1
      %p172 = scmp.ne.s32.totalorder %s167, %s169
      %p173 = scmp.eq.s32.totalorder %s30, 0
      %p174 = por %p172, %p173
      %p175 = scmp.ne.s32.totalorder %s167, %s169
      %p176 = scmp.eq.s32.totalorder %s35, 1
      %p177 = por %p175, %p176
      %p178 = scmp.ne.s32.totalorder %s169, %s170
      %p179 = scmp.eq.s32.totalorder %s35, 0
      %p180 = por %p178, %p179
      %p181 = scmp.ne.s32.totalorder %s169, %s170
      %p182 = scmp.eq.s32.totalorder %s36, 1
      %p183 = por %p181, %p182
      %p185 = scmp.ne.s32.totalorder %s170, %s184
      %p186 = scmp.eq.s32.totalorder %s36, 0
      %p187 = por %p185, %p186
      %s189 = sadd.s32 %s188, 1
      %p192 = scmp.eq.s32.totalorder %s30, 1
      %p193 = scmp.ne.s32.totalorder %s188, %s190
      %p194 = scmp.eq.s32.totalorder %s30, 0
      %p195 = por %p193, %p194
      %p196 = scmp.ne.s32.totalorder %s188, %s190
      %p197 = scmp.eq.s32.totalorder %s35, 1
      %p198 = por %p196, %p197
      %p199 = scmp.ne.s32.totalorder %s190, %s191
      %p200 = scmp.eq.s32.totalorder %s35, 0
      %p201 = por %p199, %p200
      %p202 = scmp.ne.s32.totalorder %s190, %s191
      %p203 = scmp.eq.s32.totalorder %s36, 1
      %p204 = por %p202, %p203
      %p206 = scmp.ne.s32.totalorder %s191, %s205
      %p207 = scmp.eq.s32.totalorder %s36, 0
      %p208 = por %p206, %p207
      %s210 = sadd.s32 %s209, 1
      %p213 = scmp.eq.s32.totalorder %s30, 1
      %p214 = scmp.ne.s32.totalorder %s209, %s211
      %p215 = scmp.eq.s32.totalorder %s30, 0
      %p216 = por %p214, %p215
      %p217 = scmp.ne.s32.totalorder %s209, %s211
      %p218 = scmp.eq.s32.totalorder %s35, 1
      %p219 = por %p217, %p218
      %p220 = scmp.ne.s32.totalorder %s211, %s212
      %p221 = scmp.eq.s32.totalorder %s35, 0
      %p222 = por %p220, %p221
      %p223 = scmp.ne.s32.totalorder %s211, %s212
      %p224 = scmp.eq.s32.totalorder %s36, 1
      %p225 = por %p223, %p224
      %p227 = scmp.ne.s32.totalorder %s212, %s226
      %p228 = scmp.eq.s32.totalorder %s36, 0
      %p229 = por %p227, %p228
      %s231 = sadd.s32 %s230, 1
      %p234 = scmp.eq.s32.totalorder %s30, 1
      %p235 = scmp.ne.s32.totalorder %s230, %s232
      %p236 = scmp.eq.s32.totalorder %s30, 0
      %p237 = por %p235, %p236
      %p238 = scmp.ne.s32.totalorder %s230, %s232
      %p239 = scmp.eq.s32.totalorder %s35, 1
      %p240 = por %p238, %p239
      %p241 = scmp.ne.s32.totalorder %s232, %s233
      %p242 = scmp.eq.s32.totalorder %s35, 0
      %p243 = por %p241, %p242
      %p244 = scmp.ne.s32.totalorder %s232, %s233
      %p245 = scmp.eq.s32.totalorder %s36, 1
      %p246 = por %p244, %p245
      %p248 = scmp.ne.s32.totalorder %s233, %s247
      %p249 = scmp.eq.s32.totalorder %s36, 0
      %p250 = por %p248, %p249
      %s252 = sadd.s32 %s251, 1
      %p255 = scmp.eq.s32.totalorder %s30, 1
      %p256 = scmp.ne.s32.totalorder %s251, %s253
      %p257 = scmp.eq.s32.totalorder %s30, 0
      %p258 = por %p256, %p257
      %p259 = scmp.ne.s32.totalorder %s251, %s253
      %p260 = scmp.eq.s32.totalorder %s35, 1
      %p261 = por %p259, %p260
      %p262 = scmp.ne.s32.totalorder %s253, %s254
      %p263 = scmp.eq.s32.totalorder %s35, 0
      %p264 = por %p262, %p263
      %p265 = scmp.ne.s32.totalorder %s253, %s254
      %p266 = scmp.eq.s32.totalorder %s36, 1
      %p267 = por %p265, %p266
      %p269 = scmp.ne.s32.totalorder %s254, %s268
      %p270 = scmp.eq.s32.totalorder %s36, 0
      %p271 = por %p269, %p270
      %s273 = sadd.s32 %s272, 1
      %p276 = scmp.eq.s32.totalorder %s30, 1
      %p277 = scmp.ne.s32.totalorder %s272, %s274
      %p278 = scmp.eq.s32.totalorder %s30, 0
      %p279 = por %p277, %p278
      %p280 = scmp.ne.s32.totalorder %s272, %s274
      %p281 = scmp.eq.s32.totalorder %s35, 1
      %p282 = por %p280, %p281
      %p283 = scmp.ne.s32.totalorder %s274, %s275
      %p284 = scmp.eq.s32.totalorder %s35, 0
      %p285 = por %p283, %p284
      %p286 = scmp.ne.s32.totalorder %s274, %s275
      %p287 = scmp.eq.s32.totalorder %s36, 1
      %p288 = por %p286, %p287
      %p290 = scmp.ne.s32.totalorder %s275, %s289
      %p291 = scmp.eq.s32.totalorder %s36, 0
      %p292 = por %p290, %p291
      %s293 = ssub.s32 %s37, %s49
      %s294 = ssub.s32 %s38, %s45
      %s295 = sor.u32 %s293, %s294
      %p296 = scmp.eq.s32.totalorder %s295, 0
      %s298 = sadd.s32 %s297, 1
      %s299 = scalar_select %p296, %s297, %s298
      %p302 = pneg %p296
      %p303 = scmp.eq.s32.totalorder %s30, 1
      %p304 = por %p302, %p303
      %p305 = scmp.ne.s32.totalorder %s297, %s300
      %p306 = scmp.eq.s32.totalorder %s30, 0
      %p307 = por %p305, %p306
      %p308 = scmp.ne.s32.totalorder %s297, %s300
      %p309 = scmp.eq.s32.totalorder %s35, 1
      %p310 = por %p308, %p309
      %p311 = scmp.ne.s32.totalorder %s300, %s301
      %p312 = scmp.eq.s32.totalorder %s35, 0
      %p313 = por %p311, %p312
      %p314 = scmp.ne.s32.totalorder %s300, %s301
      %p315 = scmp.eq.s32.totalorder %s36, 1
      %p316 = por %p314, %p315
      %p318 = scmp.ne.s32.totalorder %s301, %s317
      %p319 = scmp.eq.s32.totalorder %s36, 0
      %p320 = por %p318, %p319
      %p321 = scmp.le.s32.totalorder 1, %s30
      %p322 = scmp.lt.s32.totalorder %s30, 3
      %p323 = pnand %p321, %p322
      %p324 = pneg %p323
      // Predicated region
      $region9: #{_lambda_.7} parent=5 // pred_check
        _
      $region10: #{_lambda_.7} parent=5 // pred_check_branch
        %326 = sbr.rel (%p323) target = $region12
      $region11: #{_lambda_.7} parent=5 // pred_region
        %s327 = ssub.s32 %s30, 1
        // Predicated region
        $region13: #{_lambda_.7} parent=11 // pred_check
          %p328 = pneg %p117
        $region14: #{_lambda_.7} parent=11 // pred_check_branch
          %330 = sbr.rel (%p328) target = $region16
        $region15: #{_lambda_.7} parent=11 // pred_region
          %s332 = ssub.s32 32768, 32768
          %333 = vsyncadd [#allocation7], %s332
          %s334 = sshll.u32 [#allocation8], 4
          %s335 = int_to_ptr.vmem [resolvable:$true] %s334
          %340 = dma.hbm_to_vmem [thread:$0]  %s2, 32768, %s335, [#allocation7], 256, 256, 16
        $region16: #{_lambda_.7} parent=11 // pred_fallthru
          _
        // Predicated region
        $region17: #{_lambda_.7} parent=11 // pred_check
          %p341 = pneg %p138
        $region18: #{_lambda_.7} parent=11 // pred_check_branch
          %343 = sbr.rel (%p341) target = $region20
        $region19: #{_lambda_.7} parent=11 // pred_region
          %s345 = ssub.s32 2048, 2048
          %346 = vsyncadd [#allocation10], %s345
          %s347 = sshll.u32 [#allocation9], 4
          %s348 = int_to_ptr.vmem [resolvable:$true] %s347
          %353 = dma.hbm_to_vmem [thread:$0]  %s3, 2048, %s348, [#allocation10], 256, 256, 16
        $region20: #{_lambda_.7} parent=11 // pred_fallthru
          _
        // Predicated region
        $region21: #{_lambda_.7} parent=11 // pred_check
          %p354 = pneg %p159
        $region22: #{_lambda_.7} parent=11 // pred_check_branch
          %356 = sbr.rel (%p354) target = $region24
        $region23: #{_lambda_.7} parent=11 // pred_region
          %s358 = ssub.s32 64, 64
          %359 = vsyncadd [#allocation10], %s358
          %s361 = sshll.u32 [#allocation11], 4
          %s362 = int_to_ptr.vmem [resolvable:$true] %s361
          %364 = dma.hbm_to_vmem [thread:$0]  %s4, 64, %s362, [#allocation10]
        $region24: #{_lambda_.7} parent=11 // pred_fallthru
          _
        // Predicated region
        $region25: #{_lambda_.7} parent=11 // pred_check
          %p365 = pneg %p180
        $region26: #{_lambda_.7} parent=11 // pred_check_branch
          %367 = sbr.rel (%p365) target = $region28
        $region27: #{_lambda_.7} parent=11 // pred_region
          %s369 = ssub.s32 8192, 8192
          %370 = vsyncadd [#allocation13], %s369
          %s371 = sshll.u32 [#allocation12], 4
          %s372 = int_to_ptr.vmem [resolvable:$true] %s371
          %377 = dma.hbm_to_vmem [thread:$0]  %s5, 8192, %s372, [#allocation13], 128, 128, 8
        $region28: #{_lambda_.7} parent=11 // pred_fallthru
          _
        // Predicated region
        $region29: #{_lambda_.7} parent=11 // pred_check
          %p378 = pneg %p201
        $region30: #{_lambda_.7} parent=11 // pred_check_branch
          %380 = sbr.rel (%p378) target = $region32
        $region31: #{_lambda_.7} parent=11 // pred_region
          %s382 = ssub.s32 32, 32
          %383 = vsyncadd [#allocation13], %s382
          %s385 = sshll.u32 [#allocation14], 4
          %s386 = int_to_ptr.vmem [resolvable:$true] %s385
          %388 = dma.hbm_to_vmem [thread:$0]  %s6, 32, %s386, [#allocation13]
        $region32: #{_lambda_.7} parent=11 // pred_fallthru
          _
        // Predicated region
        $region33: #{_lambda_.7} parent=11 // pred_check
          %p389 = pneg %p222
        $region34: #{_lambda_.7} parent=11 // pred_check_branch
          %391 = sbr.rel (%p389) target = $region36
        $region35: #{_lambda_.7} parent=11 // pred_region
          %s393 = ssub.s32 2048, 2048
          %394 = vsyncadd [#allocation16], %s393
          %s395 = sshll.u32 [#allocation15], 4
          %s396 = int_to_ptr.vmem [resolvable:$true] %s395
          %401 = dma.hbm_to_vmem [thread:$0]  %s7, 2048, %s396, [#allocation16], 64, 64, 4
        $region36: #{_lambda_.7} parent=11 // pred_fallthru
          _
        // Predicated region
        $region37: #{_lambda_.7} parent=11 // pred_check
          %p402 = pneg %p243
        $region38: #{_lambda_.7} parent=11 // pred_check_branch
          %404 = sbr.rel (%p402) target = $region40
        $region39: #{_lambda_.7} parent=11 // pred_region
          %s406 = ssub.s32 16, 16
          %407 = vsyncadd [#allocation16], %s406
          %s409 = sshll.u32 [#allocation17], 4
          %s410 = int_to_ptr.vmem [resolvable:$true] %s409
          %412 = dma.hbm_to_vmem [thread:$0]  %s8, 16, %s410, [#allocation16]
        $region40: #{_lambda_.7} parent=11 // pred_fallthru
          _
        // Predicated region
        $region41: #{_lambda_.7} parent=11 // pred_check
          %p413 = pneg %p264
        $region42: #{_lambda_.7} parent=11 // pred_check_branch
          %415 = sbr.rel (%p413) target = $region44
        $region43: #{_lambda_.7} parent=11 // pred_region
          %s417 = ssub.s32 1024, 1024
          %418 = vsyncadd [#allocation19], %s417
          %s419 = sshll.u32 [#allocation18], 4
          %s420 = int_to_ptr.vmem [resolvable:$true] %s419
          %425 = dma.hbm_to_vmem [thread:$0]  %s9, 1024, %s420, [#allocation19], 64, 64, 4
        $region44: #{_lambda_.7} parent=11 // pred_fallthru
          _
        // Predicated region
        $region45: #{_lambda_.7} parent=11 // pred_check
          %p426 = pneg %p285
        $region46: #{_lambda_.7} parent=11 // pred_check_branch
          %428 = sbr.rel (%p426) target = $region48
        $region47: #{_lambda_.7} parent=11 // pred_region
          %s430 = ssub.s32 16, 16
          %431 = vsyncadd [#allocation19], %s430
          %s433 = sshll.u32 [#allocation20], 4
          %s434 = int_to_ptr.vmem [resolvable:$true] %s433
          %436 = dma.hbm_to_vmem [thread:$0]  %s10, 16, %s434, [#allocation19]
        $region48: #{_lambda_.7} parent=11 // pred_fallthru
          _
      $region12: #{_lambda_.7} parent=5 // pred_fallthru
        _
      %p437 = scmp.lt.s32.totalorder %s30, 2
      // Predicated region
      $region49: #{_lambda_.7} parent=5 // pred_check
        %p438 = pneg %p437
      $region50: #{_lambda_.7} parent=5 // pred_check_branch
        %440 = sbr.rel (%p438) target = $region52
      $region51: #{_lambda_.7} parent=5 // pred_region
        // Predicated region
        $region53: #{_lambda_.7} parent=51 // pred_check
          %p441 = pneg %p64
        $region54: #{_lambda_.7} parent=51 // pred_check_branch
          %443 = sbr.rel (%p441) target = $region56
        $region55: #{_lambda_.7} parent=51 // pred_region
          %s444 = sand.u32 %s54, 1
          %s445 = scalar_lea.sflag [#allocation4], %s444
          %s446 = sand.u32 %s54, 1
          %s447 = smul.addr %s446, 8
          %s448 = scalar_lea.vmem [#allocation3], %s447
          %s449 = smul.u32 2, %s38
          %s451 = ssub.s32 128, 128
          %452 = vsyncadd %s445, %s451
          %s453 = smul.addr %s37, 2
          %s454 = sadd.s32 %s449, %s453
          %s455 = smul.addr %s454, 64
          %s456 = scalar_lea.hbm %s0, %s455
          %s457 = sshll.u32 %s448, 4
          %s458 = int_to_ptr.vmem [resolvable:$true] %s457
          %463 = dma.hbm_to_vmem [thread:$0]  %s456, 128, %s458, %s445, 64, 64, 4
        $region56: #{_lambda_.7} parent=51 // pred_fallthru
          _
        // Predicated region
        $region57: #{_lambda_.7} parent=51 // pred_check
          %p464 = pneg %p90
        $region58: #{_lambda_.7} parent=51 // pred_check_branch
          %466 = sbr.rel (%p464) target = $region60
        $region59: #{_lambda_.7} parent=51 // pred_region
          %s467 = sand.u32 %s30, 1
          %s468 = scalar_lea.sflag [#allocation7], %s467
          %s469 = sand.u32 %s80, 1
          %s470 = smul.addr %s469, 8
          %s471 = scalar_lea.vmem [#allocation6], %s470
          %s473 = ssub.s32 128, 128
          %474 = vsyncadd %s468, %s473
          %s475 = smul.addr %s37, 8
          %s476 = smul.addr %s475, 16
          %s477 = scalar_lea.hbm %s1, %s476
          %s479 = sshll.u32 %s471, 4
          %s480 = int_to_ptr.vmem [resolvable:$true] %s479
          %482 = dma.hbm_to_vmem [thread:$0]  %s477, 128, %s480, %s468
        $region60: #{_lambda_.7} parent=51 // pred_fallthru
          _
      $region52: #{_lambda_.7} parent=5 // pred_fallthru
        _
      %p483 = scmp.le.s32.totalorder 1, %s30
      %p484 = scmp.lt.s32.totalorder %s30, 3
      %p485 = pnand %p483, %p484
      %p486 = pneg %p485
      // Predicated region
      $region61: #{_lambda_.7} parent=5 // pred_check
        _
      $region62: #{_lambda_.7} parent=5 // pred_check_branch
        %488 = sbr.rel (%p485) target = $region64
      $region63: #{_lambda_.7} parent=5 // pred_region
        %s489 = ssub.s32 %s30, 1
        %s490 = sand.u32 %s57, 1
        %s491 = scalar_lea.sflag [#allocation4], %s490
        %s492 = sand.u32 %s57, 1
        %s493 = smul.addr %s492, 8
        %s494 = scalar_lea.vmem [#allocation3], %s493
        // Predicated region
        $region65: #{_lambda_.7} parent=63 // pred_check
          %p495 = pneg %p70
        $region66: #{_lambda_.7} parent=63 // pred_check_branch
          %497 = sbr.rel (%p495) target = $region68
        $region67: #{_lambda_.7} parent=63 // pred_region
          %498 = dma.done %s491, 128
        $region68: #{_lambda_.7} parent=63 // pred_fallthru
          _
        %s499 = sand.u32 %s35, 1
        %s500 = scalar_lea.sflag [#allocation7], %s499
        %s501 = sand.u32 %s83, 1
        %s502 = smul.addr %s501, 8
        %s503 = scalar_lea.vmem [#allocation6], %s502
        // Predicated region
        $region69: #{_lambda_.7} parent=63 // pred_check
          %p504 = pneg %p96
        $region70: #{_lambda_.7} parent=63 // pred_check_branch
          %506 = sbr.rel (%p504) target = $region72
        $region71: #{_lambda_.7} parent=63 // pred_region
          %507 = dma.done %s500, 128
        $region72: #{_lambda_.7} parent=63 // pred_fallthru
          _
        // Predicated region
        $region73: #{_lambda_.7} parent=63 // pred_check
          %p508 = pneg %p117
        $region74: #{_lambda_.7} parent=63 // pred_check_branch
          %510 = sbr.rel (%p508) target = $region76
        $region75: #{_lambda_.7} parent=63 // pred_region
          %511 = dma.done [#allocation7], 32768
        $region76: #{_lambda_.7} parent=63 // pred_fallthru
          _
        // Predicated region
        $region77: #{_lambda_.7} parent=63 // pred_check
          %p512 = pneg %p138
        $region78: #{_lambda_.7} parent=63 // pred_check_branch
          %514 = sbr.rel (%p512) target = $region80
        $region79: #{_lambda_.7} parent=63 // pred_region
          %515 = dma.done [#allocation10], 2048
        $region80: #{_lambda_.7} parent=63 // pred_fallthru
          _
        // Predicated region
        $region81: #{_lambda_.7} parent=63 // pred_check
          %p516 = pneg %p159
        $region82: #{_lambda_.7} parent=63 // pred_check_branch
          %518 = sbr.rel (%p516) target = $region84
        $region83: #{_lambda_.7} parent=63 // pred_region
          %519 = dma.done [#allocation10], 64
        $region84: #{_lambda_.7} parent=63 // pred_fallthru
          _
        // Predicated region
        $region85: #{_lambda_.7} parent=63 // pred_check
          %p520 = pneg %p180
        $region86: #{_lambda_.7} parent=63 // pred_check_branch
          %522 = sbr.rel (%p520) target = $region88
        $region87: #{_lambda_.7} parent=63 // pred_region
          %523 = dma.done [#allocation13], 8192
        $region88: #{_lambda_.7} parent=63 // pred_fallthru
          _
        // Predicated region
        $region89: #{_lambda_.7} parent=63 // pred_check
          %p524 = pneg %p201
        $region90: #{_lambda_.7} parent=63 // pred_check_branch
          %526 = sbr.rel (%p524) target = $region92
        $region91: #{_lambda_.7} parent=63 // pred_region
          %527 = dma.done [#allocation13], 32
        $region92: #{_lambda_.7} parent=63 // pred_fallthru
          _
        // Predicated region
        $region93: #{_lambda_.7} parent=63 // pred_check
          %p528 = pneg %p222
        $region94: #{_lambda_.7} parent=63 // pred_check_branch
          %530 = sbr.rel (%p528) target = $region96
        $region95: #{_lambda_.7} parent=63 // pred_region
          %531 = dma.done [#allocation16], 2048
        $region96: #{_lambda_.7} parent=63 // pred_fallthru
          _
        // Predicated region
        $region97: #{_lambda_.7} parent=63 // pred_check
          %p532 = pneg %p243
        $region98: #{_lambda_.7} parent=63 // pred_check_branch
          %534 = sbr.rel (%p532) target = $region100
        $region99: #{_lambda_.7} parent=63 // pred_region
          %535 = dma.done [#allocation16], 16
        $region100: #{_lambda_.7} parent=63 // pred_fallthru
          _
        // Predicated region
        $region101: #{_lambda_.7} parent=63 // pred_check
          %p536 = pneg %p264
        $region102: #{_lambda_.7} parent=63 // pred_check_branch
          %538 = sbr.rel (%p536) target = $region104
        $region103: #{_lambda_.7} parent=63 // pred_region
          %539 = dma.done [#allocation19], 1024
        $region104: #{_lambda_.7} parent=63 // pred_fallthru
          _
        // Predicated region
        $region105: #{_lambda_.7} parent=63 // pred_check
          %p540 = pneg %p285
        $region106: #{_lambda_.7} parent=63 // pred_check_branch
          %542 = sbr.rel (%p540) target = $region108
        $region107: #{_lambda_.7} parent=63 // pred_region
          %543 = dma.done [#allocation19], 16
        $region108: #{_lambda_.7} parent=63 // pred_fallthru
          _
        %s544 = sand.u32 %s57, 1
        %s545 = scalar_lea.sflag [#allocation4], %s544
        %s546 = sand.u32 %s57, 1
        %s547 = smul.addr %s546, 8
        %s548 = scalar_lea.vmem [#allocation3], %s547
        %p549 = pneg %p70
        %p550 = pneg %p67
        %s551 = sand.u32 %s35, 1
        %s552 = scalar_lea.sflag [#allocation7], %s551
        %s553 = sand.u32 %s83, 1
        %s554 = smul.addr %s553, 8
        %s555 = scalar_lea.vmem [#allocation6], %s554
        %p556 = pneg %p96
        %p557 = pneg %p93
        %p558 = pneg %p117
        %p559 = pneg %p114
        %p560 = pneg %p138
        %p561 = pneg %p135
        %p562 = pneg %p159
        %p563 = pneg %p156
        %p564 = pneg %p180
        %p565 = pneg %p177
        %p566 = pneg %p201
        %p567 = pneg %p198
        %p568 = pneg %p222
        %p569 = pneg %p219
        %p570 = pneg %p243
        %p571 = pneg %p240
        %p572 = pneg %p264
        %p573 = pneg %p261
        %p574 = pneg %p285
        %p575 = pneg %p282
        %p576 = pneg %p313
        %p577 = pneg %p310
        %s578 = sand.u32 %s300, 1
        %s579 = scalar_lea.sflag [#allocation5], %s578
        %s580 = sand.u32 %s300, 1
        %s581 = smul.addr %s580, 16
        %s582 = scalar_lea.vmem [#allocation21], %s581
        %s583 = smul.u32 2, %s40
        %s584 = smul.u32 2, %s40
        %p586 = scmp.eq.s32.totalorder %s40, 0
        // Predicated region
        $region109: #{_lambda_.7} parent=63 // pred_check
          %p587 = pneg %p586
        $region110: #{_lambda_.7} parent=63 // pred_check_branch
          %589 = sbr.rel (%p587) target = $region112
        $region111: #{_lambda_.7} parent=63 // pred_region
          %v590 = vld [vmem:[%s503] sm:$0xff]
          %v592 = vlaneseq
          %v593 = vshrl.u32 %v592, 7
          %v594 = vsub.s32 0, %v593
          %v595 = vrot.slane %v590, %v594
          %v596 = vlaneseq
          %v597 = vshrl.u32 %v596, 7
          %v598 = vsub.s32 1, %v597
          %v599 = vrot.slane %v590, %v598
          %v600 = vlaneseq
          %v601 = vshrl.u32 %v600, 7
          %v602 = vsub.s32 2, %v601
          %v603 = vrot.slane %v590, %v602
          %v604 = vlaneseq
          %v605 = vshrl.u32 %v604, 7
          %v606 = vsub.s32 3, %v605
          %v607 = vrot.slane %v590, %v606
          %v608 = vlaneseq
          %v609 = vshrl.u32 %v608, 7
          %v610 = vsub.s32 4, %v609
          %v611 = vrot.slane %v590, %v610
          %v612 = vlaneseq
          %v613 = vshrl.u32 %v612, 7
          %v614 = vsub.s32 5, %v613
          %v615 = vrot.slane %v590, %v614
          %v616 = vlaneseq
          %v617 = vshrl.u32 %v616, 7
          %v618 = vsub.s32 6, %v617
          %v619 = vrot.slane %v590, %v618
          %v620 = vlaneseq
          %v621 = vshrl.u32 %v620, 7
          %v622 = vsub.s32 7, %v621
          %v623 = vrot.slane %v590, %v622
          %v632 = vpack.c.bf16 %v595, %v595
          %v633 = vpack.c.bf16 %v599, %v599
          %v634 = vpack.c.bf16 %v603, %v603
          %v635 = vpack.c.bf16 %v607, %v607
          %v636 = vpack.c.bf16 %v611, %v611
          %v637 = vpack.c.bf16 %v615, %v615
          %v638 = vpack.c.bf16 %v619, %v619
          %v639 = vpack.c.bf16 %v623, %v623
          %v640 = vld [vmem:[#allocation8] sm:$0xff]
          %v641 = vld [vmem:[#allocation8 + $0x8] sm:$0xff]
          %v642 = vld [vmem:[#allocation8 + $0x10] sm:$0xff]
          %v643 = vld [vmem:[#allocation8 + $0x18] sm:$0xff]
          %v644 = vld [vmem:[#allocation8 + $0x20] sm:$0xff]
          %v645 = vld [vmem:[#allocation8 + $0x28] sm:$0xff]
          %v646 = vld [vmem:[#allocation8 + $0x30] sm:$0xff]
          %v647 = vld [vmem:[#allocation8 + $0x38] sm:$0xff]
          %v648 = vld [vmem:[#allocation8 + $0x40] sm:$0xff]
          %v649 = vld [vmem:[#allocation8 + $0x48] sm:$0xff]
          %v650 = vld [vmem:[#allocation8 + $0x50] sm:$0xff]
          %v651 = vld [vmem:[#allocation8 + $0x58] sm:$0xff]
          %v652 = vld [vmem:[#allocation8 + $0x60] sm:$0xff]
          %v653 = vld [vmem:[#allocation8 + $0x68] sm:$0xff]
          %v654 = vld [vmem:[#allocation8 + $0x70] sm:$0xff]
          %v655 = vld [vmem:[#allocation8 + $0x78] sm:$0xff]
          %v656 = vld [vmem:[#allocation8 + $0x80] sm:$0xff]
          %v657 = vld [vmem:[#allocation8 + $0x88] sm:$0xff]
          %v658 = vld [vmem:[#allocation8 + $0x90] sm:$0xff]
          %v659 = vld [vmem:[#allocation8 + $0x98] sm:$0xff]
          %v660 = vld [vmem:[#allocation8 + $0xa0] sm:$0xff]
          %v661 = vld [vmem:[#allocation8 + $0xa8] sm:$0xff]
          %v662 = vld [vmem:[#allocation8 + $0xb0] sm:$0xff]
          %v663 = vld [vmem:[#allocation8 + $0xb8] sm:$0xff]
          %v664 = vld [vmem:[#allocation8 + $0xc0] sm:$0xff]
          %v665 = vld [vmem:[#allocation8 + $0xc8] sm:$0xff]
          %v666 = vld [vmem:[#allocation8 + $0xd0] sm:$0xff]
          %v667 = vld [vmem:[#allocation8 + $0xd8] sm:$0xff]
          %v668 = vld [vmem:[#allocation8 + $0xe0] sm:$0xff]
          %v669 = vld [vmem:[#allocation8 + $0xe8] sm:$0xff]
          %v670 = vld [vmem:[#allocation8 + $0xf0] sm:$0xff]
          %v671 = vld [vmem:[#allocation8 + $0xf8] sm:$0xff]
          %v672 = vld [vmem:[#allocation8 + $0x100] sm:$0xff]
          %v673 = vld [vmem:[#allocation8 + $0x108] sm:$0xff]
          %v674 = vld [vmem:[#allocation8 + $0x110] sm:$0xff]
          %v675 = vld [vmem:[#allocation8 + $0x118] sm:$0xff]
          %v676 = vld [vmem:[#allocation8 + $0x120] sm:$0xff]
          %v677 = vld [vmem:[#allocation8 + $0x128] sm:$0xff]
          %v678 = vld [vmem:[#allocation8 + $0x130] sm:$0xff]
          %v679 = vld [vmem:[#allocation8 + $0x138] sm:$0xff]
          %v680 = vld [vmem:[#allocation8 + $0x140] sm:$0xff]
          %v681 = vld [vmem:[#allocation8 + $0x148] sm:$0xff]
          %v682 = vld [vmem:[#allocation8 + $0x150] sm:$0xff]
          %v683 = vld [vmem:[#allocation8 + $0x158] sm:$0xff]
          %v684 = vld [vmem:[#allocation8 + $0x160] sm:$0xff]
          %v685 = vld [vmem:[#allocation8 + $0x168] sm:$0xff]
          %v686 = vld [vmem:[#allocation8 + $0x170] sm:$0xff]
          %v687 = vld [vmem:[#allocation8 + $0x178] sm:$0xff]
          %v688 = vld [vmem:[#allocation8 + $0x180] sm:$0xff]
          %v689 = vld [vmem:[#allocation8 + $0x188] sm:$0xff]
          %v690 = vld [vmem:[#allocation8 + $0x190] sm:$0xff]
          %v691 = vld [vmem:[#allocation8 + $0x198] sm:$0xff]
          %v692 = vld [vmem:[#allocation8 + $0x1a0] sm:$0xff]
          %v693 = vld [vmem:[#allocation8 + $0x1a8] sm:$0xff]
          %v694 = vld [vmem:[#allocation8 + $0x1b0] sm:$0xff]
          %v695 = vld [vmem:[#allocation8 + $0x1b8] sm:$0xff]
          %v696 = vld [vmem:[#allocation8 + $0x1c0] sm:$0xff]
          %v697 = vld [vmem:[#allocation8 + $0x1c8] sm:$0xff]
          %v698 = vld [vmem:[#allocation8 + $0x1d0] sm:$0xff]
          %v699 = vld [vmem:[#allocation8 + $0x1d8] sm:$0xff]
          %v700 = vld [vmem:[#allocation8 + $0x1e0] sm:$0xff]
          %v701 = vld [vmem:[#allocation8 + $0x1e8] sm:$0xff]
          %v702 = vld [vmem:[#allocation8 + $0x1f0] sm:$0xff]
          %v703 = vld [vmem:[#allocation8 + $0x1f8] sm:$0xff]
          %v704 = vld [vmem:[#allocation8 + $0x200] sm:$0xff]
          %v705 = vld [vmem:[#allocation8 + $0x208] sm:$0xff]
          %v706 = vld [vmem:[#allocation8 + $0x210] sm:$0xff]
          %v707 = vld [vmem:[#allocation8 + $0x218] sm:$0xff]
          %v708 = vld [vmem:[#allocation8 + $0x220] sm:$0xff]
          %v709 = vld [vmem:[#allocation8 + $0x228] sm:$0xff]
          %v710 = vld [vmem:[#allocation8 + $0x230] sm:$0xff]
          %v711 = vld [vmem:[#allocation8 + $0x238] sm:$0xff]
          %v712 = vld [vmem:[#allocation8 + $0x240] sm:$0xff]
          %v713 = vld [vmem:[#allocation8 + $0x248] sm:$0xff]
          %v714 = vld [vmem:[#allocation8 + $0x250] sm:$0xff]
          %v715 = vld [vmem:[#allocation8 + $0x258] sm:$0xff]
          %v716 = vld [vmem:[#allocation8 + $0x260] sm:$0xff]
          %v717 = vld [vmem:[#allocation8 + $0x268] sm:$0xff]
          %v718 = vld [vmem:[#allocation8 + $0x270] sm:$0xff]
          %v719 = vld [vmem:[#allocation8 + $0x278] sm:$0xff]
          %v720 = vld [vmem:[#allocation8 + $0x280] sm:$0xff]
          %v721 = vld [vmem:[#allocation8 + $0x288] sm:$0xff]
          %v722 = vld [vmem:[#allocation8 + $0x290] sm:$0xff]
          %v723 = vld [vmem:[#allocation8 + $0x298] sm:$0xff]
          %v724 = vld [vmem:[#allocation8 + $0x2a0] sm:$0xff]
          %v725 = vld [vmem:[#allocation8 + $0x2a8] sm:$0xff]
          %v726 = vld [vmem:[#allocation8 + $0x2b0] sm:$0xff]
          %v727 = vld [vmem:[#allocation8 + $0x2b8] sm:$0xff]
          %v728 = vld [vmem:[#allocation8 + $0x2c0] sm:$0xff]
          %v729 = vld [vmem:[#allocation8 + $0x2c8] sm:$0xff]
          %v730 = vld [vmem:[#allocation8 + $0x2d0] sm:$0xff]
          %v731 = vld [vmem:[#allocation8 + $0x2d8] sm:$0xff]
          %v732 = vld [vmem:[#allocation8 + $0x2e0] sm:$0xff]
          %v733 = vld [vmem:[#allocation8 + $0x2e8] sm:$0xff]
          %v734 = vld [vmem:[#allocation8 + $0x2f0] sm:$0xff]
          %v735 = vld [vmem:[#allocation8 + $0x2f8] sm:$0xff]
          %v736 = vld [vmem:[#allocation8 + $0x300] sm:$0xff]
          %v737 = vld [vmem:[#allocation8 + $0x308] sm:$0xff]
          %v738 = vld [vmem:[#allocation8 + $0x310] sm:$0xff]
          %v739 = vld [vmem:[#allocation8 + $0x318] sm:$0xff]
          %v740 = vld [vmem:[#allocation8 + $0x320] sm:$0xff]
          %v741 = vld [vmem:[#allocation8 + $0x328] sm:$0xff]
          %v742 = vld [vmem:[#allocation8 + $0x330] sm:$0xff]
          %v743 = vld [vmem:[#allocation8 + $0x338] sm:$0xff]
          %v744 = vld [vmem:[#allocation8 + $0x340] sm:$0xff]
          %v745 = vld [vmem:[#allocation8 + $0x348] sm:$0xff]
          %v746 = vld [vmem:[#allocation8 + $0x350] sm:$0xff]
          %v747 = vld [vmem:[#allocation8 + $0x358] sm:$0xff]
          %v748 = vld [vmem:[#allocation8 + $0x360] sm:$0xff]
          %v749 = vld [vmem:[#allocation8 + $0x368] sm:$0xff]
          %v750 = vld [vmem:[#allocation8 + $0x370] sm:$0xff]
          %v751 = vld [vmem:[#allocation8 + $0x378] sm:$0xff]
          %v752 = vld [vmem:[#allocation8 + $0x380] sm:$0xff]
          %v753 = vld [vmem:[#allocation8 + $0x388] sm:$0xff]
          %v754 = vld [vmem:[#allocation8 + $0x390] sm:$0xff]
          %v755 = vld [vmem:[#allocation8 + $0x398] sm:$0xff]
          %v756 = vld [vmem:[#allocation8 + $0x3a0] sm:$0xff]
          %v757 = vld [vmem:[#allocation8 + $0x3a8] sm:$0xff]
          %v758 = vld [vmem:[#allocation8 + $0x3b0] sm:$0xff]
          %v759 = vld [vmem:[#allocation8 + $0x3b8] sm:$0xff]
          %v760 = vld [vmem:[#allocation8 + $0x3c0] sm:$0xff]
          %v761 = vld [vmem:[#allocation8 + $0x3c8] sm:$0xff]
          %v762 = vld [vmem:[#allocation8 + $0x3d0] sm:$0xff]
          %v763 = vld [vmem:[#allocation8 + $0x3d8] sm:$0xff]
          %v764 = vld [vmem:[#allocation8 + $0x3e0] sm:$0xff]
          %v765 = vld [vmem:[#allocation8 + $0x3e8] sm:$0xff]
          %v766 = vld [vmem:[#allocation8 + $0x3f0] sm:$0xff]
          %v767 = vld [vmem:[#allocation8 + $0x3f8] sm:$0xff]
          %v768 = vld [vmem:[#allocation8 + $0x400] sm:$0xff]
          %v769 = vld [vmem:[#allocation8 + $0x408] sm:$0xff]
          %v770 = vld [vmem:[#allocation8 + $0x410] sm:$0xff]
          %v771 = vld [vmem:[#allocation8 + $0x418] sm:$0xff]
          %v772 = vld [vmem:[#allocation8 + $0x420] sm:$0xff]
          %v773 = vld [vmem:[#allocation8 + $0x428] sm:$0xff]
          %v774 = vld [vmem:[#allocation8 + $0x430] sm:$0xff]
          %v775 = vld [vmem:[#allocation8 + $0x438] sm:$0xff]
          %v776 = vld [vmem:[#allocation8 + $0x440] sm:$0xff]
          %v777 = vld [vmem:[#allocation8 + $0x448] sm:$0xff]
          %v778 = vld [vmem:[#allocation8 + $0x450] sm:$0xff]
          %v779 = vld [vmem:[#allocation8 + $0x458] sm:$0xff]
          %v780 = vld [vmem:[#allocation8 + $0x460] sm:$0xff]
          %v781 = vld [vmem:[#allocation8 + $0x468] sm:$0xff]
          %v782 = vld [vmem:[#allocation8 + $0x470] sm:$0xff]
          %v783 = vld [vmem:[#allocation8 + $0x478] sm:$0xff]
          %v784 = vld [vmem:[#allocation8 + $0x480] sm:$0xff]
          %v785 = vld [vmem:[#allocation8 + $0x488] sm:$0xff]
          %v786 = vld [vmem:[#allocation8 + $0x490] sm:$0xff]
          %v787 = vld [vmem:[#allocation8 + $0x498] sm:$0xff]
          %v788 = vld [vmem:[#allocation8 + $0x4a0] sm:$0xff]
          %v789 = vld [vmem:[#allocation8 + $0x4a8] sm:$0xff]
          %v790 = vld [vmem:[#allocation8 + $0x4b0] sm:$0xff]
          %v791 = vld [vmem:[#allocation8 + $0x4b8] sm:$0xff]
          %v792 = vld [vmem:[#allocation8 + $0x4c0] sm:$0xff]
          %v793 = vld [vmem:[#allocation8 + $0x4c8] sm:$0xff]
          %v794 = vld [vmem:[#allocation8 + $0x4d0] sm:$0xff]
          %v795 = vld [vmem:[#allocation8 + $0x4d8] sm:$0xff]
          %v796 = vld [vmem:[#allocation8 + $0x4e0] sm:$0xff]
          %v797 = vld [vmem:[#allocation8 + $0x4e8] sm:$0xff]
          %v798 = vld [vmem:[#allocation8 + $0x4f0] sm:$0xff]
          %v799 = vld [vmem:[#allocation8 + $0x4f8] sm:$0xff]
          %v800 = vld [vmem:[#allocation8 + $0x500] sm:$0xff]
          %v801 = vld [vmem:[#allocation8 + $0x508] sm:$0xff]
          %v802 = vld [vmem:[#allocation8 + $0x510] sm:$0xff]
          %v803 = vld [vmem:[#allocation8 + $0x518] sm:$0xff]
          %v804 = vld [vmem:[#allocation8 + $0x520] sm:$0xff]
          %v805 = vld [vmem:[#allocation8 + $0x528] sm:$0xff]
          %v806 = vld [vmem:[#allocation8 + $0x530] sm:$0xff]
          %v807 = vld [vmem:[#allocation8 + $0x538] sm:$0xff]
          %v808 = vld [vmem:[#allocation8 + $0x540] sm:$0xff]
          %v809 = vld [vmem:[#allocation8 + $0x548] sm:$0xff]
          %v810 = vld [vmem:[#allocation8 + $0x550] sm:$0xff]
          %v811 = vld [vmem:[#allocation8 + $0x558] sm:$0xff]
          %v812 = vld [vmem:[#allocation8 + $0x560] sm:$0xff]
          %v813 = vld [vmem:[#allocation8 + $0x568] sm:$0xff]
          %v814 = vld [vmem:[#allocation8 + $0x570] sm:$0xff]
          %v815 = vld [vmem:[#allocation8 + $0x578] sm:$0xff]
          %v816 = vld [vmem:[#allocation8 + $0x580] sm:$0xff]
          %v817 = vld [vmem:[#allocation8 + $0x588] sm:$0xff]
          %v818 = vld [vmem:[#allocation8 + $0x590] sm:$0xff]
          %v819 = vld [vmem:[#allocation8 + $0x598] sm:$0xff]
          %v820 = vld [vmem:[#allocation8 + $0x5a0] sm:$0xff]
          %v821 = vld [vmem:[#allocation8 + $0x5a8] sm:$0xff]
          %v822 = vld [vmem:[#allocation8 + $0x5b0] sm:$0xff]
          %v823 = vld [vmem:[#allocation8 + $0x5b8] sm:$0xff]
          %v824 = vld [vmem:[#allocation8 + $0x5c0] sm:$0xff]
          %v825 = vld [vmem:[#allocation8 + $0x5c8] sm:$0xff]
          %v826 = vld [vmem:[#allocation8 + $0x5d0] sm:$0xff]
          %v827 = vld [vmem:[#allocation8 + $0x5d8] sm:$0xff]
          %v828 = vld [vmem:[#allocation8 + $0x5e0] sm:$0xff]
          %v829 = vld [vmem:[#allocation8 + $0x5e8] sm:$0xff]
          %v830 = vld [vmem:[#allocation8 + $0x5f0] sm:$0xff]
          %v831 = vld [vmem:[#allocation8 + $0x5f8] sm:$0xff]
          %v832 = vld [vmem:[#allocation8 + $0x600] sm:$0xff]
          %v833 = vld [vmem:[#allocation8 + $0x608] sm:$0xff]
          %v834 = vld [vmem:[#allocation8 + $0x610] sm:$0xff]
          %v835 = vld [vmem:[#allocation8 + $0x618] sm:$0xff]
          %v836 = vld [vmem:[#allocation8 + $0x620] sm:$0xff]
          %v837 = vld [vmem:[#allocation8 + $0x628] sm:$0xff]
          %v838 = vld [vmem:[#allocation8 + $0x630] sm:$0xff]
          %v839 = vld [vmem:[#allocation8 + $0x638] sm:$0xff]
          %v840 = vld [vmem:[#allocation8 + $0x640] sm:$0xff]
          %v841 = vld [vmem:[#allocation8 + $0x648] sm:$0xff]
          %v842 = vld [vmem:[#allocation8 + $0x650] sm:$0xff]
          %v843 = vld [vmem:[#allocation8 + $0x658] sm:$0xff]
          %v844 = vld [vmem:[#allocation8 + $0x660] sm:$0xff]
          %v845 = vld [vmem:[#allocation8 + $0x668] sm:$0xff]
          %v846 = vld [vmem:[#allocation8 + $0x670] sm:$0xff]
          %v847 = vld [vmem:[#allocation8 + $0x678] sm:$0xff]
          %v848 = vld [vmem:[#allocation8 + $0x680] sm:$0xff]
          %v849 = vld [vmem:[#allocation8 + $0x688] sm:$0xff]
          %v850 = vld [vmem:[#allocation8 + $0x690] sm:$0xff]
          %v851 = vld [vmem:[#allocation8 + $0x698] sm:$0xff]
          %v852 = vld [vmem:[#allocation8 + $0x6a0] sm:$0xff]
          %v853 = vld [vmem:[#allocation8 + $0x6a8] sm:$0xff]
          %v854 = vld [vmem:[#allocation8 + $0x6b0] sm:$0xff]
          %v855 = vld [vmem:[#allocation8 + $0x6b8] sm:$0xff]
          %v856 = vld [vmem:[#allocation8 + $0x6c0] sm:$0xff]
          %v857 = vld [vmem:[#allocation8 + $0x6c8] sm:$0xff]
          %v858 = vld [vmem:[#allocation8 + $0x6d0] sm:$0xff]
          %v859 = vld [vmem:[#allocation8 + $0x6d8] sm:$0xff]
          %v860 = vld [vmem:[#allocation8 + $0x6e0] sm:$0xff]
          %v861 = vld [vmem:[#allocation8 + $0x6e8] sm:$0xff]
          %v862 = vld [vmem:[#allocation8 + $0x6f0] sm:$0xff]
          %v863 = vld [vmem:[#allocation8 + $0x6f8] sm:$0xff]
          %v864 = vld [vmem:[#allocation8 + $0x700] sm:$0xff]
          %v865 = vld [vmem:[#allocation8 + $0x708] sm:$0xff]
          %v866 = vld [vmem:[#allocation8 + $0x710] sm:$0xff]
          %v867 = vld [vmem:[#allocation8 + $0x718] sm:$0xff]
          %v868 = vld [vmem:[#allocation8 + $0x720] sm:$0xff]
          %v869 = vld [vmem:[#allocation8 + $0x728] sm:$0xff]
          %v870 = vld [vmem:[#allocation8 + $0x730] sm:$0xff]
          %v871 = vld [vmem:[#allocation8 + $0x738] sm:$0xff]
          %v872 = vld [vmem:[#allocation8 + $0x740] sm:$0xff]
          %v873 = vld [vmem:[#allocation8 + $0x748] sm:$0xff]
          %v874 = vld [vmem:[#allocation8 + $0x750] sm:$0xff]
          %v875 = vld [vmem:[#allocation8 + $0x758] sm:$0xff]
          %v876 = vld [vmem:[#allocation8 + $0x760] sm:$0xff]
          %v877 = vld [vmem:[#allocation8 + $0x768] sm:$0xff]
          %v878 = vld [vmem:[#allocation8 + $0x770] sm:$0xff]
          %v879 = vld [vmem:[#allocation8 + $0x778] sm:$0xff]
          %v880 = vld [vmem:[#allocation8 + $0x780] sm:$0xff]
          %v881 = vld [vmem:[#allocation8 + $0x788] sm:$0xff]
          %v882 = vld [vmem:[#allocation8 + $0x790] sm:$0xff]
          %v883 = vld [vmem:[#allocation8 + $0x798] sm:$0xff]
          %v884 = vld [vmem:[#allocation8 + $0x7a0] sm:$0xff]
          %v885 = vld [vmem:[#allocation8 + $0x7a8] sm:$0xff]
          %v886 = vld [vmem:[#allocation8 + $0x7b0] sm:$0xff]
          %v887 = vld [vmem:[#allocation8 + $0x7b8] sm:$0xff]
          %v888 = vld [vmem:[#allocation8 + $0x7c0] sm:$0xff]
          %v889 = vld [vmem:[#allocation8 + $0x7c8] sm:$0xff]
          %v890 = vld [vmem:[#allocation8 + $0x7d0] sm:$0xff]
          %v891 = vld [vmem:[#allocation8 + $0x7d8] sm:$0xff]
          %v892 = vld [vmem:[#allocation8 + $0x7e0] sm:$0xff]
          %v893 = vld [vmem:[#allocation8 + $0x7e8] sm:$0xff]
          %v894 = vld [vmem:[#allocation8 + $0x7f0] sm:$0xff]
          %v895 = vld [vmem:[#allocation8 + $0x7f8] sm:$0xff]
          %v1152 = vunpack.c.l.b16 %v640
          %v1153 = vunpack.c.h.b16 %v640
          %v1154 = vunpack.c.l.b16 %v641
          %v1155 = vunpack.c.h.b16 %v641
          %v1156 = vunpack.c.l.b16 %v642
          %v1157 = vunpack.c.h.b16 %v642
          %v1158 = vunpack.c.l.b16 %v643
          %v1159 = vunpack.c.h.b16 %v643
          %v1160 = vunpack.c.l.b16 %v644
          %v1161 = vunpack.c.h.b16 %v644
          %v1162 = vunpack.c.l.b16 %v645
          %v1163 = vunpack.c.h.b16 %v645
          %v1164 = vunpack.c.l.b16 %v646
          %v1165 = vunpack.c.h.b16 %v646
          %v1166 = vunpack.c.l.b16 %v647
          %v1167 = vunpack.c.h.b16 %v647
          %v1168 = vunpack.c.l.b16 %v648
          %v1169 = vunpack.c.h.b16 %v648
          %v1170 = vunpack.c.l.b16 %v649
          %v1171 = vunpack.c.h.b16 %v649
          %v1172 = vunpack.c.l.b16 %v650
          %v1173 = vunpack.c.h.b16 %v650
          %v1174 = vunpack.c.l.b16 %v651
          %v1175 = vunpack.c.h.b16 %v651
          %v1176 = vunpack.c.l.b16 %v652
          %v1177 = vunpack.c.h.b16 %v652
          %v1178 = vunpack.c.l.b16 %v653
          %v1179 = vunpack.c.h.b16 %v653
          %v1180 = vunpack.c.l.b16 %v654
          %v1181 = vunpack.c.h.b16 %v654
          %v1182 = vunpack.c.l.b16 %v655
          %v1183 = vunpack.c.h.b16 %v655
          %v1184 = vunpack.c.l.b16 %v656
          %v1185 = vunpack.c.h.b16 %v656
          %v1186 = vunpack.c.l.b16 %v657
          %v1187 = vunpack.c.h.b16 %v657
          %v1188 = vunpack.c.l.b16 %v658
          %v1189 = vunpack.c.h.b16 %v658
          %v1190 = vunpack.c.l.b16 %v659
          %v1191 = vunpack.c.h.b16 %v659
          %v1192 = vunpack.c.l.b16 %v660
          %v1193 = vunpack.c.h.b16 %v660
          %v1194 = vunpack.c.l.b16 %v661
          %v1195 = vunpack.c.h.b16 %v661
          %v1196 = vunpack.c.l.b16 %v662
          %v1197 = vunpack.c.h.b16 %v662
          %v1198 = vunpack.c.l.b16 %v663
          %v1199 = vunpack.c.h.b16 %v663
          %v1200 = vunpack.c.l.b16 %v664
          %v1201 = vunpack.c.h.b16 %v664
          %v1202 = vunpack.c.l.b16 %v665
          %v1203 = vunpack.c.h.b16 %v665
          %v1204 = vunpack.c.l.b16 %v666
          %v1205 = vunpack.c.h.b16 %v666
          %v1206 = vunpack.c.l.b16 %v667
          %v1207 = vunpack.c.h.b16 %v667
          %v1208 = vunpack.c.l.b16 %v668
          %v1209 = vunpack.c.h.b16 %v668
          %v1210 = vunpack.c.l.b16 %v669
          %v1211 = vunpack.c.h.b16 %v669
          %v1212 = vunpack.c.l.b16 %v670
          %v1213 = vunpack.c.h.b16 %v670
          %v1214 = vunpack.c.l.b16 %v671
          %v1215 = vunpack.c.h.b16 %v671
          %v1216 = vunpack.c.l.b16 %v672
          %v1217 = vunpack.c.h.b16 %v672
          %v1218 = vunpack.c.l.b16 %v673
          %v1219 = vunpack.c.h.b16 %v673
          %v1220 = vunpack.c.l.b16 %v674
          %v1221 = vunpack.c.h.b16 %v674
          %v1222 = vunpack.c.l.b16 %v675
          %v1223 = vunpack.c.h.b16 %v675
          %v1224 = vunpack.c.l.b16 %v676
          %v1225 = vunpack.c.h.b16 %v676
          %v1226 = vunpack.c.l.b16 %v677
          %v1227 = vunpack.c.h.b16 %v677
          %v1228 = vunpack.c.l.b16 %v678
          %v1229 = vunpack.c.h.b16 %v678
          %v1230 = vunpack.c.l.b16 %v679
          %v1231 = vunpack.c.h.b16 %v679
          %v1232 = vunpack.c.l.b16 %v680
          %v1233 = vunpack.c.h.b16 %v680
          %v1234 = vunpack.c.l.b16 %v681
          %v1235 = vunpack.c.h.b16 %v681
          %v1236 = vunpack.c.l.b16 %v682
          %v1237 = vunpack.c.h.b16 %v682
          %v1238 = vunpack.c.l.b16 %v683
          %v1239 = vunpack.c.h.b16 %v683
          %v1240 = vunpack.c.l.b16 %v684
          %v1241 = vunpack.c.h.b16 %v684
          %v1242 = vunpack.c.l.b16 %v685
          %v1243 = vunpack.c.h.b16 %v685
          %v1244 = vunpack.c.l.b16 %v686
          %v1245 = vunpack.c.h.b16 %v686
          %v1246 = vunpack.c.l.b16 %v687
          %v1247 = vunpack.c.h.b16 %v687
          %v1248 = vunpack.c.l.b16 %v688
          %v1249 = vunpack.c.h.b16 %v688
          %v1250 = vunpack.c.l.b16 %v689
          %v1251 = vunpack.c.h.b16 %v689
          %v1252 = vunpack.c.l.b16 %v690
          %v1253 = vunpack.c.h.b16 %v690
          %v1254 = vunpack.c.l.b16 %v691
          %v1255 = vunpack.c.h.b16 %v691
          %v1256 = vunpack.c.l.b16 %v692
          %v1257 = vunpack.c.h.b16 %v692
          %v1258 = vunpack.c.l.b16 %v693
          %v1259 = vunpack.c.h.b16 %v693
          %v1260 = vunpack.c.l.b16 %v694
          %v1261 = vunpack.c.h.b16 %v694
          %v1262 = vunpack.c.l.b16 %v695
          %v1263 = vunpack.c.h.b16 %v695
          %v1264 = vunpack.c.l.b16 %v696
          %v1265 = vunpack.c.h.b16 %v696
          %v1266 = vunpack.c.l.b16 %v697
          %v1267 = vunpack.c.h.b16 %v697
          %v1268 = vunpack.c.l.b16 %v698
          %v1269 = vunpack.c.h.b16 %v698
          %v1270 = vunpack.c.l.b16 %v699
          %v1271 = vunpack.c.h.b16 %v699
          %v1272 = vunpack.c.l.b16 %v700
          %v1273 = vunpack.c.h.b16 %v700
          %v1274 = vunpack.c.l.b16 %v701
          %v1275 = vunpack.c.h.b16 %v701
          %v1276 = vunpack.c.l.b16 %v702
          %v1277 = vunpack.c.h.b16 %v702
          %v1278 = vunpack.c.l.b16 %v703
          %v1279 = vunpack.c.h.b16 %v703
          %v1280 = vunpack.c.l.b16 %v704
          %v1281 = vunpack.c.h.b16 %v704
          %v1282 = vunpack.c.l.b16 %v705
          %v1283 = vunpack.c.h.b16 %v705
          %v1284 = vunpack.c.l.b16 %v706
          %v1285 = vunpack.c.h.b16 %v706
          %v1286 = vunpack.c.l.b16 %v707
          %v1287 = vunpack.c.h.b16 %v707
          %v1288 = vunpack.c.l.b16 %v708
          %v1289 = vunpack.c.h.b16 %v708
          %v1290 = vunpack.c.l.b16 %v709
          %v1291 = vunpack.c.h.b16 %v709
          %v1292 = vunpack.c.l.b16 %v710
          %v1293 = vunpack.c.h.b16 %v710
          %v1294 = vunpack.c.l.b16 %v711
          %v1295 = vunpack.c.h.b16 %v711
          %v1296 = vunpack.c.l.b16 %v712
          %v1297 = vunpack.c.h.b16 %v712
          %v1298 = vunpack.c.l.b16 %v713
          %v1299 = vunpack.c.h.b16 %v713
          %v1300 = vunpack.c.l.b16 %v714
          %v1301 = vunpack.c.h.b16 %v714
          %v1302 = vunpack.c.l.b16 %v715
          %v1303 = vunpack.c.h.b16 %v715
          %v1304 = vunpack.c.l.b16 %v716
          %v1305 = vunpack.c.h.b16 %v716
          %v1306 = vunpack.c.l.b16 %v717
          %v1307 = vunpack.c.h.b16 %v717
          %v1308 = vunpack.c.l.b16 %v718
          %v1309 = vunpack.c.h.b16 %v718
          %v1310 = vunpack.c.l.b16 %v719
          %v1311 = vunpack.c.h.b16 %v719
          %v1312 = vunpack.c.l.b16 %v720
          %v1313 = vunpack.c.h.b16 %v720
          %v1314 = vunpack.c.l.b16 %v721
          %v1315 = vunpack.c.h.b16 %v721
          %v1316 = vunpack.c.l.b16 %v722
          %v1317 = vunpack.c.h.b16 %v722
          %v1318 = vunpack.c.l.b16 %v723
          %v1319 = vunpack.c.h.b16 %v723
          %v1320 = vunpack.c.l.b16 %v724
          %v1321 = vunpack.c.h.b16 %v724
          %v1322 = vunpack.c.l.b16 %v725
          %v1323 = vunpack.c.h.b16 %v725
          %v1324 = vunpack.c.l.b16 %v726
          %v1325 = vunpack.c.h.b16 %v726
          %v1326 = vunpack.c.l.b16 %v727
          %v1327 = vunpack.c.h.b16 %v727
          %v1328 = vunpack.c.l.b16 %v728
          %v1329 = vunpack.c.h.b16 %v728
          %v1330 = vunpack.c.l.b16 %v729
          %v1331 = vunpack.c.h.b16 %v729
          %v1332 = vunpack.c.l.b16 %v730
          %v1333 = vunpack.c.h.b16 %v730
          %v1334 = vunpack.c.l.b16 %v731
          %v1335 = vunpack.c.h.b16 %v731
          %v1336 = vunpack.c.l.b16 %v732
          %v1337 = vunpack.c.h.b16 %v732
          %v1338 = vunpack.c.l.b16 %v733
          %v1339 = vunpack.c.h.b16 %v733
          %v1340 = vunpack.c.l.b16 %v734
          %v1341 = vunpack.c.h.b16 %v734
          %v1342 = vunpack.c.l.b16 %v735
          %v1343 = vunpack.c.h.b16 %v735
          %v1344 = vunpack.c.l.b16 %v736
          %v1345 = vunpack.c.h.b16 %v736
          %v1346 = vunpack.c.l.b16 %v737
          %v1347 = vunpack.c.h.b16 %v737
          %v1348 = vunpack.c.l.b16 %v738
          %v1349 = vunpack.c.h.b16 %v738
          %v1350 = vunpack.c.l.b16 %v739
          %v1351 = vunpack.c.h.b16 %v739
          %v1352 = vunpack.c.l.b16 %v740
          %v1353 = vunpack.c.h.b16 %v740
          %v1354 = vunpack.c.l.b16 %v741
          %v1355 = vunpack.c.h.b16 %v741
          %v1356 = vunpack.c.l.b16 %v742
          %v1357 = vunpack.c.h.b16 %v742
          %v1358 = vunpack.c.l.b16 %v743
          %v1359 = vunpack.c.h.b16 %v743
          %v1360 = vunpack.c.l.b16 %v744
          %v1361 = vunpack.c.h.b16 %v744
          %v1362 = vunpack.c.l.b16 %v745
          %v1363 = vunpack.c.h.b16 %v745
          %v1364 = vunpack.c.l.b16 %v746
          %v1365 = vunpack.c.h.b16 %v746
          %v1366 = vunpack.c.l.b16 %v747
          %v1367 = vunpack.c.h.b16 %v747
          %v1368 = vunpack.c.l.b16 %v748
          %v1369 = vunpack.c.h.b16 %v748
          %v1370 = vunpack.c.l.b16 %v749
          %v1371 = vunpack.c.h.b16 %v749
          %v1372 = vunpack.c.l.b16 %v750
          %v1373 = vunpack.c.h.b16 %v750
          %v1374 = vunpack.c.l.b16 %v751
          %v1375 = vunpack.c.h.b16 %v751
          %v1376 = vunpack.c.l.b16 %v752
          %v1377 = vunpack.c.h.b16 %v752
          %v1378 = vunpack.c.l.b16 %v753
          %v1379 = vunpack.c.h.b16 %v753
          %v1380 = vunpack.c.l.b16 %v754
          %v1381 = vunpack.c.h.b16 %v754
          %v1382 = vunpack.c.l.b16 %v755
          %v1383 = vunpack.c.h.b16 %v755
          %v1384 = vunpack.c.l.b16 %v756
          %v1385 = vunpack.c.h.b16 %v756
          %v1386 = vunpack.c.l.b16 %v757
          %v1387 = vunpack.c.h.b16 %v757
          %v1388 = vunpack.c.l.b16 %v758
          %v1389 = vunpack.c.h.b16 %v758
          %v1390 = vunpack.c.l.b16 %v759
          %v1391 = vunpack.c.h.b16 %v759
          %v1392 = vunpack.c.l.b16 %v760
          %v1393 = vunpack.c.h.b16 %v760
          %v1394 = vunpack.c.l.b16 %v761
          %v1395 = vunpack.c.h.b16 %v761
          %v1396 = vunpack.c.l.b16 %v762
          %v1397 = vunpack.c.h.b16 %v762
          %v1398 = vunpack.c.l.b16 %v763
          %v1399 = vunpack.c.h.b16 %v763
          %v1400 = vunpack.c.l.b16 %v764
          %v1401 = vunpack.c.h.b16 %v764
          %v1402 = vunpack.c.l.b16 %v765
          %v1403 = vunpack.c.h.b16 %v765
          %v1404 = vunpack.c.l.b16 %v766
          %v1405 = vunpack.c.h.b16 %v766
          %v1406 = vunpack.c.l.b16 %v767
          %v1407 = vunpack.c.h.b16 %v767
          %v1408 = vunpack.c.l.b16 %v768
          %v1409 = vunpack.c.h.b16 %v768
          %v1410 = vunpack.c.l.b16 %v769
          %v1411 = vunpack.c.h.b16 %v769
          %v1412 = vunpack.c.l.b16 %v770
          %v1413 = vunpack.c.h.b16 %v770
          %v1414 = vunpack.c.l.b16 %v771
          %v1415 = vunpack.c.h.b16 %v771
          %v1416 = vunpack.c.l.b16 %v772
          %v1417 = vunpack.c.h.b16 %v772
          %v1418 = vunpack.c.l.b16 %v773
          %v1419 = vunpack.c.h.b16 %v773
          %v1420 = vunpack.c.l.b16 %v774
          %v1421 = vunpack.c.h.b16 %v774
          %v1422 = vunpack.c.l.b16 %v775
          %v1423 = vunpack.c.h.b16 %v775
          %v1424 = vunpack.c.l.b16 %v776
          %v1425 = vunpack.c.h.b16 %v776
          %v1426 = vunpack.c.l.b16 %v777
          %v1427 = vunpack.c.h.b16 %v777
          %v1428 = vunpack.c.l.b16 %v778
          %v1429 = vunpack.c.h.b16 %v778
          %v1430 = vunpack.c.l.b16 %v779
          %v1431 = vunpack.c.h.b16 %v779
          %v1432 = vunpack.c.l.b16 %v780
          %v1433 = vunpack.c.h.b16 %v780
          %v1434 = vunpack.c.l.b16 %v781
          %v1435 = vunpack.c.h.b16 %v781
          %v1436 = vunpack.c.l.b16 %v782
          %v1437 = vunpack.c.h.b16 %v782
          %v1438 = vunpack.c.l.b16 %v783
          %v1439 = vunpack.c.h.b16 %v783
          %v1440 = vunpack.c.l.b16 %v784
          %v1441 = vunpack.c.h.b16 %v784
          %v1442 = vunpack.c.l.b16 %v785
          %v1443 = vunpack.c.h.b16 %v785
          %v1444 = vunpack.c.l.b16 %v786
          %v1445 = vunpack.c.h.b16 %v786
          %v1446 = vunpack.c.l.b16 %v787
          %v1447 = vunpack.c.h.b16 %v787
          %v1448 = vunpack.c.l.b16 %v788
          %v1449 = vunpack.c.h.b16 %v788
          %v1450 = vunpack.c.l.b16 %v789
          %v1451 = vunpack.c.h.b16 %v789
          %v1452 = vunpack.c.l.b16 %v790
          %v1453 = vunpack.c.h.b16 %v790
          %v1454 = vunpack.c.l.b16 %v791
          %v1455 = vunpack.c.h.b16 %v791
          %v1456 = vunpack.c.l.b16 %v792
          %v1457 = vunpack.c.h.b16 %v792
          %v1458 = vunpack.c.l.b16 %v793
          %v1459 = vunpack.c.h.b16 %v793
          %v1460 = vunpack.c.l.b16 %v794
          %v1461 = vunpack.c.h.b16 %v794
          %v1462 = vunpack.c.l.b16 %v795
          %v1463 = vunpack.c.h.b16 %v795
          %v1464 = vunpack.c.l.b16 %v796
          %v1465 = vunpack.c.h.b16 %v796
          %v1466 = vunpack.c.l.b16 %v797
          %v1467 = vunpack.c.h.b16 %v797
          %v1468 = vunpack.c.l.b16 %v798
          %v1469 = vunpack.c.h.b16 %v798
          %v1470 = vunpack.c.l.b16 %v799
          %v1471 = vunpack.c.h.b16 %v799
          %v1472 = vunpack.c.l.b16 %v800
          %v1473 = vunpack.c.h.b16 %v800
          %v1474 = vunpack.c.l.b16 %v801
          %v1475 = vunpack.c.h.b16 %v801
          %v1476 = vunpack.c.l.b16 %v802
          %v1477 = vunpack.c.h.b16 %v802
          %v1478 = vunpack.c.l.b16 %v803
          %v1479 = vunpack.c.h.b16 %v803
          %v1480 = vunpack.c.l.b16 %v804
          %v1481 = vunpack.c.h.b16 %v804
          %v1482 = vunpack.c.l.b16 %v805
          %v1483 = vunpack.c.h.b16 %v805
          %v1484 = vunpack.c.l.b16 %v806
          %v1485 = vunpack.c.h.b16 %v806
          %v1486 = vunpack.c.l.b16 %v807
          %v1487 = vunpack.c.h.b16 %v807
          %v1488 = vunpack.c.l.b16 %v808
          %v1489 = vunpack.c.h.b16 %v808
          %v1490 = vunpack.c.l.b16 %v809
          %v1491 = vunpack.c.h.b16 %v809
          %v1492 = vunpack.c.l.b16 %v810
          %v1493 = vunpack.c.h.b16 %v810
          %v1494 = vunpack.c.l.b16 %v811
          %v1495 = vunpack.c.h.b16 %v811
          %v1496 = vunpack.c.l.b16 %v812
          %v1497 = vunpack.c.h.b16 %v812
          %v1498 = vunpack.c.l.b16 %v813
          %v1499 = vunpack.c.h.b16 %v813
          %v1500 = vunpack.c.l.b16 %v814
          %v1501 = vunpack.c.h.b16 %v814
          %v1502 = vunpack.c.l.b16 %v815
          %v1503 = vunpack.c.h.b16 %v815
          %v1504 = vunpack.c.l.b16 %v816
          %v1505 = vunpack.c.h.b16 %v816
          %v1506 = vunpack.c.l.b16 %v817
          %v1507 = vunpack.c.h.b16 %v817
          %v1508 = vunpack.c.l.b16 %v818
          %v1509 = vunpack.c.h.b16 %v818
          %v1510 = vunpack.c.l.b16 %v819
          %v1511 = vunpack.c.h.b16 %v819
          %v1512 = vunpack.c.l.b16 %v820
          %v1513 = vunpack.c.h.b16 %v820
          %v1514 = vunpack.c.l.b16 %v821
          %v1515 = vunpack.c.h.b16 %v821
          %v1516 = vunpack.c.l.b16 %v822
          %v1517 = vunpack.c.h.b16 %v822
          %v1518 = vunpack.c.l.b16 %v823
          %v1519 = vunpack.c.h.b16 %v823
          %v1520 = vunpack.c.l.b16 %v824
          %v1521 = vunpack.c.h.b16 %v824
          %v1522 = vunpack.c.l.b16 %v825
          %v1523 = vunpack.c.h.b16 %v825
          %v1524 = vunpack.c.l.b16 %v826
          %v1525 = vunpack.c.h.b16 %v826
          %v1526 = vunpack.c.l.b16 %v827
          %v1527 = vunpack.c.h.b16 %v827
          %v1528 = vunpack.c.l.b16 %v828
          %v1529 = vunpack.c.h.b16 %v828
          %v1530 = vunpack.c.l.b16 %v829
          %v1531 = vunpack.c.h.b16 %v829
          %v1532 = vunpack.c.l.b16 %v830
          %v1533 = vunpack.c.h.b16 %v830
          %v1534 = vunpack.c.l.b16 %v831
          %v1535 = vunpack.c.h.b16 %v831
          %v1536 = vunpack.c.l.b16 %v832
          %v1537 = vunpack.c.h.b16 %v832
          %v1538 = vunpack.c.l.b16 %v833
          %v1539 = vunpack.c.h.b16 %v833
          %v1540 = vunpack.c.l.b16 %v834
          %v1541 = vunpack.c.h.b16 %v834
          %v1542 = vunpack.c.l.b16 %v835
          %v1543 = vunpack.c.h.b16 %v835
          %v1544 = vunpack.c.l.b16 %v836
          %v1545 = vunpack.c.h.b16 %v836
          %v1546 = vunpack.c.l.b16 %v837
          %v1547 = vunpack.c.h.b16 %v837
          %v1548 = vunpack.c.l.b16 %v838
          %v1549 = vunpack.c.h.b16 %v838
          %v1550 = vunpack.c.l.b16 %v839
          %v1551 = vunpack.c.h.b16 %v839
          %v1552 = vunpack.c.l.b16 %v840
          %v1553 = vunpack.c.h.b16 %v840
          %v1554 = vunpack.c.l.b16 %v841
          %v1555 = vunpack.c.h.b16 %v841
          %v1556 = vunpack.c.l.b16 %v842
          %v1557 = vunpack.c.h.b16 %v842
          %v1558 = vunpack.c.l.b16 %v843
          %v1559 = vunpack.c.h.b16 %v843
          %v1560 = vunpack.c.l.b16 %v844
          %v1561 = vunpack.c.h.b16 %v844
          %v1562 = vunpack.c.l.b16 %v845
          %v1563 = vunpack.c.h.b16 %v845
          %v1564 = vunpack.c.l.b16 %v846
          %v1565 = vunpack.c.h.b16 %v846
          %v1566 = vunpack.c.l.b16 %v847
          %v1567 = vunpack.c.h.b16 %v847
          %v1568 = vunpack.c.l.b16 %v848
          %v1569 = vunpack.c.h.b16 %v848
          %v1570 = vunpack.c.l.b16 %v849
          %v1571 = vunpack.c.h.b16 %v849
          %v1572 = vunpack.c.l.b16 %v850
          %v1573 = vunpack.c.h.b16 %v850
          %v1574 = vunpack.c.l.b16 %v851
          %v1575 = vunpack.c.h.b16 %v851
          %v1576 = vunpack.c.l.b16 %v852
          %v1577 = vunpack.c.h.b16 %v852
          %v1578 = vunpack.c.l.b16 %v853
          %v1579 = vunpack.c.h.b16 %v853
          %v1580 = vunpack.c.l.b16 %v854
          %v1581 = vunpack.c.h.b16 %v854
          %v1582 = vunpack.c.l.b16 %v855
          %v1583 = vunpack.c.h.b16 %v855
          %v1584 = vunpack.c.l.b16 %v856
          %v1585 = vunpack.c.h.b16 %v856
          %v1586 = vunpack.c.l.b16 %v857
          %v1587 = vunpack.c.h.b16 %v857
          %v1588 = vunpack.c.l.b16 %v858
          %v1589 = vunpack.c.h.b16 %v858
          %v1590 = vunpack.c.l.b16 %v859
          %v1591 = vunpack.c.h.b16 %v859
          %v1592 = vunpack.c.l.b16 %v860
          %v1593 = vunpack.c.h.b16 %v860
          %v1594 = vunpack.c.l.b16 %v861
          %v1595 = vunpack.c.h.b16 %v861
          %v1596 = vunpack.c.l.b16 %v862
          %v1597 = vunpack.c.h.b16 %v862
          %v1598 = vunpack.c.l.b16 %v863
          %v1599 = vunpack.c.h.b16 %v863
          %v1600 = vunpack.c.l.b16 %v864
          %v1601 = vunpack.c.h.b16 %v864
          %v1602 = vunpack.c.l.b16 %v865
          %v1603 = vunpack.c.h.b16 %v865
          %v1604 = vunpack.c.l.b16 %v866
          %v1605 = vunpack.c.h.b16 %v866
          %v1606 = vunpack.c.l.b16 %v867
          %v1607 = vunpack.c.h.b16 %v867
          %v1608 = vunpack.c.l.b16 %v868
          %v1609 = vunpack.c.h.b16 %v868
          %v1610 = vunpack.c.l.b16 %v869
          %v1611 = vunpack.c.h.b16 %v869
          %v1612 = vunpack.c.l.b16 %v870
          %v1613 = vunpack.c.h.b16 %v870
          %v1614 = vunpack.c.l.b16 %v871
          %v1615 = vunpack.c.h.b16 %v871
          %v1616 = vunpack.c.l.b16 %v872
          %v1617 = vunpack.c.h.b16 %v872
          %v1618 = vunpack.c.l.b16 %v873
          %v1619 = vunpack.c.h.b16 %v873
          %v1620 = vunpack.c.l.b16 %v874
          %v1621 = vunpack.c.h.b16 %v874
          %v1622 = vunpack.c.l.b16 %v875
          %v1623 = vunpack.c.h.b16 %v875
          %v1624 = vunpack.c.l.b16 %v876
          %v1625 = vunpack.c.h.b16 %v876
          %v1626 = vunpack.c.l.b16 %v877
          %v1627 = vunpack.c.h.b16 %v877
          %v1628 = vunpack.c.l.b16 %v878
          %v1629 = vunpack.c.h.b16 %v878
          %v1630 = vunpack.c.l.b16 %v879
          %v1631 = vunpack.c.h.b16 %v879
          %v1632 = vunpack.c.l.b16 %v880
          %v1633 = vunpack.c.h.b16 %v880
          %v1634 = vunpack.c.l.b16 %v881
          %v1635 = vunpack.c.h.b16 %v881
          %v1636 = vunpack.c.l.b16 %v882
          %v1637 = vunpack.c.h.b16 %v882
          %v1638 = vunpack.c.l.b16 %v883
          %v1639 = vunpack.c.h.b16 %v883
          %v1640 = vunpack.c.l.b16 %v884
          %v1641 = vunpack.c.h.b16 %v884
          %v1642 = vunpack.c.l.b16 %v885
          %v1643 = vunpack.c.h.b16 %v885
          %v1644 = vunpack.c.l.b16 %v886
          %v1645 = vunpack.c.h.b16 %v886
          %v1646 = vunpack.c.l.b16 %v887
          %v1647 = vunpack.c.h.b16 %v887
          %v1648 = vunpack.c.l.b16 %v888
          %v1649 = vunpack.c.h.b16 %v888
          %v1650 = vunpack.c.l.b16 %v889
          %v1651 = vunpack.c.h.b16 %v889
          %v1652 = vunpack.c.l.b16 %v890
          %v1653 = vunpack.c.h.b16 %v890
          %v1654 = vunpack.c.l.b16 %v891
          %v1655 = vunpack.c.h.b16 %v891
          %v1656 = vunpack.c.l.b16 %v892
          %v1657 = vunpack.c.h.b16 %v892
          %v1658 = vunpack.c.l.b16 %v893
          %v1659 = vunpack.c.h.b16 %v893
          %v1660 = vunpack.c.l.b16 %v894
          %v1661 = vunpack.c.h.b16 %v894
          %v1662 = vunpack.c.l.b16 %v895
          %v1663 = vunpack.c.h.b16 %v895
          %v1664 = vpack.c.b16 %v1156, %v1152
          %v1665 = vpack.c.b16 %v1157, %v1153
          %v1666 = vpack.c.b16 %v1158, %v1154
          %v1667 = vpack.c.b16 %v1159, %v1155
          %v1668 = vpack.c.b16 %v1164, %v1160
          %v1669 = vpack.c.b16 %v1165, %v1161
          %v1670 = vpack.c.b16 %v1166, %v1162
          %v1671 = vpack.c.b16 %v1167, %v1163
          %v1672 = vpack.c.b16 %v1172, %v1168
          %v1673 = vpack.c.b16 %v1173, %v1169
          %v1674 = vpack.c.b16 %v1174, %v1170
          %v1675 = vpack.c.b16 %v1175, %v1171
          %v1676 = vpack.c.b16 %v1180, %v1176
          %v1677 = vpack.c.b16 %v1181, %v1177
          %v1678 = vpack.c.b16 %v1182, %v1178
          %v1679 = vpack.c.b16 %v1183, %v1179
          %v1680 = vpack.c.b16 %v1188, %v1184
          %v1681 = vpack.c.b16 %v1189, %v1185
          %v1682 = vpack.c.b16 %v1190, %v1186
          %v1683 = vpack.c.b16 %v1191, %v1187
          %v1684 = vpack.c.b16 %v1196, %v1192
          %v1685 = vpack.c.b16 %v1197, %v1193
          %v1686 = vpack.c.b16 %v1198, %v1194
          %v1687 = vpack.c.b16 %v1199, %v1195
          %v1688 = vpack.c.b16 %v1204, %v1200
          %v1689 = vpack.c.b16 %v1205, %v1201
          %v1690 = vpack.c.b16 %v1206, %v1202
          %v1691 = vpack.c.b16 %v1207, %v1203
          %v1692 = vpack.c.b16 %v1212, %v1208
          %v1693 = vpack.c.b16 %v1213, %v1209
          %v1694 = vpack.c.b16 %v1214, %v1210
          %v1695 = vpack.c.b16 %v1215, %v1211
          %v1696 = vpack.c.b16 %v1220, %v1216
          %v1697 = vpack.c.b16 %v1221, %v1217
          %v1698 = vpack.c.b16 %v1222, %v1218
          %v1699 = vpack.c.b16 %v1223, %v1219
          %v1700 = vpack.c.b16 %v1228, %v1224
          %v1701 = vpack.c.b16 %v1229, %v1225
          %v1702 = vpack.c.b16 %v1230, %v1226
          %v1703 = vpack.c.b16 %v1231, %v1227
          %v1704 = vpack.c.b16 %v1236, %v1232
          %v1705 = vpack.c.b16 %v1237, %v1233
          %v1706 = vpack.c.b16 %v1238, %v1234
          %v1707 = vpack.c.b16 %v1239, %v1235
          %v1708 = vpack.c.b16 %v1244, %v1240
          %v1709 = vpack.c.b16 %v1245, %v1241
          %v1710 = vpack.c.b16 %v1246, %v1242
          %v1711 = vpack.c.b16 %v1247, %v1243
          %v1712 = vpack.c.b16 %v1252, %v1248
          %v1713 = vpack.c.b16 %v1253, %v1249
          %v1714 = vpack.c.b16 %v1254, %v1250
          %v1715 = vpack.c.b16 %v1255, %v1251
          %v1716 = vpack.c.b16 %v1260, %v1256
          %v1717 = vpack.c.b16 %v1261, %v1257
          %v1718 = vpack.c.b16 %v1262, %v1258
          %v1719 = vpack.c.b16 %v1263, %v1259
          %v1720 = vpack.c.b16 %v1268, %v1264
          %v1721 = vpack.c.b16 %v1269, %v1265
          %v1722 = vpack.c.b16 %v1270, %v1266
          %v1723 = vpack.c.b16 %v1271, %v1267
          %v1724 = vpack.c.b16 %v1276, %v1272
          %v1725 = vpack.c.b16 %v1277, %v1273
          %v1726 = vpack.c.b16 %v1278, %v1274
          %v1727 = vpack.c.b16 %v1279, %v1275
          %v1728 = vpack.c.b16 %v1284, %v1280
          %v1729 = vpack.c.b16 %v1285, %v1281
          %v1730 = vpack.c.b16 %v1286, %v1282
          %v1731 = vpack.c.b16 %v1287, %v1283
          %v1732 = vpack.c.b16 %v1292, %v1288
          %v1733 = vpack.c.b16 %v1293, %v1289
          %v1734 = vpack.c.b16 %v1294, %v1290
          %v1735 = vpack.c.b16 %v1295, %v1291
          %v1736 = vpack.c.b16 %v1300, %v1296
          %v1737 = vpack.c.b16 %v1301, %v1297
          %v1738 = vpack.c.b16 %v1302, %v1298
          %v1739 = vpack.c.b16 %v1303, %v1299
          %v1740 = vpack.c.b16 %v1308, %v1304
          %v1741 = vpack.c.b16 %v1309, %v1305
          %v1742 = vpack.c.b16 %v1310, %v1306
          %v1743 = vpack.c.b16 %v1311, %v1307
          %v1744 = vpack.c.b16 %v1316, %v1312
          %v1745 = vpack.c.b16 %v1317, %v1313
          %v1746 = vpack.c.b16 %v1318, %v1314
          %v1747 = vpack.c.b16 %v1319, %v1315
          %v1748 = vpack.c.b16 %v1324, %v1320
          %v1749 = vpack.c.b16 %v1325, %v1321
          %v1750 = vpack.c.b16 %v1326, %v1322
          %v1751 = vpack.c.b16 %v1327, %v1323
          %v1752 = vpack.c.b16 %v1332, %v1328
          %v1753 = vpack.c.b16 %v1333, %v1329
          %v1754 = vpack.c.b16 %v1334, %v1330
          %v1755 = vpack.c.b16 %v1335, %v1331
          %v1756 = vpack.c.b16 %v1340, %v1336
          %v1757 = vpack.c.b16 %v1341, %v1337
          %v1758 = vpack.c.b16 %v1342, %v1338
          %v1759 = vpack.c.b16 %v1343, %v1339
          %v1760 = vpack.c.b16 %v1348, %v1344
          %v1761 = vpack.c.b16 %v1349, %v1345
          %v1762 = vpack.c.b16 %v1350, %v1346
          %v1763 = vpack.c.b16 %v1351, %v1347
          %v1764 = vpack.c.b16 %v1356, %v1352
          %v1765 = vpack.c.b16 %v1357, %v1353
          %v1766 = vpack.c.b16 %v1358, %v1354
          %v1767 = vpack.c.b16 %v1359, %v1355
          %v1768 = vpack.c.b16 %v1364, %v1360
          %v1769 = vpack.c.b16 %v1365, %v1361
          %v1770 = vpack.c.b16 %v1366, %v1362
          %v1771 = vpack.c.b16 %v1367, %v1363
          %v1772 = vpack.c.b16 %v1372, %v1368
          %v1773 = vpack.c.b16 %v1373, %v1369
          %v1774 = vpack.c.b16 %v1374, %v1370
          %v1775 = vpack.c.b16 %v1375, %v1371
          %v1776 = vpack.c.b16 %v1380, %v1376
          %v1777 = vpack.c.b16 %v1381, %v1377
          %v1778 = vpack.c.b16 %v1382, %v1378
          %v1779 = vpack.c.b16 %v1383, %v1379
          %v1780 = vpack.c.b16 %v1388, %v1384
          %v1781 = vpack.c.b16 %v1389, %v1385
          %v1782 = vpack.c.b16 %v1390, %v1386
          %v1783 = vpack.c.b16 %v1391, %v1387
          %v1784 = vpack.c.b16 %v1396, %v1392
          %v1785 = vpack.c.b16 %v1397, %v1393
          %v1786 = vpack.c.b16 %v1398, %v1394
          %v1787 = vpack.c.b16 %v1399, %v1395
          %v1788 = vpack.c.b16 %v1404, %v1400
          %v1789 = vpack.c.b16 %v1405, %v1401
          %v1790 = vpack.c.b16 %v1406, %v1402
          %v1791 = vpack.c.b16 %v1407, %v1403
          %v1792 = vpack.c.b16 %v1412, %v1408
          %v1793 = vpack.c.b16 %v1413, %v1409
          %v1794 = vpack.c.b16 %v1414, %v1410
          %v1795 = vpack.c.b16 %v1415, %v1411
          %v1796 = vpack.c.b16 %v1420, %v1416
          %v1797 = vpack.c.b16 %v1421, %v1417
          %v1798 = vpack.c.b16 %v1422, %v1418
          %v1799 = vpack.c.b16 %v1423, %v1419
          %v1800 = vpack.c.b16 %v1428, %v1424
          %v1801 = vpack.c.b16 %v1429, %v1425
          %v1802 = vpack.c.b16 %v1430, %v1426
          %v1803 = vpack.c.b16 %v1431, %v1427
          %v1804 = vpack.c.b16 %v1436, %v1432
          %v1805 = vpack.c.b16 %v1437, %v1433
          %v1806 = vpack.c.b16 %v1438, %v1434
          %v1807 = vpack.c.b16 %v1439, %v1435
          %v1808 = vpack.c.b16 %v1444, %v1440
          %v1809 = vpack.c.b16 %v1445, %v1441
          %v1810 = vpack.c.b16 %v1446, %v1442
          %v1811 = vpack.c.b16 %v1447, %v1443
          %v1812 = vpack.c.b16 %v1452, %v1448
          %v1813 = vpack.c.b16 %v1453, %v1449
          %v1814 = vpack.c.b16 %v1454, %v1450
          %v1815 = vpack.c.b16 %v1455, %v1451
          %v1816 = vpack.c.b16 %v1460, %v1456
          %v1817 = vpack.c.b16 %v1461, %v1457
          %v1818 = vpack.c.b16 %v1462, %v1458
          %v1819 = vpack.c.b16 %v1463, %v1459
          %v1820 = vpack.c.b16 %v1468, %v1464
          %v1821 = vpack.c.b16 %v1469, %v1465
          %v1822 = vpack.c.b16 %v1470, %v1466
          %v1823 = vpack.c.b16 %v1471, %v1467
          %v1824 = vpack.c.b16 %v1476, %v1472
          %v1825 = vpack.c.b16 %v1477, %v1473
          %v1826 = vpack.c.b16 %v1478, %v1474
          %v1827 = vpack.c.b16 %v1479, %v1475
          %v1828 = vpack.c.b16 %v1484, %v1480
          %v1829 = vpack.c.b16 %v1485, %v1481
          %v1830 = vpack.c.b16 %v1486, %v1482
          %v1831 = vpack.c.b16 %v1487, %v1483
          %v1832 = vpack.c.b16 %v1492, %v1488
          %v1833 = vpack.c.b16 %v1493, %v1489
          %v1834 = vpack.c.b16 %v1494, %v1490
          %v1835 = vpack.c.b16 %v1495, %v1491
          %v1836 = vpack.c.b16 %v1500, %v1496
          %v1837 = vpack.c.b16 %v1501, %v1497
          %v1838 = vpack.c.b16 %v1502, %v1498
          %v1839 = vpack.c.b16 %v1503, %v1499
          %v1840 = vpack.c.b16 %v1508, %v1504
          %v1841 = vpack.c.b16 %v1509, %v1505
          %v1842 = vpack.c.b16 %v1510, %v1506
          %v1843 = vpack.c.b16 %v1511, %v1507
          %v1844 = vpack.c.b16 %v1516, %v1512
          %v1845 = vpack.c.b16 %v1517, %v1513
          %v1846 = vpack.c.b16 %v1518, %v1514
          %v1847 = vpack.c.b16 %v1519, %v1515
          %v1848 = vpack.c.b16 %v1524, %v1520
          %v1849 = vpack.c.b16 %v1525, %v1521
          %v1850 = vpack.c.b16 %v1526, %v1522
          %v1851 = vpack.c.b16 %v1527, %v1523
          %v1852 = vpack.c.b16 %v1532, %v1528
          %v1853 = vpack.c.b16 %v1533, %v1529
          %v1854 = vpack.c.b16 %v1534, %v1530
          %v1855 = vpack.c.b16 %v1535, %v1531
          %v1856 = vpack.c.b16 %v1540, %v1536
          %v1857 = vpack.c.b16 %v1541, %v1537
          %v1858 = vpack.c.b16 %v1542, %v1538
          %v1859 = vpack.c.b16 %v1543, %v1539
          %v1860 = vpack.c.b16 %v1548, %v1544
          %v1861 = vpack.c.b16 %v1549, %v1545
          %v1862 = vpack.c.b16 %v1550, %v1546
          %v1863 = vpack.c.b16 %v1551, %v1547
          %v1864 = vpack.c.b16 %v1556, %v1552
          %v1865 = vpack.c.b16 %v1557, %v1553
          %v1866 = vpack.c.b16 %v1558, %v1554
          %v1867 = vpack.c.b16 %v1559, %v1555
          %v1868 = vpack.c.b16 %v1564, %v1560
          %v1869 = vpack.c.b16 %v1565, %v1561
          %v1870 = vpack.c.b16 %v1566, %v1562
          %v1871 = vpack.c.b16 %v1567, %v1563
          %v1872 = vpack.c.b16 %v1572, %v1568
          %v1873 = vpack.c.b16 %v1573, %v1569
          %v1874 = vpack.c.b16 %v1574, %v1570
          %v1875 = vpack.c.b16 %v1575, %v1571
          %v1876 = vpack.c.b16 %v1580, %v1576
          %v1877 = vpack.c.b16 %v1581, %v1577
          %v1878 = vpack.c.b16 %v1582, %v1578
          %v1879 = vpack.c.b16 %v1583, %v1579
          %v1880 = vpack.c.b16 %v1588, %v1584
          %v1881 = vpack.c.b16 %v1589, %v1585
          %v1882 = vpack.c.b16 %v1590, %v1586
          %v1883 = vpack.c.b16 %v1591, %v1587
          %v1884 = vpack.c.b16 %v1596, %v1592
          %v1885 = vpack.c.b16 %v1597, %v1593
          %v1886 = vpack.c.b16 %v1598, %v1594
          %v1887 = vpack.c.b16 %v1599, %v1595
          %v1888 = vpack.c.b16 %v1604, %v1600
          %v1889 = vpack.c.b16 %v1605, %v1601
          %v1890 = vpack.c.b16 %v1606, %v1602
          %v1891 = vpack.c.b16 %v1607, %v1603
          %v1892 = vpack.c.b16 %v1612, %v1608
          %v1893 = vpack.c.b16 %v1613, %v1609
          %v1894 = vpack.c.b16 %v1614, %v1610
          %v1895 = vpack.c.b16 %v1615, %v1611
          %v1896 = vpack.c.b16 %v1620, %v1616
          %v1897 = vpack.c.b16 %v1621, %v1617
          %v1898 = vpack.c.b16 %v1622, %v1618
          %v1899 = vpack.c.b16 %v1623, %v1619
          %v1900 = vpack.c.b16 %v1628, %v1624
          %v1901 = vpack.c.b16 %v1629, %v1625
          %v1902 = vpack.c.b16 %v1630, %v1626
          %v1903 = vpack.c.b16 %v1631, %v1627
          %v1904 = vpack.c.b16 %v1636, %v1632
          %v1905 = vpack.c.b16 %v1637, %v1633
          %v1906 = vpack.c.b16 %v1638, %v1634
          %v1907 = vpack.c.b16 %v1639, %v1635
          %v1908 = vpack.c.b16 %v1644, %v1640
          %v1909 = vpack.c.b16 %v1645, %v1641
          %v1910 = vpack.c.b16 %v1646, %v1642
          %v1911 = vpack.c.b16 %v1647, %v1643
          %v1912 = vpack.c.b16 %v1652, %v1648
          %v1913 = vpack.c.b16 %v1653, %v1649
          %v1914 = vpack.c.b16 %v1654, %v1650
          %v1915 = vpack.c.b16 %v1655, %v1651
          %v1916 = vpack.c.b16 %v1660, %v1656
          %v1917 = vpack.c.b16 %v1661, %v1657
          %v1918 = vpack.c.b16 %v1662, %v1658
          %v1919 = vpack.c.b16 %v1663, %v1659
          %2176 = vmatprep.subr.bf16.mxu0 %v1665
          %2177 = vmatpush1.bf16.msra.mxu0 %v1664
          %2178 = vmatprep.subr.bf16.mxu0 %v1669
          %2179 = vmatpush1.bf16.msra.mxu0 %v1668
          %2180 = vmatprep.subr.bf16.mxu0 %v1673
          %2181 = vmatpush1.bf16.msra.mxu0 %v1672
          %2182 = vmatprep.subr.bf16.mxu0 %v1677
          %2183 = vmatpush1.bf16.msra.mxu0 %v1676
          %2184 = vmatprep.subr.bf16.mxu0 %v1681
          %2185 = vmatpush1.bf16.msra.mxu0 %v1680
          %2186 = vmatprep.subr.bf16.mxu0 %v1685
          %2187 = vmatpush1.bf16.msra.mxu0 %v1684
          %2188 = vmatprep.subr.bf16.mxu0 %v1689
          %2189 = vmatpush1.bf16.msra.mxu0 %v1688
          %2190 = vmatprep.subr.bf16.mxu0 %v1693
          %2191 = vmatpush1.bf16.msra.mxu0 %v1692
          %2192 = vmatprep.subr.bf16.mxu0 %v1697
          %2193 = vmatpush1.bf16.msra.mxu0 %v1696
          %2194 = vmatprep.subr.bf16.mxu0 %v1701
          %2195 = vmatpush1.bf16.msra.mxu0 %v1700
          %2196 = vmatprep.subr.bf16.mxu0 %v1705
          %2197 = vmatpush1.bf16.msra.mxu0 %v1704
          %2198 = vmatprep.subr.bf16.mxu0 %v1709
          %2199 = vmatpush1.bf16.msra.mxu0 %v1708
          %2200 = vmatprep.subr.bf16.mxu0 %v1713
          %2201 = vmatpush1.bf16.msra.mxu0 %v1712
          %2202 = vmatprep.subr.bf16.mxu0 %v1717
          %2203 = vmatpush1.bf16.msra.mxu0 %v1716
          %2204 = vmatprep.subr.bf16.mxu0 %v1721
          %2205 = vmatpush1.bf16.msra.mxu0 %v1720
          %2206 = vmatprep.subr.bf16.mxu0 %v1725
          %2207 = vmatpush1.bf16.msra.mxu0 %v1724
          %2208 = vmatprep.mubr.bf16.mxu0 %v633
          %2209 = vmatmul.mubr.bf16.gmra.mrb[0].mxu0 %v632
          %v2210 = vpop.f32.mrb[0].mxu0
          %v2211 = vadd.f32 0.0, %v2210
          %v2212 = vpop.f32.mrb[0].mxu0
          %v2213 = vadd.f32 0.0, %v2212
          %v2214 = vpop.f32.mrb[0].mxu0
          %v2215 = vpop.f32.mrb[0].mxu0
          %2216 = vdwg.mxu0
          %2217 = vmatprep.subr.bf16.mxu0 %v1729
          %2218 = vmatpush1.bf16.msra.mxu0 %v1728
          %2219 = vmatprep.subr.bf16.mxu0 %v1733
          %2220 = vmatpush1.bf16.msra.mxu0 %v1732
          %2221 = vmatprep.subr.bf16.mxu0 %v1737
          %2222 = vmatpush1.bf16.msra.mxu0 %v1736
          %2223 = vmatprep.subr.bf16.mxu0 %v1741
          %2224 = vmatpush1.bf16.msra.mxu0 %v1740
          %2225 = vmatprep.subr.bf16.mxu0 %v1745
          %2226 = vmatpush1.bf16.msra.mxu0 %v1744
          %2227 = vmatprep.subr.bf16.mxu0 %v1749
          %2228 = vmatpush1.bf16.msra.mxu0 %v1748
          %2229 = vmatprep.subr.bf16.mxu0 %v1753
          %2230 = vmatpush1.bf16.msra.mxu0 %v1752
          %2231 = vmatprep.subr.bf16.mxu0 %v1757
          %2232 = vmatpush1.bf16.msra.mxu0 %v1756
          %2233 = vmatprep.subr.bf16.mxu0 %v1761
          %2234 = vmatpush1.bf16.msra.mxu0 %v1760
          %2235 = vmatprep.subr.bf16.mxu0 %v1765
          %2236 = vmatpush1.bf16.msra.mxu0 %v1764
          %2237 = vmatprep.subr.bf16.mxu0 %v1769
          %2238 = vmatpush1.bf16.msra.mxu0 %v1768
          %2239 = vmatprep.subr.bf16.mxu0 %v1773
          %2240 = vmatpush1.bf16.msra.mxu0 %v1772
          %2241 = vmatprep.subr.bf16.mxu0 %v1777
          %2242 = vmatpush1.bf16.msra.mxu0 %v1776
          %2243 = vmatprep.subr.bf16.mxu0 %v1781
          %2244 = vmatpush1.bf16.msra.mxu0 %v1780
          %2245 = vmatprep.subr.bf16.mxu0 %v1785
          %2246 = vmatpush1.bf16.msra.mxu0 %v1784
          %2247 = vmatprep.subr.bf16.mxu0 %v1789
          %2248 = vmatpush1.bf16.msra.mxu0 %v1788
          %2249 = vmatprep.mubr.bf16.mxu0 %v635
          %2250 = vmatmul.mubr.bf16.gmra.mrb[0].mxu0 %v634
          %v2251 = vpop.f32.mrb[0].mxu0
          %v2252 = vadd.f32 %v2211, %v2251
          %v2253 = vpop.f32.mrb[0].mxu0
          %v2254 = vadd.f32 %v2213, %v2253
          %v2255 = vpop.f32.mrb[0].mxu0
          %v2256 = vpop.f32.mrb[0].mxu0
          %2257 = vdwg.mxu0
          %2258 = vmatprep.subr.bf16.mxu0 %v1793
          %2259 = vmatpush1.bf16.msra.mxu0 %v1792
          %2260 = vmatprep.subr.bf16.mxu0 %v1797
          %2261 = vmatpush1.bf16.msra.mxu0 %v1796
          %2262 = vmatprep.subr.bf16.mxu0 %v1801
          %2263 = vmatpush1.bf16.msra.mxu0 %v1800
          %2264 = vmatprep.subr.bf16.mxu0 %v1805
          %2265 = vmatpush1.bf16.msra.mxu0 %v1804
          %2266 = vmatprep.subr.bf16.mxu0 %v1809
          %2267 = vmatpush1.bf16.msra.mxu0 %v1808
          %2268 = vmatprep.subr.bf16.mxu0 %v1813
          %2269 = vmatpush1.bf16.msra.mxu0 %v1812
          %2270 = vmatprep.subr.bf16.mxu0 %v1817
          %2271 = vmatpush1.bf16.msra.mxu0 %v1816
          %2272 = vmatprep.subr.bf16.mxu0 %v1821
          %2273 = vmatpush1.bf16.msra.mxu0 %v1820
          %2274 = vmatprep.subr.bf16.mxu0 %v1825
          %2275 = vmatpush1.bf16.msra.mxu0 %v1824
          %2276 = vmatprep.subr.bf16.mxu0 %v1829
          %2277 = vmatpush1.bf16.msra.mxu0 %v1828
          %2278 = vmatprep.subr.bf16.mxu0 %v1833
          %2279 = vmatpush1.bf16.msra.mxu0 %v1832
          %2280 = vmatprep.subr.bf16.mxu0 %v1837
          %2281 = vmatpush1.bf16.msra.mxu0 %v1836
          %2282 = vmatprep.subr.bf16.mxu0 %v1841
          %2283 = vmatpush1.bf16.msra.mxu0 %v1840
          %2284 = vmatprep.subr.bf16.mxu0 %v1845
          %2285 = vmatpush1.bf16.msra.mxu0 %v1844
          %2286 = vmatprep.subr.bf16.mxu0 %v1849
          %2287 = vmatpush1.bf16.msra.mxu0 %v1848
          %2288 = vmatprep.subr.bf16.mxu0 %v1853
          %2289 = vmatpush1.bf16.msra.mxu0 %v1852
          %2290 = vmatprep.mubr.bf16.mxu0 %v637
          %2291 = vmatmul.mubr.bf16.gmra.mrb[0].mxu0 %v636
          %v2292 = vpop.f32.mrb[0].mxu0
          %v2293 = vadd.f32 %v2252, %v2292
          %v2294 = vpop.f32.mrb[0].mxu0
          %v2295 = vadd.f32 %v2254, %v2294
          %v2296 = vpop.f32.mrb[0].mxu0
          %v2297 = vpop.f32.mrb[0].mxu0
          %2298 = vdwg.mxu0
          %2299 = vmatprep.subr.bf16.mxu0 %v1857
          %2300 = vmatpush1.bf16.msra.mxu0 %v1856
          %2301 = vmatprep.subr.bf16.mxu0 %v1861
          %2302 = vmatpush1.bf16.msra.mxu0 %v1860
          %2303 = vmatprep.subr.bf16.mxu0 %v1865
          %2304 = vmatpush1.bf16.msra.mxu0 %v1864
          %2305 = vmatprep.subr.bf16.mxu0 %v1869
          %2306 = vmatpush1.bf16.msra.mxu0 %v1868
          %2307 = vmatprep.subr.bf16.mxu0 %v1873
          %2308 = vmatpush1.bf16.msra.mxu0 %v1872
          %2309 = vmatprep.subr.bf16.mxu0 %v1877
          %2310 = vmatpush1.bf16.msra.mxu0 %v1876
          %2311 = vmatprep.subr.bf16.mxu0 %v1881
          %2312 = vmatpush1.bf16.msra.mxu0 %v1880
          %2313 = vmatprep.subr.bf16.mxu0 %v1885
          %2314 = vmatpush1.bf16.msra.mxu0 %v1884
          %2315 = vmatprep.subr.bf16.mxu0 %v1889
          %2316 = vmatpush1.bf16.msra.mxu0 %v1888
          %2317 = vmatprep.subr.bf16.mxu0 %v1893
          %2318 = vmatpush1.bf16.msra.mxu0 %v1892
          %2319 = vmatprep.subr.bf16.mxu0 %v1897
          %2320 = vmatpush1.bf16.msra.mxu0 %v1896
          %2321 = vmatprep.subr.bf16.mxu0 %v1901
          %2322 = vmatpush1.bf16.msra.mxu0 %v1900
          %2323 = vmatprep.subr.bf16.mxu0 %v1905
          %2324 = vmatpush1.bf16.msra.mxu0 %v1904
          %2325 = vmatprep.subr.bf16.mxu0 %v1909
          %2326 = vmatpush1.bf16.msra.mxu0 %v1908
          %2327 = vmatprep.subr.bf16.mxu0 %v1913
          %2328 = vmatpush1.bf16.msra.mxu0 %v1912
          %2329 = vmatprep.subr.bf16.mxu0 %v1917
          %2330 = vmatpush1.bf16.msra.mxu0 %v1916
          %2331 = vmatprep.mubr.bf16.mxu0 %v639
          %2332 = vmatmul.mubr.bf16.gmra.mrb[0].mxu0 %v638
          %v2333 = vpop.f32.mrb[0].mxu0
          %v2334 = vadd.f32 %v2293, %v2333
          %v2335 = vpop.f32.mrb[0].mxu0
          %v2336 = vadd.f32 %v2295, %v2335
          %v2337 = vpop.f32.mrb[0].mxu0
          %v2338 = vpop.f32.mrb[0].mxu0
          %2339 = vdwg.mxu0
          %2340 = vmatprep.subr.bf16.mxu0 %v1667
          %2341 = vmatpush1.bf16.msra.mxu0 %v1666
          %2342 = vmatprep.subr.bf16.mxu0 %v1671
          %2343 = vmatpush1.bf16.msra.mxu0 %v1670
          %2344 = vmatprep.subr.bf16.mxu0 %v1675
          %2345 = vmatpush1.bf16.msra.mxu0 %v1674
          %2346 = vmatprep.subr.bf16.mxu0 %v1679
          %2347 = vmatpush1.bf16.msra.mxu0 %v1678
          %2348 = vmatprep.subr.bf16.mxu0 %v1683
          %2349 = vmatpush1.bf16.msra.mxu0 %v1682
          %2350 = vmatprep.subr.bf16.mxu0 %v1687
          %2351 = vmatpush1.bf16.msra.mxu0 %v1686
          %2352 = vmatprep.subr.bf16.mxu0 %v1691
          %2353 = vmatpush1.bf16.msra.mxu0 %v1690
          %2354 = vmatprep.subr.bf16.mxu0 %v1695
          %2355 = vmatpush1.bf16.msra.mxu0 %v1694
          %2356 = vmatprep.subr.bf16.mxu0 %v1699
          %2357 = vmatpush1.bf16.msra.mxu0 %v1698
          %2358 = vmatprep.subr.bf16.mxu0 %v1703
          %2359 = vmatpush1.bf16.msra.mxu0 %v1702
          %2360 = vmatprep.subr.bf16.mxu0 %v1707
          %2361 = vmatpush1.bf16.msra.mxu0 %v1706
          %2362 = vmatprep.subr.bf16.mxu0 %v1711
          %2363 = vmatpush1.bf16.msra.mxu0 %v1710
          %2364 = vmatprep.subr.bf16.mxu0 %v1715
          %2365 = vmatpush1.bf16.msra.mxu0 %v1714
          %2366 = vmatprep.subr.bf16.mxu0 %v1719
          %2367 = vmatpush1.bf16.msra.mxu0 %v1718
          %2368 = vmatprep.subr.bf16.mxu0 %v1723
          %2369 = vmatpush1.bf16.msra.mxu0 %v1722
          %2370 = vmatprep.subr.bf16.mxu0 %v1727
          %2371 = vmatpush1.bf16.msra.mxu0 %v1726
          %2372 = vmatprep.mubr.bf16.mxu0 %v633
          %2373 = vmatmul.mubr.bf16.gmra.mrb[0].mxu0 %v632
          %v2374 = vpop.f32.mrb[0].mxu0
          %v2375 = vadd.f32 0.0, %v2374
          %v2376 = vpop.f32.mrb[0].mxu0
          %v2377 = vadd.f32 0.0, %v2376
          %v2378 = vpop.f32.mrb[0].mxu0
          %v2379 = vpop.f32.mrb[0].mxu0
          %2380 = vdwg.mxu0
          %2381 = vmatprep.subr.bf16.mxu0 %v1731
          %2382 = vmatpush1.bf16.msra.mxu0 %v1730
          %2383 = vmatprep.subr.bf16.mxu0 %v1735
          %2384 = vmatpush1.bf16.msra.mxu0 %v1734
          %2385 = vmatprep.subr.bf16.mxu0 %v1739
          %2386 = vmatpush1.bf16.msra.mxu0 %v1738
          %2387 = vmatprep.subr.bf16.mxu0 %v1743
          %2388 = vmatpush1.bf16.msra.mxu0 %v1742
          %2389 = vmatprep.subr.bf16.mxu0 %v1747
          %2390 = vmatpush1.bf16.msra.mxu0 %v1746
          %2391 = vmatprep.subr.bf16.mxu0 %v1751
          %2392 = vmatpush1.bf16.msra.mxu0 %v1750
          %2393 = vmatprep.subr.bf16.mxu0 %v1755
          %2394 = vmatpush1.bf16.msra.mxu0 %v1754
          %2395 = vmatprep.subr.bf16.mxu0 %v1759
          %2396 = vmatpush1.bf16.msra.mxu0 %v1758
          %2397 = vmatprep.subr.bf16.mxu0 %v1763
          %2398 = vmatpush1.bf16.msra.mxu0 %v1762
          %2399 = vmatprep.subr.bf16.mxu0 %v1767
          %2400 = vmatpush1.bf16.msra.mxu0 %v1766
          %2401 = vmatprep.subr.bf16.mxu0 %v1771
          %2402 = vmatpush1.bf16.msra.mxu0 %v1770
          %2403 = vmatprep.subr.bf16.mxu0 %v1775
          %2404 = vmatpush1.bf16.msra.mxu0 %v1774
          %2405 = vmatprep.subr.bf16.mxu0 %v1779
          %2406 = vmatpush1.bf16.msra.mxu0 %v1778
          %2407 = vmatprep.subr.bf16.mxu0 %v1783
          %2408 = vmatpush1.bf16.msra.mxu0 %v1782
          %2409 = vmatprep.subr.bf16.mxu0 %v1787
          %2410 = vmatpush1.bf16.msra.mxu0 %v1786
          %2411 = vmatprep.subr.bf16.mxu0 %v1791
          %2412 = vmatpush1.bf16.msra.mxu0 %v1790
          %2413 = vmatprep.mubr.bf16.mxu0 %v635
          %2414 = vmatmul.mubr.bf16.gmra.mrb[0].mxu0 %v634
          %v2415 = vpop.f32.mrb[0].mxu0
          %v2416 = vadd.f32 %v2375, %v2415
          %v2417 = vpop.f32.mrb[0].mxu0
          %v2418 = vadd.f32 %v2377, %v2417
          %v2419 = vpop.f32.mrb[0].mxu0
          %v2420 = vpop.f32.mrb[0].mxu0
          %2421 = vdwg.mxu0
          %2422 = vmatprep.subr.bf16.mxu0 %v1795
          %2423 = vmatpush1.bf16.msra.mxu0 %v1794
          %2424 = vmatprep.subr.bf16.mxu0 %v1799
          %2425 = vmatpush1.bf16.msra.mxu0 %v1798
          %2426 = vmatprep.subr.bf16.mxu0 %v1803
          %2427 = vmatpush1.bf16.msra.mxu0 %v1802
          %2428 = vmatprep.subr.bf16.mxu0 %v1807
          %2429 = vmatpush1.bf16.msra.mxu0 %v1806
          %2430 = vmatprep.subr.bf16.mxu0 %v1811
          %2431 = vmatpush1.bf16.msra.mxu0 %v1810
          %2432 = vmatprep.subr.bf16.mxu0 %v1815
          %2433 = vmatpush1.bf16.msra.mxu0 %v1814
          %2434 = vmatprep.subr.bf16.mxu0 %v1819
          %2435 = vmatpush1.bf16.msra.mxu0 %v1818
          %2436 = vmatprep.subr.bf16.mxu0 %v1823
          %2437 = vmatpush1.bf16.msra.mxu0 %v1822
          %2438 = vmatprep.subr.bf16.mxu0 %v1827
          %2439 = vmatpush1.bf16.msra.mxu0 %v1826
          %2440 = vmatprep.subr.bf16.mxu0 %v1831
          %2441 = vmatpush1.bf16.msra.mxu0 %v1830
          %2442 = vmatprep.subr.bf16.mxu0 %v1835
          %2443 = vmatpush1.bf16.msra.mxu0 %v1834
          %2444 = vmatprep.subr.bf16.mxu0 %v1839
          %2445 = vmatpush1.bf16.msra.mxu0 %v1838
          %2446 = vmatprep.subr.bf16.mxu0 %v1843
          %2447 = vmatpush1.bf16.msra.mxu0 %v1842
          %2448 = vmatprep.subr.bf16.mxu0 %v1847
          %2449 = vmatpush1.bf16.msra.mxu0 %v1846
          %2450 = vmatprep.subr.bf16.mxu0 %v1851
          %2451 = vmatpush1.bf16.msra.mxu0 %v1850
          %2452 = vmatprep.subr.bf16.mxu0 %v1855
          %2453 = vmatpush1.bf16.msra.mxu0 %v1854
          %2454 = vmatprep.mubr.bf16.mxu0 %v637
          %2455 = vmatmul.mubr.bf16.gmra.mrb[0].mxu0 %v636
          %v2456 = vpop.f32.mrb[0].mxu0
          %v2457 = vadd.f32 %v2416, %v2456
          %v2458 = vpop.f32.mrb[0].mxu0
          %v2459 = vadd.f32 %v2418, %v2458
          %v2460 = vpop.f32.mrb[0].mxu0
          %v2461 = vpop.f32.mrb[0].mxu0
          %2462 = vdwg.mxu0
          %2463 = vmatprep.subr.bf16.mxu0 %v1859
          %2464 = vmatpush1.bf16.msra.mxu0 %v1858
          %2465 = vmatprep.subr.bf16.mxu0 %v1863
          %2466 = vmatpush1.bf16.msra.mxu0 %v1862
          %2467 = vmatprep.subr.bf16.mxu0 %v1867
          %2468 = vmatpush1.bf16.msra.mxu0 %v1866
          %2469 = vmatprep.subr.bf16.mxu0 %v1871
          %2470 = vmatpush1.bf16.msra.mxu0 %v1870
          %2471 = vmatprep.subr.bf16.mxu0 %v1875
          %2472 = vmatpush1.bf16.msra.mxu0 %v1874
          %2473 = vmatprep.subr.bf16.mxu0 %v1879
          %2474 = vmatpush1.bf16.msra.mxu0 %v1878
          %2475 = vmatprep.subr.bf16.mxu0 %v1883
          %2476 = vmatpush1.bf16.msra.mxu0 %v1882
          %2477 = vmatprep.subr.bf16.mxu0 %v1887
          %2478 = vmatpush1.bf16.msra.mxu0 %v1886
          %2479 = vmatprep.subr.bf16.mxu0 %v1891
          %2480 = vmatpush1.bf16.msra.mxu0 %v1890
          %2481 = vmatprep.subr.bf16.mxu0 %v1895
          %2482 = vmatpush1.bf16.msra.mxu0 %v1894
          %2483 = vmatprep.subr.bf16.mxu0 %v1899
          %2484 = vmatpush1.bf16.msra.mxu0 %v1898
          %2485 = vmatprep.subr.bf16.mxu0 %v1903
          %2486 = vmatpush1.bf16.msra.mxu0 %v1902
          %2487 = vmatprep.subr.bf16.mxu0 %v1907
          %2488 = vmatpush1.bf16.msra.mxu0 %v1906
          %2489 = vmatprep.subr.bf16.mxu0 %v1911
          %2490 = vmatpush1.bf16.msra.mxu0 %v1910
          %2491 = vmatprep.subr.bf16.mxu0 %v1915
          %2492 = vmatpush1.bf16.msra.mxu0 %v1914
          %2493 = vmatprep.subr.bf16.mxu0 %v1919
          %2494 = vmatpush1.bf16.msra.mxu0 %v1918
          %2495 = vmatprep.mubr.bf16.mxu0 %v639
          %2496 = vmatmul.mubr.bf16.gmra.mrb[0].mxu0 %v638
          %v2497 = vpop.f32.mrb[0].mxu0
          %v2498 = vadd.f32 %v2457, %v2497
          %v2499 = vpop.f32.mrb[0].mxu0
          %v2500 = vadd.f32 %v2459, %v2499
          %v2501 = vpop.f32.mrb[0].mxu0
          %v2502 = vpop.f32.mrb[0].mxu0
          %2503 = vdwg.mxu0
          %v2508 = vcombine.low %v2334, %v2336
          %v2509 = vcombine.low %v2498, %v2500
          %v2511 = vunpack.c.l.s4 1966171168
          %v2512 = vunpack.c.0.s8 %v2511
          %v2513 = vlaneseq
          %v2514 = vshrl.u32 %v2513, 7
          %v2515 = vsub.s32 %v2512, %v2514
          %v2516 = vrot.slane %v2508, %v2515
          %v2518 = vunpack.c.l.s4 1966171168
          %v2519 = vunpack.c.0.s8 %v2518
          %v2520 = vlaneseq
          %v2521 = vshrl.u32 %v2520, 7
          %v2522 = vsub.s32 %v2519, %v2521
          %v2523 = vrot.slane %v2509, %v2522
          %v2524 = vcombine.low %v2516, %v2523
          %v2526 = vunpack.c.l.s4 1966171168
          %v2527 = vunpack.c.0.s8 %v2526
          %v2528 = vlaneseq
          %v2529 = vshrl.u32 %v2528, 7
          %v2530 = vsub.s32 %v2527, %v2529
          %v2531 = vrot.slane %v2524, %v2530
          %v2533 = vlaneseq
          %vm2534 = vcmp.ge.s32.totalorder %v2533, 0
          %vm2535 = vcmp.lt.s32.totalorder %v2533, 512
          %vm2536 = vmand %vm2534, %vm2535
          %2537 = vst.msk [vmem:[#allocation2] sm:$0xf] %vm2536, %v2531
        $region112: #{_lambda_.7} parent=63 // pred_fallthru
          _
        %v2538 = vld [vmem:[%s494] sm:$0xf]
        %v2539 = vld [vmem:[%s494 + $0x4] sm:$0xf]
        %v2540 = vld [vmem:[#allocation9] sm:$0xff]
        %v2541 = vld [vmem:[#allocation9 + $0x8] sm:$0xff]
        %v2542 = vld [vmem:[#allocation9 + $0x10] sm:$0xff]
        %v2543 = vld [vmem:[#allocation9 + $0x18] sm:$0xff]
        %v2544 = vld [vmem:[#allocation9 + $0x20] sm:$0xff]
        %v2545 = vld [vmem:[#allocation9 + $0x28] sm:$0xff]
        %v2546 = vld [vmem:[#allocation9 + $0x30] sm:$0xff]
        %v2547 = vld [vmem:[#allocation9 + $0x38] sm:$0xff]
        %v2548 = vld [vmem:[#allocation9 + $0x40] sm:$0xff]
        %v2549 = vld [vmem:[#allocation9 + $0x48] sm:$0xff]
        %v2550 = vld [vmem:[#allocation9 + $0x50] sm:$0xff]
        %v2551 = vld [vmem:[#allocation9 + $0x58] sm:$0xff]
        %v2552 = vld [vmem:[#allocation9 + $0x60] sm:$0xff]
        %v2553 = vld [vmem:[#allocation9 + $0x68] sm:$0xff]
        %v2554 = vld [vmem:[#allocation9 + $0x70] sm:$0xff]
        %v2555 = vld [vmem:[#allocation9 + $0x78] sm:$0xff]
        %v2556 = vld [vmem:[#allocation2] sm:$0xf]
        %v2558 = vlaneseq
        %v2559 = vshrl.u32 %v2558, 7
        %v2560 = vsub.s32 0, %v2559
        %v2561 = vrot.slane %v2556, %v2560
        %v2562 = vlaneseq
        %v2563 = vshrl.u32 %v2562, 7
        %v2564 = vsub.s32 1, %v2563
        %v2565 = vrot.slane %v2556, %v2564
        %v2566 = vlaneseq
        %v2567 = vshrl.u32 %v2566, 7
        %v2568 = vsub.s32 2, %v2567
        %v2569 = vrot.slane %v2556, %v2568
        %v2570 = vlaneseq
        %v2571 = vshrl.u32 %v2570, 7
        %v2572 = vsub.s32 3, %v2571
        %v2573 = vrot.slane %v2556, %v2572
        %v2580 = vunpack.c.l.b16 %v2538
        %v2581 = vunpack.c.l.b16 %v2539
        %v2582 = vpack.c.b16 %v2581, %v2580
        %v2599 = vunpack.c.l.b16 %v2540
        %v2600 = vunpack.c.h.b16 %v2540
        %v2601 = vunpack.c.l.b16 %v2541
        %v2602 = vunpack.c.h.b16 %v2541
        %v2603 = vunpack.c.l.b16 %v2542
        %v2604 = vunpack.c.h.b16 %v2542
        %v2605 = vunpack.c.l.b16 %v2543
        %v2606 = vunpack.c.h.b16 %v2543
        %v2607 = vunpack.c.l.b16 %v2544
        %v2608 = vunpack.c.h.b16 %v2544
        %v2609 = vunpack.c.l.b16 %v2545
        %v2610 = vunpack.c.h.b16 %v2545
        %v2611 = vunpack.c.l.b16 %v2546
        %v2612 = vunpack.c.h.b16 %v2546
        %v2613 = vunpack.c.l.b16 %v2547
        %v2614 = vunpack.c.h.b16 %v2547
        %v2615 = vunpack.c.l.b16 %v2548
        %v2616 = vunpack.c.h.b16 %v2548
        %v2617 = vunpack.c.l.b16 %v2549
        %v2618 = vunpack.c.h.b16 %v2549
        %v2619 = vunpack.c.l.b16 %v2550
        %v2620 = vunpack.c.h.b16 %v2550
        %v2621 = vunpack.c.l.b16 %v2551
        %v2622 = vunpack.c.h.b16 %v2551
        %v2623 = vunpack.c.l.b16 %v2552
        %v2624 = vunpack.c.h.b16 %v2552
        %v2625 = vunpack.c.l.b16 %v2553
        %v2626 = vunpack.c.h.b16 %v2553
        %v2627 = vunpack.c.l.b16 %v2554
        %v2628 = vunpack.c.h.b16 %v2554
        %v2629 = vunpack.c.l.b16 %v2555
        %v2630 = vunpack.c.h.b16 %v2555
        %v2631 = vpack.c.b16 %v2603, %v2599
        %v2632 = vpack.c.b16 %v2604, %v2600
        %v2633 = vpack.c.b16 %v2605, %v2601
        %v2634 = vpack.c.b16 %v2606, %v2602
        %v2635 = vpack.c.b16 %v2611, %v2607
        %v2636 = vpack.c.b16 %v2612, %v2608
        %v2637 = vpack.c.b16 %v2613, %v2609
        %v2638 = vpack.c.b16 %v2614, %v2610
        %v2639 = vpack.c.b16 %v2619, %v2615
        %v2640 = vpack.c.b16 %v2620, %v2616
        %v2641 = vpack.c.b16 %v2621, %v2617
        %v2642 = vpack.c.b16 %v2622, %v2618
        %v2643 = vpack.c.b16 %v2627, %v2623
        %v2644 = vpack.c.b16 %v2628, %v2624
        %v2645 = vpack.c.b16 %v2629, %v2625
        %v2646 = vpack.c.b16 %v2630, %v2626
        %vm2663 = vcmask 523264
        %v2665 = vsel %vm2663, %v2582, 0
        %2667 = vmatprep.subr.bf16.mxu0 %v2632
        %2668 = vmatpush1.bf16.msra.mxu0 %v2631
        %2669 = vmatprep.subr.bf16.mxu0 %v2636
        %2670 = vmatpush1.bf16.msra.mxu0 %v2635
        %2671 = vmatprep.subr.bf16.mxu0 %v2640
        %2672 = vmatpush1.bf16.msra.mxu0 %v2639
        %2673 = vmatprep.subr.bf16.mxu0 %v2644
        %2674 = vmatpush1.bf16.msra.mxu0 %v2643
        %2675 = vmatprep.subr.bf16.mxu0 0
        %2676 = vmatpush1.bf16.msra.mxu0 0
        %2677 = vmatprep.subr.bf16.mxu0 0
        %2678 = vmatpush1.bf16.msra.mxu0 0
        %2679 = vmatprep.subr.bf16.mxu0 0
        %2680 = vmatpush1.bf16.msra.mxu0 0
        %2681 = vmatprep.subr.bf16.mxu0 0
        %2682 = vmatpush1.bf16.msra.mxu0 0
        %2683 = vmatprep.subr.bf16.mxu0 0
        %2684 = vmatpush1.bf16.msra.mxu0 0
        %2685 = vmatprep.subr.bf16.mxu0 0
        %2686 = vmatpush1.bf16.msra.mxu0 0
        %2687 = vmatprep.subr.bf16.mxu0 0
        %2688 = vmatpush1.bf16.msra.mxu0 0
        %2689 = vmatprep.subr.bf16.mxu0 0
        %2690 = vmatpush1.bf16.msra.mxu0 0
        %2691 = vmatprep.subr.bf16.mxu0 0
        %2692 = vmatpush1.bf16.msra.mxu0 0
        %2693 = vmatprep.subr.bf16.mxu0 0
        %2694 = vmatpush1.bf16.msra.mxu0 0
        %2695 = vmatprep.subr.bf16.mxu0 0
        %2696 = vmatpush1.bf16.msra.mxu0 0
        %2697 = vmatprep.subr.bf16.mxu0 0
        %2698 = vmatpush1.bf16.msra.mxu0 0
        %2699 = vmatprep.mubr.bf16.mxu0 0
        %2700 = vmatmul.mubr.bf16.gmra.mrb[0].mxu0 %v2665
        %v2701 = vpop.f32.mrb[0].mxu0
        %v2702 = vadd.f32 %v2561, %v2701
        %v2703 = vpop.f32.mrb[0].mxu0
        %v2704 = vadd.f32 %v2565, %v2703
        %v2705 = vpop.f32.mrb[0].mxu0
        %v2706 = vadd.f32 %v2561, %v2705
        %v2707 = vpop.f32.mrb[0].mxu0
        %v2708 = vadd.f32 %v2565, %v2707
        %2709 = vdwg.mxu0
        %2710 = vmatprep.subr.bf16.mxu0 %v2634
        %2711 = vmatpush1.bf16.msra.mxu0 %v2633
        %2712 = vmatprep.subr.bf16.mxu0 %v2638
        %2713 = vmatpush1.bf16.msra.mxu0 %v2637
        %2714 = vmatprep.subr.bf16.mxu0 %v2642
        %2715 = vmatpush1.bf16.msra.mxu0 %v2641
        %2716 = vmatprep.subr.bf16.mxu0 %v2646
        %2717 = vmatpush1.bf16.msra.mxu0 %v2645
        %2718 = vmatprep.subr.bf16.mxu0 0
        %2719 = vmatpush1.bf16.msra.mxu0 0
        %2720 = vmatprep.subr.bf16.mxu0 0
        %2721 = vmatpush1.bf16.msra.mxu0 0
        %2722 = vmatprep.subr.bf16.mxu0 0
        %2723 = vmatpush1.bf16.msra.mxu0 0
        %2724 = vmatprep.subr.bf16.mxu0 0
        %2725 = vmatpush1.bf16.msra.mxu0 0
        %2726 = vmatprep.subr.bf16.mxu0 0
        %2727 = vmatpush1.bf16.msra.mxu0 0
        %2728 = vmatprep.subr.bf16.mxu0 0
        %2729 = vmatpush1.bf16.msra.mxu0 0
        %2730 = vmatprep.subr.bf16.mxu0 0
        %2731 = vmatpush1.bf16.msra.mxu0 0
        %2732 = vmatprep.subr.bf16.mxu0 0
        %2733 = vmatpush1.bf16.msra.mxu0 0
        %2734 = vmatprep.subr.bf16.mxu0 0
        %2735 = vmatpush1.bf16.msra.mxu0 0
        %2736 = vmatprep.subr.bf16.mxu0 0
        %2737 = vmatpush1.bf16.msra.mxu0 0
        %2738 = vmatprep.subr.bf16.mxu0 0
        %2739 = vmatpush1.bf16.msra.mxu0 0
        %2740 = vmatprep.subr.bf16.mxu0 0
        %2741 = vmatpush1.bf16.msra.mxu0 0
        %2742 = vmatprep.mubr.bf16.mxu0 0
        %2743 = vmatmul.mubr.bf16.gmra.mrb[0].mxu0 %v2665
        %v2744 = vpop.f32.mrb[0].mxu0
        %v2745 = vadd.f32 %v2569, %v2744
        %v2746 = vpop.f32.mrb[0].mxu0
        %v2747 = vadd.f32 %v2573, %v2746
        %v2748 = vpop.f32.mrb[0].mxu0
        %v2749 = vadd.f32 %v2569, %v2748
        %v2750 = vpop.f32.mrb[0].mxu0
        %v2751 = vadd.f32 %v2573, %v2750
        %2752 = vdwg.mxu0
        %v2753 = vld [vmem:[#allocation11] sm:$0xf]
        %v2755 = vlaneseq
        %v2756 = vshrl.u32 %v2755, 7
        %v2757 = vsub.s32 0, %v2756
        %v2758 = vrot.slane %v2753, %v2757
        %v2759 = vlaneseq
        %v2760 = vshrl.u32 %v2759, 7
        %v2761 = vsub.s32 1, %v2760
        %v2762 = vrot.slane %v2753, %v2761
        %v2763 = vlaneseq
        %v2764 = vshrl.u32 %v2763, 7
        %v2765 = vsub.s32 2, %v2764
        %v2766 = vrot.slane %v2753, %v2765
        %v2767 = vlaneseq
        %v2768 = vshrl.u32 %v2767, 7
        %v2769 = vsub.s32 3, %v2768
        %v2770 = vrot.slane %v2753, %v2769
        %v2775 = vadd.f32 %v2702, %v2758
        %v2776 = vadd.f32 %v2704, %v2762
        %v2777 = vadd.f32 %v2745, %v2766
        %v2778 = vadd.f32 %v2747, %v2770
        %v2779 = vadd.f32 %v2706, %v2758
        %v2780 = vadd.f32 %v2708, %v2762
        %v2781 = vadd.f32 %v2749, %v2766
        %v2782 = vadd.f32 %v2751, %v2770
        %v2783 = vmax.f32 %v2775, 0.0
        %v2784 = vmax.f32 %v2776, 0.0
        %v2785 = vmax.f32 %v2777, 0.0
        %v2786 = vmax.f32 %v2778, 0.0
        %v2787 = vmax.f32 %v2779, 0.0
        %v2788 = vmax.f32 %v2780, 0.0
        %v2789 = vmax.f32 %v2781, 0.0
        %v2790 = vmax.f32 %v2782, 0.0
        %v2791 = vpack.c.bf16 %v2787, %v2783
        %v2792 = vpack.c.bf16 %v2788, %v2784
        %v2793 = vpack.c.bf16 %v2789, %v2785
        %v2794 = vpack.c.bf16 %v2790, %v2786
        %v2795 = vld [vmem:[#allocation12] sm:$0xff]
        %v2796 = vld [vmem:[#allocation12 + $0x8] sm:$0xff]
        %v2797 = vld [vmem:[#allocation12 + $0x10] sm:$0xff]
        %v2798 = vld [vmem:[#allocation12 + $0x18] sm:$0xff]
        %v2799 = vld [vmem:[#allocation12 + $0x20] sm:$0xff]
        %v2800 = vld [vmem:[#allocation12 + $0x28] sm:$0xff]
        %v2801 = vld [vmem:[#allocation12 + $0x30] sm:$0xff]
        %v2802 = vld [vmem:[#allocation12 + $0x38] sm:$0xff]
        %v2803 = vld [vmem:[#allocation12 + $0x40] sm:$0xff]
        %v2804 = vld [vmem:[#allocation12 + $0x48] sm:$0xff]
        %v2805 = vld [vmem:[#allocation12 + $0x50] sm:$0xff]
        %v2806 = vld [vmem:[#allocation12 + $0x58] sm:$0xff]
        %v2807 = vld [vmem:[#allocation12 + $0x60] sm:$0xff]
        %v2808 = vld [vmem:[#allocation12 + $0x68] sm:$0xff]
        %v2809 = vld [vmem:[#allocation12 + $0x70] sm:$0xff]
        %v2810 = vld [vmem:[#allocation12 + $0x78] sm:$0xff]
        %v2811 = vld [vmem:[#allocation12 + $0x80] sm:$0xff]
        %v2812 = vld [vmem:[#allocation12 + $0x88] sm:$0xff]
        %v2813 = vld [vmem:[#allocation12 + $0x90] sm:$0xff]
        %v2814 = vld [vmem:[#allocation12 + $0x98] sm:$0xff]
        %v2815 = vld [vmem:[#allocation12 + $0xa0] sm:$0xff]
        %v2816 = vld [vmem:[#allocation12 + $0xa8] sm:$0xff]
        %v2817 = vld [vmem:[#allocation12 + $0xb0] sm:$0xff]
        %v2818 = vld [vmem:[#allocation12 + $0xb8] sm:$0xff]
        %v2819 = vld [vmem:[#allocation12 + $0xc0] sm:$0xff]
        %v2820 = vld [vmem:[#allocation12 + $0xc8] sm:$0xff]
        %v2821 = vld [vmem:[#allocation12 + $0xd0] sm:$0xff]
        %v2822 = vld [vmem:[#allocation12 + $0xd8] sm:$0xff]
        %v2823 = vld [vmem:[#allocation12 + $0xe0] sm:$0xff]
        %v2824 = vld [vmem:[#allocation12 + $0xe8] sm:$0xff]
        %v2825 = vld [vmem:[#allocation12 + $0xf0] sm:$0xff]
        %v2826 = vld [vmem:[#allocation12 + $0xf8] sm:$0xff]
        %v2827 = vld [vmem:[#allocation12 + $0x100] sm:$0xff]
        %v2828 = vld [vmem:[#allocation12 + $0x108] sm:$0xff]
        %v2829 = vld [vmem:[#allocation12 + $0x110] sm:$0xff]
        %v2830 = vld [vmem:[#allocation12 + $0x118] sm:$0xff]
        %v2831 = vld [vmem:[#allocation12 + $0x120] sm:$0xff]
        %v2832 = vld [vmem:[#allocation12 + $0x128] sm:$0xff]
        %v2833 = vld [vmem:[#allocation12 + $0x130] sm:$0xff]
        %v2834 = vld [vmem:[#allocation12 + $0x138] sm:$0xff]
        %v2835 = vld [vmem:[#allocation12 + $0x140] sm:$0xff]
        %v2836 = vld [vmem:[#allocation12 + $0x148] sm:$0xff]
        %v2837 = vld [vmem:[#allocation12 + $0x150] sm:$0xff]
        %v2838 = vld [vmem:[#allocation12 + $0x158] sm:$0xff]
        %v2839 = vld [vmem:[#allocation12 + $0x160] sm:$0xff]
        %v2840 = vld [vmem:[#allocation12 + $0x168] sm:$0xff]
        %v2841 = vld [vmem:[#allocation12 + $0x170] sm:$0xff]
        %v2842 = vld [vmem:[#allocation12 + $0x178] sm:$0xff]
        %v2843 = vld [vmem:[#allocation12 + $0x180] sm:$0xff]
        %v2844 = vld [vmem:[#allocation12 + $0x188] sm:$0xff]
        %v2845 = vld [vmem:[#allocation12 + $0x190] sm:$0xff]
        %v2846 = vld [vmem:[#allocation12 + $0x198] sm:$0xff]
        %v2847 = vld [vmem:[#allocation12 + $0x1a0] sm:$0xff]
        %v2848 = vld [vmem:[#allocation12 + $0x1a8] sm:$0xff]
        %v2849 = vld [vmem:[#allocation12 + $0x1b0] sm:$0xff]
        %v2850 = vld [vmem:[#allocation12 + $0x1b8] sm:$0xff]
        %v2851 = vld [vmem:[#allocation12 + $0x1c0] sm:$0xff]
        %v2852 = vld [vmem:[#allocation12 + $0x1c8] sm:$0xff]
        %v2853 = vld [vmem:[#allocation12 + $0x1d0] sm:$0xff]
        %v2854 = vld [vmem:[#allocation12 + $0x1d8] sm:$0xff]
        %v2855 = vld [vmem:[#allocation12 + $0x1e0] sm:$0xff]
        %v2856 = vld [vmem:[#allocation12 + $0x1e8] sm:$0xff]
        %v2857 = vld [vmem:[#allocation12 + $0x1f0] sm:$0xff]
        %v2858 = vld [vmem:[#allocation12 + $0x1f8] sm:$0xff]
        %v2859 = vld [vmem:[#allocation14] sm:$0x3]
        %v2861 = vlaneseq
        %v2862 = vshrl.u32 %v2861, 7
        %v2863 = vsub.s32 0, %v2862
        %v2864 = vrot.slane %v2859, %v2863
        %v2865 = vlaneseq
        %v2866 = vshrl.u32 %v2865, 7
        %v2867 = vsub.s32 1, %v2866
        %v2868 = vrot.slane %v2859, %v2867
        %v2935 = vunpack.c.l.b16 %v2795
        %v2936 = vunpack.c.h.b16 %v2795
        %v2937 = vunpack.c.l.b16 %v2796
        %v2938 = vunpack.c.h.b16 %v2796
        %v2939 = vunpack.c.l.b16 %v2797
        %v2940 = vunpack.c.h.b16 %v2797
        %v2941 = vunpack.c.l.b16 %v2798
        %v2942 = vunpack.c.h.b16 %v2798
        %v2943 = vunpack.c.l.b16 %v2799
        %v2944 = vunpack.c.h.b16 %v2799
        %v2945 = vunpack.c.l.b16 %v2800
        %v2946 = vunpack.c.h.b16 %v2800
        %v2947 = vunpack.c.l.b16 %v2801
        %v2948 = vunpack.c.h.b16 %v2801
        %v2949 = vunpack.c.l.b16 %v2802
        %v2950 = vunpack.c.h.b16 %v2802
        %v2951 = vunpack.c.l.b16 %v2803
        %v2952 = vunpack.c.h.b16 %v2803
        %v2953 = vunpack.c.l.b16 %v2804
        %v2954 = vunpack.c.h.b16 %v2804
        %v2955 = vunpack.c.l.b16 %v2805
        %v2956 = vunpack.c.h.b16 %v2805
        %v2957 = vunpack.c.l.b16 %v2806
        %v2958 = vunpack.c.h.b16 %v2806
        %v2959 = vunpack.c.l.b16 %v2807
        %v2960 = vunpack.c.h.b16 %v2807
        %v2961 = vunpack.c.l.b16 %v2808
        %v2962 = vunpack.c.h.b16 %v2808
        %v2963 = vunpack.c.l.b16 %v2809
        %v2964 = vunpack.c.h.b16 %v2809
        %v2965 = vunpack.c.l.b16 %v2810
        %v2966 = vunpack.c.h.b16 %v2810
        %v2967 = vunpack.c.l.b16 %v2811
        %v2968 = vunpack.c.h.b16 %v2811
        %v2969 = vunpack.c.l.b16 %v2812
        %v2970 = vunpack.c.h.b16 %v2812
        %v2971 = vunpack.c.l.b16 %v2813
        %v2972 = vunpack.c.h.b16 %v2813
        %v2973 = vunpack.c.l.b16 %v2814
        %v2974 = vunpack.c.h.b16 %v2814
        %v2975 = vunpack.c.l.b16 %v2815
        %v2976 = vunpack.c.h.b16 %v2815
        %v2977 = vunpack.c.l.b16 %v2816
        %v2978 = vunpack.c.h.b16 %v2816
        %v2979 = vunpack.c.l.b16 %v2817
        %v2980 = vunpack.c.h.b16 %v2817
        %v2981 = vunpack.c.l.b16 %v2818
        %v2982 = vunpack.c.h.b16 %v2818
        %v2983 = vunpack.c.l.b16 %v2819
        %v2984 = vunpack.c.h.b16 %v2819
        %v2985 = vunpack.c.l.b16 %v2820
        %v2986 = vunpack.c.h.b16 %v2820
        %v2987 = vunpack.c.l.b16 %v2821
        %v2988 = vunpack.c.h.b16 %v2821
        %v2989 = vunpack.c.l.b16 %v2822
        %v2990 = vunpack.c.h.b16 %v2822
        %v2991 = vunpack.c.l.b16 %v2823
        %v2992 = vunpack.c.h.b16 %v2823
        %v2993 = vunpack.c.l.b16 %v2824
        %v2994 = vunpack.c.h.b16 %v2824
        %v2995 = vunpack.c.l.b16 %v2825
        %v2996 = vunpack.c.h.b16 %v2825
        %v2997 = vunpack.c.l.b16 %v2826
        %v2998 = vunpack.c.h.b16 %v2826
        %v2999 = vunpack.c.l.b16 %v2827
        %v3000 = vunpack.c.h.b16 %v2827
        %v3001 = vunpack.c.l.b16 %v2828
        %v3002 = vunpack.c.h.b16 %v2828
        %v3003 = vunpack.c.l.b16 %v2829
        %v3004 = vunpack.c.h.b16 %v2829
        %v3005 = vunpack.c.l.b16 %v2830
        %v3006 = vunpack.c.h.b16 %v2830
        %v3007 = vunpack.c.l.b16 %v2831
        %v3008 = vunpack.c.h.b16 %v2831
        %v3009 = vunpack.c.l.b16 %v2832
        %v3010 = vunpack.c.h.b16 %v2832
        %v3011 = vunpack.c.l.b16 %v2833
        %v3012 = vunpack.c.h.b16 %v2833
        %v3013 = vunpack.c.l.b16 %v2834
        %v3014 = vunpack.c.h.b16 %v2834
        %v3015 = vunpack.c.l.b16 %v2835
        %v3016 = vunpack.c.h.b16 %v2835
        %v3017 = vunpack.c.l.b16 %v2836
        %v3018 = vunpack.c.h.b16 %v2836
        %v3019 = vunpack.c.l.b16 %v2837
        %v3020 = vunpack.c.h.b16 %v2837
        %v3021 = vunpack.c.l.b16 %v2838
        %v3022 = vunpack.c.h.b16 %v2838
        %v3023 = vunpack.c.l.b16 %v2839
        %v3024 = vunpack.c.h.b16 %v2839
        %v3025 = vunpack.c.l.b16 %v2840
        %v3026 = vunpack.c.h.b16 %v2840
        %v3027 = vunpack.c.l.b16 %v2841
        %v3028 = vunpack.c.h.b16 %v2841
        %v3029 = vunpack.c.l.b16 %v2842
        %v3030 = vunpack.c.h.b16 %v2842
        %v3031 = vunpack.c.l.b16 %v2843
        %v3032 = vunpack.c.h.b16 %v2843
        %v3033 = vunpack.c.l.b16 %v2844
        %v3034 = vunpack.c.h.b16 %v2844
        %v3035 = vunpack.c.l.b16 %v2845
        %v3036 = vunpack.c.h.b16 %v2845
        %v3037 = vunpack.c.l.b16 %v2846
        %v3038 = vunpack.c.h.b16 %v2846
        %v3039 = vunpack.c.l.b16 %v2847
        %v3040 = vunpack.c.h.b16 %v2847
        %v3041 = vunpack.c.l.b16 %v2848
        %v3042 = vunpack.c.h.b16 %v2848
        %v3043 = vunpack.c.l.b16 %v2849
        %v3044 = vunpack.c.h.b16 %v2849
        %v3045 = vunpack.c.l.b16 %v2850
        %v3046 = vunpack.c.h.b16 %v2850
        %v3047 = vunpack.c.l.b16 %v2851
        %v3048 = vunpack.c.h.b16 %v2851
        %v3049 = vunpack.c.l.b16 %v2852
        %v3050 = vunpack.c.h.b16 %v2852
        %v3051 = vunpack.c.l.b16 %v2853
        %v3052 = vunpack.c.h.b16 %v2853
        %v3053 = vunpack.c.l.b16 %v2854
        %v3054 = vunpack.c.h.b16 %v2854
        %v3055 = vunpack.c.l.b16 %v2855
        %v3056 = vunpack.c.h.b16 %v2855
        %v3057 = vunpack.c.l.b16 %v2856
        %v3058 = vunpack.c.h.b16 %v2856
        %v3059 = vunpack.c.l.b16 %v2857
        %v3060 = vunpack.c.h.b16 %v2857
        %v3061 = vunpack.c.l.b16 %v2858
        %v3062 = vunpack.c.h.b16 %v2858
        %v3063 = vpack.c.b16 %v2937, %v2935
        %v3064 = vpack.c.b16 %v2938, %v2936
        %v3065 = vpack.c.b16 %v2941, %v2939
        %v3066 = vpack.c.b16 %v2942, %v2940
        %v3067 = vpack.c.b16 %v2945, %v2943
        %v3068 = vpack.c.b16 %v2946, %v2944
        %v3069 = vpack.c.b16 %v2949, %v2947
        %v3070 = vpack.c.b16 %v2950, %v2948
        %v3071 = vpack.c.b16 %v2953, %v2951
        %v3072 = vpack.c.b16 %v2954, %v2952
        %v3073 = vpack.c.b16 %v2957, %v2955
        %v3074 = vpack.c.b16 %v2958, %v2956
        %v3075 = vpack.c.b16 %v2961, %v2959
        %v3076 = vpack.c.b16 %v2962, %v2960
        %v3077 = vpack.c.b16 %v2965, %v2963
        %v3078 = vpack.c.b16 %v2966, %v2964
        %v3079 = vpack.c.b16 %v2969, %v2967
        %v3080 = vpack.c.b16 %v2970, %v2968
        %v3081 = vpack.c.b16 %v2973, %v2971
        %v3082 = vpack.c.b16 %v2974, %v2972
        %v3083 = vpack.c.b16 %v2977, %v2975
        %v3084 = vpack.c.b16 %v2978, %v2976
        %v3085 = vpack.c.b16 %v2981, %v2979
        %v3086 = vpack.c.b16 %v2982, %v2980
        %v3087 = vpack.c.b16 %v2985, %v2983
        %v3088 = vpack.c.b16 %v2986, %v2984
        %v3089 = vpack.c.b16 %v2989, %v2987
        %v3090 = vpack.c.b16 %v2990, %v2988
        %v3091 = vpack.c.b16 %v2993, %v2991
        %v3092 = vpack.c.b16 %v2994, %v2992
        %v3093 = vpack.c.b16 %v2997, %v2995
        %v3094 = vpack.c.b16 %v2998, %v2996
        %v3095 = vpack.c.b16 %v3001, %v2999
        %v3096 = vpack.c.b16 %v3002, %v3000
        %v3097 = vpack.c.b16 %v3005, %v3003
        %v3098 = vpack.c.b16 %v3006, %v3004
        %v3099 = vpack.c.b16 %v3009, %v3007
        %v3100 = vpack.c.b16 %v3010, %v3008
        %v3101 = vpack.c.b16 %v3013, %v3011
        %v3102 = vpack.c.b16 %v3014, %v3012
        %v3103 = vpack.c.b16 %v3017, %v3015
        %v3104 = vpack.c.b16 %v3018, %v3016
        %v3105 = vpack.c.b16 %v3021, %v3019
        %v3106 = vpack.c.b16 %v3022, %v3020
        %v3107 = vpack.c.b16 %v3025, %v3023
        %v3108 = vpack.c.b16 %v3026, %v3024
        %v3109 = vpack.c.b16 %v3029, %v3027
        %v3110 = vpack.c.b16 %v3030, %v3028
        %v3111 = vpack.c.b16 %v3033, %v3031
        %v3112 = vpack.c.b16 %v3034, %v3032
        %v3113 = vpack.c.b16 %v3037, %v3035
        %v3114 = vpack.c.b16 %v3038, %v3036
        %v3115 = vpack.c.b16 %v3041, %v3039
        %v3116 = vpack.c.b16 %v3042, %v3040
        %v3117 = vpack.c.b16 %v3045, %v3043
        %v3118 = vpack.c.b16 %v3046, %v3044
        %v3119 = vpack.c.b16 %v3049, %v3047
        %v3120 = vpack.c.b16 %v3050, %v3048
        %v3121 = vpack.c.b16 %v3053, %v3051
        %v3122 = vpack.c.b16 %v3054, %v3052
        %v3123 = vpack.c.b16 %v3057, %v3055
        %v3124 = vpack.c.b16 %v3058, %v3056
        %v3125 = vpack.c.b16 %v3061, %v3059
        %v3126 = vpack.c.b16 %v3062, %v3060
        %3191 = vmatprep.subr.bf16.mxu0 %v3064
        %3192 = vmatpush1.bf16.msra.mxu0 %v3063
        %3193 = vmatprep.subr.bf16.mxu0 %v3066
        %3194 = vmatpush1.bf16.msra.mxu0 %v3065
        %3195 = vmatprep.subr.bf16.mxu0 %v3068
        %3196 = vmatpush1.bf16.msra.mxu0 %v3067
        %3197 = vmatprep.subr.bf16.mxu0 %v3070
        %3198 = vmatpush1.bf16.msra.mxu0 %v3069
        %3199 = vmatprep.subr.bf16.mxu0 %v3072
        %3200 = vmatpush1.bf16.msra.mxu0 %v3071
        %3201 = vmatprep.subr.bf16.mxu0 %v3074
        %3202 = vmatpush1.bf16.msra.mxu0 %v3073
        %3203 = vmatprep.subr.bf16.mxu0 %v3076
        %3204 = vmatpush1.bf16.msra.mxu0 %v3075
        %3205 = vmatprep.subr.bf16.mxu0 %v3078
        %3206 = vmatpush1.bf16.msra.mxu0 %v3077
        %3207 = vmatprep.subr.bf16.mxu0 %v3080
        %3208 = vmatpush1.bf16.msra.mxu0 %v3079
        %3209 = vmatprep.subr.bf16.mxu0 %v3082
        %3210 = vmatpush1.bf16.msra.mxu0 %v3081
        %3211 = vmatprep.subr.bf16.mxu0 %v3084
        %3212 = vmatpush1.bf16.msra.mxu0 %v3083
        %3213 = vmatprep.subr.bf16.mxu0 %v3086
        %3214 = vmatpush1.bf16.msra.mxu0 %v3085
        %3215 = vmatprep.subr.bf16.mxu0 %v3088
        %3216 = vmatpush1.bf16.msra.mxu0 %v3087
        %3217 = vmatprep.subr.bf16.mxu0 %v3090
        %3218 = vmatpush1.bf16.msra.mxu0 %v3089
        %3219 = vmatprep.subr.bf16.mxu0 %v3092
        %3220 = vmatpush1.bf16.msra.mxu0 %v3091
        %3221 = vmatprep.subr.bf16.mxu0 %v3094
        %3222 = vmatpush1.bf16.msra.mxu0 %v3093
        %3223 = vmatprep.mubr.bf16.mxu0 %v2792
        %3224 = vmatmul.mubr.bf16.gmra.mrb[0].mxu0 %v2791
        %v3225 = vpop.f32.mrb[0].mxu0
        %v3226 = vadd.f32 %v2864, %v3225
        %v3227 = vpop.f32.mrb[0].mxu0
        %v3228 = vadd.f32 %v2868, %v3227
        %v3229 = vpop.f32.mrb[0].mxu0
        %v3230 = vadd.f32 %v2864, %v3229
        %v3231 = vpop.f32.mrb[0].mxu0
        %v3232 = vadd.f32 %v2868, %v3231
        %3233 = vdwg.mxu0
        %3234 = vmatprep.subr.bf16.mxu0 %v3096
        %3235 = vmatpush1.bf16.msra.mxu0 %v3095
        %3236 = vmatprep.subr.bf16.mxu0 %v3098
        %3237 = vmatpush1.bf16.msra.mxu0 %v3097
        %3238 = vmatprep.subr.bf16.mxu0 %v3100
        %3239 = vmatpush1.bf16.msra.mxu0 %v3099
        %3240 = vmatprep.subr.bf16.mxu0 %v3102
        %3241 = vmatpush1.bf16.msra.mxu0 %v3101
        %3242 = vmatprep.subr.bf16.mxu0 %v3104
        %3243 = vmatpush1.bf16.msra.mxu0 %v3103
        %3244 = vmatprep.subr.bf16.mxu0 %v3106
        %3245 = vmatpush1.bf16.msra.mxu0 %v3105
        %3246 = vmatprep.subr.bf16.mxu0 %v3108
        %3247 = vmatpush1.bf16.msra.mxu0 %v3107
        %3248 = vmatprep.subr.bf16.mxu0 %v3110
        %3249 = vmatpush1.bf16.msra.mxu0 %v3109
        %3250 = vmatprep.subr.bf16.mxu0 %v3112
        %3251 = vmatpush1.bf16.msra.mxu0 %v3111
        %3252 = vmatprep.subr.bf16.mxu0 %v3114
        %3253 = vmatpush1.bf16.msra.mxu0 %v3113
        %3254 = vmatprep.subr.bf16.mxu0 %v3116
        %3255 = vmatpush1.bf16.msra.mxu0 %v3115
        %3256 = vmatprep.subr.bf16.mxu0 %v3118
        %3257 = vmatpush1.bf16.msra.mxu0 %v3117
        %3258 = vmatprep.subr.bf16.mxu0 %v3120
        %3259 = vmatpush1.bf16.msra.mxu0 %v3119
        %3260 = vmatprep.subr.bf16.mxu0 %v3122
        %3261 = vmatpush1.bf16.msra.mxu0 %v3121
        %3262 = vmatprep.subr.bf16.mxu0 %v3124
        %3263 = vmatpush1.bf16.msra.mxu0 %v3123
        %3264 = vmatprep.subr.bf16.mxu0 %v3126
        %3265 = vmatpush1.bf16.msra.mxu0 %v3125
        %3266 = vmatprep.mubr.bf16.mxu0 %v2794
        %3267 = vmatmul.mubr.bf16.gmra.mrb[0].mxu0 %v2793
        %v3268 = vpop.f32.mrb[0].mxu0
        %v3269 = vadd.f32 %v3226, %v3268
        %v3270 = vpop.f32.mrb[0].mxu0
        %v3271 = vadd.f32 %v3228, %v3270
        %v3272 = vpop.f32.mrb[0].mxu0
        %v3273 = vadd.f32 %v3230, %v3272
        %v3274 = vpop.f32.mrb[0].mxu0
        %v3275 = vadd.f32 %v3232, %v3274
        %3276 = vdwg.mxu0
        %v3277 = vmax.f32 %v3269, 0.0
        %v3278 = vmax.f32 %v3271, 0.0
        %v3279 = vmax.f32 %v3273, 0.0
        %v3280 = vmax.f32 %v3275, 0.0
        %v3281 = vpack.c.bf16 %v3279, %v3277
        %v3282 = vpack.c.bf16 %v3280, %v3278
        %v3283 = vld [vmem:[#allocation15] sm:$0xf]
        %v3284 = vld [vmem:[#allocation15 + $0x4] sm:$0xf]
        %v3285 = vld [vmem:[#allocation15 + $0x8] sm:$0xf]
        %v3286 = vld [vmem:[#allocation15 + $0xc] sm:$0xf]
        %v3287 = vld [vmem:[#allocation15 + $0x10] sm:$0xf]
        %v3288 = vld [vmem:[#allocation15 + $0x14] sm:$0xf]
        %v3289 = vld [vmem:[#allocation15 + $0x18] sm:$0xf]
        %v3290 = vld [vmem:[#allocation15 + $0x1c] sm:$0xf]
        %v3291 = vld [vmem:[#allocation15 + $0x20] sm:$0xf]
        %v3292 = vld [vmem:[#allocation15 + $0x24] sm:$0xf]
        %v3293 = vld [vmem:[#allocation15 + $0x28] sm:$0xf]
        %v3294 = vld [vmem:[#allocation15 + $0x2c] sm:$0xf]
        %v3295 = vld [vmem:[#allocation15 + $0x30] sm:$0xf]
        %v3296 = vld [vmem:[#allocation15 + $0x34] sm:$0xf]
        %v3297 = vld [vmem:[#allocation15 + $0x38] sm:$0xf]
        %v3298 = vld [vmem:[#allocation15 + $0x3c] sm:$0xf]
        %v3299 = vld [vmem:[#allocation15 + $0x40] sm:$0xf]
        %v3300 = vld [vmem:[#allocation15 + $0x44] sm:$0xf]
        %v3301 = vld [vmem:[#allocation15 + $0x48] sm:$0xf]
        %v3302 = vld [vmem:[#allocation15 + $0x4c] sm:$0xf]
        %v3303 = vld [vmem:[#allocation15 + $0x50] sm:$0xf]
        %v3304 = vld [vmem:[#allocation15 + $0x54] sm:$0xf]
        %v3305 = vld [vmem:[#allocation15 + $0x58] sm:$0xf]
        %v3306 = vld [vmem:[#allocation15 + $0x5c] sm:$0xf]
        %v3307 = vld [vmem:[#allocation15 + $0x60] sm:$0xf]
        %v3308 = vld [vmem:[#allocation15 + $0x64] sm:$0xf]
        %v3309 = vld [vmem:[#allocation15 + $0x68] sm:$0xf]
        %v3310 = vld [vmem:[#allocation15 + $0x6c] sm:$0xf]
        %v3311 = vld [vmem:[#allocation15 + $0x70] sm:$0xf]
        %v3312 = vld [vmem:[#allocation15 + $0x74] sm:$0xf]
        %v3313 = vld [vmem:[#allocation15 + $0x78] sm:$0xf]
        %v3314 = vld [vmem:[#allocation15 + $0x7c] sm:$0xf]
        %v3315 = vld [vmem:[#allocation17] sm:$0x1]
        %v3317 = vlaneseq
        %v3318 = vshrl.u32 %v3317, 7
        %v3319 = vsub.s32 0, %v3318
        %v3320 = vrot.slane %v3315, %v3319
        %v3354 = vunpack.c.l.b16 %v3283
        %v3355 = vunpack.c.l.b16 %v3284
        %v3356 = vunpack.c.l.b16 %v3285
        %v3357 = vunpack.c.l.b16 %v3286
        %v3358 = vunpack.c.l.b16 %v3287
        %v3359 = vunpack.c.l.b16 %v3288
        %v3360 = vunpack.c.l.b16 %v3289
        %v3361 = vunpack.c.l.b16 %v3290
        %v3362 = vunpack.c.l.b16 %v3291
        %v3363 = vunpack.c.l.b16 %v3292
        %v3364 = vunpack.c.l.b16 %v3293
        %v3365 = vunpack.c.l.b16 %v3294
        %v3366 = vunpack.c.l.b16 %v3295
        %v3367 = vunpack.c.l.b16 %v3296
        %v3368 = vunpack.c.l.b16 %v3297
        %v3369 = vunpack.c.l.b16 %v3298
        %v3370 = vunpack.c.l.b16 %v3299
        %v3371 = vunpack.c.l.b16 %v3300
        %v3372 = vunpack.c.l.b16 %v3301
        %v3373 = vunpack.c.l.b16 %v3302
        %v3374 = vunpack.c.l.b16 %v3303
        %v3375 = vunpack.c.l.b16 %v3304
        %v3376 = vunpack.c.l.b16 %v3305
        %v3377 = vunpack.c.l.b16 %v3306
        %v3378 = vunpack.c.l.b16 %v3307
        %v3379 = vunpack.c.l.b16 %v3308
        %v3380 = vunpack.c.l.b16 %v3309
        %v3381 = vunpack.c.l.b16 %v3310
        %v3382 = vunpack.c.l.b16 %v3311
        %v3383 = vunpack.c.l.b16 %v3312
        %v3384 = vunpack.c.l.b16 %v3313
        %v3385 = vunpack.c.l.b16 %v3314
        %v3386 = vpack.c.b16 %v3355, %v3354
        %v3387 = vpack.c.b16 %v3357, %v3356
        %v3388 = vpack.c.b16 %v3359, %v3358
        %v3389 = vpack.c.b16 %v3361, %v3360
        %v3390 = vpack.c.b16 %v3363, %v3362
        %v3391 = vpack.c.b16 %v3365, %v3364
        %v3392 = vpack.c.b16 %v3367, %v3366
        %v3393 = vpack.c.b16 %v3369, %v3368
        %v3394 = vpack.c.b16 %v3371, %v3370
        %v3395 = vpack.c.b16 %v3373, %v3372
        %v3396 = vpack.c.b16 %v3375, %v3374
        %v3397 = vpack.c.b16 %v3377, %v3376
        %v3398 = vpack.c.b16 %v3379, %v3378
        %v3399 = vpack.c.b16 %v3381, %v3380
        %v3400 = vpack.c.b16 %v3383, %v3382
        %v3401 = vpack.c.b16 %v3385, %v3384
        %3418 = vmatprep.subr.bf16.mxu0 0
        %3419 = vmatpush1.bf16.msra.mxu0 %v3386
        %3420 = vmatprep.subr.bf16.mxu0 0
        %3421 = vmatpush1.bf16.msra.mxu0 %v3387
        %3422 = vmatprep.subr.bf16.mxu0 0
        %3423 = vmatpush1.bf16.msra.mxu0 %v3388
        %3424 = vmatprep.subr.bf16.mxu0 0
        %3425 = vmatpush1.bf16.msra.mxu0 %v3389
        %3426 = vmatprep.subr.bf16.mxu0 0
        %3427 = vmatpush1.bf16.msra.mxu0 %v3390
        %3428 = vmatprep.subr.bf16.mxu0 0
        %3429 = vmatpush1.bf16.msra.mxu0 %v3391
        %3430 = vmatprep.subr.bf16.mxu0 0
        %3431 = vmatpush1.bf16.msra.mxu0 %v3392
        %3432 = vmatprep.subr.bf16.mxu0 0
        %3433 = vmatpush1.bf16.msra.mxu0 %v3393
        %3434 = vmatprep.subr.bf16.mxu0 0
        %3435 = vmatpush1.bf16.msra.mxu0 %v3394
        %3436 = vmatprep.subr.bf16.mxu0 0
        %3437 = vmatpush1.bf16.msra.mxu0 %v3395
        %3438 = vmatprep.subr.bf16.mxu0 0
        %3439 = vmatpush1.bf16.msra.mxu0 %v3396
        %3440 = vmatprep.subr.bf16.mxu0 0
        %3441 = vmatpush1.bf16.msra.mxu0 %v3397
        %3442 = vmatprep.subr.bf16.mxu0 0
        %3443 = vmatpush1.bf16.msra.mxu0 %v3398
        %3444 = vmatprep.subr.bf16.mxu0 0
        %3445 = vmatpush1.bf16.msra.mxu0 %v3399
        %3446 = vmatprep.subr.bf16.mxu0 0
        %3447 = vmatpush1.bf16.msra.mxu0 %v3400
        %3448 = vmatprep.subr.bf16.mxu0 0
        %3449 = vmatpush1.bf16.msra.mxu0 %v3401
        %3450 = vmatprep.mubr.bf16.mxu0 %v3282
        %3451 = vmatmul.mubr.bf16.gmra.mrb[0].mxu0 %v3281
        %v3452 = vpop.f32.mrb[0].mxu0
        %v3453 = vadd.f32 %v3320, %v3452
        %v3454 = vpop.f32.mrb[0].mxu0
        %v3455 = vpop.f32.mrb[0].mxu0
        %v3456 = vadd.f32 %v3320, %v3455
        %v3457 = vpop.f32.mrb[0].mxu0
        %3458 = vdwg.mxu0
        %v3459 = vmax.f32 %v3453, 0.0
        %v3460 = vmax.f32 %v3456, 0.0
        %v3461 = vpack.c.bf16 %v3460, %v3459
        %v3462 = vld [vmem:[#allocation18] sm:$0xf]
        %v3463 = vld [vmem:[#allocation18 + $0x4] sm:$0xf]
        %v3464 = vld [vmem:[#allocation18 + $0x8] sm:$0xf]
        %v3465 = vld [vmem:[#allocation18 + $0xc] sm:$0xf]
        %v3466 = vld [vmem:[#allocation18 + $0x10] sm:$0xf]
        %v3467 = vld [vmem:[#allocation18 + $0x14] sm:$0xf]
        %v3468 = vld [vmem:[#allocation18 + $0x18] sm:$0xf]
        %v3469 = vld [vmem:[#allocation18 + $0x1c] sm:$0xf]
        %v3470 = vld [vmem:[#allocation18 + $0x20] sm:$0xf]
        %v3471 = vld [vmem:[#allocation18 + $0x24] sm:$0xf]
        %v3472 = vld [vmem:[#allocation18 + $0x28] sm:$0xf]
        %v3473 = vld [vmem:[#allocation18 + $0x2c] sm:$0xf]
        %v3474 = vld [vmem:[#allocation18 + $0x30] sm:$0xf]
        %v3475 = vld [vmem:[#allocation18 + $0x34] sm:$0xf]
        %v3476 = vld [vmem:[#allocation18 + $0x38] sm:$0xf]
        %v3477 = vld [vmem:[#allocation18 + $0x3c] sm:$0xf]
        %v3478 = vld [vmem:[#allocation20] sm:$0x1]
        %v3480 = vlaneseq
        %v3481 = vshrl.u32 %v3480, 7
        %v3482 = vsub.s32 0, %v3481
        %v3483 = vrot.slane %v3478, %v3482
        %v3501 = vunpack.c.l.b16 %v3462
        %v3502 = vunpack.c.l.b16 %v3463
        %v3503 = vunpack.c.l.b16 %v3464
        %v3504 = vunpack.c.l.b16 %v3465
        %v3505 = vunpack.c.l.b16 %v3466
        %v3506 = vunpack.c.l.b16 %v3467
        %v3507 = vunpack.c.l.b16 %v3468
        %v3508 = vunpack.c.l.b16 %v3469
        %v3509 = vunpack.c.l.b16 %v3470
        %v3510 = vunpack.c.l.b16 %v3471
        %v3511 = vunpack.c.l.b16 %v3472
        %v3512 = vunpack.c.l.b16 %v3473
        %v3513 = vunpack.c.l.b16 %v3474
        %v3514 = vunpack.c.l.b16 %v3475
        %v3515 = vunpack.c.l.b16 %v3476
        %v3516 = vunpack.c.l.b16 %v3477
        %v3517 = vpack.c.b16 %v3502, %v3501
        %v3518 = vpack.c.b16 %v3504, %v3503
        %v3519 = vpack.c.b16 %v3506, %v3505
        %v3520 = vpack.c.b16 %v3508, %v3507
        %v3521 = vpack.c.b16 %v3510, %v3509
        %v3522 = vpack.c.b16 %v3512, %v3511
        %v3523 = vpack.c.b16 %v3514, %v3513
        %v3524 = vpack.c.b16 %v3516, %v3515
        %3533 = vmatprep.subr.bf16.mxu0 0
        %3534 = vmatpush1.bf16.msra.mxu0 %v3517
        %3535 = vmatprep.subr.bf16.mxu0 0
        %3536 = vmatpush1.bf16.msra.mxu0 %v3518
        %3537 = vmatprep.subr.bf16.mxu0 0
        %3538 = vmatpush1.bf16.msra.mxu0 %v3519
        %3539 = vmatprep.subr.bf16.mxu0 0
        %3540 = vmatpush1.bf16.msra.mxu0 %v3520
        %3541 = vmatprep.subr.bf16.mxu0 0
        %3542 = vmatpush1.bf16.msra.mxu0 %v3521
        %3543 = vmatprep.subr.bf16.mxu0 0
        %3544 = vmatpush1.bf16.msra.mxu0 %v3522
        %3545 = vmatprep.subr.bf16.mxu0 0
        %3546 = vmatpush1.bf16.msra.mxu0 %v3523
        %3547 = vmatprep.subr.bf16.mxu0 0
        %3548 = vmatpush1.bf16.msra.mxu0 %v3524
        %3549 = vmatprep.subr.bf16.mxu0 0
        %3550 = vmatpush1.bf16.msra.mxu0 0
        %3551 = vmatprep.subr.bf16.mxu0 0
        %3552 = vmatpush1.bf16.msra.mxu0 0
        %3553 = vmatprep.subr.bf16.mxu0 0
        %3554 = vmatpush1.bf16.msra.mxu0 0
        %3555 = vmatprep.subr.bf16.mxu0 0
        %3556 = vmatpush1.bf16.msra.mxu0 0
        %3557 = vmatprep.subr.bf16.mxu0 0
        %3558 = vmatpush1.bf16.msra.mxu0 0
        %3559 = vmatprep.subr.bf16.mxu0 0
        %3560 = vmatpush1.bf16.msra.mxu0 0
        %3561 = vmatprep.subr.bf16.mxu0 0
        %3562 = vmatpush1.bf16.msra.mxu0 0
        %3563 = vmatprep.subr.bf16.mxu0 0
        %3564 = vmatpush1.bf16.msra.mxu0 0
        %3565 = vmatprep.mubr.bf16.mxu0 0
        %3566 = vmatmul.mubr.bf16.gmra.mrb[0].mxu0 %v3461
        %v3567 = vpop.f32.mrb[0].mxu0
        %v3568 = vadd.f32 %v3483, %v3567
        %v3569 = vpop.f32.mrb[0].mxu0
        %v3570 = vpop.f32.mrb[0].mxu0
        %v3571 = vadd.f32 %v3483, %v3570
        %v3572 = vpop.f32.mrb[0].mxu0
        %3573 = vdwg.mxu0
        %3574 = vmax.xlane.f32.xlu0 %v3568
        %v3575 = vpop.xlane.xlu0 %3574
        %3576 = vmax.xlane.f32.xlu0 %v3571
        %v3577 = vpop.xlane.xlu0 %3576
        %v3578 = vsub.f32 %v3568, %v3575
        %v3579 = vsub.f32 %v3571, %v3577
        %v3580 = vmul.f32 %v3578, 1.442695
        %v3581 = vpow.pop %v3580
        %v3582 = vmul.f32 %v3579, 1.442695
        %v3583 = vpow.pop %v3582
        %3584 = vadd.xlane.f32.xlu0 %v3581
        %v3585 = vpop.xlane.xlu0 %3584
        %3586 = vadd.xlane.f32.xlu0 %v3583
        %v3587 = vpop.xlane.xlu0 %3586
        %v3588 = vlog2.pop %v3585
        %v3589 = vmul.f32 %v3588, 0.6931472
        %v3590 = vlog2.pop %v3587
        %v3591 = vmul.f32 %v3590, 0.6931472
        %v3592 = vsub.f32 %v3578, %v3589
        %v3593 = vsub.f32 %v3579, %v3591
        %3594 = vst [vmem:[%s582] sm:$0xff] %v3592
        %3595 = vst [vmem:[%s582 + $0x8] sm:$0xff] %v3593
        %s3596 = sand.u32 %s300, 1
        %s3597 = scalar_lea.sflag [#allocation5], %s3596
        %s3598 = sand.u32 %s300, 1
        %s3599 = smul.addr %s3598, 16
        %s3600 = scalar_lea.vmem [#allocation21], %s3599
        // Predicated region
        $region113: #{_lambda_.7} parent=63 // pred_check
          %p3601 = pneg %p310
        $region114: #{_lambda_.7} parent=63 // pred_check_branch
          %3603 = sbr.rel (%p3601) target = $region116
        $region115: #{_lambda_.7} parent=63 // pred_region
          %s3604 = smul.u32 2, %s40
          %s3606 = ssub.s32 256, 256
          %3607 = vsyncadd %s3597, %s3606
          %s3608 = smul.addr %s39, 2
          %s3609 = sadd.s32 %s3604, %s3608
          %s3610 = smul.addr %s3609, 128
          %s3611 = scalar_lea.hbm %s11, %s3610
          %s3612 = sshll.u32 %s3600, 4
          %s3613 = int_to_ptr.vmem [resolvable:$true] %s3612
          %3618 = dma.vmem_to_hbm [thread:$0]  %s3613, 256, %s3611, %s3597, 128, 128, 8
        $region116: #{_lambda_.7} parent=63 // pred_fallthru
          _
      $region64: #{_lambda_.7} parent=5 // pred_fallthru
        _
      %p3619 = scmp.le.s32.totalorder 2, %s30
      // Predicated region
      $region117: #{_lambda_.7} parent=5 // pred_check
        %p3620 = pneg %p3619
      $region118: #{_lambda_.7} parent=5 // pred_check_branch
        %3622 = sbr.rel (%p3620) target = $region120
      $region119: #{_lambda_.7} parent=5 // pred_region
        %s3623 = ssub.s32 %s30, 2
        // Predicated region
        $region121: #{_lambda_.7} parent=119 // pred_check
          %p3624 = pneg %p316
        $region122: #{_lambda_.7} parent=119 // pred_check_branch
          %3626 = sbr.rel (%p3624) target = $region124
        $region123: #{_lambda_.7} parent=119 // pred_region
          %s3627 = sand.u32 %s301, 1
          %s3628 = scalar_lea.sflag [#allocation5], %s3627
          %s3629 = sand.u32 %s301, 1
          %s3630 = smul.addr %s3629, 16
          %s3631 = scalar_lea.vmem [#allocation21], %s3630
          %3632 = dma.done %s3628, 256
        $region124: #{_lambda_.7} parent=119 // pred_fallthru
          _
      $region120: #{_lambda_.7} parent=5 // pred_fallthru
        _
    $region6: #{_lambda_.7} parent=1 // loop_footer
      %s34 = sadd.s32 1, %s30
    $region7: #{_lambda_.7} parent=1 // loop_footer_branch
      %29 = sbr.rel target = $region3
    $region8: #{_lambda_.7} parent=1 // loop_exit
      _
    %3633 = vsyncpa [#allocation4], 1
    %s3634 = scalar_lea.sflag [#allocation4], 1
    %3635 = vsyncpa %s3634, 1
    %3636 = vsyncpa [#allocation7], 1
    %s3637 = scalar_lea.sflag [#allocation7], 1
    %3638 = vsyncpa %s3637, 1
    %3639 = vsyncpa [#allocation10], 1
    %3640 = vsyncpa [#allocation13], 1
    %3641 = vsyncpa [#allocation16], 1
    %3642 = vsyncpa [#allocation19], 1
    %3643 = vsyncpa [#allocation5], 1
    %s3644 = scalar_lea.sflag [#allocation5], 1
    %3645 = vsyncpa %s3644, 1

</llo_original>
